<compile_context>
chip_gen: v6e
topology: v6e:2x2x1
jax: 0.10.0
libtpu: 0.0.40
codegen_flags: <defaults>
</compile_context>

<pallas_src>
import math

import jax
import jax.numpy as jnp
import numpy as np
from jax import lax
from jax.experimental import pallas as pl
from jax.experimental.pallas import tpu as pltpu


def _choose_group_size(num_heads, head_dim, target_lanes=256):
    """Smallest divisor G of num_heads such that G*head_dim >= target_lanes."""
    for g in range(1, num_heads + 1):
        if num_heads % g == 0 and g * head_dim >= target_lanes:
            return g
    return num_heads


def _default_vmem_limit_bytes():
    try:
        return int(0.75 * pltpu.get_tpu_info().vmem_capacity_bytes)
    except Exception:
        return 48 * 1024 * 1024


def pack_attention_params(params, num_heads, *, target_lanes=256,
                          weight_dtype=jnp.bfloat16):
    """One-time weight packing (hoisted out of the per-call forward path).

    params: wq/wk/wv/wo of shape (H, H) in (in, out) layout (i.e. transposed
    vs torch.nn.Linear.weight), bq/bk/bv/bo of shape (H,).
    Folds the 1/sqrt(head_dim) scale into the packed Q columns/bias and casts
    matmul weights to bf16 (MXU-native).
    """
    H = params["wq"].shape[0]
    assert H % num_heads == 0
    d = H // num_heads
    scale = 1.0 / math.sqrt(d)
    G = _choose_group_size(num_heads, d, target_lanes)
    num_groups = num_heads // G
    Gd = G * d

    def split_cols(w):            # (H, H) -> (num_groups, H, Gd)
        return w.reshape(H, num_groups, Gd).transpose(1, 0, 2)

    def split_bias(b):            # (H,)  -> (num_groups, 1, Gd)
        return b.reshape(num_groups, 1, Gd)

    wqkv = jnp.concatenate(
        [split_cols(params["wq"] * scale),          # scale folded into Q
         split_cols(params["wk"]),
         split_cols(params["wv"])], axis=-1).astype(weight_dtype)
    bqkv = jnp.concatenate(
        [split_bias(params["bq"] * scale),
         split_bias(params["bk"]),
         split_bias(params["bv"])], axis=-1).astype(jnp.float32)
    wo = params["wo"].reshape(num_groups, Gd, H).astype(weight_dtype)
    bo = params["bo"].reshape(1, H).astype(jnp.float32)

    return dict(wqkv=wqkv, bqkv=bqkv, wo=wo, bo=bo,
                num_heads=num_heads, num_groups=num_groups,
                group_size=G, head_dim=d, hidden_size=H)


def _make_attention_kernel(num_groups, group_size, head_dim,
                           s_actual, s_pad, with_probs):
    Gd = group_size * head_dim

    def kernel(x_ref, wqkv_ref, bqkv_ref, wo_ref, bo_ref, *rest):
        idx = 0
        out_ref = rest[idx]; idx += 1
        probs_ref = None
        if with_probs:
            probs_ref = rest[idx]; idx += 1
        ctx_ref = rest[idx]; idx += 1
        acc_ref = rest[idx] if num_groups > 1 else None

        g = pl.program_id(1)

        x = x_ref[0]                                              # (S_pad, H) bf16

        # Fused Q/K/V projection for this head group: one wide bf16 MXU matmul
        # (f32 accumulation). Scale is already folded into the Q columns/bias.
        qkv = jnp.dot(x, wqkv_ref[g], preferred_element_type=jnp.float32)
        qkv = qkv + bqkv_ref[g]                                   # (S_pad, 3Gd) f32

        # Key-padding mask (static: s_actual/s_pad are Python ints). Built once
        # outside the head loop.
        key_mask = None
        if s_pad != s_actual:
            key_mask = lax.broadcasted_iota(jnp.int32, (1, s_pad), 1) < s_actual

        for j in range(group_size):                               # static unroll
            qj = qkv[:, j * head_dim:(j + 1) * head_dim].astype(jnp.bfloat16)
            kj = qkv[:, Gd + j * head_dim:
                        Gd + (j + 1) * head_dim].astype(jnp.bfloat16)
            vj = qkv[:, 2 * Gd + j * head_dim:
                        2 * Gd + (j + 1) * head_dim].astype(jnp.bfloat16)

            # Contraction over head_dim without materializing k.T (bf16 in,
            # f32 accumulate).
            scores = lax.dot_general(
                qj, kj, (((1,), (1,)), ((), ())),
                preferred_element_type=jnp.float32)               # (S_pad, S_pad)

            if key_mask is not None:
                scores = jnp.where(key_mask, scores, jnp.float32(-1e30))

            # Numerically stable softmax; approx reciprocal runs on the EUP.
            scores = scores - jnp.max(scores, axis=-1, keepdims=True)
            e = jnp.exp(scores)
            probs = e * pl.reciprocal(jnp.sum(e, axis=-1, keepdims=True),
                                      approx=True)
            p = probs.astype(jnp.bfloat16)

            # TODO(synk): attn_dropout is identity (eval / rate 0.0).
            if with_probs:
                probs_ref[0, j] = p.astype(probs_ref.dtype)

            # Write this head's context into the preallocated scratch (no
            # concatenate -> no cross-lane relayout, small live ranges).
            ctx_ref[:, j * head_dim:(j + 1) * head_dim] = jnp.dot(
                p, vj, preferred_element_type=jnp.float32).astype(ctx_ref.dtype)

        # This head group's slice of the output projection (bf16 operands).
        partial = jnp.dot(ctx_ref[...], wo_ref[g],
                          preferred_element_type=jnp.float32)     # (S_pad, H) f32

        if num_groups == 1:
            # TODO(synk): proj_dropout is identity (eval / rate 0.0).
            out_ref[0] = (partial + bo_ref[...]).astype(out_ref.dtype)
        else:
            @pl.when(g == 0)
            def _():
                acc_ref[...] = partial

            @pl.when(g > 0)
            def _():
                acc_ref[...] += partial

            @pl.when(g == num_groups - 1)
            def _():
                # TODO(synk): proj_dropout is identity (eval / rate 0.0).
                out_ref[0] = (acc_ref[...] + bo_ref[...]).astype(out_ref.dtype)

    return kernel


def attention_forward(hidden_states, packed, *, probs_dtype=jnp.bfloat16,
                      return_probs=True, seq_pad_multiple=128,
                      vmem_limit_bytes=None):
    """Fused multi-head attention Pallas kernel.

    hidden_states: (B, S, H); packed: output of pack_attention_params().
    Returns (attention_output (B,S,H), attention_probs (B,num_heads,S,S) or None).
    """
    B, S, H = hidden_states.shape
    num_heads = packed["num_heads"]
    num_groups = packed["num_groups"]
    G = packed["group_size"]
    d = packed["head_dim"]
    Gd = G * d
    assert H == packed["hidden_size"] == num_heads * d

    # Pad S to a multiple of 128 so the (S,S) probs / (S,H) output stores are
    # lane-dense (padded key columns are masked inside the kernel).
    if seq_pad_multiple:
        S_pad = -(-S // seq_pad_multiple) * seq_pad_multiple
    else:
        S_pad = S

    x = hidden_states.astype(jnp.bfloat16)        # bf16 MXU operand, halves DMA
    if S_pad != S:
        x = jnp.pad(x, ((0, 0), (0, S_pad - S), (0, 0)))

    wqkv, bqkv, wo, bo = packed["wqkv"], packed["bqkv"], packed["wo"], packed["bo"]

    if vmem_limit_bytes is None:
        vmem_limit_bytes = _default_vmem_limit_bytes()

    kernel = _make_attention_kernel(num_groups, G, d, S, S_pad, return_probs)
    grid = (B, num_groups)

    def build_in_specs(single_buffer_weights):
        # Weights/biases never change across the grid: constant index maps make
        # them VMEM-resident, Buffered(1) kills the useless second buffer.
        wkw = dict(pipeline_mode=pl.Buffered(1)) if single_buffer_weights else {}
        return [
            pl.BlockSpec((1, S_pad, H), lambda b, g: (b, 0, 0)),                  # x
            pl.BlockSpec((num_groups, H, 3 * Gd), lambda b, g: (0, 0, 0), **wkw),  # wqkv
            pl.BlockSpec((num_groups, 1, 3 * Gd), lambda b, g: (0, 0, 0), **wkw),  # bqkv
            pl.BlockSpec((num_groups, Gd, H), lambda b, g: (0, 0, 0), **wkw),      # wo
            pl.BlockSpec((1, H), lambda b, g: (0, 0), **wkw),                      # bo
        ]

    out_specs = [pl.BlockSpec((1, S_pad, H), lambda b, g: (b, 0, 0))]
    out_shape = [jax.ShapeDtypeStruct((B, S_pad, H), hidden_states.dtype)]
    if return_probs:
        out_specs.append(pl.BlockSpec((1, G, S_pad, S_pad),
                                      lambda b, g: (b, g, 0, 0)))
        out_shape.append(jax.ShapeDtypeStruct((B, num_heads, S_pad, S_pad),
                                              probs_dtype))

    scratch_shapes = [pltpu.VMEM((S_pad, Gd), jnp.bfloat16)]       # ctx
    if num_groups > 1:
        scratch_shapes.append(pltpu.VMEM((S_pad, H), jnp.float32))  # f32 accumulator

    def run(single_buffer_weights):
        return pl.pallas_call(
            kernel,
            grid_spec=pltpu.PrefetchScalarGridSpec(
                num_scalar_prefetch=0,
                grid=grid,
                in_specs=build_in_specs(single_buffer_weights),
                out_specs=out_specs,
                scratch_shapes=scratch_shapes,
            ),
            out_shape=out_shape,
            compiler_params=pltpu.CompilerParams(
                dimension_semantics=("parallel", "arbitrary"),
                vmem_limit_bytes=int(vmem_limit_bytes),
            ),
        )(x, wqkv, bqkv, wo, bo)

    try:
        results = run(True)
    except Exception:
        # TODO(synk): fallback for jax versions without BlockSpec pipeline_mode.
        results = run(False)

    if return_probs:
        out, probs = results
    else:
        (out,) = results
        probs = None

    if S_pad != S:
        out = out[:, :S, :]
        if probs is not None:
            probs = probs[:, :, :S, :S]
    return out, probs


def attention_reference(hidden_states, params, num_heads):
    """Pure-JAX reference mirroring the PyTorch forward."""
    B, S, H = hidden_states.shape
    d = H // num_heads

    def proj(x, w, b):
        return jnp.einsum("bsh,hk->bsk", x, w) + b

    def split_heads(x):  # (B, S, H) -> (B, nh, S, d)
        return x.reshape(B, S, num_heads, d).transpose(0, 2, 1, 3)

    q = split_heads(proj(hidden_states, params["wq"], params["bq"]))
    k = split_heads(proj(hidden_states, params["wk"], params["bk"]))
    v = split_heads(proj(hidden_states, params["wv"], params["bv"]))

    scores = jnp.einsum("bnqd,bnkd->bnqk", q, k) / math.sqrt(d)
    probs = jax.nn.softmax(scores, axis=-1)
    ctx = jnp.einsum("bnqk,bnkd->bnqd", probs, v)
    ctx = ctx.transpose(0, 2, 1, 3).reshape(B, S, H)
    out = jnp.einsum("bsh,hk->bsk", ctx, params["wo"]) + params["bo"]
    return out, probs


def _make_params(key, H, wscale=0.02):
    keys = jax.random.split(key, 8)
    return {
        "wq": wscale * jax.random.normal(keys[0], (H, H), jnp.float32),
        "bq": wscale * jax.random.normal(keys[1], (H,), jnp.float32),
        "wk": wscale * jax.random.normal(keys[2], (H, H), jnp.float32),
        "bk": wscale * jax.random.normal(keys[3], (H,), jnp.float32),
        "wv": wscale * jax.random.normal(keys[4], (H, H), jnp.float32),
        "bv": wscale * jax.random.normal(keys[5], (H,), jnp.float32),
        "wo": wscale * jax.random.normal(keys[6], (H, H), jnp.float32),
        "bo": wscale * jax.random.normal(keys[7], (H,), jnp.float32),
    }


if __name__ == "__main__":
    # bf16 MXU operands + bf16 probs -> loosened tolerances vs the f32 reference.
    RTOL, ATOL = 5e-2, 5e-3

    # ---- Config 1: module-consistent small shapes (hidden=32, heads=4) ------
    # Exercises the S-padding (8 -> 128) + key-mask path, single head group.
    B, S, H, num_heads = 2, 8, 32, 4
    key = jax.random.PRNGKey(0)
    k_params, k_x, k2_params, k2_x = jax.random.split(key, 4)

    params = _make_params(k_params, H)
    hidden_states = jax.random.normal(k_x, (B, S, H), jnp.float32)

    packed = pack_attention_params(params, num_heads)   # one-time packing
    out, probs = attention_forward(hidden_states, packed)
    out = jax.block_until_ready(out)
    probs = jax.block_until_ready(probs)

    ref_out, ref_probs = attention_reference(hidden_states, params, num_heads)
    np.testing.assert_allclose(np.asarray(out, dtype=np.float32),
                               np.asarray(ref_out), rtol=RTOL, atol=ATOL)
    np.testing.assert_allclose(np.asarray(probs, dtype=np.float32),
                               np.asarray(ref_probs), rtol=RTOL, atol=ATOL)

    # probs-free path (skips the dominant HBM writeback entirely).
    out_np, none_probs = attention_forward(hidden_states, packed,
                                           return_probs=False)
    out_np = jax.block_until_ready(out_np)
    assert none_probs is None
    np.testing.assert_allclose(np.asarray(out_np, dtype=np.float32),
                               np.asarray(ref_out), rtol=RTOL, atol=ATOL)

    # ---- Config 2: no-padding (S multiple of 128) + multi-group accumulation -
    B2, S2, H2, nh2 = 1, 128, 64, 8
    params2 = _make_params(k2_params, H2)
    hidden2 = jax.random.normal(k2_x, (B2, S2, H2), jnp.float32)

    packed2 = pack_attention_params(params2, nh2, target_lanes=16)  # -> 4 groups
    out2, probs2 = attention_forward(hidden2, packed2)
    out2 = jax.block_until_ready(out2)
    probs2 = jax.block_until_ready(probs2)

    ref_out2, ref_probs2 = attention_reference(hidden2, params2, nh2)
    np.testing.assert_allclose(np.asarray(out2, dtype=np.float32),
                               np.asarray(ref_out2), rtol=RTOL, atol=ATOL)
    np.testing.assert_allclose(np.asarray(probs2, dtype=np.float32),
                               np.asarray(ref_probs2), rtol=RTOL, atol=ATOL)

    print("KERNEL_OK")
</pallas_src>

<mosaic_0001>
module attributes {stable_mosaic.version = 11 : i64} {
  func.func @kernel(%arg0: i32, %arg1: i32, %arg2: memref<1x128x32xbf16, #tpu.memory_space<vmem>>, %arg3: memref<1x32x96xbf16, #tpu.memory_space<vmem>>, %arg4: memref<1x1x96xf32, #tpu.memory_space<vmem>>, %arg5: memref<1x32x32xbf16, #tpu.memory_space<vmem>>, %arg6: memref<1x32xf32, #tpu.memory_space<vmem>>, %arg7: memref<1x128x32xf32, #tpu.memory_space<vmem>>, %arg8: memref<1x4x128x128xbf16, #tpu.memory_space<vmem>>, %arg9: memref<128x32xbf16, #tpu.memory_space<vmem>>) attributes {dimension_semantics = [#tpu.dimension_semantics<parallel>, #tpu.dimension_semantics<arbitrary>], iteration_bounds = array<i64: 2, 1>, scalar_prefetch = 0 : i64, scratch_operands = 1 : i64, tpu.core_type = #tpu.core_type<tc>, window_params = [{transform_indices = @transform_0, window_bounds = array<i64: 1, 128, 32>}, {pipeline_mode = #tpu.pipeline_mode<synchronous>, transform_indices = @transform_1, window_bounds = array<i64: 1, 32, 96>}, {pipeline_mode = #tpu.pipeline_mode<synchronous>, transform_indices = @transform_2, window_bounds = array<i64: 1, 1, 96>}, {pipeline_mode = #tpu.pipeline_mode<synchronous>, transform_indices = @transform_3, window_bounds = array<i64: 1, 32, 32>}, {pipeline_mode = #tpu.pipeline_mode<synchronous>, transform_indices = @transform_4, window_bounds = array<i64: 1, 32>}, {transform_indices = @transform_5, window_bounds = array<i64: 1, 128, 32>}, {transform_indices = @transform_6, window_bounds = array<i64: 1, 4, 128, 128>}]} {
    %c0 = arith.constant 0 : index
    %c0_0 = arith.constant 0 : index
    %c0_1 = arith.constant 0 : index
    %0 = vector.load %arg2[%c0, %c0_0, %c0_1] : memref<1x128x32xbf16, #tpu.memory_space<vmem>>, vector<1x128x32xbf16>
    %1 = vector.shape_cast %0 : vector<1x128x32xbf16> to vector<128x32xbf16>
    %2 = arith.index_cast %arg1 : i32 to index
    %c0_2 = arith.constant 0 : index
    %c0_3 = arith.constant 0 : index
    %3 = vector.load %arg3[%2, %c0_2, %c0_3] : memref<1x32x96xbf16, #tpu.memory_space<vmem>>, vector<1x32x96xbf16>
    %4 = vector.shape_cast %3 : vector<1x32x96xbf16> to vector<32x96xbf16>
    %cst = arith.constant dense<0.000000e+00> : vector<128x96xf32>
    %5 = tpu.matmul %1, %4, %cst {dimension_numbers = #tpu.dot_dimension_numbers<[1], [0], [0], [1], [0, 0, 1, 1], [], []>} : vector<128x32xbf16>, vector<32x96xbf16>, vector<128x96xf32> -> vector<128x96xf32>
    %6 = arith.index_cast %arg1 : i32 to index
    %c0_4 = arith.constant 0 : index
    %c0_5 = arith.constant 0 : index
    %7 = vector.load %arg4[%6, %c0_4, %c0_5] : memref<1x1x96xf32, #tpu.memory_space<vmem>>, vector<1x1x96xf32>
    %8 = vector.shape_cast %7 : vector<1x1x96xf32> to vector<1x96xf32>
    %9 = vector.broadcast %8 : vector<1x96xf32> to vector<128x96xf32>
    %10 = arith.addf %5, %9 : vector<128x96xf32>
    %11 = tpu.iota {dimensions = array<i32: 1>} : vector<1x128xi32>
    %c8_i32 = arith.constant 8 : i32
    %12 = vector.broadcast %c8_i32 : i32 to vector<1x128xi32>
    %13 = arith.cmpi slt, %11, %12 : vector<1x128xi32>
    %14 = vector.extract_strided_slice %10 {offsets = [0, 0], sizes = [128, 8], strides = [1, 1]} : vector<128x96xf32> to vector<128x8xf32>
    %15 = arith.truncf %14 : vector<128x8xf32> to vector<128x8xbf16>
    %16 = vector.extract_strided_slice %10 {offsets = [0, 32], sizes = [128, 8], strides = [1, 1]} : vector<128x96xf32> to vector<128x8xf32>
    %17 = arith.truncf %16 : vector<128x8xf32> to vector<128x8xbf16>
    %18 = vector.extract_strided_slice %10 {offsets = [0, 64], sizes = [128, 8], strides = [1, 1]} : vector<128x96xf32> to vector<128x8xf32>
    %19 = arith.truncf %18 : vector<128x8xf32> to vector<128x8xbf16>
    %cst_6 = arith.constant dense<0.000000e+00> : vector<128x128xf32>
    %20 = tpu.matmul %15, %17, %cst_6 {dimension_numbers = #tpu.dot_dimension_numbers<[1], [1], [0], [0], [0, 0, 1, 0], [], []>} : vector<128x8xbf16>, vector<128x8xbf16>, vector<128x128xf32> -> vector<128x128xf32>
    %cst_7 = arith.constant -1.000000e+30 : f32
    %21 = vector.shape_cast %13 : vector<1x128xi1> to vector<1x128xi1>
    %22 = vector.broadcast %21 : vector<1x128xi1> to vector<128x128xi1>
    %23 = vector.broadcast %cst_7 : f32 to vector<128x128xf32>
    %24 = arith.select %22, %20, %23 : vector<128x128xi1>, vector<128x128xf32>
    %cst_8 = arith.constant dense<0xFF800000> : vector<128xf32>
    %25 = vector.multi_reduction <maximumf>, %24, %cst_8 [1] : vector<128x128xf32> to vector<128xf32>
    %26 = vector.shape_cast %25 : vector<128xf32> to vector<128x1xf32>
    %27 = vector.broadcast %26 : vector<128x1xf32> to vector<128x128xf32>
    %28 = arith.subf %24, %27 : vector<128x128xf32>
    %29 = math.exp %28 : vector<128x128xf32>
    %cst_9 = arith.constant dense<0.000000e+00> : vector<128xf32>
    %30 = vector.multi_reduction <add>, %29, %cst_9 [1] : vector<128x128xf32> to vector<128xf32>
    %31 = vector.shape_cast %30 : vector<128xf32> to vector<128x1xf32>
    %32 = tpu.reciprocal %31 {approx = true} : vector<128x1xf32> -> vector<128x1xf32>
    %33 = vector.broadcast %32 : vector<128x1xf32> to vector<128x128xf32>
    %34 = arith.mulf %29, %33 : vector<128x128xf32>
    %35 = arith.truncf %34 : vector<128x128xf32> to vector<128x128xbf16>
    %c0_10 = arith.constant 0 : index
    %c0_11 = arith.constant 0 : index
    %c0_12 = arith.constant 0 : index
    %c0_13 = arith.constant 0 : index
    %36 = vector.load %arg8[%c0_10, %c0_11, %c0_12, %c0_13] : memref<1x4x128x128xbf16, #tpu.memory_space<vmem>>, vector<1x1x128x128xbf16>
    %37 = vector.shape_cast %36 : vector<1x1x128x128xbf16> to vector<128x128xbf16>
    %38 = vector.shape_cast %35 : vector<128x128xbf16> to vector<1x1x128x128xbf16>
    tpu.vector_store %arg8[%c0_10, %c0_11, %c0_12, %c0_13], %38 {strides = array<i32>} : memref<1x4x128x128xbf16, #tpu.memory_space<vmem>>, vector<1x1x128x128xbf16>,
    %cst_14 = arith.constant dense<0.000000e+00> : vector<128x8xf32>
    %39 = tpu.matmul %35, %19, %cst_14 {dimension_numbers = #tpu.dot_dimension_numbers<[1], [0], [0], [1], [0, 0, 1, 1], [], []>} : vector<128x128xbf16>, vector<128x8xbf16>, vector<128x8xf32> -> vector<128x8xf32>
    %40 = arith.truncf %39 : vector<128x8xf32> to vector<128x8xbf16>
    %c0_15 = arith.constant 0 : index
    %c0_16 = arith.constant 0 : index
    %41 = vector.load %arg9[%c0_15, %c0_16] : memref<128x32xbf16, #tpu.memory_space<vmem>>, vector<128x8xbf16>
    tpu.vector_store %arg9[%c0_15, %c0_16], %40 {strides = array<i32>} : memref<128x32xbf16, #tpu.memory_space<vmem>>, vector<128x8xbf16>,
    %42 = vector.extract_strided_slice %10 {offsets = [0, 8], sizes = [128, 8], strides = [1, 1]} : vector<128x96xf32> to vector<128x8xf32>
    %43 = arith.truncf %42 : vector<128x8xf32> to vector<128x8xbf16>
    %44 = vector.extract_strided_slice %10 {offsets = [0, 40], sizes = [128, 8], strides = [1, 1]} : vector<128x96xf32> to vector<128x8xf32>
    %45 = arith.truncf %44 : vector<128x8xf32> to vector<128x8xbf16>
    %46 = vector.extract_strided_slice %10 {offsets = [0, 72], sizes = [128, 8], strides = [1, 1]} : vector<128x96xf32> to vector<128x8xf32>
    %47 = arith.truncf %46 : vector<128x8xf32> to vector<128x8xbf16>
    %cst_17 = arith.constant dense<0.000000e+00> : vector<128x128xf32>
    %48 = tpu.matmul %43, %45, %cst_17 {dimension_numbers = #tpu.dot_dimension_numbers<[1], [1], [0], [0], [0, 0, 1, 0], [], []>} : vector<128x8xbf16>, vector<128x8xbf16>, vector<128x128xf32> -> vector<128x128xf32>
    %cst_18 = arith.constant -1.000000e+30 : f32
    %49 = vector.shape_cast %13 : vector<1x128xi1> to vector<1x128xi1>
    %50 = vector.broadcast %49 : vector<1x128xi1> to vector<128x128xi1>
    %51 = vector.broadcast %cst_18 : f32 to vector<128x128xf32>
    %52 = arith.select %50, %48, %51 : vector<128x128xi1>, vector<128x128xf32>
    %cst_19 = arith.constant dense<0xFF800000> : vector<128xf32>
    %53 = vector.multi_reduction <maximumf>, %52, %cst_19 [1] : vector<128x128xf32> to vector<128xf32>
    %54 = vector.shape_cast %53 : vector<128xf32> to vector<128x1xf32>
    %55 = vector.broadcast %54 : vector<128x1xf32> to vector<128x128xf32>
    %56 = arith.subf %52, %55 : vector<128x128xf32>
    %57 = math.exp %56 : vector<128x128xf32>
    %cst_20 = arith.constant dense<0.000000e+00> : vector<128xf32>
    %58 = vector.multi_reduction <add>, %57, %cst_20 [1] : vector<128x128xf32> to vector<128xf32>
    %59 = vector.shape_cast %58 : vector<128xf32> to vector<128x1xf32>
    %60 = tpu.reciprocal %59 {approx = true} : vector<128x1xf32> -> vector<128x1xf32>
    %61 = vector.broadcast %60 : vector<128x1xf32> to vector<128x128xf32>
    %62 = arith.mulf %57, %61 : vector<128x128xf32>
    %63 = arith.truncf %62 : vector<128x128xf32> to vector<128x128xbf16>
    %c0_21 = arith.constant 0 : index
    %c1 = arith.constant 1 : index
    %c0_22 = arith.constant 0 : index
    %c0_23 = arith.constant 0 : index
    %64 = vector.load %arg8[%c0_21, %c1, %c0_22, %c0_23] : memref<1x4x128x128xbf16, #tpu.memory_space<vmem>>, vector<1x1x128x128xbf16>
    %65 = vector.shape_cast %64 : vector<1x1x128x128xbf16> to vector<128x128xbf16>
    %66 = vector.shape_cast %63 : vector<128x128xbf16> to vector<1x1x128x128xbf16>
    tpu.vector_store %arg8[%c0_21, %c1, %c0_22, %c0_23], %66 {strides = array<i32>} : memref<1x4x128x128xbf16, #tpu.memory_space<vmem>>, vector<1x1x128x128xbf16>,
    %cst_24 = arith.constant dense<0.000000e+00> : vector<128x8xf32>
    %67 = tpu.matmul %63, %47, %cst_24 {dimension_numbers = #tpu.dot_dimension_numbers<[1], [0], [0], [1], [0, 0, 1, 1], [], []>} : vector<128x128xbf16>, vector<128x8xbf16>, vector<128x8xf32> -> vector<128x8xf32>
    %68 = arith.truncf %67 : vector<128x8xf32> to vector<128x8xbf16>
    %c0_25 = arith.constant 0 : index
    %c8 = arith.constant 8 : index
    %69 = vector.load %arg9[%c0_25, %c8] : memref<128x32xbf16, #tpu.memory_space<vmem>>, vector<128x8xbf16>
    tpu.vector_store %arg9[%c0_25, %c8], %68 {strides = array<i32>} : memref<128x32xbf16, #tpu.memory_space<vmem>>, vector<128x8xbf16>,
    %70 = vector.extract_strided_slice %10 {offsets = [0, 16], sizes = [128, 8], strides = [1, 1]} : vector<128x96xf32> to vector<128x8xf32>
    %71 = arith.truncf %70 : vector<128x8xf32> to vector<128x8xbf16>
    %72 = vector.extract_strided_slice %10 {offsets = [0, 48], sizes = [128, 8], strides = [1, 1]} : vector<128x96xf32> to vector<128x8xf32>
    %73 = arith.truncf %72 : vector<128x8xf32> to vector<128x8xbf16>
    %74 = vector.extract_strided_slice %10 {offsets = [0, 80], sizes = [128, 8], strides = [1, 1]} : vector<128x96xf32> to vector<128x8xf32>
    %75 = arith.truncf %74 : vector<128x8xf32> to vector<128x8xbf16>
    %cst_26 = arith.constant dense<0.000000e+00> : vector<128x128xf32>
    %76 = tpu.matmul %71, %73, %cst_26 {dimension_numbers = #tpu.dot_dimension_numbers<[1], [1], [0], [0], [0, 0, 1, 0], [], []>} : vector<128x8xbf16>, vector<128x8xbf16>, vector<128x128xf32> -> vector<128x128xf32>
    %cst_27 = arith.constant -1.000000e+30 : f32
    %77 = vector.shape_cast %13 : vector<1x128xi1> to vector<1x128xi1>
    %78 = vector.broadcast %77 : vector<1x128xi1> to vector<128x128xi1>
    %79 = vector.broadcast %cst_27 : f32 to vector<128x128xf32>
    %80 = arith.select %78, %76, %79 : vector<128x128xi1>, vector<128x128xf32>
    %cst_28 = arith.constant dense<0xFF800000> : vector<128xf32>
    %81 = vector.multi_reduction <maximumf>, %80, %cst_28 [1] : vector<128x128xf32> to vector<128xf32>
    %82 = vector.shape_cast %81 : vector<128xf32> to vector<128x1xf32>
    %83 = vector.broadcast %82 : vector<128x1xf32> to vector<128x128xf32>
    %84 = arith.subf %80, %83 : vector<128x128xf32>
    %85 = math.exp %84 : vector<128x128xf32>
    %cst_29 = arith.constant dense<0.000000e+00> : vector<128xf32>
    %86 = vector.multi_reduction <add>, %85, %cst_29 [1] : vector<128x128xf32> to vector<128xf32>
    %87 = vector.shape_cast %86 : vector<128xf32> to vector<128x1xf32>
    %88 = tpu.reciprocal %87 {approx = true} : vector<128x1xf32> -> vector<128x1xf32>
    %89 = vector.broadcast %88 : vector<128x1xf32> to vector<128x128xf32>
    %90 = arith.mulf %85, %89 : vector<128x128xf32>
    %91 = arith.truncf %90 : vector<128x128xf32> to vector<128x128xbf16>
    %c0_30 = arith.constant 0 : index
    %c2 = arith.constant 2 : index
    %c0_31 = arith.constant 0 : index
    %c0_32 = arith.constant 0 : index
    %92 = vector.load %arg8[%c0_30, %c2, %c0_31, %c0_32] : memref<1x4x128x128xbf16, #tpu.memory_space<vmem>>, vector<1x1x128x128xbf16>
    %93 = vector.shape_cast %92 : vector<1x1x128x128xbf16> to vector<128x128xbf16>
    %94 = vector.shape_cast %91 : vector<128x128xbf16> to vector<1x1x128x128xbf16>
    tpu.vector_store %arg8[%c0_30, %c2, %c0_31, %c0_32], %94 {strides = array<i32>} : memref<1x4x128x128xbf16, #tpu.memory_space<vmem>>, vector<1x1x128x128xbf16>,
    %cst_33 = arith.constant dense<0.000000e+00> : vector<128x8xf32>
    %95 = tpu.matmul %91, %75, %cst_33 {dimension_numbers = #tpu.dot_dimension_numbers<[1], [0], [0], [1], [0, 0, 1, 1], [], []>} : vector<128x128xbf16>, vector<128x8xbf16>, vector<128x8xf32> -> vector<128x8xf32>
    %96 = arith.truncf %95 : vector<128x8xf32> to vector<128x8xbf16>
    %c0_34 = arith.constant 0 : index
    %c16 = arith.constant 16 : index
    %97 = vector.load %arg9[%c0_34, %c16] : memref<128x32xbf16, #tpu.memory_space<vmem>>, vector<128x8xbf16>
    tpu.vector_store %arg9[%c0_34, %c16], %96 {strides = array<i32>} : memref<128x32xbf16, #tpu.memory_space<vmem>>, vector<128x8xbf16>,
    %98 = vector.extract_strided_slice %10 {offsets = [0, 24], sizes = [128, 8], strides = [1, 1]} : vector<128x96xf32> to vector<128x8xf32>
    %99 = arith.truncf %98 : vector<128x8xf32> to vector<128x8xbf16>
    %100 = vector.extract_strided_slice %10 {offsets = [0, 56], sizes = [128, 8], strides = [1, 1]} : vector<128x96xf32> to vector<128x8xf32>
    %101 = arith.truncf %100 : vector<128x8xf32> to vector<128x8xbf16>
    %102 = vector.extract_strided_slice %10 {offsets = [0, 88], sizes = [128, 8], strides = [1, 1]} : vector<128x96xf32> to vector<128x8xf32>
    %103 = arith.truncf %102 : vector<128x8xf32> to vector<128x8xbf16>
    %cst_35 = arith.constant dense<0.000000e+00> : vector<128x128xf32>
    %104 = tpu.matmul %99, %101, %cst_35 {dimension_numbers = #tpu.dot_dimension_numbers<[1], [1], [0], [0], [0, 0, 1, 0], [], []>} : vector<128x8xbf16>, vector<128x8xbf16>, vector<128x128xf32> -> vector<128x128xf32>
    %cst_36 = arith.constant -1.000000e+30 : f32
    %105 = vector.shape_cast %13 : vector<1x128xi1> to vector<1x128xi1>
    %106 = vector.broadcast %105 : vector<1x128xi1> to vector<128x128xi1>
    %107 = vector.broadcast %cst_36 : f32 to vector<128x128xf32>
    %108 = arith.select %106, %104, %107 : vector<128x128xi1>, vector<128x128xf32>
    %cst_37 = arith.constant dense<0xFF800000> : vector<128xf32>
    %109 = vector.multi_reduction <maximumf>, %108, %cst_37 [1] : vector<128x128xf32> to vector<128xf32>
    %110 = vector.shape_cast %109 : vector<128xf32> to vector<128x1xf32>
    %111 = vector.broadcast %110 : vector<128x1xf32> to vector<128x128xf32>
    %112 = arith.subf %108, %111 : vector<128x128xf32>
    %113 = math.exp %112 : vector<128x128xf32>
    %cst_38 = arith.constant dense<0.000000e+00> : vector<128xf32>
    %114 = vector.multi_reduction <add>, %113, %cst_38 [1] : vector<128x128xf32> to vector<128xf32>
    %115 = vector.shape_cast %114 : vector<128xf32> to vector<128x1xf32>
    %116 = tpu.reciprocal %115 {approx = true} : vector<128x1xf32> -> vector<128x1xf32>
    %117 = vector.broadcast %116 : vector<128x1xf32> to vector<128x128xf32>
    %118 = arith.mulf %113, %117 : vector<128x128xf32>
    %119 = arith.truncf %118 : vector<128x128xf32> to vector<128x128xbf16>
    %c0_39 = arith.constant 0 : index
    %c3 = arith.constant 3 : index
    %c0_40 = arith.constant 0 : index
    %c0_41 = arith.constant 0 : index
    %120 = vector.load %arg8[%c0_39, %c3, %c0_40, %c0_41] : memref<1x4x128x128xbf16, #tpu.memory_space<vmem>>, vector<1x1x128x128xbf16>
    %121 = vector.shape_cast %120 : vector<1x1x128x128xbf16> to vector<128x128xbf16>
    %122 = vector.shape_cast %119 : vector<128x128xbf16> to vector<1x1x128x128xbf16>
    tpu.vector_store %arg8[%c0_39, %c3, %c0_40, %c0_41], %122 {strides = array<i32>} : memref<1x4x128x128xbf16, #tpu.memory_space<vmem>>, vector<1x1x128x128xbf16>,
    %cst_42 = arith.constant dense<0.000000e+00> : vector<128x8xf32>
    %123 = tpu.matmul %119, %103, %cst_42 {dimension_numbers = #tpu.dot_dimension_numbers<[1], [0], [0], [1], [0, 0, 1, 1], [], []>} : vector<128x128xbf16>, vector<128x8xbf16>, vector<128x8xf32> -> vector<128x8xf32>
    %124 = arith.truncf %123 : vector<128x8xf32> to vector<128x8xbf16>
    %c0_43 = arith.constant 0 : index
    %c24 = arith.constant 24 : index
    %125 = vector.load %arg9[%c0_43, %c24] : memref<128x32xbf16, #tpu.memory_space<vmem>>, vector<128x8xbf16>
    tpu.vector_store %arg9[%c0_43, %c24], %124 {strides = array<i32>} : memref<128x32xbf16, #tpu.memory_space<vmem>>, vector<128x8xbf16>,
    %c0_44 = arith.constant 0 : index
    %c0_45 = arith.constant 0 : index
    %126 = vector.load %arg9[%c0_44, %c0_45] : memref<128x32xbf16, #tpu.memory_space<vmem>>, vector<128x32xbf16>
    %127 = arith.index_cast %arg1 : i32 to index
    %c0_46 = arith.constant 0 : index
    %c0_47 = arith.constant 0 : index
    %128 = vector.load %arg5[%127, %c0_46, %c0_47] : memref<1x32x32xbf16, #tpu.memory_space<vmem>>, vector<1x32x32xbf16>
    %129 = vector.shape_cast %128 : vector<1x32x32xbf16> to vector<32x32xbf16>
    %cst_48 = arith.constant dense<0.000000e+00> : vector<128x32xf32>
    %130 = tpu.matmul %126, %129, %cst_48 {dimension_numbers = #tpu.dot_dimension_numbers<[1], [0], [0], [1], [0, 0, 1, 1], [], []>} : vector<128x32xbf16>, vector<32x32xbf16>, vector<128x32xf32> -> vector<128x32xf32>
    %c0_49 = arith.constant 0 : index
    %c0_50 = arith.constant 0 : index
    %131 = vector.load %arg6[%c0_49, %c0_50] : memref<1x32xf32, #tpu.memory_space<vmem>>, vector<1x32xf32>
    %132 = vector.broadcast %131 : vector<1x32xf32> to vector<128x32xf32>
    %133 = arith.addf %130, %132 : vector<128x32xf32>
    %c0_51 = arith.constant 0 : index
    %c0_52 = arith.constant 0 : index
    %c0_53 = arith.constant 0 : index
    %134 = vector.load %arg7[%c0_51, %c0_52, %c0_53] : memref<1x128x32xf32, #tpu.memory_space<vmem>>, vector<1x128x32xf32>
    %135 = vector.shape_cast %134 : vector<1x128x32xf32> to vector<128x32xf32>
    %136 = vector.shape_cast %133 : vector<128x32xf32> to vector<1x128x32xf32>
    tpu.vector_store %arg7[%c0_51, %c0_52, %c0_53], %136 {strides = array<i32>} : memref<1x128x32xf32, #tpu.memory_space<vmem>>, vector<1x128x32xf32>,
    return
  }
  func.func @transform_0(%arg0: i32, %arg1: i32) -> (i32, i32, i32) {
    %c0_i32 = arith.constant 0 : i32
    %c0_i32_0 = arith.constant 0 : i32
    %c0_i32_1 = arith.constant 0 : i32
    return %arg0, %c0_i32, %c0_i32_0 : i32, i32, i32
  }
  func.func @transform_1(%arg0: i32, %arg1: i32) -> (i32, i32, i32) {
    %c0_i32 = arith.constant 0 : i32
    %c0_i32_0 = arith.constant 0 : i32
    %c0_i32_1 = arith.constant 0 : i32
    %c0_i32_2 = arith.constant 0 : i32
    return %c0_i32, %c0_i32_0, %c0_i32_1 : i32, i32, i32
  }
  func.func @transform_2(%arg0: i32, %arg1: i32) -> (i32, i32, i32) {
    %c0_i32 = arith.constant 0 : i32
    %c0_i32_0 = arith.constant 0 : i32
    %c0_i32_1 = arith.constant 0 : i32
    %c0_i32_2 = arith.constant 0 : i32
    return %c0_i32, %c0_i32_0, %c0_i32_1 : i32, i32, i32
  }
  func.func @transform_3(%arg0: i32, %arg1: i32) -> (i32, i32, i32) {
    %c0_i32 = arith.constant 0 : i32
    %c0_i32_0 = arith.constant 0 : i32
    %c0_i32_1 = arith.constant 0 : i32
    %c0_i32_2 = arith.constant 0 : i32
    return %c0_i32, %c0_i32_0, %c0_i32_1 : i32, i32, i32
  }
  func.func @transform_4(%arg0: i32, %arg1: i32) -> (i32, i32) {
    %c0_i32 = arith.constant 0 : i32
    %c0_i32_0 = arith.constant 0 : i32
    %c0_i32_1 = arith.constant 0 : i32
    return %c0_i32, %c0_i32_0 : i32, i32
  }
  func.func @transform_5(%arg0: i32, %arg1: i32) -> (i32, i32, i32) {
    %c0_i32 = arith.constant 0 : i32
    %c0_i32_0 = arith.constant 0 : i32
    %c0_i32_1 = arith.constant 0 : i32
    return %arg0, %c0_i32, %c0_i32_0 : i32, i32, i32
  }
  func.func @transform_6(%arg0: i32, %arg1: i32) -> (i32, i32, i32, i32) {
    %c0_i32 = arith.constant 0 : i32
    %c0_i32_0 = arith.constant 0 : i32
    %c0_i32_1 = arith.constant 0 : i32
    return %arg0, %arg1, %c0_i32, %c0_i32_0 : i32, i32, i32, i32
  }
}

module attributes {stable_mosaic.version = 11 : i64} {
  func.func @kernel(%arg0: i32, %arg1: i32, %arg2: memref<1x128x32xbf16, #tpu.memory_space<vmem>>, %arg3: memref<1x32x96xbf16, #tpu.memory_space<vmem>>, %arg4: memref<1x1x96xf32, #tpu.memory_space<vmem>>, %arg5: memref<1x32x32xbf16, #tpu.memory_space<vmem>>, %arg6: memref<1x32xf32, #tpu.memory_space<vmem>>, %arg7: memref<1x128x32xf32, #tpu.memory_space<vmem>>, %arg8: memref<1x4x128x128xbf16, #tpu.memory_space<vmem>>, %arg9: memref<128x32xbf16, #tpu.memory_space<vmem>>) attributes {dimension_semantics = [#tpu.dimension_semantics<parallel>, #tpu.dimension_semantics<arbitrary>], iteration_bounds = array<i64: 2, 1>, scalar_prefetch = 0 : i64, scratch_operands = 1 : i64, tpu.core_type = #tpu.core_type<tc>, window_params = [{transform_indices = @transform_0, window_bounds = array<i64: 1, 128, 32>}, {pipeline_mode = #tpu.pipeline_mode<synchronous>, transform_indices = @transform_1, window_bounds = array<i64: 1, 32, 96>}, {pipeline_mode = #tpu.pipeline_mode<synchronous>, transform_indices = @transform_2, window_bounds = array<i64: 1, 1, 96>}, {pipeline_mode = #tpu.pipeline_mode<synchronous>, transform_indices = @transform_3, window_bounds = array<i64: 1, 32, 32>}, {pipeline_mode = #tpu.pipeline_mode<synchronous>, transform_indices = @transform_4, window_bounds = array<i64: 1, 32>}, {transform_indices = @transform_5, window_bounds = array<i64: 1, 128, 32>}, {transform_indices = @transform_6, window_bounds = array<i64: 1, 4, 128, 128>}]} {
    %c0 = arith.constant 0 : index
    %c0_0 = arith.constant 0 : index
    %c0_1 = arith.constant 0 : index
    %0 = vector.load %arg2[%c0, %c0_0, %c0_1] : memref<1x128x32xbf16, #tpu.memory_space<vmem>>, vector<1x128x32xbf16>
    %1 = vector.shape_cast %0 : vector<1x128x32xbf16> to vector<128x32xbf16>
    %2 = arith.index_cast %arg1 : i32 to index
    %c0_2 = arith.constant 0 : index
    %c0_3 = arith.constant 0 : index
    %3 = vector.load %arg3[%2, %c0_2, %c0_3] : memref<1x32x96xbf16, #tpu.memory_space<vmem>>, vector<1x32x96xbf16>
    %4 = vector.shape_cast %3 : vector<1x32x96xbf16> to vector<32x96xbf16>
    %cst = arith.constant dense<0.000000e+00> : vector<128x96xf32>
    %5 = tpu.matmul %1, %4, %cst {dimension_numbers = #tpu.dot_dimension_numbers<[1], [0], [0], [1], [0, 0, 1, 1], [], []>} : vector<128x32xbf16>, vector<32x96xbf16>, vector<128x96xf32> -> vector<128x96xf32>
    %6 = arith.index_cast %arg1 : i32 to index
    %c0_4 = arith.constant 0 : index
    %c0_5 = arith.constant 0 : index
    %7 = vector.load %arg4[%6, %c0_4, %c0_5] : memref<1x1x96xf32, #tpu.memory_space<vmem>>, vector<1x1x96xf32>
    %8 = vector.shape_cast %7 : vector<1x1x96xf32> to vector<1x96xf32>
    %9 = vector.broadcast %8 : vector<1x96xf32> to vector<128x96xf32>
    %10 = arith.addf %5, %9 : vector<128x96xf32>
    %11 = tpu.iota {dimensions = array<i32: 1>} : vector<1x128xi32>
    %c8_i32 = arith.constant 8 : i32
    %12 = vector.broadcast %c8_i32 : i32 to vector<1x128xi32>
    %13 = arith.cmpi slt, %11, %12 : vector<1x128xi32>
    %14 = vector.extract_strided_slice %10 {offsets = [0, 0], sizes = [128, 8], strides = [1, 1]} : vector<128x96xf32> to vector<128x8xf32>
    %15 = arith.truncf %14 : vector<128x8xf32> to vector<128x8xbf16>
    %16 = vector.extract_strided_slice %10 {offsets = [0, 32], sizes = [128, 8], strides = [1, 1]} : vector<128x96xf32> to vector<128x8xf32>
    %17 = arith.truncf %16 : vector<128x8xf32> to vector<128x8xbf16>
    %18 = vector.extract_strided_slice %10 {offsets = [0, 64], sizes = [128, 8], strides = [1, 1]} : vector<128x96xf32> to vector<128x8xf32>
    %19 = arith.truncf %18 : vector<128x8xf32> to vector<128x8xbf16>
    %cst_6 = arith.constant dense<0.000000e+00> : vector<128x128xf32>
    %20 = tpu.matmul %15, %17, %cst_6 {dimension_numbers = #tpu.dot_dimension_numbers<[1], [1], [0], [0], [0, 0, 1, 0], [], []>} : vector<128x8xbf16>, vector<128x8xbf16>, vector<128x128xf32> -> vector<128x128xf32>
    %cst_7 = arith.constant -1.000000e+30 : f32
    %21 = vector.shape_cast %13 : vector<1x128xi1> to vector<1x128xi1>
    %22 = vector.broadcast %21 : vector<1x128xi1> to vector<128x128xi1>
    %23 = vector.broadcast %cst_7 : f32 to vector<128x128xf32>
    %24 = arith.select %22, %20, %23 : vector<128x128xi1>, vector<128x128xf32>
    %cst_8 = arith.constant dense<0xFF800000> : vector<128xf32>
    %25 = vector.multi_reduction <maximumf>, %24, %cst_8 [1] : vector<128x128xf32> to vector<128xf32>
    %26 = vector.shape_cast %25 : vector<128xf32> to vector<128x1xf32>
    %27 = vector.broadcast %26 : vector<128x1xf32> to vector<128x128xf32>
    %28 = arith.subf %24, %27 : vector<128x128xf32>
    %29 = math.exp %28 : vector<128x128xf32>
    %cst_9 = arith.constant dense<0.000000e+00> : vector<128xf32>
    %30 = vector.multi_reduction <add>, %29, %cst_9 [1] : vector<128x128xf32> to vector<128xf32>
    %31 = vector.shape_cast %30 : vector<128xf32> to vector<128x1xf32>
    %32 = tpu.reciprocal %31 {approx = true} : vector<128x1xf32> -> vector<128x1xf32>
    %33 = vector.broadcast %32 : vector<128x1xf32> to vector<128x128xf32>
    %34 = arith.mulf %29, %33 : vector<128x128xf32>
    %35 = arith.truncf %34 : vector<128x128xf32> to vector<128x128xbf16>
    %c0_10 = arith.constant 0 : index
    %c0_11 = arith.constant 0 : index
    %c0_12 = arith.constant 0 : index
    %c0_13 = arith.constant 0 : index
    %36 = vector.load %arg8[%c0_10, %c0_11, %c0_12, %c0_13] : memref<1x4x128x128xbf16, #tpu.memory_space<vmem>>, vector<1x1x128x128xbf16>
    %37 = vector.shape_cast %36 : vector<1x1x128x128xbf16> to vector<128x128xbf16>
    %38 = vector.shape_cast %35 : vector<128x128xbf16> to vector<1x1x128x128xbf16>
    tpu.vector_store %arg8[%c0_10, %c0_11, %c0_12, %c0_13], %38 {strides = array<i32>} : memref<1x4x128x128xbf16, #tpu.memory_space<vmem>>, vector<1x1x128x128xbf16>,
    %cst_14 = arith.constant dense<0.000000e+00> : vector<128x8xf32>
    %39 = tpu.matmul %35, %19, %cst_14 {dimension_numbers = #tpu.dot_dimension_numbers<[1], [0], [0], [1], [0, 0, 1, 1], [], []>} : vector<128x128xbf16>, vector<128x8xbf16>, vector<128x8xf32> -> vector<128x8xf32>
    %40 = arith.truncf %39 : vector<128x8xf32> to vector<128x8xbf16>
    %c0_15 = arith.constant 0 : index
    %c0_16 = arith.constant 0 : index
    %41 = vector.load %arg9[%c0_15, %c0_16] : memref<128x32xbf16, #tpu.memory_space<vmem>>, vector<128x8xbf16>
    tpu.vector_store %arg9[%c0_15, %c0_16], %40 {strides = array<i32>} : memref<128x32xbf16, #tpu.memory_space<vmem>>, vector<128x8xbf16>,
    %42 = vector.extract_strided_slice %10 {offsets = [0, 8], sizes = [128, 8], strides = [1, 1]} : vector<128x96xf32> to vector<128x8xf32>
    %43 = arith.truncf %42 : vector<128x8xf32> to vector<128x8xbf16>
    %44 = vector.extract_strided_slice %10 {offsets = [0, 40], sizes = [128, 8], strides = [1, 1]} : vector<128x96xf32> to vector<128x8xf32>
    %45 = arith.truncf %44 : vector<128x8xf32> to vector<128x8xbf16>
    %46 = vector.extract_strided_slice %10 {offsets = [0, 72], sizes = [128, 8], strides = [1, 1]} : vector<128x96xf32> to vector<128x8xf32>
    %47 = arith.truncf %46 : vector<128x8xf32> to vector<128x8xbf16>
    %cst_17 = arith.constant dense<0.000000e+00> : vector<128x128xf32>
    %48 = tpu.matmul %43, %45, %cst_17 {dimension_numbers = #tpu.dot_dimension_numbers<[1], [1], [0], [0], [0, 0, 1, 0], [], []>} : vector<128x8xbf16>, vector<128x8xbf16>, vector<128x128xf32> -> vector<128x128xf32>
    %cst_18 = arith.constant -1.000000e+30 : f32
    %49 = vector.shape_cast %13 : vector<1x128xi1> to vector<1x128xi1>
    %50 = vector.broadcast %49 : vector<1x128xi1> to vector<128x128xi1>
    %51 = vector.broadcast %cst_18 : f32 to vector<128x128xf32>
    %52 = arith.select %50, %48, %51 : vector<128x128xi1>, vector<128x128xf32>
    %cst_19 = arith.constant dense<0xFF800000> : vector<128xf32>
    %53 = vector.multi_reduction <maximumf>, %52, %cst_19 [1] : vector<128x128xf32> to vector<128xf32>
    %54 = vector.shape_cast %53 : vector<128xf32> to vector<128x1xf32>
    %55 = vector.broadcast %54 : vector<128x1xf32> to vector<128x128xf32>
    %56 = arith.subf %52, %55 : vector<128x128xf32>
    %57 = math.exp %56 : vector<128x128xf32>
    %cst_20 = arith.constant dense<0.000000e+00> : vector<128xf32>
    %58 = vector.multi_reduction <add>, %57, %cst_20 [1] : vector<128x128xf32> to vector<128xf32>
    %59 = vector.shape_cast %58 : vector<128xf32> to vector<128x1xf32>
    %60 = tpu.reciprocal %59 {approx = true} : vector<128x1xf32> -> vector<128x1xf32>
    %61 = vector.broadcast %60 : vector<128x1xf32> to vector<128x128xf32>
    %62 = arith.mulf %57, %61 : vector<128x128xf32>
    %63 = arith.truncf %62 : vector<128x128xf32> to vector<128x128xbf16>
    %c0_21 = arith.constant 0 : index
    %c1 = arith.constant 1 : index
    %c0_22 = arith.constant 0 : index
    %c0_23 = arith.constant 0 : index
    %64 = vector.load %arg8[%c0_21, %c1, %c0_22, %c0_23] : memref<1x4x128x128xbf16, #tpu.memory_space<vmem>>, vector<1x1x128x128xbf16>
    %65 = vector.shape_cast %64 : vector<1x1x128x128xbf16> to vector<128x128xbf16>
    %66 = vector.shape_cast %63 : vector<128x128xbf16> to vector<1x1x128x128xbf16>
    tpu.vector_store %arg8[%c0_21, %c1, %c0_22, %c0_23], %66 {strides = array<i32>} : memref<1x4x128x128xbf16, #tpu.memory_space<vmem>>, vector<1x1x128x128xbf16>,
    %cst_24 = arith.constant dense<0.000000e+00> : vector<128x8xf32>
    %67 = tpu.matmul %63, %47, %cst_24 {dimension_numbers = #tpu.dot_dimension_numbers<[1], [0], [0], [1], [0, 0, 1, 1], [], []>} : vector<128x128xbf16>, vector<128x8xbf16>, vector<128x8xf32> -> vector<128x8xf32>
    %68 = arith.truncf %67 : vector<128x8xf32> to vector<128x8xbf16>
    %c0_25 = arith.constant 0 : index
    %c8 = arith.constant 8 : index
    %69 = vector.load %arg9[%c0_25, %c8] : memref<128x32xbf16, #tpu.memory_space<vmem>>, vector<128x8xbf16>
    tpu.vector_store %arg9[%c0_25, %c8], %68 {strides = array<i32>} : memref<128x32xbf16, #tpu.memory_space<vmem>>, vector<128x8xbf16>,
    %70 = vector.extract_strided_slice %10 {offsets = [0, 16], sizes = [128, 8], strides = [1, 1]} : vector<128x96xf32> to vector<128x8xf32>
    %71 = arith.truncf %70 : vector<128x8xf32> to vector<128x8xbf16>
    %72 = vector.extract_strided_slice %10 {offsets = [0, 48], sizes = [128, 8], strides = [1, 1]} : vector<128x96xf32> to vector<128x8xf32>
    %73 = arith.truncf %72 : vector<128x8xf32> to vector<128x8xbf16>
    %74 = vector.extract_strided_slice %10 {offsets = [0, 80], sizes = [128, 8], strides = [1, 1]} : vector<128x96xf32> to vector<128x8xf32>
    %75 = arith.truncf %74 : vector<128x8xf32> to vector<128x8xbf16>
    %cst_26 = arith.constant dense<0.000000e+00> : vector<128x128xf32>
    %76 = tpu.matmul %71, %73, %cst_26 {dimension_numbers = #tpu.dot_dimension_numbers<[1], [1], [0], [0], [0, 0, 1, 0], [], []>} : vector<128x8xbf16>, vector<128x8xbf16>, vector<128x128xf32> -> vector<128x128xf32>
    %cst_27 = arith.constant -1.000000e+30 : f32
    %77 = vector.shape_cast %13 : vector<1x128xi1> to vector<1x128xi1>
    %78 = vector.broadcast %77 : vector<1x128xi1> to vector<128x128xi1>
    %79 = vector.broadcast %cst_27 : f32 to vector<128x128xf32>
    %80 = arith.select %78, %76, %79 : vector<128x128xi1>, vector<128x128xf32>
    %cst_28 = arith.constant dense<0xFF800000> : vector<128xf32>
    %81 = vector.multi_reduction <maximumf>, %80, %cst_28 [1] : vector<128x128xf32> to vector<128xf32>
    %82 = vector.shape_cast %81 : vector<128xf32> to vector<128x1xf32>
    %83 = vector.broadcast %82 : vector<128x1xf32> to vector<128x128xf32>
    %84 = arith.subf %80, %83 : vector<128x128xf32>
    %85 = math.exp %84 : vector<128x128xf32>
    %cst_29 = arith.constant dense<0.000000e+00> : vector<128xf32>
    %86 = vector.multi_reduction <add>, %85, %cst_29 [1] : vector<128x128xf32> to vector<128xf32>
    %87 = vector.shape_cast %86 : vector<128xf32> to vector<128x1xf32>
    %88 = tpu.reciprocal %87 {approx = true} : vector<128x1xf32> -> vector<128x1xf32>
    %89 = vector.broadcast %88 : vector<128x1xf32> to vector<128x128xf32>
    %90 = arith.mulf %85, %89 : vector<128x128xf32>
    %91 = arith.truncf %90 : vector<128x128xf32> to vector<128x128xbf16>
    %c0_30 = arith.constant 0 : index
    %c2 = arith.constant 2 : index
    %c0_31 = arith.constant 0 : index
    %c0_32 = arith.constant 0 : index
    %92 = vector.load %arg8[%c0_30, %c2, %c0_31, %c0_32] : memref<1x4x128x128xbf16, #tpu.memory_space<vmem>>, vector<1x1x128x128xbf16>
    %93 = vector.shape_cast %92 : vector<1x1x128x128xbf16> to vector<128x128xbf16>
    %94 = vector.shape_cast %91 : vector<128x128xbf16> to vector<1x1x128x128xbf16>
    tpu.vector_store %arg8[%c0_30, %c2, %c0_31, %c0_32], %94 {strides = array<i32>} : memref<1x4x128x128xbf16, #tpu.memory_space<vmem>>, vector<1x1x128x128xbf16>,
    %cst_33 = arith.constant dense<0.000000e+00> : vector<128x8xf32>
    %95 = tpu.matmul %91, %75, %cst_33 {dimension_numbers = #tpu.dot_dimension_numbers<[1], [0], [0], [1], [0, 0, 1, 1], [], []>} : vector<128x128xbf16>, vector<128x8xbf16>, vector<128x8xf32> -> vector<128x8xf32>
    %96 = arith.truncf %95 : vector<128x8xf32> to vector<128x8xbf16>
    %c0_34 = arith.constant 0 : index
    %c16 = arith.constant 16 : index
    %97 = vector.load %arg9[%c0_34, %c16] : memref<128x32xbf16, #tpu.memory_space<vmem>>, vector<128x8xbf16>
    tpu.vector_store %arg9[%c0_34, %c16], %96 {strides = array<i32>} : memref<128x32xbf16, #tpu.memory_space<vmem>>, vector<128x8xbf16>,
    %98 = vector.extract_strided_slice %10 {offsets = [0, 24], sizes = [128, 8], strides = [1, 1]} : vector<128x96xf32> to vector<128x8xf32>
    %99 = arith.truncf %98 : vector<128x8xf32> to vector<128x8xbf16>
    %100 = vector.extract_strided_slice %10 {offsets = [0, 56], sizes = [128, 8], strides = [1, 1]} : vector<128x96xf32> to vector<128x8xf32>
    %101 = arith.truncf %100 : vector<128x8xf32> to vector<128x8xbf16>
    %102 = vector.extract_strided_slice %10 {offsets = [0, 88], sizes = [128, 8], strides = [1, 1]} : vector<128x96xf32> to vector<128x8xf32>
    %103 = arith.truncf %102 : vector<128x8xf32> to vector<128x8xbf16>
    %cst_35 = arith.constant dense<0.000000e+00> : vector<128x128xf32>
    %104 = tpu.matmul %99, %101, %cst_35 {dimension_numbers = #tpu.dot_dimension_numbers<[1], [1], [0], [0], [0, 0, 1, 0], [], []>} : vector<128x8xbf16>, vector<128x8xbf16>, vector<128x128xf32> -> vector<128x128xf32>
    %cst_36 = arith.constant -1.000000e+30 : f32
    %105 = vector.shape_cast %13 : vector<1x128xi1> to vector<1x128xi1>
    %106 = vector.broadcast %105 : vector<1x128xi1> to vector<128x128xi1>
    %107 = vector.broadcast %cst_36 : f32 to vector<128x128xf32>
    %108 = arith.select %106, %104, %107 : vector<128x128xi1>, vector<128x128xf32>
    %cst_37 = arith.constant dense<0xFF800000> : vector<128xf32>
    %109 = vector.multi_reduction <maximumf>, %108, %cst_37 [1] : vector<128x128xf32> to vector<128xf32>
    %110 = vector.shape_cast %109 : vector<128xf32> to vector<128x1xf32>
    %111 = vector.broadcast %110 : vector<128x1xf32> to vector<128x128xf32>
    %112 = arith.subf %108, %111 : vector<128x128xf32>
    %113 = math.exp %112 : vector<128x128xf32>
    %cst_38 = arith.constant dense<0.000000e+00> : vector<128xf32>
    %114 = vector.multi_reduction <add>, %113, %cst_38 [1] : vector<128x128xf32> to vector<128xf32>
    %115 = vector.shape_cast %114 : vector<128xf32> to vector<128x1xf32>
    %116 = tpu.reciprocal %115 {approx = true} : vector<128x1xf32> -> vector<128x1xf32>
    %117 = vector.broadcast %116 : vector<128x1xf32> to vector<128x128xf32>
    %118 = arith.mulf %113, %117 : vector<128x128xf32>
    %119 = arith.truncf %118 : vector<128x128xf32> to vector<128x128xbf16>
    %c0_39 = arith.constant 0 : index
    %c3 = arith.constant 3 : index
    %c0_40 = arith.constant 0 : index
    %c0_41 = arith.constant 0 : index
    %120 = vector.load %arg8[%c0_39, %c3, %c0_40, %c0_41] : memref<1x4x128x128xbf16, #tpu.memory_space<vmem>>, vector<1x1x128x128xbf16>
    %121 = vector.shape_cast %120 : vector<1x1x128x128xbf16> to vector<128x128xbf16>
    %122 = vector.shape_cast %119 : vector<128x128xbf16> to vector<1x1x128x128xbf16>
    tpu.vector_store %arg8[%c0_39, %c3, %c0_40, %c0_41], %122 {strides = array<i32>} : memref<1x4x128x128xbf16, #tpu.memory_space<vmem>>, vector<1x1x128x128xbf16>,
    %cst_42 = arith.constant dense<0.000000e+00> : vector<128x8xf32>
    %123 = tpu.matmul %119, %103, %cst_42 {dimension_numbers = #tpu.dot_dimension_numbers<[1], [0], [0], [1], [0, 0, 1, 1], [], []>} : vector<128x128xbf16>, vector<128x8xbf16>, vector<128x8xf32> -> vector<128x8xf32>
    %124 = arith.truncf %123 : vector<128x8xf32> to vector<128x8xbf16>
    %c0_43 = arith.constant 0 : index
    %c24 = arith.constant 24 : index
    %125 = vector.load %arg9[%c0_43, %c24] : memref<128x32xbf16, #tpu.memory_space<vmem>>, vector<128x8xbf16>
    tpu.vector_store %arg9[%c0_43, %c24], %124 {strides = array<i32>} : memref<128x32xbf16, #tpu.memory_space<vmem>>, vector<128x8xbf16>,
    %c0_44 = arith.constant 0 : index
    %c0_45 = arith.constant 0 : index
    %126 = vector.load %arg9[%c0_44, %c0_45] : memref<128x32xbf16, #tpu.memory_space<vmem>>, vector<128x32xbf16>
    %127 = arith.index_cast %arg1 : i32 to index
    %c0_46 = arith.constant 0 : index
    %c0_47 = arith.constant 0 : index
    %128 = vector.load %arg5[%127, %c0_46, %c0_47] : memref<1x32x32xbf16, #tpu.memory_space<vmem>>, vector<1x32x32xbf16>
    %129 = vector.shape_cast %128 : vector<1x32x32xbf16> to vector<32x32xbf16>
    %cst_48 = arith.constant dense<0.000000e+00> : vector<128x32xf32>
    %130 = tpu.matmul %126, %129, %cst_48 {dimension_numbers = #tpu.dot_dimension_numbers<[1], [0], [0], [1], [0, 0, 1, 1], [], []>} : vector<128x32xbf16>, vector<32x32xbf16>, vector<128x32xf32> -> vector<128x32xf32>
    %c0_49 = arith.constant 0 : index
    %c0_50 = arith.constant 0 : index
    %131 = vector.load %arg6[%c0_49, %c0_50] : memref<1x32xf32, #tpu.memory_space<vmem>>, vector<1x32xf32>
    %132 = vector.broadcast %131 : vector<1x32xf32> to vector<128x32xf32>
    %133 = arith.addf %130, %132 : vector<128x32xf32>
    %c0_51 = arith.constant 0 : index
    %c0_52 = arith.constant 0 : index
    %c0_53 = arith.constant 0 : index
    %134 = vector.load %arg7[%c0_51, %c0_52, %c0_53] : memref<1x128x32xf32, #tpu.memory_space<vmem>>, vector<1x128x32xf32>
    %135 = vector.shape_cast %134 : vector<1x128x32xf32> to vector<128x32xf32>
    %136 = vector.shape_cast %133 : vector<128x32xf32> to vector<1x128x32xf32>
    tpu.vector_store %arg7[%c0_51, %c0_52, %c0_53], %136 {strides = array<i32>} : memref<1x128x32xf32, #tpu.memory_space<vmem>>, vector<1x128x32xf32>,
    return
  }
  func.func @transform_0(%arg0: i32, %arg1: i32) -> (i32, i32, i32) {
    %c0_i32 = arith.constant 0 : i32
    %c0_i32_0 = arith.constant 0 : i32
    %c0_i32_1 = arith.constant 0 : i32
    return %arg0, %c0_i32, %c0_i32_0 : i32, i32, i32
  }
  func.func @transform_1(%arg0: i32, %arg1: i32) -> (i32, i32, i32) {
    %c0_i32 = arith.constant 0 : i32
    %c0_i32_0 = arith.constant 0 : i32
    %c0_i32_1 = arith.constant 0 : i32
    %c0_i32_2 = arith.constant 0 : i32
    return %c0_i32, %c0_i32_0, %c0_i32_1 : i32, i32, i32
  }
  func.func @transform_2(%arg0: i32, %arg1: i32) -> (i32, i32, i32) {
    %c0_i32 = arith.constant 0 : i32
    %c0_i32_0 = arith.constant 0 : i32
    %c0_i32_1 = arith.constant 0 : i32
    %c0_i32_2 = arith.constant 0 : i32
    return %c0_i32, %c0_i32_0, %c0_i32_1 : i32, i32, i32
  }
  func.func @transform_3(%arg0: i32, %arg1: i32) -> (i32, i32, i32) {
    %c0_i32 = arith.constant 0 : i32
    %c0_i32_0 = arith.constant 0 : i32
    %c0_i32_1 = arith.constant 0 : i32
    %c0_i32_2 = arith.constant 0 : i32
    return %c0_i32, %c0_i32_0, %c0_i32_1 : i32, i32, i32
  }
  func.func @transform_4(%arg0: i32, %arg1: i32) -> (i32, i32) {
    %c0_i32 = arith.constant 0 : i32
    %c0_i32_0 = arith.constant 0 : i32
    %c0_i32_1 = arith.constant 0 : i32
    return %c0_i32, %c0_i32_0 : i32, i32
  }
  func.func @transform_5(%arg0: i32, %arg1: i32) -> (i32, i32, i32) {
    %c0_i32 = arith.constant 0 : i32
    %c0_i32_0 = arith.constant 0 : i32
    %c0_i32_1 = arith.constant 0 : i32
    return %arg0, %c0_i32, %c0_i32_0 : i32, i32, i32
  }
  func.func @transform_6(%arg0: i32, %arg1: i32) -> (i32, i32, i32, i32) {
    %c0_i32 = arith.constant 0 : i32
    %c0_i32_0 = arith.constant 0 : i32
    %c0_i32_1 = arith.constant 0 : i32
    return %arg0, %arg1, %c0_i32, %c0_i32_0 : i32, i32, i32, i32
  }
}

</mosaic_0001>

<llo_original>
// kernel: tpu_custom_call.1
$region0: #{tpu_custom_call.1}
  #allocation0 [shape = 'u32[]', space=smem, size = 0x4, offset = 0x4, fixed_abs, tag = 'smem constant byte address 0x4 - core index']
  #allocation1 [shape = 'u32[144,128]{1,0:T(1,128)}', space=vmem, size = 0x12000, scoped, tag = 'internal scratch']
  #allocation2 [shape = 'bf16[128,32]{1,0:T(8,128)(2,1)}', space=vmem, size = 0x8000, scoped, tag = 'scratch operand']
  %s0 = inlined_call_operand.vmem [shape: bf16[2,128,32], index: 0, kind: input, shape index: {}]
  %s1 = inlined_call_operand.vmem [shape: bf16[1,32,96], index: 1, kind: input, shape index: {}]
  %s2 = inlined_call_operand.vmem [shape: f32[1,1,96], index: 2, kind: input, shape index: {}]
  %s3 = inlined_call_operand.vmem [shape: bf16[1,32,32], index: 3, kind: input, shape index: {}]
  %s4 = inlined_call_operand.vmem [shape: f32[1,32], index: 4, kind: input, shape index: {}]
  %s5 = inlined_call_operand.vmem [shape: f32[2,128,32], index: 5, kind: output, shape index: {0}]
  %s6 = inlined_call_operand.hbm [shape: bf16[2,4,128,128], index: 6, kind: output, shape index: {1}]
  %7 = xla_tuple %s5, %s6
  %s8 = sld [smem:[#allocation0]]
  $region61: #{tpu_custom_call.1} parent=0
    _
  %s10 = ssub.s32 1, %s8
  %s11 = scalar_select 0, %s10, %s8
  $region1: #{tpu_custom_call.1} parent=0
    #allocation3 [shape = 'u8[262144]{0}', space=vmem, size = 0x40000, scoped, tag = 'output window, operand 1']
    #allocation4 [shape = 's32[2]{0}', space=sflag, size = 0x8, scoped, tag = 'scoped memory for tpu_custom_call.1']
    %12 = vsyncpa [#allocation4], 0
    %s13 = scalar_lea.sflag [#allocation4], 1
    %14 = vsyncpa %s13, 0
    loop: start=0, step=1, limit=4
    $region2: #{tpu_custom_call.1} parent=1 // loop_pre_header
      _
    $region3: #{tpu_custom_call.1} parent=1 // loop_header
      %s16 = sphi 0, %s20
      %p17 = scmp.ge.s32.totalorder %s16, 4
      %s23 = sphi 0, %s35
      %s24 = sphi 0, %s31
      %s25 = sphi 0, %s23
      %s26 = sphi 0, %s24
      %s27 = sphi 0, %s25
      %s28 = sphi 0, %s26
      %s38 = sphi 0, %s40
      %s41 = sphi 0, %s38
      %s42 = sphi 0, %s41
      %s58 = sphi 0, %s42
      %s62 = sphi 0, %s62
      %s64 = sphi 0, %s62
      %s65 = sphi 0, %s64
      %s79 = sphi 0, %s65
      %s83 = sphi 0, %s83
      %s85 = sphi 0, %s83
      %s86 = sphi 0, %s85
      %s100 = sphi 0, %s86
      %s104 = sphi 0, %s104
      %s106 = sphi 0, %s104
      %s107 = sphi 0, %s106
      %s121 = sphi 0, %s107
      %s125 = sphi 0, %s125
      %s127 = sphi 0, %s125
      %s128 = sphi 0, %s127
      %s142 = sphi 0, %s128
      %s148 = sphi 0, %s150
      %s151 = sphi 0, %s148
      %s152 = sphi 0, %s151
      %s168 = sphi 0, %s152
      %s176 = sphi 0, %s178
      %s179 = sphi 0, %s176
      %s180 = sphi 0, %s179
      %s196 = sphi 0, %s180
    $region4: #{tpu_custom_call.1} parent=1 // loop_header_branch
      %19 = sbr.rel (%p17) target = $region8
    $region5: #{tpu_custom_call.1} parent=1 // loop_body
      %s21 = ssub.s32 %s16, 1
      %s22 = ssub.s32 %s16, 2
      %s29 = sadd.s32 1, %s24
      %p30 = scmp.ge.s32.totalorder %s29, 1
      %s31 = scalar_select %p30, 0, %s29
      %s32 = sadd.s32 1, %s23
      %s33 = scalar_select %p30, %s32, %s23
      %p34 = scmp.ge.s32.totalorder %s33, 2
      %s35 = scalar_select %p34, 0, %s33
      %s36 = ssub.s32 %s23, %s35
      %p37 = scmp.eq.s32.totalorder %s36, 0
      %s39 = sadd.s32 %s38, 1
      %s40 = scalar_select %p37, %s38, %s39
      %p43 = pneg %p37
      %p44 = scmp.eq.s32.totalorder %s16, 1
      %p45 = por %p43, %p44
      %p46 = scmp.ne.s32.totalorder %s38, %s41
      %p47 = scmp.eq.s32.totalorder %s16, 0
      %p48 = por %p46, %p47
      %p49 = scmp.ne.s32.totalorder %s38, %s41
      %p50 = scmp.eq.s32.totalorder %s21, 1
      %p51 = por %p49, %p50
      %p52 = scmp.ne.s32.totalorder %s41, %s42
      %p53 = scmp.eq.s32.totalorder %s21, 0
      %p54 = por %p52, %p53
      %p55 = scmp.ne.s32.totalorder %s41, %s42
      %p56 = scmp.eq.s32.totalorder %s22, 1
      %p57 = por %p55, %p56
      %p59 = scmp.ne.s32.totalorder %s42, %s58
      %p60 = scmp.eq.s32.totalorder %s22, 0
      %p61 = por %p59, %p60
      %s63 = sadd.s32 %s62, 1
      %p66 = scmp.eq.s32.totalorder %s16, 1
      %p67 = scmp.ne.s32.totalorder %s62, %s64
      %p68 = scmp.eq.s32.totalorder %s16, 0
      %p69 = por %p67, %p68
      %p70 = scmp.ne.s32.totalorder %s62, %s64
      %p71 = scmp.eq.s32.totalorder %s21, 1
      %p72 = por %p70, %p71
      %p73 = scmp.ne.s32.totalorder %s64, %s65
      %p74 = scmp.eq.s32.totalorder %s21, 0
      %p75 = por %p73, %p74
      %p76 = scmp.ne.s32.totalorder %s64, %s65
      %p77 = scmp.eq.s32.totalorder %s22, 1
      %p78 = por %p76, %p77
      %p80 = scmp.ne.s32.totalorder %s65, %s79
      %p81 = scmp.eq.s32.totalorder %s22, 0
      %p82 = por %p80, %p81
      %s84 = sadd.s32 %s83, 1
      %p87 = scmp.eq.s32.totalorder %s16, 1
      %p88 = scmp.ne.s32.totalorder %s83, %s85
      %p89 = scmp.eq.s32.totalorder %s16, 0
      %p90 = por %p88, %p89
      %p91 = scmp.ne.s32.totalorder %s83, %s85
      %p92 = scmp.eq.s32.totalorder %s21, 1
      %p93 = por %p91, %p92
      %p94 = scmp.ne.s32.totalorder %s85, %s86
      %p95 = scmp.eq.s32.totalorder %s21, 0
      %p96 = por %p94, %p95
      %p97 = scmp.ne.s32.totalorder %s85, %s86
      %p98 = scmp.eq.s32.totalorder %s22, 1
      %p99 = por %p97, %p98
      %p101 = scmp.ne.s32.totalorder %s86, %s100
      %p102 = scmp.eq.s32.totalorder %s22, 0
      %p103 = por %p101, %p102
      %s105 = sadd.s32 %s104, 1
      %p108 = scmp.eq.s32.totalorder %s16, 1
      %p109 = scmp.ne.s32.totalorder %s104, %s106
      %p110 = scmp.eq.s32.totalorder %s16, 0
      %p111 = por %p109, %p110
      %p112 = scmp.ne.s32.totalorder %s104, %s106
      %p113 = scmp.eq.s32.totalorder %s21, 1
      %p114 = por %p112, %p113
      %p115 = scmp.ne.s32.totalorder %s106, %s107
      %p116 = scmp.eq.s32.totalorder %s21, 0
      %p117 = por %p115, %p116
      %p118 = scmp.ne.s32.totalorder %s106, %s107
      %p119 = scmp.eq.s32.totalorder %s22, 1
      %p120 = por %p118, %p119
      %p122 = scmp.ne.s32.totalorder %s107, %s121
      %p123 = scmp.eq.s32.totalorder %s22, 0
      %p124 = por %p122, %p123
      %s126 = sadd.s32 %s125, 1
      %p129 = scmp.eq.s32.totalorder %s16, 1
      %p130 = scmp.ne.s32.totalorder %s125, %s127
      %p131 = scmp.eq.s32.totalorder %s16, 0
      %p132 = por %p130, %p131
      %p133 = scmp.ne.s32.totalorder %s125, %s127
      %p134 = scmp.eq.s32.totalorder %s21, 1
      %p135 = por %p133, %p134
      %p136 = scmp.ne.s32.totalorder %s127, %s128
      %p137 = scmp.eq.s32.totalorder %s21, 0
      %p138 = por %p136, %p137
      %p139 = scmp.ne.s32.totalorder %s127, %s128
      %p140 = scmp.eq.s32.totalorder %s22, 1
      %p141 = por %p139, %p140
      %p143 = scmp.ne.s32.totalorder %s128, %s142
      %p144 = scmp.eq.s32.totalorder %s22, 0
      %p145 = por %p143, %p144
      %s146 = ssub.s32 %s23, %s35
      %p147 = scmp.eq.s32.totalorder %s146, 0
      %s149 = sadd.s32 %s148, 1
      %s150 = scalar_select %p147, %s148, %s149
      %p153 = pneg %p147
      %p154 = scmp.eq.s32.totalorder %s16, 1
      %p155 = por %p153, %p154
      %p156 = scmp.ne.s32.totalorder %s148, %s151
      %p157 = scmp.eq.s32.totalorder %s16, 0
      %p158 = por %p156, %p157
      %p159 = scmp.ne.s32.totalorder %s148, %s151
      %p160 = scmp.eq.s32.totalorder %s21, 1
      %p161 = por %p159, %p160
      %p162 = scmp.ne.s32.totalorder %s151, %s152
      %p163 = scmp.eq.s32.totalorder %s21, 0
      %p164 = por %p162, %p163
      %p165 = scmp.ne.s32.totalorder %s151, %s152
      %p166 = scmp.eq.s32.totalorder %s22, 1
      %p167 = por %p165, %p166
      %p169 = scmp.ne.s32.totalorder %s152, %s168
      %p170 = scmp.eq.s32.totalorder %s22, 0
      %p171 = por %p169, %p170
      %s172 = ssub.s32 %s23, %s35
      %s173 = ssub.s32 %s24, %s31
      %s174 = sor.u32 %s172, %s173
      %p175 = scmp.eq.s32.totalorder %s174, 0
      %s177 = sadd.s32 %s176, 1
      %s178 = scalar_select %p175, %s176, %s177
      %p181 = pneg %p175
      %p182 = scmp.eq.s32.totalorder %s16, 1
      %p183 = por %p181, %p182
      %p184 = scmp.ne.s32.totalorder %s176, %s179
      %p185 = scmp.eq.s32.totalorder %s16, 0
      %p186 = por %p184, %p185
      %p187 = scmp.ne.s32.totalorder %s176, %s179
      %p188 = scmp.eq.s32.totalorder %s21, 1
      %p189 = por %p187, %p188
      %p190 = scmp.ne.s32.totalorder %s179, %s180
      %p191 = scmp.eq.s32.totalorder %s21, 0
      %p192 = por %p190, %p191
      %p193 = scmp.ne.s32.totalorder %s179, %s180
      %p194 = scmp.eq.s32.totalorder %s22, 1
      %p195 = por %p193, %p194
      %p197 = scmp.ne.s32.totalorder %s180, %s196
      %p198 = scmp.eq.s32.totalorder %s22, 0
      %p199 = por %p197, %p198
      %p200 = scmp.le.s32.totalorder 1, %s16
      %p201 = scmp.lt.s32.totalorder %s16, 3
      %p202 = pnand %p200, %p201
      %p203 = pneg %p202
      // Predicated region
      $region9: #{tpu_custom_call.1} parent=5 // pred_check
        _
      $region10: #{tpu_custom_call.1} parent=5 // pred_check_branch
        %205 = sbr.rel (%p202) target = $region12
      $region11: #{tpu_custom_call.1} parent=5 // pred_region
        %s206 = ssub.s32 %s16, 1
        // Predicated region
        $region13: #{tpu_custom_call.1} parent=11 // pred_check
          %p207 = pneg %p75
        $region14: #{tpu_custom_call.1} parent=11 // pred_check_branch
          %209 = sbr.rel (%p207) target = $region16
        $region15: #{tpu_custom_call.1} parent=11 // pred_region
          _
        $region16: #{tpu_custom_call.1} parent=11 // pred_fallthru
          _
        // Predicated region
        $region17: #{tpu_custom_call.1} parent=11 // pred_check
          %p210 = pneg %p96
        $region18: #{tpu_custom_call.1} parent=11 // pred_check_branch
          %212 = sbr.rel (%p210) target = $region20
        $region19: #{tpu_custom_call.1} parent=11 // pred_region
          _
        $region20: #{tpu_custom_call.1} parent=11 // pred_fallthru
          _
        // Predicated region
        $region21: #{tpu_custom_call.1} parent=11 // pred_check
          %p213 = pneg %p117
        $region22: #{tpu_custom_call.1} parent=11 // pred_check_branch
          %215 = sbr.rel (%p213) target = $region24
        $region23: #{tpu_custom_call.1} parent=11 // pred_region
          _
        $region24: #{tpu_custom_call.1} parent=11 // pred_fallthru
          _
        // Predicated region
        $region25: #{tpu_custom_call.1} parent=11 // pred_check
          %p216 = pneg %p138
        $region26: #{tpu_custom_call.1} parent=11 // pred_check_branch
          %218 = sbr.rel (%p216) target = $region28
        $region27: #{tpu_custom_call.1} parent=11 // pred_region
          _
        $region28: #{tpu_custom_call.1} parent=11 // pred_fallthru
          _
      $region12: #{tpu_custom_call.1} parent=5 // pred_fallthru
        _
      %p219 = scmp.lt.s32.totalorder %s16, 2
      // Predicated region
      $region29: #{tpu_custom_call.1} parent=5 // pred_check
        %p220 = pneg %p219
      $region30: #{tpu_custom_call.1} parent=5 // pred_check_branch
        %222 = sbr.rel (%p220) target = $region32
      $region31: #{tpu_custom_call.1} parent=5 // pred_region
        // Predicated region
        $region33: #{tpu_custom_call.1} parent=31 // pred_check
          %p223 = pneg %p48
        $region34: #{tpu_custom_call.1} parent=31 // pred_check_branch
          %225 = sbr.rel (%p223) target = $region36
        $region35: #{tpu_custom_call.1} parent=31 // pred_region
          %p226 = scmp.lt.s32.totalorder %s23, 1
          %s227 = scalar_select %p226, %s23, 1
          %s228 = smul.addr %s227, 16
          %s229 = smul.addr %s228, 4
          %s230 = scalar_lea.vmem %s0, %s229
        $region36: #{tpu_custom_call.1} parent=31 // pred_fallthru
          _
      $region32: #{tpu_custom_call.1} parent=5 // pred_fallthru
        _
      %p231 = scmp.le.s32.totalorder 1, %s16
      %p232 = scmp.lt.s32.totalorder %s16, 3
      %p233 = pnand %p231, %p232
      %p234 = pneg %p233
      // Predicated region
      $region37: #{tpu_custom_call.1} parent=5 // pred_check
        _
      $region38: #{tpu_custom_call.1} parent=5 // pred_check_branch
        %236 = sbr.rel (%p233) target = $region40
      $region39: #{tpu_custom_call.1} parent=5 // pred_region
        %s237 = ssub.s32 %s16, 1
        %p238 = scmp.lt.s32.totalorder %s25, 1
        %s239 = scalar_select %p238, %s25, 1
        %s240 = smul.addr %s239, 16
        %s241 = smul.addr %s240, 4
        %s242 = scalar_lea.vmem %s0, %s241
        %p243 = pneg %p54
        %p244 = pneg %p51
        %p245 = pneg %p75
        %p246 = pneg %p72
        %p247 = pneg %p96
        %p248 = pneg %p93
        %p249 = pneg %p117
        %p250 = pneg %p114
        %p251 = pneg %p138
        %p252 = pneg %p135
        %p253 = pneg %p164
        %p254 = pneg %p161
        %p255 = scmp.lt.s32.totalorder %s25, 1
        %s256 = scalar_select %p255, %s25, 1
        %s257 = smul.addr %s256, 16
        %s258 = smul.addr %s257, 8
        %s259 = scalar_lea.vmem %s5, %s258
        %p260 = pneg %p192
        %p261 = pneg %p189
        %s262 = sand.u32 %s179, 1
        %s263 = scalar_lea.sflag [#allocation4], %s262
        %s264 = sand.u32 %s179, 1
        %s265 = smul.addr %s264, 256
        %s266 = scalar_lea.vmem [#allocation3], %s265
        %p267 = scmp.lt.s32.totalorder %s25, 1
        %s268 = scalar_select %p267, %s25, 1
        %s269 = smul.addr %s268, 16
        %s270 = smul.addr %s269, 4
        %s271 = scalar_lea.vmem %s0, %s270
        %p272 = scmp.lt.s32.totalorder %s25, 1
        %s273 = scalar_select %p272, %s25, 1
        %s274 = smul.addr %s273, 16
        %s275 = smul.addr %s274, 8
        %s276 = scalar_lea.vmem %s5, %s275
        %s277 = smul.u32 4, %s26
        %v279 = vld [vmem:[%s271] sm:$0xf]
        %v280 = vld [vmem:[%s271 + $0x4] sm:$0xf]
        %v281 = vld [vmem:[%s271 + $0x8] sm:$0xf]
        %v282 = vld [vmem:[%s271 + $0xc] sm:$0xf]
        %v283 = vld [vmem:[%s271 + $0x10] sm:$0xf]
        %v284 = vld [vmem:[%s271 + $0x14] sm:$0xf]
        %v285 = vld [vmem:[%s271 + $0x18] sm:$0xf]
        %v286 = vld [vmem:[%s271 + $0x1c] sm:$0xf]
        %v287 = vld [vmem:[%s271 + $0x20] sm:$0xf]
        %v288 = vld [vmem:[%s271 + $0x24] sm:$0xf]
        %v289 = vld [vmem:[%s271 + $0x28] sm:$0xf]
        %v290 = vld [vmem:[%s271 + $0x2c] sm:$0xf]
        %v291 = vld [vmem:[%s271 + $0x30] sm:$0xf]
        %v292 = vld [vmem:[%s271 + $0x34] sm:$0xf]
        %v293 = vld [vmem:[%s271 + $0x38] sm:$0xf]
        %v294 = vld [vmem:[%s271 + $0x3c] sm:$0xf]
        %s295 = smul.u32 %s26, 4
        %s296 = smul.addr %s295, 4
        %s297 = scalar_lea.vmem %s1, %s296
        %v298 = vld [vmem:[%s297] sm:$0xf]
        %v299 = vld [vmem:[%s297 + $0x4] sm:$0xf]
        %v300 = vld [vmem:[%s297 + $0x8] sm:$0xf]
        %v301 = vld [vmem:[%s297 + $0xc] sm:$0xf]
        %s302 = scalar_lea.vmem %s2, %s26
        %v303 = vld [vmem:[%s302] sm:$0x1]
        %v305 = vlaneseq
        %v306 = vshrl.u32 %v305, 7
        %v307 = vsub.s32 0, %v306
        %v308 = vrot.slane %v303, %v307
        %v326 = vunpack.c.l.b16 %v279
        %v327 = vunpack.c.l.b16 %v280
        %v328 = vunpack.c.l.b16 %v281
        %v329 = vunpack.c.l.b16 %v282
        %v330 = vunpack.c.l.b16 %v283
        %v331 = vunpack.c.l.b16 %v284
        %v332 = vunpack.c.l.b16 %v285
        %v333 = vunpack.c.l.b16 %v286
        %v334 = vunpack.c.l.b16 %v287
        %v335 = vunpack.c.l.b16 %v288
        %v336 = vunpack.c.l.b16 %v289
        %v337 = vunpack.c.l.b16 %v290
        %v338 = vunpack.c.l.b16 %v291
        %v339 = vunpack.c.l.b16 %v292
        %v340 = vunpack.c.l.b16 %v293
        %v341 = vunpack.c.l.b16 %v294
        %v342 = vpack.c.b16 %v327, %v326
        %v343 = vpack.c.b16 %v329, %v328
        %v344 = vpack.c.b16 %v331, %v330
        %v345 = vpack.c.b16 %v333, %v332
        %v346 = vpack.c.b16 %v335, %v334
        %v347 = vpack.c.b16 %v337, %v336
        %v348 = vpack.c.b16 %v339, %v338
        %v349 = vpack.c.b16 %v341, %v340
        %v354 = vunpack.c.l.b16 %v298
        %v355 = vunpack.c.l.b16 %v299
        %v356 = vunpack.c.l.b16 %v300
        %v357 = vunpack.c.l.b16 %v301
        %v358 = vpack.c.b16 %v355, %v354
        %v359 = vpack.c.b16 %v357, %v356
        %vm362 = vcmask 261120
        %v364 = vsel %vm362, %v342, 0
        %v367 = vsel %vm362, %v343, 0
        %v370 = vsel %vm362, %v344, 0
        %v373 = vsel %vm362, %v345, 0
        %v376 = vsel %vm362, %v346, 0
        %v379 = vsel %vm362, %v347, 0
        %v382 = vsel %vm362, %v348, 0
        %v385 = vsel %vm362, %v349, 0
        %387 = vmatprep.subr.bf16.mxu0 0
        %388 = vmatpush1.bf16.msra.mxu0 0
        %389 = vmatprep.subr.bf16.mxu0 0
        %390 = vmatpush1.bf16.msra.mxu0 0
        %391 = vmatprep.subr.bf16.mxu0 0
        %392 = vmatpush1.bf16.msra.mxu0 0
        %393 = vmatprep.subr.bf16.mxu0 0
        %394 = vmatpush1.bf16.msra.mxu0 0
        %395 = vmatprep.subr.bf16.mxu0 0
        %396 = vmatpush1.bf16.msra.mxu0 0
        %397 = vmatprep.subr.bf16.mxu0 0
        %398 = vmatpush1.bf16.msra.mxu0 0
        %399 = vmatprep.subr.bf16.mxu0 0
        %400 = vmatpush1.bf16.msra.mxu0 %v359
        %401 = vmatprep.subr.bf16.mxu0 0
        %402 = vmatpush1.bf16.msra.mxu0 %v358
        %403 = vmatprep.subr.bf16.mxu0 0
        %404 = vmatpush2.bf16.msra.mxu0 0
        %405 = vmatprep.subr.bf16.mxu0 0
        %406 = vmatpush2.bf16.msra.mxu0 0
        %407 = vmatprep.subr.bf16.mxu0 0
        %408 = vmatpush2.bf16.msra.mxu0 0
        %409 = vmatprep.subr.bf16.mxu0 0
        %410 = vmatpush2.bf16.msra.mxu0 0
        %411 = vmatprep.subr.bf16.mxu0 0
        %412 = vmatpush2.bf16.msra.mxu0 0
        %413 = vmatprep.subr.bf16.mxu0 0
        %414 = vmatpush2.bf16.msra.mxu0 0
        %415 = vmatprep.subr.bf16.mxu0 0
        %416 = vmatpush2.bf16.msra.mxu0 0
        %417 = vmatprep.subr.bf16.mxu0 0
        %418 = vmatpush2.bf16.msra.mxu0 0
        %419 = vmatprep.mubr.bf16.mxu0 0
        %420 = vmatmul.mubr.bf16.gmra.mxu0 %v364
        %v421 = vpop.f32.mrf.mxu0
        %v422 = vadd.f32 %v308, %v421
        %v423 = vpop.f32.mrf.mxu0
        %v424 = vpop.f32.mrf.mxu0
        %v425 = vadd.f32 %v308, %v424
        %v426 = vpop.f32.mrf.mxu0
        %427 = vmatprep.mubr.bf16.mxu0 0
        %428 = vmatmul.mubr.bf16.gmra.mxu0 %v367
        %v429 = vpop.f32.mrf.mxu0
        %v430 = vadd.f32 %v308, %v429
        %v431 = vpop.f32.mrf.mxu0
        %v432 = vpop.f32.mrf.mxu0
        %v433 = vadd.f32 %v308, %v432
        %v434 = vpop.f32.mrf.mxu0
        %435 = vmatprep.mubr.bf16.mxu0 0
        %436 = vmatmul.mubr.bf16.gmra.mxu0 %v370
        %v437 = vpop.f32.mrf.mxu0
        %v438 = vadd.f32 %v308, %v437
        %v439 = vpop.f32.mrf.mxu0
        %v440 = vpop.f32.mrf.mxu0
        %v441 = vadd.f32 %v308, %v440
        %v442 = vpop.f32.mrf.mxu0
        %443 = vmatprep.mubr.bf16.mxu0 0
        %444 = vmatmul.mubr.bf16.gmra.mxu0 %v373
        %v445 = vpop.f32.mrf.mxu0
        %v446 = vadd.f32 %v308, %v445
        %v447 = vpop.f32.mrf.mxu0
        %v448 = vpop.f32.mrf.mxu0
        %v449 = vadd.f32 %v308, %v448
        %v450 = vpop.f32.mrf.mxu0
        %451 = vmatprep.mubr.bf16.mxu0 0
        %452 = vmatmul.mubr.bf16.gmra.mxu0 %v376
        %v453 = vpop.f32.mrf.mxu0
        %v454 = vadd.f32 %v308, %v453
        %v455 = vpop.f32.mrf.mxu0
        %v456 = vpop.f32.mrf.mxu0
        %v457 = vadd.f32 %v308, %v456
        %v458 = vpop.f32.mrf.mxu0
        %459 = vmatprep.mubr.bf16.mxu0 0
        %460 = vmatmul.mubr.bf16.gmra.mxu0 %v379
        %v461 = vpop.f32.mrf.mxu0
        %v462 = vadd.f32 %v308, %v461
        %v463 = vpop.f32.mrf.mxu0
        %v464 = vpop.f32.mrf.mxu0
        %v465 = vadd.f32 %v308, %v464
        %v466 = vpop.f32.mrf.mxu0
        %467 = vmatprep.mubr.bf16.mxu0 0
        %468 = vmatmul.mubr.bf16.gmra.mxu0 %v382
        %v469 = vpop.f32.mrf.mxu0
        %v470 = vadd.f32 %v308, %v469
        %v471 = vpop.f32.mrf.mxu0
        %v472 = vpop.f32.mrf.mxu0
        %v473 = vadd.f32 %v308, %v472
        %v474 = vpop.f32.mrf.mxu0
        %475 = vmatprep.mubr.bf16.mxu0 0
        %476 = vmatmul.mubr.bf16.gmra.mxu0 %v385
        %v477 = vpop.f32.mrf.mxu0
        %v478 = vadd.f32 %v308, %v477
        %v479 = vpop.f32.mrf.mxu0
        %v480 = vpop.f32.mrf.mxu0
        %v481 = vadd.f32 %v308, %v480
        %v482 = vpop.f32.mrf.mxu0
        %483 = vdwg.mxu0
        %v484 = vlaneseq
        %v485 = vand.u32 %v484, 127
        %vm486 = vcmp.lt.s32.totalorder %v485, 8
        %v487 = vpack.c.bf16 %v425, %v422
        %v488 = vpack.c.bf16 %v433, %v430
        %v489 = vpack.c.bf16 %v441, %v438
        %v490 = vpack.c.bf16 %v449, %v446
        %v491 = vpack.c.bf16 %v457, %v454
        %v492 = vpack.c.bf16 %v465, %v462
        %v493 = vpack.c.bf16 %v473, %v470
        %v494 = vpack.c.bf16 %v481, %v478
        %503 = vrot.lane.b32.xlu0 %v487, 96
        %v504 = vpop.permute.xlu0 %503
        %505 = vrot.lane.b32.xlu0 %v488, 96
        %v506 = vpop.permute.xlu0 %505
        %507 = vrot.lane.b32.xlu0 %v489, 96
        %v508 = vpop.permute.xlu0 %507
        %509 = vrot.lane.b32.xlu0 %v490, 96
        %v510 = vpop.permute.xlu0 %509
        %511 = vrot.lane.b32.xlu0 %v491, 96
        %v512 = vpop.permute.xlu0 %511
        %513 = vrot.lane.b32.xlu0 %v492, 96
        %v514 = vpop.permute.xlu0 %513
        %515 = vrot.lane.b32.xlu0 %v493, 96
        %v516 = vpop.permute.xlu0 %515
        %517 = vrot.lane.b32.xlu0 %v494, 96
        %v518 = vpop.permute.xlu0 %517
        %vm519 = vcmask 64512
        %v521 = vsel %vm519, %v487, 0
        %v524 = vsel %vm519, %v488, 0
        %v527 = vsel %vm519, %v489, 0
        %v530 = vsel %vm519, %v490, 0
        %v533 = vsel %vm519, %v491, 0
        %v536 = vsel %vm519, %v492, 0
        %v539 = vsel %vm519, %v493, 0
        %v542 = vsel %vm519, %v494, 0
        %v545 = vsel %vm519, %v504, 0
        %v548 = vsel %vm519, %v506, 0
        %v551 = vsel %vm519, %v508, 0
        %v554 = vsel %vm519, %v510, 0
        %v557 = vsel %vm519, %v512, 0
        %v560 = vsel %vm519, %v514, 0
        %v563 = vsel %vm519, %v516, 0
        %v566 = vsel %vm519, %v518, 0
        %568 = vmatprep.subr.bf16.mxu0 0
        %569 = vmatpush1.bf16.xpose.msra.mxu0 %v566
        %570 = vmatprep.subr.bf16.mxu0 0
        %571 = vmatpush1.bf16.xpose.msra.mxu0 %v563
        %572 = vmatprep.subr.bf16.mxu0 0
        %573 = vmatpush1.bf16.xpose.msra.mxu0 %v560
        %574 = vmatprep.subr.bf16.mxu0 0
        %575 = vmatpush1.bf16.xpose.msra.mxu0 %v557
        %576 = vmatprep.subr.bf16.mxu0 0
        %577 = vmatpush1.bf16.xpose.msra.mxu0 %v554
        %578 = vmatprep.subr.bf16.mxu0 0
        %579 = vmatpush1.bf16.xpose.msra.mxu0 %v551
        %580 = vmatprep.subr.bf16.mxu0 0
        %581 = vmatpush1.bf16.xpose.msra.mxu0 %v548
        %582 = vmatprep.subr.bf16.mxu0 0
        %583 = vmatpush1.bf16.xpose.msra.mxu0 %v545
        %584 = vmatprep.subr.bf16.mxu0 0
        %585 = vmatpush2.bf16.xpose.msra.mxu0 0
        %586 = vmatprep.subr.bf16.mxu0 0
        %587 = vmatpush2.bf16.xpose.msra.mxu0 0
        %588 = vmatprep.subr.bf16.mxu0 0
        %589 = vmatpush2.bf16.xpose.msra.mxu0 0
        %590 = vmatprep.subr.bf16.mxu0 0
        %591 = vmatpush2.bf16.xpose.msra.mxu0 0
        %592 = vmatprep.subr.bf16.mxu0 0
        %593 = vmatpush2.bf16.xpose.msra.mxu0 0
        %594 = vmatprep.subr.bf16.mxu0 0
        %595 = vmatpush2.bf16.xpose.msra.mxu0 0
        %596 = vmatprep.subr.bf16.mxu0 0
        %597 = vmatpush2.bf16.xpose.msra.mxu0 0
        %598 = vmatprep.subr.bf16.mxu0 0
        %599 = vmatpush2.bf16.xpose.msra.mxu0 0
        %600 = vmatprep.mubr.bf16.mxu0 0
        %601 = vmatmul.mubr.bf16.gmra.mxu0 %v521
        %v602 = vpop.f32.mrf.mxu0
        %v603 = vadd.f32 0.0, %v602
        %v604 = vpop.f32.mrf.mxu0
        %v605 = vpop.f32.mrf.mxu0
        %v606 = vadd.f32 0.0, %v605
        %v607 = vpop.f32.mrf.mxu0
        %608 = vmatprep.mubr.bf16.mxu0 0
        %609 = vmatmul.mubr.bf16.gmra.mxu0 %v524
        %v610 = vpop.f32.mrf.mxu0
        %v611 = vadd.f32 0.0, %v610
        %v612 = vpop.f32.mrf.mxu0
        %v613 = vpop.f32.mrf.mxu0
        %v614 = vadd.f32 0.0, %v613
        %v615 = vpop.f32.mrf.mxu0
        %616 = vmatprep.mubr.bf16.mxu0 0
        %617 = vmatmul.mubr.bf16.gmra.mxu0 %v527
        %v618 = vpop.f32.mrf.mxu0
        %v619 = vadd.f32 0.0, %v618
        %v620 = vpop.f32.mrf.mxu0
        %v621 = vpop.f32.mrf.mxu0
        %v622 = vadd.f32 0.0, %v621
        %v623 = vpop.f32.mrf.mxu0
        %624 = vmatprep.mubr.bf16.mxu0 0
        %625 = vmatmul.mubr.bf16.gmra.mxu0 %v530
        %v626 = vpop.f32.mrf.mxu0
        %v627 = vadd.f32 0.0, %v626
        %v628 = vpop.f32.mrf.mxu0
        %v629 = vpop.f32.mrf.mxu0
        %v630 = vadd.f32 0.0, %v629
        %v631 = vpop.f32.mrf.mxu0
        %632 = vmatprep.mubr.bf16.mxu0 0
        %633 = vmatmul.mubr.bf16.gmra.mxu0 %v533
        %v634 = vpop.f32.mrf.mxu0
        %v635 = vadd.f32 0.0, %v634
        %v636 = vpop.f32.mrf.mxu0
        %v637 = vpop.f32.mrf.mxu0
        %v638 = vadd.f32 0.0, %v637
        %v639 = vpop.f32.mrf.mxu0
        %640 = vmatprep.mubr.bf16.mxu0 0
        %641 = vmatmul.mubr.bf16.gmra.mxu0 %v536
        %v642 = vpop.f32.mrf.mxu0
        %v643 = vadd.f32 0.0, %v642
        %v644 = vpop.f32.mrf.mxu0
        %v645 = vpop.f32.mrf.mxu0
        %v646 = vadd.f32 0.0, %v645
        %v647 = vpop.f32.mrf.mxu0
        %648 = vmatprep.mubr.bf16.mxu0 0
        %649 = vmatmul.mubr.bf16.gmra.mxu0 %v539
        %v650 = vpop.f32.mrf.mxu0
        %v651 = vadd.f32 0.0, %v650
        %v652 = vpop.f32.mrf.mxu0
        %v653 = vpop.f32.mrf.mxu0
        %v654 = vadd.f32 0.0, %v653
        %v655 = vpop.f32.mrf.mxu0
        %656 = vmatprep.mubr.bf16.mxu0 0
        %657 = vmatmul.mubr.bf16.gmra.mxu0 %v542
        %v658 = vpop.f32.mrf.mxu0
        %v659 = vadd.f32 0.0, %v658
        %v660 = vpop.f32.mrf.mxu0
        %v661 = vpop.f32.mrf.mxu0
        %v662 = vadd.f32 0.0, %v661
        %v663 = vpop.f32.mrf.mxu0
        %664 = vdwg.mxu0
        %v665 = vsel %vm486, 1, 0
        %vm666 = vcmp.eq.s32.totalorder %v665, 1
        %v667 = vsel %vm666, %v603, -1e+30
        %v668 = vsel %vm666, %v606, -1e+30
        %v669 = vsel %vm666, %v611, -1e+30
        %v670 = vsel %vm666, %v614, -1e+30
        %v671 = vsel %vm666, %v619, -1e+30
        %v672 = vsel %vm666, %v622, -1e+30
        %v673 = vsel %vm666, %v627, -1e+30
        %v674 = vsel %vm666, %v630, -1e+30
        %v675 = vsel %vm666, %v635, -1e+30
        %v676 = vsel %vm666, %v638, -1e+30
        %v677 = vsel %vm666, %v643, -1e+30
        %v678 = vsel %vm666, %v646, -1e+30
        %v679 = vsel %vm666, %v651, -1e+30
        %v680 = vsel %vm666, %v654, -1e+30
        %v681 = vsel %vm666, %v659, -1e+30
        %v682 = vsel %vm666, %v662, -1e+30
        %683 = vmax.xlane.f32.xlu0 %v667
        %v684 = vpop.xlane.xlu0 %683
        %685 = vmax.xlane.f32.xlu0 %v668
        %v686 = vpop.xlane.xlu0 %685
        %687 = vmax.xlane.f32.xlu0 %v669
        %v688 = vpop.xlane.xlu0 %687
        %689 = vmax.xlane.f32.xlu0 %v670
        %v690 = vpop.xlane.xlu0 %689
        %691 = vmax.xlane.f32.xlu0 %v671
        %v692 = vpop.xlane.xlu0 %691
        %693 = vmax.xlane.f32.xlu0 %v672
        %v694 = vpop.xlane.xlu0 %693
        %695 = vmax.xlane.f32.xlu0 %v673
        %v696 = vpop.xlane.xlu0 %695
        %697 = vmax.xlane.f32.xlu0 %v674
        %v698 = vpop.xlane.xlu0 %697
        %699 = vmax.xlane.f32.xlu0 %v675
        %v700 = vpop.xlane.xlu0 %699
        %701 = vmax.xlane.f32.xlu0 %v676
        %v702 = vpop.xlane.xlu0 %701
        %703 = vmax.xlane.f32.xlu0 %v677
        %v704 = vpop.xlane.xlu0 %703
        %705 = vmax.xlane.f32.xlu0 %v678
        %v706 = vpop.xlane.xlu0 %705
        %707 = vmax.xlane.f32.xlu0 %v679
        %v708 = vpop.xlane.xlu0 %707
        %709 = vmax.xlane.f32.xlu0 %v680
        %v710 = vpop.xlane.xlu0 %709
        %711 = vmax.xlane.f32.xlu0 %v681
        %v712 = vpop.xlane.xlu0 %711
        %713 = vmax.xlane.f32.xlu0 %v682
        %v714 = vpop.xlane.xlu0 %713
        %v715 = vsub.f32 %v667, %v684
        %v716 = vsub.f32 %v668, %v686
        %v717 = vsub.f32 %v669, %v688
        %v718 = vsub.f32 %v670, %v690
        %v719 = vsub.f32 %v671, %v692
        %v720 = vsub.f32 %v672, %v694
        %v721 = vsub.f32 %v673, %v696
        %v722 = vsub.f32 %v674, %v698
        %v723 = vsub.f32 %v675, %v700
        %v724 = vsub.f32 %v676, %v702
        %v725 = vsub.f32 %v677, %v704
        %v726 = vsub.f32 %v678, %v706
        %v727 = vsub.f32 %v679, %v708
        %v728 = vsub.f32 %v680, %v710
        %v729 = vsub.f32 %v681, %v712
        %v730 = vsub.f32 %v682, %v714
        %v731 = vmul.f32 %v715, 1.442695
        %v732 = vpow.pop %v731
        %v733 = vmul.f32 %v716, 1.442695
        %v734 = vpow.pop %v733
        %v735 = vmul.f32 %v717, 1.442695
        %v736 = vpow.pop %v735
        %v737 = vmul.f32 %v718, 1.442695
        %v738 = vpow.pop %v737
        %v739 = vmul.f32 %v719, 1.442695
        %v740 = vpow.pop %v739
        %v741 = vmul.f32 %v720, 1.442695
        %v742 = vpow.pop %v741
        %v743 = vmul.f32 %v721, 1.442695
        %v744 = vpow.pop %v743
        %v745 = vmul.f32 %v722, 1.442695
        %v746 = vpow.pop %v745
        %v747 = vmul.f32 %v723, 1.442695
        %v748 = vpow.pop %v747
        %v749 = vmul.f32 %v724, 1.442695
        %v750 = vpow.pop %v749
        %v751 = vmul.f32 %v725, 1.442695
        %v752 = vpow.pop %v751
        %v753 = vmul.f32 %v726, 1.442695
        %v754 = vpow.pop %v753
        %v755 = vmul.f32 %v727, 1.442695
        %v756 = vpow.pop %v755
        %v757 = vmul.f32 %v728, 1.442695
        %v758 = vpow.pop %v757
        %v759 = vmul.f32 %v729, 1.442695
        %v760 = vpow.pop %v759
        %v761 = vmul.f32 %v730, 1.442695
        %v762 = vpow.pop %v761
        %763 = vadd.xlane.f32.xlu0 %v732
        %v764 = vpop.xlane.xlu0 %763
        %765 = vadd.xlane.f32.xlu0 %v734
        %v766 = vpop.xlane.xlu0 %765
        %767 = vadd.xlane.f32.xlu0 %v736
        %v768 = vpop.xlane.xlu0 %767
        %769 = vadd.xlane.f32.xlu0 %v738
        %v770 = vpop.xlane.xlu0 %769
        %771 = vadd.xlane.f32.xlu0 %v740
        %v772 = vpop.xlane.xlu0 %771
        %773 = vadd.xlane.f32.xlu0 %v742
        %v774 = vpop.xlane.xlu0 %773
        %775 = vadd.xlane.f32.xlu0 %v744
        %v776 = vpop.xlane.xlu0 %775
        %777 = vadd.xlane.f32.xlu0 %v746
        %v778 = vpop.xlane.xlu0 %777
        %779 = vadd.xlane.f32.xlu0 %v748
        %v780 = vpop.xlane.xlu0 %779
        %781 = vadd.xlane.f32.xlu0 %v750
        %v782 = vpop.xlane.xlu0 %781
        %783 = vadd.xlane.f32.xlu0 %v752
        %v784 = vpop.xlane.xlu0 %783
        %785 = vadd.xlane.f32.xlu0 %v754
        %v786 = vpop.xlane.xlu0 %785
        %787 = vadd.xlane.f32.xlu0 %v756
        %v788 = vpop.xlane.xlu0 %787
        %789 = vadd.xlane.f32.xlu0 %v758
        %v790 = vpop.xlane.xlu0 %789
        %791 = vadd.xlane.f32.xlu0 %v760
        %v792 = vpop.xlane.xlu0 %791
        %793 = vadd.xlane.f32.xlu0 %v762
        %v794 = vpop.xlane.xlu0 %793
        %v795 = vrcp.pop %v764
        %v796 = vrcp.pop %v766
        %v797 = vrcp.pop %v768
        %v798 = vrcp.pop %v770
        %v799 = vrcp.pop %v772
        %v800 = vrcp.pop %v774
        %v801 = vrcp.pop %v776
        %v802 = vrcp.pop %v778
        %v803 = vrcp.pop %v780
        %v804 = vrcp.pop %v782
        %v805 = vrcp.pop %v784
        %v806 = vrcp.pop %v786
        %v807 = vrcp.pop %v788
        %v808 = vrcp.pop %v790
        %v809 = vrcp.pop %v792
        %v810 = vrcp.pop %v794
        %v811 = vmul.f32 %v732, %v795
        %v812 = vmul.f32 %v734, %v796
        %v813 = vmul.f32 %v736, %v797
        %v814 = vmul.f32 %v738, %v798
        %v815 = vmul.f32 %v740, %v799
        %v816 = vmul.f32 %v742, %v800
        %v817 = vmul.f32 %v744, %v801
        %v818 = vmul.f32 %v746, %v802
        %v819 = vmul.f32 %v748, %v803
        %v820 = vmul.f32 %v750, %v804
        %v821 = vmul.f32 %v752, %v805
        %v822 = vmul.f32 %v754, %v806
        %v823 = vmul.f32 %v756, %v807
        %v824 = vmul.f32 %v758, %v808
        %v825 = vmul.f32 %v760, %v809
        %v826 = vmul.f32 %v762, %v810
        %v827 = vpack.c.bf16 %v812, %v811
        %v828 = vpack.c.bf16 %v814, %v813
        %v829 = vpack.c.bf16 %v816, %v815
        %v830 = vpack.c.bf16 %v818, %v817
        %v831 = vpack.c.bf16 %v820, %v819
        %v832 = vpack.c.bf16 %v822, %v821
        %v833 = vpack.c.bf16 %v824, %v823
        %v834 = vpack.c.bf16 %v826, %v825
        %v843 = vunpack.c.l.b16 %v827
        %v844 = vunpack.c.h.b16 %v827
        %v845 = vunpack.c.l.b16 %v828
        %v846 = vunpack.c.h.b16 %v828
        %v847 = vunpack.c.l.b16 %v829
        %v848 = vunpack.c.h.b16 %v829
        %v849 = vunpack.c.l.b16 %v830
        %v850 = vunpack.c.h.b16 %v830
        %v851 = vunpack.c.l.b16 %v831
        %v852 = vunpack.c.h.b16 %v831
        %v853 = vunpack.c.l.b16 %v832
        %v854 = vunpack.c.h.b16 %v832
        %v855 = vunpack.c.l.b16 %v833
        %v856 = vunpack.c.h.b16 %v833
        %v857 = vunpack.c.l.b16 %v834
        %v858 = vunpack.c.h.b16 %v834
        %v859 = vpack.c.b16 %v843, %v843
        %v860 = vpack.c.b16 %v844, %v844
        %v861 = vpack.c.b16 %v845, %v845
        %v862 = vpack.c.b16 %v846, %v846
        %v863 = vpack.c.b16 %v847, %v847
        %v864 = vpack.c.b16 %v848, %v848
        %v865 = vpack.c.b16 %v849, %v849
        %v866 = vpack.c.b16 %v850, %v850
        %v867 = vpack.c.b16 %v851, %v851
        %v868 = vpack.c.b16 %v852, %v852
        %v869 = vpack.c.b16 %v853, %v853
        %v870 = vpack.c.b16 %v854, %v854
        %v871 = vpack.c.b16 %v855, %v855
        %v872 = vpack.c.b16 %v856, %v856
        %v873 = vpack.c.b16 %v857, %v857
        %v874 = vpack.c.b16 %v858, %v858
        %891 = vst [vmem:[%s266] sm:$0xf] %v859
        %892 = vst [vmem:[%s266 + $0x4] sm:$0xf] %v860
        %893 = vst [vmem:[%s266 + $0x8] sm:$0xf] %v861
        %894 = vst [vmem:[%s266 + $0xc] sm:$0xf] %v862
        %895 = vst [vmem:[%s266 + $0x10] sm:$0xf] %v863
        %896 = vst [vmem:[%s266 + $0x14] sm:$0xf] %v864
        %897 = vst [vmem:[%s266 + $0x18] sm:$0xf] %v865
        %898 = vst [vmem:[%s266 + $0x1c] sm:$0xf] %v866
        %899 = vst [vmem:[%s266 + $0x20] sm:$0xf] %v867
        %900 = vst [vmem:[%s266 + $0x24] sm:$0xf] %v868
        %901 = vst [vmem:[%s266 + $0x28] sm:$0xf] %v869
        %902 = vst [vmem:[%s266 + $0x2c] sm:$0xf] %v870
        %903 = vst [vmem:[%s266 + $0x30] sm:$0xf] %v871
        %904 = vst [vmem:[%s266 + $0x34] sm:$0xf] %v872
        %905 = vst [vmem:[%s266 + $0x38] sm:$0xf] %v873
        %906 = vst [vmem:[%s266 + $0x3c] sm:$0xf] %v874
        %907 = vrot.lane.b32.xlu0 %v487, 64
        %v908 = vpop.permute.xlu0 %907
        %909 = vrot.lane.b32.xlu0 %v488, 64
        %v910 = vpop.permute.xlu0 %909
        %911 = vrot.lane.b32.xlu0 %v489, 64
        %v912 = vpop.permute.xlu0 %911
        %913 = vrot.lane.b32.xlu0 %v490, 64
        %v914 = vpop.permute.xlu0 %913
        %915 = vrot.lane.b32.xlu0 %v491, 64
        %v916 = vpop.permute.xlu0 %915
        %917 = vrot.lane.b32.xlu0 %v492, 64
        %v918 = vpop.permute.xlu0 %917
        %919 = vrot.lane.b32.xlu0 %v493, 64
        %v920 = vpop.permute.xlu0 %919
        %921 = vrot.lane.b32.xlu0 %v494, 64
        %v922 = vpop.permute.xlu0 %921
        %931 = vmatprep.subr.bf16.mxu0 0
        %932 = vmatpush1.bf16.msra.mxu0 %v922
        %933 = vmatprep.subr.bf16.mxu0 0
        %934 = vmatpush1.bf16.msra.mxu0 %v920
        %935 = vmatprep.subr.bf16.mxu0 0
        %936 = vmatpush1.bf16.msra.mxu0 %v918
        %937 = vmatprep.subr.bf16.mxu0 0
        %938 = vmatpush1.bf16.msra.mxu0 %v916
        %939 = vmatprep.subr.bf16.mxu0 0
        %940 = vmatpush1.bf16.msra.mxu0 %v914
        %941 = vmatprep.subr.bf16.mxu0 0
        %942 = vmatpush1.bf16.msra.mxu0 %v912
        %943 = vmatprep.subr.bf16.mxu0 0
        %944 = vmatpush1.bf16.msra.mxu0 %v910
        %945 = vmatprep.subr.bf16.mxu0 0
        %946 = vmatpush1.bf16.msra.mxu0 %v908
        %947 = vmatprep.subr.bf16.mxu0 0
        %948 = vmatpush2.bf16.msra.mxu0 0
        %949 = vmatprep.subr.bf16.mxu0 0
        %950 = vmatpush2.bf16.msra.mxu0 0
        %951 = vmatprep.subr.bf16.mxu0 0
        %952 = vmatpush2.bf16.msra.mxu0 0
        %953 = vmatprep.subr.bf16.mxu0 0
        %954 = vmatpush2.bf16.msra.mxu0 0
        %955 = vmatprep.subr.bf16.mxu0 0
        %956 = vmatpush2.bf16.msra.mxu0 0
        %957 = vmatprep.subr.bf16.mxu0 0
        %958 = vmatpush2.bf16.msra.mxu0 0
        %959 = vmatprep.subr.bf16.mxu0 0
        %960 = vmatpush2.bf16.msra.mxu0 0
        %961 = vmatprep.subr.bf16.mxu0 0
        %962 = vmatpush2.bf16.msra.mxu0 0
        %963 = vmatprep.mubr.bf16.mxu0 0
        %964 = vmatmul.mubr.bf16.gmra.mxu0 %v827
        %v965 = vpop.f32.mrf.mxu0
        %v966 = vadd.f32 0.0, %v965
        %v967 = vpop.f32.mrf.mxu0
        %v968 = vpop.f32.mrf.mxu0
        %v969 = vadd.f32 0.0, %v968
        %v970 = vpop.f32.mrf.mxu0
        %971 = vmatprep.mubr.bf16.mxu0 0
        %972 = vmatmul.mubr.bf16.gmra.mxu0 %v828
        %v973 = vpop.f32.mrf.mxu0
        %v974 = vadd.f32 0.0, %v973
        %v975 = vpop.f32.mrf.mxu0
        %v976 = vpop.f32.mrf.mxu0
        %v977 = vadd.f32 0.0, %v976
        %v978 = vpop.f32.mrf.mxu0
        %979 = vmatprep.mubr.bf16.mxu0 0
        %980 = vmatmul.mubr.bf16.gmra.mxu0 %v829
        %v981 = vpop.f32.mrf.mxu0
        %v982 = vadd.f32 0.0, %v981
        %v983 = vpop.f32.mrf.mxu0
        %v984 = vpop.f32.mrf.mxu0
        %v985 = vadd.f32 0.0, %v984
        %v986 = vpop.f32.mrf.mxu0
        %987 = vmatprep.mubr.bf16.mxu0 0
        %988 = vmatmul.mubr.bf16.gmra.mxu0 %v830
        %v989 = vpop.f32.mrf.mxu0
        %v990 = vadd.f32 0.0, %v989
        %v991 = vpop.f32.mrf.mxu0
        %v992 = vpop.f32.mrf.mxu0
        %v993 = vadd.f32 0.0, %v992
        %v994 = vpop.f32.mrf.mxu0
        %995 = vmatprep.mubr.bf16.mxu0 0
        %996 = vmatmul.mubr.bf16.gmra.mxu0 %v831
        %v997 = vpop.f32.mrf.mxu0
        %v998 = vadd.f32 0.0, %v997
        %v999 = vpop.f32.mrf.mxu0
        %v1000 = vpop.f32.mrf.mxu0
        %v1001 = vadd.f32 0.0, %v1000
        %v1002 = vpop.f32.mrf.mxu0
        %1003 = vmatprep.mubr.bf16.mxu0 0
        %1004 = vmatmul.mubr.bf16.gmra.mxu0 %v832
        %v1005 = vpop.f32.mrf.mxu0
        %v1006 = vadd.f32 0.0, %v1005
        %v1007 = vpop.f32.mrf.mxu0
        %v1008 = vpop.f32.mrf.mxu0
        %v1009 = vadd.f32 0.0, %v1008
        %v1010 = vpop.f32.mrf.mxu0
        %1011 = vmatprep.mubr.bf16.mxu0 0
        %1012 = vmatmul.mubr.bf16.gmra.mxu0 %v833
        %v1013 = vpop.f32.mrf.mxu0
        %v1014 = vadd.f32 0.0, %v1013
        %v1015 = vpop.f32.mrf.mxu0
        %v1016 = vpop.f32.mrf.mxu0
        %v1017 = vadd.f32 0.0, %v1016
        %v1018 = vpop.f32.mrf.mxu0
        %1019 = vmatprep.mubr.bf16.mxu0 0
        %1020 = vmatmul.mubr.bf16.gmra.mxu0 %v834
        %v1021 = vpop.f32.mrf.mxu0
        %v1022 = vadd.f32 0.0, %v1021
        %v1023 = vpop.f32.mrf.mxu0
        %v1024 = vpop.f32.mrf.mxu0
        %v1025 = vadd.f32 0.0, %v1024
        %v1026 = vpop.f32.mrf.mxu0
        %1027 = vdwg.mxu0
        %v1028 = vpack.c.bf16 %v969, %v966
        %v1029 = vpack.c.bf16 %v977, %v974
        %v1030 = vpack.c.bf16 %v985, %v982
        %v1031 = vpack.c.bf16 %v993, %v990
        %v1032 = vpack.c.bf16 %v1001, %v998
        %v1033 = vpack.c.bf16 %v1009, %v1006
        %v1034 = vpack.c.bf16 %v1017, %v1014
        %v1035 = vpack.c.bf16 %v1025, %v1022
        %v1044 = vunpack.c.l.b16 %v1028
        %v1045 = vunpack.c.h.b16 %v1028
        %v1046 = vunpack.c.l.b16 %v1029
        %v1047 = vunpack.c.h.b16 %v1029
        %v1048 = vunpack.c.l.b16 %v1030
        %v1049 = vunpack.c.h.b16 %v1030
        %v1050 = vunpack.c.l.b16 %v1031
        %v1051 = vunpack.c.h.b16 %v1031
        %v1052 = vunpack.c.l.b16 %v1032
        %v1053 = vunpack.c.h.b16 %v1032
        %v1054 = vunpack.c.l.b16 %v1033
        %v1055 = vunpack.c.h.b16 %v1033
        %v1056 = vunpack.c.l.b16 %v1034
        %v1057 = vunpack.c.h.b16 %v1034
        %v1058 = vunpack.c.l.b16 %v1035
        %v1059 = vunpack.c.h.b16 %v1035
        %v1060 = vpack.c.b16 %v1044, %v1044
        %v1061 = vpack.c.b16 %v1045, %v1045
        %v1062 = vpack.c.b16 %v1046, %v1046
        %v1063 = vpack.c.b16 %v1047, %v1047
        %v1064 = vpack.c.b16 %v1048, %v1048
        %v1065 = vpack.c.b16 %v1049, %v1049
        %v1066 = vpack.c.b16 %v1050, %v1050
        %v1067 = vpack.c.b16 %v1051, %v1051
        %v1068 = vpack.c.b16 %v1052, %v1052
        %v1069 = vpack.c.b16 %v1053, %v1053
        %v1070 = vpack.c.b16 %v1054, %v1054
        %v1071 = vpack.c.b16 %v1055, %v1055
        %v1072 = vpack.c.b16 %v1056, %v1056
        %v1073 = vpack.c.b16 %v1057, %v1057
        %v1074 = vpack.c.b16 %v1058, %v1058
        %v1075 = vpack.c.b16 %v1059, %v1059
        %vm1092 = vcmask 60416
        %1093 = vst.msk [vmem:[#allocation2] sm:$0xf] %vm1092, %v1060
        %1094 = vst.msk [vmem:[#allocation2 + $0x4] sm:$0xf] %vm1092, %v1061
        %1095 = vst.msk [vmem:[#allocation2 + $0x8] sm:$0xf] %vm1092, %v1062
        %1096 = vst.msk [vmem:[#allocation2 + $0xc] sm:$0xf] %vm1092, %v1063
        %1097 = vst.msk [vmem:[#allocation2 + $0x10] sm:$0xf] %vm1092, %v1064
        %1098 = vst.msk [vmem:[#allocation2 + $0x14] sm:$0xf] %vm1092, %v1065
        %1099 = vst.msk [vmem:[#allocation2 + $0x18] sm:$0xf] %vm1092, %v1066
        %1100 = vst.msk [vmem:[#allocation2 + $0x1c] sm:$0xf] %vm1092, %v1067
        %1101 = vst.msk [vmem:[#allocation2 + $0x20] sm:$0xf] %vm1092, %v1068
        %1102 = vst.msk [vmem:[#allocation2 + $0x24] sm:$0xf] %vm1092, %v1069
        %1103 = vst.msk [vmem:[#allocation2 + $0x28] sm:$0xf] %vm1092, %v1070
        %1104 = vst.msk [vmem:[#allocation2 + $0x2c] sm:$0xf] %vm1092, %v1071
        %1105 = vst.msk [vmem:[#allocation2 + $0x30] sm:$0xf] %vm1092, %v1072
        %1106 = vst.msk [vmem:[#allocation2 + $0x34] sm:$0xf] %vm1092, %v1073
        %1107 = vst.msk [vmem:[#allocation2 + $0x38] sm:$0xf] %vm1092, %v1074
        %1108 = vst.msk [vmem:[#allocation2 + $0x3c] sm:$0xf] %vm1092, %v1075
        %1109 = vrot.lane.b32.xlu0 %v487, 120
        %v1110 = vpop.permute.xlu0 %1109
        %1111 = vrot.lane.b32.xlu0 %v488, 120
        %v1112 = vpop.permute.xlu0 %1111
        %1113 = vrot.lane.b32.xlu0 %v489, 120
        %v1114 = vpop.permute.xlu0 %1113
        %1115 = vrot.lane.b32.xlu0 %v490, 120
        %v1116 = vpop.permute.xlu0 %1115
        %1117 = vrot.lane.b32.xlu0 %v491, 120
        %v1118 = vpop.permute.xlu0 %1117
        %1119 = vrot.lane.b32.xlu0 %v492, 120
        %v1120 = vpop.permute.xlu0 %1119
        %1121 = vrot.lane.b32.xlu0 %v493, 120
        %v1122 = vpop.permute.xlu0 %1121
        %1123 = vrot.lane.b32.xlu0 %v494, 120
        %v1124 = vpop.permute.xlu0 %1123
        %1125 = vrot.lane.b32.xlu0 %v487, 88
        %v1126 = vpop.permute.xlu0 %1125
        %1127 = vrot.lane.b32.xlu0 %v488, 88
        %v1128 = vpop.permute.xlu0 %1127
        %1129 = vrot.lane.b32.xlu0 %v489, 88
        %v1130 = vpop.permute.xlu0 %1129
        %1131 = vrot.lane.b32.xlu0 %v490, 88
        %v1132 = vpop.permute.xlu0 %1131
        %1133 = vrot.lane.b32.xlu0 %v491, 88
        %v1134 = vpop.permute.xlu0 %1133
        %1135 = vrot.lane.b32.xlu0 %v492, 88
        %v1136 = vpop.permute.xlu0 %1135
        %1137 = vrot.lane.b32.xlu0 %v493, 88
        %v1138 = vpop.permute.xlu0 %1137
        %1139 = vrot.lane.b32.xlu0 %v494, 88
        %v1140 = vpop.permute.xlu0 %1139
        %v1142 = vsel %vm519, %v1110, 0
        %v1145 = vsel %vm519, %v1112, 0
        %v1148 = vsel %vm519, %v1114, 0
        %v1151 = vsel %vm519, %v1116, 0
        %v1154 = vsel %vm519, %v1118, 0
        %v1157 = vsel %vm519, %v1120, 0
        %v1160 = vsel %vm519, %v1122, 0
        %v1163 = vsel %vm519, %v1124, 0
        %v1166 = vsel %vm519, %v1126, 0
        %v1169 = vsel %vm519, %v1128, 0
        %v1172 = vsel %vm519, %v1130, 0
        %v1175 = vsel %vm519, %v1132, 0
        %v1178 = vsel %vm519, %v1134, 0
        %v1181 = vsel %vm519, %v1136, 0
        %v1184 = vsel %vm519, %v1138, 0
        %v1187 = vsel %vm519, %v1140, 0
        %1189 = vmatprep.subr.bf16.mxu0 0
        %1190 = vmatpush1.bf16.xpose.msra.mxu0 %v1187
        %1191 = vmatprep.subr.bf16.mxu0 0
        %1192 = vmatpush1.bf16.xpose.msra.mxu0 %v1184
        %1193 = vmatprep.subr.bf16.mxu0 0
        %1194 = vmatpush1.bf16.xpose.msra.mxu0 %v1181
        %1195 = vmatprep.subr.bf16.mxu0 0
        %1196 = vmatpush1.bf16.xpose.msra.mxu0 %v1178
        %1197 = vmatprep.subr.bf16.mxu0 0
        %1198 = vmatpush1.bf16.xpose.msra.mxu0 %v1175
        %1199 = vmatprep.subr.bf16.mxu0 0
        %1200 = vmatpush1.bf16.xpose.msra.mxu0 %v1172
        %1201 = vmatprep.subr.bf16.mxu0 0
        %1202 = vmatpush1.bf16.xpose.msra.mxu0 %v1169
        %1203 = vmatprep.subr.bf16.mxu0 0
        %1204 = vmatpush1.bf16.xpose.msra.mxu0 %v1166
        %1205 = vmatprep.subr.bf16.mxu0 0
        %1206 = vmatpush2.bf16.xpose.msra.mxu0 0
        %1207 = vmatprep.subr.bf16.mxu0 0
        %1208 = vmatpush2.bf16.xpose.msra.mxu0 0
        %1209 = vmatprep.subr.bf16.mxu0 0
        %1210 = vmatpush2.bf16.xpose.msra.mxu0 0
        %1211 = vmatprep.subr.bf16.mxu0 0
        %1212 = vmatpush2.bf16.xpose.msra.mxu0 0
        %1213 = vmatprep.subr.bf16.mxu0 0
        %1214 = vmatpush2.bf16.xpose.msra.mxu0 0
        %1215 = vmatprep.subr.bf16.mxu0 0
        %1216 = vmatpush2.bf16.xpose.msra.mxu0 0
        %1217 = vmatprep.subr.bf16.mxu0 0
        %1218 = vmatpush2.bf16.xpose.msra.mxu0 0
        %1219 = vmatprep.subr.bf16.mxu0 0
        %1220 = vmatpush2.bf16.xpose.msra.mxu0 0
        %1221 = vmatprep.mubr.bf16.mxu0 0
        %1222 = vmatmul.mubr.bf16.gmra.mxu0 %v1142
        %v1223 = vpop.f32.mrf.mxu0
        %v1224 = vadd.f32 0.0, %v1223
        %v1225 = vpop.f32.mrf.mxu0
        %v1226 = vpop.f32.mrf.mxu0
        %v1227 = vadd.f32 0.0, %v1226
        %v1228 = vpop.f32.mrf.mxu0
        %1229 = vmatprep.mubr.bf16.mxu0 0
        %1230 = vmatmul.mubr.bf16.gmra.mxu0 %v1145
        %v1231 = vpop.f32.mrf.mxu0
        %v1232 = vadd.f32 0.0, %v1231
        %v1233 = vpop.f32.mrf.mxu0
        %v1234 = vpop.f32.mrf.mxu0
        %v1235 = vadd.f32 0.0, %v1234
        %v1236 = vpop.f32.mrf.mxu0
        %1237 = vmatprep.mubr.bf16.mxu0 0
        %1238 = vmatmul.mubr.bf16.gmra.mxu0 %v1148
        %v1239 = vpop.f32.mrf.mxu0
        %v1240 = vadd.f32 0.0, %v1239
        %v1241 = vpop.f32.mrf.mxu0
        %v1242 = vpop.f32.mrf.mxu0
        %v1243 = vadd.f32 0.0, %v1242
        %v1244 = vpop.f32.mrf.mxu0
        %1245 = vmatprep.mubr.bf16.mxu0 0
        %1246 = vmatmul.mubr.bf16.gmra.mxu0 %v1151
        %v1247 = vpop.f32.mrf.mxu0
        %v1248 = vadd.f32 0.0, %v1247
        %v1249 = vpop.f32.mrf.mxu0
        %v1250 = vpop.f32.mrf.mxu0
        %v1251 = vadd.f32 0.0, %v1250
        %v1252 = vpop.f32.mrf.mxu0
        %1253 = vmatprep.mubr.bf16.mxu0 0
        %1254 = vmatmul.mubr.bf16.gmra.mxu0 %v1154
        %v1255 = vpop.f32.mrf.mxu0
        %v1256 = vadd.f32 0.0, %v1255
        %v1257 = vpop.f32.mrf.mxu0
        %v1258 = vpop.f32.mrf.mxu0
        %v1259 = vadd.f32 0.0, %v1258
        %v1260 = vpop.f32.mrf.mxu0
        %1261 = vmatprep.mubr.bf16.mxu0 0
        %1262 = vmatmul.mubr.bf16.gmra.mxu0 %v1157
        %v1263 = vpop.f32.mrf.mxu0
        %v1264 = vadd.f32 0.0, %v1263
        %v1265 = vpop.f32.mrf.mxu0
        %v1266 = vpop.f32.mrf.mxu0
        %v1267 = vadd.f32 0.0, %v1266
        %v1268 = vpop.f32.mrf.mxu0
        %1269 = vmatprep.mubr.bf16.mxu0 0
        %1270 = vmatmul.mubr.bf16.gmra.mxu0 %v1160
        %v1271 = vpop.f32.mrf.mxu0
        %v1272 = vadd.f32 0.0, %v1271
        %v1273 = vpop.f32.mrf.mxu0
        %v1274 = vpop.f32.mrf.mxu0
        %v1275 = vadd.f32 0.0, %v1274
        %v1276 = vpop.f32.mrf.mxu0
        %1277 = vmatprep.mubr.bf16.mxu0 0
        %1278 = vmatmul.mubr.bf16.gmra.mxu0 %v1163
        %v1279 = vpop.f32.mrf.mxu0
        %v1280 = vadd.f32 0.0, %v1279
        %v1281 = vpop.f32.mrf.mxu0
        %v1282 = vpop.f32.mrf.mxu0
        %v1283 = vadd.f32 0.0, %v1282
        %v1284 = vpop.f32.mrf.mxu0
        %1285 = vdwg.mxu0
        %v1286 = vsel %vm666, %v1224, -1e+30
        %v1287 = vsel %vm666, %v1227, -1e+30
        %v1288 = vsel %vm666, %v1232, -1e+30
        %v1289 = vsel %vm666, %v1235, -1e+30
        %v1290 = vsel %vm666, %v1240, -1e+30
        %v1291 = vsel %vm666, %v1243, -1e+30
        %v1292 = vsel %vm666, %v1248, -1e+30
        %v1293 = vsel %vm666, %v1251, -1e+30
        %v1294 = vsel %vm666, %v1256, -1e+30
        %v1295 = vsel %vm666, %v1259, -1e+30
        %v1296 = vsel %vm666, %v1264, -1e+30
        %v1297 = vsel %vm666, %v1267, -1e+30
        %v1298 = vsel %vm666, %v1272, -1e+30
        %v1299 = vsel %vm666, %v1275, -1e+30
        %v1300 = vsel %vm666, %v1280, -1e+30
        %v1301 = vsel %vm666, %v1283, -1e+30
        %1302 = vmax.xlane.f32.xlu0 %v1286
        %v1303 = vpop.xlane.xlu0 %1302
        %1304 = vmax.xlane.f32.xlu0 %v1287
        %v1305 = vpop.xlane.xlu0 %1304
        %1306 = vmax.xlane.f32.xlu0 %v1288
        %v1307 = vpop.xlane.xlu0 %1306
        %1308 = vmax.xlane.f32.xlu0 %v1289
        %v1309 = vpop.xlane.xlu0 %1308
        %1310 = vmax.xlane.f32.xlu0 %v1290
        %v1311 = vpop.xlane.xlu0 %1310
        %1312 = vmax.xlane.f32.xlu0 %v1291
        %v1313 = vpop.xlane.xlu0 %1312
        %1314 = vmax.xlane.f32.xlu0 %v1292
        %v1315 = vpop.xlane.xlu0 %1314
        %1316 = vmax.xlane.f32.xlu0 %v1293
        %v1317 = vpop.xlane.xlu0 %1316
        %1318 = vmax.xlane.f32.xlu0 %v1294
        %v1319 = vpop.xlane.xlu0 %1318
        %1320 = vmax.xlane.f32.xlu0 %v1295
        %v1321 = vpop.xlane.xlu0 %1320
        %1322 = vmax.xlane.f32.xlu0 %v1296
        %v1323 = vpop.xlane.xlu0 %1322
        %1324 = vmax.xlane.f32.xlu0 %v1297
        %v1325 = vpop.xlane.xlu0 %1324
        %1326 = vmax.xlane.f32.xlu0 %v1298
        %v1327 = vpop.xlane.xlu0 %1326
        %1328 = vmax.xlane.f32.xlu0 %v1299
        %v1329 = vpop.xlane.xlu0 %1328
        %1330 = vmax.xlane.f32.xlu0 %v1300
        %v1331 = vpop.xlane.xlu0 %1330
        %1332 = vmax.xlane.f32.xlu0 %v1301
        %v1333 = vpop.xlane.xlu0 %1332
        %v1334 = vsub.f32 %v1286, %v1303
        %v1335 = vsub.f32 %v1287, %v1305
        %v1336 = vsub.f32 %v1288, %v1307
        %v1337 = vsub.f32 %v1289, %v1309
        %v1338 = vsub.f32 %v1290, %v1311
        %v1339 = vsub.f32 %v1291, %v1313
        %v1340 = vsub.f32 %v1292, %v1315
        %v1341 = vsub.f32 %v1293, %v1317
        %v1342 = vsub.f32 %v1294, %v1319
        %v1343 = vsub.f32 %v1295, %v1321
        %v1344 = vsub.f32 %v1296, %v1323
        %v1345 = vsub.f32 %v1297, %v1325
        %v1346 = vsub.f32 %v1298, %v1327
        %v1347 = vsub.f32 %v1299, %v1329
        %v1348 = vsub.f32 %v1300, %v1331
        %v1349 = vsub.f32 %v1301, %v1333
        %v1350 = vmul.f32 %v1334, 1.442695
        %v1351 = vpow.pop %v1350
        %v1352 = vmul.f32 %v1335, 1.442695
        %v1353 = vpow.pop %v1352
        %v1354 = vmul.f32 %v1336, 1.442695
        %v1355 = vpow.pop %v1354
        %v1356 = vmul.f32 %v1337, 1.442695
        %v1357 = vpow.pop %v1356
        %v1358 = vmul.f32 %v1338, 1.442695
        %v1359 = vpow.pop %v1358
        %v1360 = vmul.f32 %v1339, 1.442695
        %v1361 = vpow.pop %v1360
        %v1362 = vmul.f32 %v1340, 1.442695
        %v1363 = vpow.pop %v1362
        %v1364 = vmul.f32 %v1341, 1.442695
        %v1365 = vpow.pop %v1364
        %v1366 = vmul.f32 %v1342, 1.442695
        %v1367 = vpow.pop %v1366
        %v1368 = vmul.f32 %v1343, 1.442695
        %v1369 = vpow.pop %v1368
        %v1370 = vmul.f32 %v1344, 1.442695
        %v1371 = vpow.pop %v1370
        %v1372 = vmul.f32 %v1345, 1.442695
        %v1373 = vpow.pop %v1372
        %v1374 = vmul.f32 %v1346, 1.442695
        %v1375 = vpow.pop %v1374
        %v1376 = vmul.f32 %v1347, 1.442695
        %v1377 = vpow.pop %v1376
        %v1378 = vmul.f32 %v1348, 1.442695
        %v1379 = vpow.pop %v1378
        %v1380 = vmul.f32 %v1349, 1.442695
        %v1381 = vpow.pop %v1380
        %1382 = vadd.xlane.f32.xlu0 %v1351
        %v1383 = vpop.xlane.xlu0 %1382
        %1384 = vadd.xlane.f32.xlu0 %v1353
        %v1385 = vpop.xlane.xlu0 %1384
        %1386 = vadd.xlane.f32.xlu0 %v1355
        %v1387 = vpop.xlane.xlu0 %1386
        %1388 = vadd.xlane.f32.xlu0 %v1357
        %v1389 = vpop.xlane.xlu0 %1388
        %1390 = vadd.xlane.f32.xlu0 %v1359
        %v1391 = vpop.xlane.xlu0 %1390
        %1392 = vadd.xlane.f32.xlu0 %v1361
        %v1393 = vpop.xlane.xlu0 %1392
        %1394 = vadd.xlane.f32.xlu0 %v1363
        %v1395 = vpop.xlane.xlu0 %1394
        %1396 = vadd.xlane.f32.xlu0 %v1365
        %v1397 = vpop.xlane.xlu0 %1396
        %1398 = vadd.xlane.f32.xlu0 %v1367
        %v1399 = vpop.xlane.xlu0 %1398
        %1400 = vadd.xlane.f32.xlu0 %v1369
        %v1401 = vpop.xlane.xlu0 %1400
        %1402 = vadd.xlane.f32.xlu0 %v1371
        %v1403 = vpop.xlane.xlu0 %1402
        %1404 = vadd.xlane.f32.xlu0 %v1373
        %v1405 = vpop.xlane.xlu0 %1404
        %1406 = vadd.xlane.f32.xlu0 %v1375
        %v1407 = vpop.xlane.xlu0 %1406
        %1408 = vadd.xlane.f32.xlu0 %v1377
        %v1409 = vpop.xlane.xlu0 %1408
        %1410 = vadd.xlane.f32.xlu0 %v1379
        %v1411 = vpop.xlane.xlu0 %1410
        %1412 = vadd.xlane.f32.xlu0 %v1381
        %v1413 = vpop.xlane.xlu0 %1412
        %v1414 = vrcp.pop %v1383
        %v1415 = vrcp.pop %v1385
        %v1416 = vrcp.pop %v1387
        %v1417 = vrcp.pop %v1389
        %v1418 = vrcp.pop %v1391
        %v1419 = vrcp.pop %v1393
        %v1420 = vrcp.pop %v1395
        %v1421 = vrcp.pop %v1397
        %v1422 = vrcp.pop %v1399
        %v1423 = vrcp.pop %v1401
        %v1424 = vrcp.pop %v1403
        %v1425 = vrcp.pop %v1405
        %v1426 = vrcp.pop %v1407
        %v1427 = vrcp.pop %v1409
        %v1428 = vrcp.pop %v1411
        %v1429 = vrcp.pop %v1413
        %v1430 = vmul.f32 %v1351, %v1414
        %v1431 = vmul.f32 %v1353, %v1415
        %v1432 = vmul.f32 %v1355, %v1416
        %v1433 = vmul.f32 %v1357, %v1417
        %v1434 = vmul.f32 %v1359, %v1418
        %v1435 = vmul.f32 %v1361, %v1419
        %v1436 = vmul.f32 %v1363, %v1420
        %v1437 = vmul.f32 %v1365, %v1421
        %v1438 = vmul.f32 %v1367, %v1422
        %v1439 = vmul.f32 %v1369, %v1423
        %v1440 = vmul.f32 %v1371, %v1424
        %v1441 = vmul.f32 %v1373, %v1425
        %v1442 = vmul.f32 %v1375, %v1426
        %v1443 = vmul.f32 %v1377, %v1427
        %v1444 = vmul.f32 %v1379, %v1428
        %v1445 = vmul.f32 %v1381, %v1429
        %v1446 = vpack.c.bf16 %v1431, %v1430
        %v1447 = vpack.c.bf16 %v1433, %v1432
        %v1448 = vpack.c.bf16 %v1435, %v1434
        %v1449 = vpack.c.bf16 %v1437, %v1436
        %v1450 = vpack.c.bf16 %v1439, %v1438
        %v1451 = vpack.c.bf16 %v1441, %v1440
        %v1452 = vpack.c.bf16 %v1443, %v1442
        %v1453 = vpack.c.bf16 %v1445, %v1444
        %v1462 = vunpack.c.l.b16 %v1446
        %v1463 = vunpack.c.h.b16 %v1446
        %v1464 = vunpack.c.l.b16 %v1447
        %v1465 = vunpack.c.h.b16 %v1447
        %v1466 = vunpack.c.l.b16 %v1448
        %v1467 = vunpack.c.h.b16 %v1448
        %v1468 = vunpack.c.l.b16 %v1449
        %v1469 = vunpack.c.h.b16 %v1449
        %v1470 = vunpack.c.l.b16 %v1450
        %v1471 = vunpack.c.h.b16 %v1450
        %v1472 = vunpack.c.l.b16 %v1451
        %v1473 = vunpack.c.h.b16 %v1451
        %v1474 = vunpack.c.l.b16 %v1452
        %v1475 = vunpack.c.h.b16 %v1452
        %v1476 = vunpack.c.l.b16 %v1453
        %v1477 = vunpack.c.h.b16 %v1453
        %v1478 = vpack.c.b16 %v1462, %v1462
        %v1479 = vpack.c.b16 %v1463, %v1463
        %v1480 = vpack.c.b16 %v1464, %v1464
        %v1481 = vpack.c.b16 %v1465, %v1465
        %v1482 = vpack.c.b16 %v1466, %v1466
        %v1483 = vpack.c.b16 %v1467, %v1467
        %v1484 = vpack.c.b16 %v1468, %v1468
        %v1485 = vpack.c.b16 %v1469, %v1469
        %v1486 = vpack.c.b16 %v1470, %v1470
        %v1487 = vpack.c.b16 %v1471, %v1471
        %v1488 = vpack.c.b16 %v1472, %v1472
        %v1489 = vpack.c.b16 %v1473, %v1473
        %v1490 = vpack.c.b16 %v1474, %v1474
        %v1491 = vpack.c.b16 %v1475, %v1475
        %v1492 = vpack.c.b16 %v1476, %v1476
        %v1493 = vpack.c.b16 %v1477, %v1477
        %s1510 = scalar_lea.vmem %s266, 64 [#allocation3]
        %1511 = vst [vmem:[%s1510] sm:$0xf] %v1478
        %1512 = vst [vmem:[%s1510 + $0x4] sm:$0xf] %v1479
        %1513 = vst [vmem:[%s1510 + $0x8] sm:$0xf] %v1480
        %1514 = vst [vmem:[%s1510 + $0xc] sm:$0xf] %v1481
        %1515 = vst [vmem:[%s1510 + $0x10] sm:$0xf] %v1482
        %1516 = vst [vmem:[%s1510 + $0x14] sm:$0xf] %v1483
        %1517 = vst [vmem:[%s1510 + $0x18] sm:$0xf] %v1484
        %1518 = vst [vmem:[%s1510 + $0x1c] sm:$0xf] %v1485
        %1519 = vst [vmem:[%s1510 + $0x20] sm:$0xf] %v1486
        %1520 = vst [vmem:[%s1510 + $0x24] sm:$0xf] %v1487
        %1521 = vst [vmem:[%s1510 + $0x28] sm:$0xf] %v1488
        %1522 = vst [vmem:[%s1510 + $0x2c] sm:$0xf] %v1489
        %1523 = vst [vmem:[%s1510 + $0x30] sm:$0xf] %v1490
        %1524 = vst [vmem:[%s1510 + $0x34] sm:$0xf] %v1491
        %1525 = vst [vmem:[%s1510 + $0x38] sm:$0xf] %v1492
        %1526 = vst [vmem:[%s1510 + $0x3c] sm:$0xf] %v1493
        %1527 = vrot.lane.b32.xlu0 %v487, 56
        %v1528 = vpop.permute.xlu0 %1527
        %1529 = vrot.lane.b32.xlu0 %v488, 56
        %v1530 = vpop.permute.xlu0 %1529
        %1531 = vrot.lane.b32.xlu0 %v489, 56
        %v1532 = vpop.permute.xlu0 %1531
        %1533 = vrot.lane.b32.xlu0 %v490, 56
        %v1534 = vpop.permute.xlu0 %1533
        %1535 = vrot.lane.b32.xlu0 %v491, 56
        %v1536 = vpop.permute.xlu0 %1535
        %1537 = vrot.lane.b32.xlu0 %v492, 56
        %v1538 = vpop.permute.xlu0 %1537
        %1539 = vrot.lane.b32.xlu0 %v493, 56
        %v1540 = vpop.permute.xlu0 %1539
        %1541 = vrot.lane.b32.xlu0 %v494, 56
        %v1542 = vpop.permute.xlu0 %1541
        %1551 = vmatprep.subr.bf16.mxu0 0
        %1552 = vmatpush1.bf16.msra.mxu0 %v1542
        %1553 = vmatprep.subr.bf16.mxu0 0
        %1554 = vmatpush1.bf16.msra.mxu0 %v1540
        %1555 = vmatprep.subr.bf16.mxu0 0
        %1556 = vmatpush1.bf16.msra.mxu0 %v1538
        %1557 = vmatprep.subr.bf16.mxu0 0
        %1558 = vmatpush1.bf16.msra.mxu0 %v1536
        %1559 = vmatprep.subr.bf16.mxu0 0
        %1560 = vmatpush1.bf16.msra.mxu0 %v1534
        %1561 = vmatprep.subr.bf16.mxu0 0
        %1562 = vmatpush1.bf16.msra.mxu0 %v1532
        %1563 = vmatprep.subr.bf16.mxu0 0
        %1564 = vmatpush1.bf16.msra.mxu0 %v1530
        %1565 = vmatprep.subr.bf16.mxu0 0
        %1566 = vmatpush1.bf16.msra.mxu0 %v1528
        %1567 = vmatprep.subr.bf16.mxu0 0
        %1568 = vmatpush2.bf16.msra.mxu0 0
        %1569 = vmatprep.subr.bf16.mxu0 0
        %1570 = vmatpush2.bf16.msra.mxu0 0
        %1571 = vmatprep.subr.bf16.mxu0 0
        %1572 = vmatpush2.bf16.msra.mxu0 0
        %1573 = vmatprep.subr.bf16.mxu0 0
        %1574 = vmatpush2.bf16.msra.mxu0 0
        %1575 = vmatprep.subr.bf16.mxu0 0
        %1576 = vmatpush2.bf16.msra.mxu0 0
        %1577 = vmatprep.subr.bf16.mxu0 0
        %1578 = vmatpush2.bf16.msra.mxu0 0
        %1579 = vmatprep.subr.bf16.mxu0 0
        %1580 = vmatpush2.bf16.msra.mxu0 0
        %1581 = vmatprep.subr.bf16.mxu0 0
        %1582 = vmatpush2.bf16.msra.mxu0 0
        %1583 = vmatprep.mubr.bf16.mxu0 0
        %1584 = vmatmul.mubr.bf16.gmra.mxu0 %v1446
        %v1585 = vpop.f32.mrf.mxu0
        %v1586 = vadd.f32 0.0, %v1585
        %v1587 = vpop.f32.mrf.mxu0
        %v1588 = vpop.f32.mrf.mxu0
        %v1589 = vadd.f32 0.0, %v1588
        %v1590 = vpop.f32.mrf.mxu0
        %1591 = vmatprep.mubr.bf16.mxu0 0
        %1592 = vmatmul.mubr.bf16.gmra.mxu0 %v1447
        %v1593 = vpop.f32.mrf.mxu0
        %v1594 = vadd.f32 0.0, %v1593
        %v1595 = vpop.f32.mrf.mxu0
        %v1596 = vpop.f32.mrf.mxu0
        %v1597 = vadd.f32 0.0, %v1596
        %v1598 = vpop.f32.mrf.mxu0
        %1599 = vmatprep.mubr.bf16.mxu0 0
        %1600 = vmatmul.mubr.bf16.gmra.mxu0 %v1448
        %v1601 = vpop.f32.mrf.mxu0
        %v1602 = vadd.f32 0.0, %v1601
        %v1603 = vpop.f32.mrf.mxu0
        %v1604 = vpop.f32.mrf.mxu0
        %v1605 = vadd.f32 0.0, %v1604
        %v1606 = vpop.f32.mrf.mxu0
        %1607 = vmatprep.mubr.bf16.mxu0 0
        %1608 = vmatmul.mubr.bf16.gmra.mxu0 %v1449
        %v1609 = vpop.f32.mrf.mxu0
        %v1610 = vadd.f32 0.0, %v1609
        %v1611 = vpop.f32.mrf.mxu0
        %v1612 = vpop.f32.mrf.mxu0
        %v1613 = vadd.f32 0.0, %v1612
        %v1614 = vpop.f32.mrf.mxu0
        %1615 = vmatprep.mubr.bf16.mxu0 0
        %1616 = vmatmul.mubr.bf16.gmra.mxu0 %v1450
        %v1617 = vpop.f32.mrf.mxu0
        %v1618 = vadd.f32 0.0, %v1617
        %v1619 = vpop.f32.mrf.mxu0
        %v1620 = vpop.f32.mrf.mxu0
        %v1621 = vadd.f32 0.0, %v1620
        %v1622 = vpop.f32.mrf.mxu0
        %1623 = vmatprep.mubr.bf16.mxu0 0
        %1624 = vmatmul.mubr.bf16.gmra.mxu0 %v1451
        %v1625 = vpop.f32.mrf.mxu0
        %v1626 = vadd.f32 0.0, %v1625
        %v1627 = vpop.f32.mrf.mxu0
        %v1628 = vpop.f32.mrf.mxu0
        %v1629 = vadd.f32 0.0, %v1628
        %v1630 = vpop.f32.mrf.mxu0
        %1631 = vmatprep.mubr.bf16.mxu0 0
        %1632 = vmatmul.mubr.bf16.gmra.mxu0 %v1452
        %v1633 = vpop.f32.mrf.mxu0
        %v1634 = vadd.f32 0.0, %v1633
        %v1635 = vpop.f32.mrf.mxu0
        %v1636 = vpop.f32.mrf.mxu0
        %v1637 = vadd.f32 0.0, %v1636
        %v1638 = vpop.f32.mrf.mxu0
        %1639 = vmatprep.mubr.bf16.mxu0 0
        %1640 = vmatmul.mubr.bf16.gmra.mxu0 %v1453
        %v1641 = vpop.f32.mrf.mxu0
        %v1642 = vadd.f32 0.0, %v1641
        %v1643 = vpop.f32.mrf.mxu0
        %v1644 = vpop.f32.mrf.mxu0
        %v1645 = vadd.f32 0.0, %v1644
        %v1646 = vpop.f32.mrf.mxu0
        %1647 = vdwg.mxu0
        %v1648 = vpack.c.bf16 %v1589, %v1586
        %v1649 = vpack.c.bf16 %v1597, %v1594
        %v1650 = vpack.c.bf16 %v1605, %v1602
        %v1651 = vpack.c.bf16 %v1613, %v1610
        %v1652 = vpack.c.bf16 %v1621, %v1618
        %v1653 = vpack.c.bf16 %v1629, %v1626
        %v1654 = vpack.c.bf16 %v1637, %v1634
        %v1655 = vpack.c.bf16 %v1645, %v1642
        %v1664 = vunpack.c.l.b16 %v1648
        %v1665 = vunpack.c.h.b16 %v1648
        %v1666 = vunpack.c.l.b16 %v1649
        %v1667 = vunpack.c.h.b16 %v1649
        %v1668 = vunpack.c.l.b16 %v1650
        %v1669 = vunpack.c.h.b16 %v1650
        %v1670 = vunpack.c.l.b16 %v1651
        %v1671 = vunpack.c.h.b16 %v1651
        %v1672 = vunpack.c.l.b16 %v1652
        %v1673 = vunpack.c.h.b16 %v1652
        %v1674 = vunpack.c.l.b16 %v1653
        %v1675 = vunpack.c.h.b16 %v1653
        %v1676 = vunpack.c.l.b16 %v1654
        %v1677 = vunpack.c.h.b16 %v1654
        %v1678 = vunpack.c.l.b16 %v1655
        %v1679 = vunpack.c.h.b16 %v1655
        %v1680 = vpack.c.b16 %v1664, %v1664
        %v1681 = vpack.c.b16 %v1665, %v1665
        %v1682 = vpack.c.b16 %v1666, %v1666
        %v1683 = vpack.c.b16 %v1667, %v1667
        %v1684 = vpack.c.b16 %v1668, %v1668
        %v1685 = vpack.c.b16 %v1669, %v1669
        %v1686 = vpack.c.b16 %v1670, %v1670
        %v1687 = vpack.c.b16 %v1671, %v1671
        %v1688 = vpack.c.b16 %v1672, %v1672
        %v1689 = vpack.c.b16 %v1673, %v1673
        %v1690 = vpack.c.b16 %v1674, %v1674
        %v1691 = vpack.c.b16 %v1675, %v1675
        %v1692 = vpack.c.b16 %v1676, %v1676
        %v1693 = vpack.c.b16 %v1677, %v1677
        %v1694 = vpack.c.b16 %v1678, %v1678
        %v1695 = vpack.c.b16 %v1679, %v1679
        %1696 = vrot.lane.b32.xlu0 %v1680, 8
        %v1697 = vpop.permute.xlu0 %1696
        %1698 = vrot.lane.b32.xlu0 %v1681, 8
        %v1699 = vpop.permute.xlu0 %1698
        %1700 = vrot.lane.b32.xlu0 %v1682, 8
        %v1701 = vpop.permute.xlu0 %1700
        %1702 = vrot.lane.b32.xlu0 %v1683, 8
        %v1703 = vpop.permute.xlu0 %1702
        %1704 = vrot.lane.b32.xlu0 %v1684, 8
        %v1705 = vpop.permute.xlu0 %1704
        %1706 = vrot.lane.b32.xlu0 %v1685, 8
        %v1707 = vpop.permute.xlu0 %1706
        %1708 = vrot.lane.b32.xlu0 %v1686, 8
        %v1709 = vpop.permute.xlu0 %1708
        %1710 = vrot.lane.b32.xlu0 %v1687, 8
        %v1711 = vpop.permute.xlu0 %1710
        %1712 = vrot.lane.b32.xlu0 %v1688, 8
        %v1713 = vpop.permute.xlu0 %1712
        %1714 = vrot.lane.b32.xlu0 %v1689, 8
        %v1715 = vpop.permute.xlu0 %1714
        %1716 = vrot.lane.b32.xlu0 %v1690, 8
        %v1717 = vpop.permute.xlu0 %1716
        %1718 = vrot.lane.b32.xlu0 %v1691, 8
        %v1719 = vpop.permute.xlu0 %1718
        %1720 = vrot.lane.b32.xlu0 %v1692, 8
        %v1721 = vpop.permute.xlu0 %1720
        %1722 = vrot.lane.b32.xlu0 %v1693, 8
        %v1723 = vpop.permute.xlu0 %1722
        %1724 = vrot.lane.b32.xlu0 %v1694, 8
        %v1725 = vpop.permute.xlu0 %1724
        %1726 = vrot.lane.b32.xlu0 %v1695, 8
        %v1727 = vpop.permute.xlu0 %1726
        %vm1744 = vcmask 126016
        %1745 = vst.msk [vmem:[#allocation2] sm:$0xf] %vm1744, %v1697
        %1746 = vst.msk [vmem:[#allocation2 + $0x4] sm:$0xf] %vm1744, %v1699
        %1747 = vst.msk [vmem:[#allocation2 + $0x8] sm:$0xf] %vm1744, %v1701
        %1748 = vst.msk [vmem:[#allocation2 + $0xc] sm:$0xf] %vm1744, %v1703
        %1749 = vst.msk [vmem:[#allocation2 + $0x10] sm:$0xf] %vm1744, %v1705
        %1750 = vst.msk [vmem:[#allocation2 + $0x14] sm:$0xf] %vm1744, %v1707
        %1751 = vst.msk [vmem:[#allocation2 + $0x18] sm:$0xf] %vm1744, %v1709
        %1752 = vst.msk [vmem:[#allocation2 + $0x1c] sm:$0xf] %vm1744, %v1711
        %1753 = vst.msk [vmem:[#allocation2 + $0x20] sm:$0xf] %vm1744, %v1713
        %1754 = vst.msk [vmem:[#allocation2 + $0x24] sm:$0xf] %vm1744, %v1715
        %1755 = vst.msk [vmem:[#allocation2 + $0x28] sm:$0xf] %vm1744, %v1717
        %1756 = vst.msk [vmem:[#allocation2 + $0x2c] sm:$0xf] %vm1744, %v1719
        %1757 = vst.msk [vmem:[#allocation2 + $0x30] sm:$0xf] %vm1744, %v1721
        %1758 = vst.msk [vmem:[#allocation2 + $0x34] sm:$0xf] %vm1744, %v1723
        %1759 = vst.msk [vmem:[#allocation2 + $0x38] sm:$0xf] %vm1744, %v1725
        %1760 = vst.msk [vmem:[#allocation2 + $0x3c] sm:$0xf] %vm1744, %v1727
        %1761 = vrot.lane.b32.xlu0 %v487, 112
        %v1762 = vpop.permute.xlu0 %1761
        %1763 = vrot.lane.b32.xlu0 %v488, 112
        %v1764 = vpop.permute.xlu0 %1763
        %1765 = vrot.lane.b32.xlu0 %v489, 112
        %v1766 = vpop.permute.xlu0 %1765
        %1767 = vrot.lane.b32.xlu0 %v490, 112
        %v1768 = vpop.permute.xlu0 %1767
        %1769 = vrot.lane.b32.xlu0 %v491, 112
        %v1770 = vpop.permute.xlu0 %1769
        %1771 = vrot.lane.b32.xlu0 %v492, 112
        %v1772 = vpop.permute.xlu0 %1771
        %1773 = vrot.lane.b32.xlu0 %v493, 112
        %v1774 = vpop.permute.xlu0 %1773
        %1775 = vrot.lane.b32.xlu0 %v494, 112
        %v1776 = vpop.permute.xlu0 %1775
        %1777 = vrot.lane.b32.xlu0 %v487, 80
        %v1778 = vpop.permute.xlu0 %1777
        %1779 = vrot.lane.b32.xlu0 %v488, 80
        %v1780 = vpop.permute.xlu0 %1779
        %1781 = vrot.lane.b32.xlu0 %v489, 80
        %v1782 = vpop.permute.xlu0 %1781
        %1783 = vrot.lane.b32.xlu0 %v490, 80
        %v1784 = vpop.permute.xlu0 %1783
        %1785 = vrot.lane.b32.xlu0 %v491, 80
        %v1786 = vpop.permute.xlu0 %1785
        %1787 = vrot.lane.b32.xlu0 %v492, 80
        %v1788 = vpop.permute.xlu0 %1787
        %1789 = vrot.lane.b32.xlu0 %v493, 80
        %v1790 = vpop.permute.xlu0 %1789
        %1791 = vrot.lane.b32.xlu0 %v494, 80
        %v1792 = vpop.permute.xlu0 %1791
        %v1794 = vsel %vm519, %v1762, 0
        %v1797 = vsel %vm519, %v1764, 0
        %v1800 = vsel %vm519, %v1766, 0
        %v1803 = vsel %vm519, %v1768, 0
        %v1806 = vsel %vm519, %v1770, 0
        %v1809 = vsel %vm519, %v1772, 0
        %v1812 = vsel %vm519, %v1774, 0
        %v1815 = vsel %vm519, %v1776, 0
        %v1818 = vsel %vm519, %v1778, 0
        %v1821 = vsel %vm519, %v1780, 0
        %v1824 = vsel %vm519, %v1782, 0
        %v1827 = vsel %vm519, %v1784, 0
        %v1830 = vsel %vm519, %v1786, 0
        %v1833 = vsel %vm519, %v1788, 0
        %v1836 = vsel %vm519, %v1790, 0
        %v1839 = vsel %vm519, %v1792, 0
        %1841 = vmatprep.subr.bf16.mxu0 0
        %1842 = vmatpush1.bf16.xpose.msra.mxu0 %v1839
        %1843 = vmatprep.subr.bf16.mxu0 0
        %1844 = vmatpush1.bf16.xpose.msra.mxu0 %v1836
        %1845 = vmatprep.subr.bf16.mxu0 0
        %1846 = vmatpush1.bf16.xpose.msra.mxu0 %v1833
        %1847 = vmatprep.subr.bf16.mxu0 0
        %1848 = vmatpush1.bf16.xpose.msra.mxu0 %v1830
        %1849 = vmatprep.subr.bf16.mxu0 0
        %1850 = vmatpush1.bf16.xpose.msra.mxu0 %v1827
        %1851 = vmatprep.subr.bf16.mxu0 0
        %1852 = vmatpush1.bf16.xpose.msra.mxu0 %v1824
        %1853 = vmatprep.subr.bf16.mxu0 0
        %1854 = vmatpush1.bf16.xpose.msra.mxu0 %v1821
        %1855 = vmatprep.subr.bf16.mxu0 0
        %1856 = vmatpush1.bf16.xpose.msra.mxu0 %v1818
        %1857 = vmatprep.subr.bf16.mxu0 0
        %1858 = vmatpush2.bf16.xpose.msra.mxu0 0
        %1859 = vmatprep.subr.bf16.mxu0 0
        %1860 = vmatpush2.bf16.xpose.msra.mxu0 0
        %1861 = vmatprep.subr.bf16.mxu0 0
        %1862 = vmatpush2.bf16.xpose.msra.mxu0 0
        %1863 = vmatprep.subr.bf16.mxu0 0
        %1864 = vmatpush2.bf16.xpose.msra.mxu0 0
        %1865 = vmatprep.subr.bf16.mxu0 0
        %1866 = vmatpush2.bf16.xpose.msra.mxu0 0
        %1867 = vmatprep.subr.bf16.mxu0 0
        %1868 = vmatpush2.bf16.xpose.msra.mxu0 0
        %1869 = vmatprep.subr.bf16.mxu0 0
        %1870 = vmatpush2.bf16.xpose.msra.mxu0 0
        %1871 = vmatprep.subr.bf16.mxu0 0
        %1872 = vmatpush2.bf16.xpose.msra.mxu0 0
        %1873 = vmatprep.mubr.bf16.mxu0 0
        %1874 = vmatmul.mubr.bf16.gmra.mxu0 %v1794
        %v1875 = vpop.f32.mrf.mxu0
        %v1876 = vadd.f32 0.0, %v1875
        %v1877 = vpop.f32.mrf.mxu0
        %v1878 = vpop.f32.mrf.mxu0
        %v1879 = vadd.f32 0.0, %v1878
        %v1880 = vpop.f32.mrf.mxu0
        %1881 = vmatprep.mubr.bf16.mxu0 0
        %1882 = vmatmul.mubr.bf16.gmra.mxu0 %v1797
        %v1883 = vpop.f32.mrf.mxu0
        %v1884 = vadd.f32 0.0, %v1883
        %v1885 = vpop.f32.mrf.mxu0
        %v1886 = vpop.f32.mrf.mxu0
        %v1887 = vadd.f32 0.0, %v1886
        %v1888 = vpop.f32.mrf.mxu0
        %1889 = vmatprep.mubr.bf16.mxu0 0
        %1890 = vmatmul.mubr.bf16.gmra.mxu0 %v1800
        %v1891 = vpop.f32.mrf.mxu0
        %v1892 = vadd.f32 0.0, %v1891
        %v1893 = vpop.f32.mrf.mxu0
        %v1894 = vpop.f32.mrf.mxu0
        %v1895 = vadd.f32 0.0, %v1894
        %v1896 = vpop.f32.mrf.mxu0
        %1897 = vmatprep.mubr.bf16.mxu0 0
        %1898 = vmatmul.mubr.bf16.gmra.mxu0 %v1803
        %v1899 = vpop.f32.mrf.mxu0
        %v1900 = vadd.f32 0.0, %v1899
        %v1901 = vpop.f32.mrf.mxu0
        %v1902 = vpop.f32.mrf.mxu0
        %v1903 = vadd.f32 0.0, %v1902
        %v1904 = vpop.f32.mrf.mxu0
        %1905 = vmatprep.mubr.bf16.mxu0 0
        %1906 = vmatmul.mubr.bf16.gmra.mxu0 %v1806
        %v1907 = vpop.f32.mrf.mxu0
        %v1908 = vadd.f32 0.0, %v1907
        %v1909 = vpop.f32.mrf.mxu0
        %v1910 = vpop.f32.mrf.mxu0
        %v1911 = vadd.f32 0.0, %v1910
        %v1912 = vpop.f32.mrf.mxu0
        %1913 = vmatprep.mubr.bf16.mxu0 0
        %1914 = vmatmul.mubr.bf16.gmra.mxu0 %v1809
        %v1915 = vpop.f32.mrf.mxu0
        %v1916 = vadd.f32 0.0, %v1915
        %v1917 = vpop.f32.mrf.mxu0
        %v1918 = vpop.f32.mrf.mxu0
        %v1919 = vadd.f32 0.0, %v1918
        %v1920 = vpop.f32.mrf.mxu0
        %1921 = vmatprep.mubr.bf16.mxu0 0
        %1922 = vmatmul.mubr.bf16.gmra.mxu0 %v1812
        %v1923 = vpop.f32.mrf.mxu0
        %v1924 = vadd.f32 0.0, %v1923
        %v1925 = vpop.f32.mrf.mxu0
        %v1926 = vpop.f32.mrf.mxu0
        %v1927 = vadd.f32 0.0, %v1926
        %v1928 = vpop.f32.mrf.mxu0
        %1929 = vmatprep.mubr.bf16.mxu0 0
        %1930 = vmatmul.mubr.bf16.gmra.mxu0 %v1815
        %v1931 = vpop.f32.mrf.mxu0
        %v1932 = vadd.f32 0.0, %v1931
        %v1933 = vpop.f32.mrf.mxu0
        %v1934 = vpop.f32.mrf.mxu0
        %v1935 = vadd.f32 0.0, %v1934
        %v1936 = vpop.f32.mrf.mxu0
        %1937 = vdwg.mxu0
        %v1938 = vsel %vm666, %v1876, -1e+30
        %v1939 = vsel %vm666, %v1879, -1e+30
        %v1940 = vsel %vm666, %v1884, -1e+30
        %v1941 = vsel %vm666, %v1887, -1e+30
        %v1942 = vsel %vm666, %v1892, -1e+30
        %v1943 = vsel %vm666, %v1895, -1e+30
        %v1944 = vsel %vm666, %v1900, -1e+30
        %v1945 = vsel %vm666, %v1903, -1e+30
        %v1946 = vsel %vm666, %v1908, -1e+30
        %v1947 = vsel %vm666, %v1911, -1e+30
        %v1948 = vsel %vm666, %v1916, -1e+30
        %v1949 = vsel %vm666, %v1919, -1e+30
        %v1950 = vsel %vm666, %v1924, -1e+30
        %v1951 = vsel %vm666, %v1927, -1e+30
        %v1952 = vsel %vm666, %v1932, -1e+30
        %v1953 = vsel %vm666, %v1935, -1e+30
        %1954 = vmax.xlane.f32.xlu0 %v1938
        %v1955 = vpop.xlane.xlu0 %1954
        %1956 = vmax.xlane.f32.xlu0 %v1939
        %v1957 = vpop.xlane.xlu0 %1956
        %1958 = vmax.xlane.f32.xlu0 %v1940
        %v1959 = vpop.xlane.xlu0 %1958
        %1960 = vmax.xlane.f32.xlu0 %v1941
        %v1961 = vpop.xlane.xlu0 %1960
        %1962 = vmax.xlane.f32.xlu0 %v1942
        %v1963 = vpop.xlane.xlu0 %1962
        %1964 = vmax.xlane.f32.xlu0 %v1943
        %v1965 = vpop.xlane.xlu0 %1964
        %1966 = vmax.xlane.f32.xlu0 %v1944
        %v1967 = vpop.xlane.xlu0 %1966
        %1968 = vmax.xlane.f32.xlu0 %v1945
        %v1969 = vpop.xlane.xlu0 %1968
        %1970 = vmax.xlane.f32.xlu0 %v1946
        %v1971 = vpop.xlane.xlu0 %1970
        %1972 = vmax.xlane.f32.xlu0 %v1947
        %v1973 = vpop.xlane.xlu0 %1972
        %1974 = vmax.xlane.f32.xlu0 %v1948
        %v1975 = vpop.xlane.xlu0 %1974
        %1976 = vmax.xlane.f32.xlu0 %v1949
        %v1977 = vpop.xlane.xlu0 %1976
        %1978 = vmax.xlane.f32.xlu0 %v1950
        %v1979 = vpop.xlane.xlu0 %1978
        %1980 = vmax.xlane.f32.xlu0 %v1951
        %v1981 = vpop.xlane.xlu0 %1980
        %1982 = vmax.xlane.f32.xlu0 %v1952
        %v1983 = vpop.xlane.xlu0 %1982
        %1984 = vmax.xlane.f32.xlu0 %v1953
        %v1985 = vpop.xlane.xlu0 %1984
        %v1986 = vsub.f32 %v1938, %v1955
        %v1987 = vsub.f32 %v1939, %v1957
        %v1988 = vsub.f32 %v1940, %v1959
        %v1989 = vsub.f32 %v1941, %v1961
        %v1990 = vsub.f32 %v1942, %v1963
        %v1991 = vsub.f32 %v1943, %v1965
        %v1992 = vsub.f32 %v1944, %v1967
        %v1993 = vsub.f32 %v1945, %v1969
        %v1994 = vsub.f32 %v1946, %v1971
        %v1995 = vsub.f32 %v1947, %v1973
        %v1996 = vsub.f32 %v1948, %v1975
        %v1997 = vsub.f32 %v1949, %v1977
        %v1998 = vsub.f32 %v1950, %v1979
        %v1999 = vsub.f32 %v1951, %v1981
        %v2000 = vsub.f32 %v1952, %v1983
        %v2001 = vsub.f32 %v1953, %v1985
        %v2002 = vmul.f32 %v1986, 1.442695
        %v2003 = vpow.pop %v2002
        %v2004 = vmul.f32 %v1987, 1.442695
        %v2005 = vpow.pop %v2004
        %v2006 = vmul.f32 %v1988, 1.442695
        %v2007 = vpow.pop %v2006
        %v2008 = vmul.f32 %v1989, 1.442695
        %v2009 = vpow.pop %v2008
        %v2010 = vmul.f32 %v1990, 1.442695
        %v2011 = vpow.pop %v2010
        %v2012 = vmul.f32 %v1991, 1.442695
        %v2013 = vpow.pop %v2012
        %v2014 = vmul.f32 %v1992, 1.442695
        %v2015 = vpow.pop %v2014
        %v2016 = vmul.f32 %v1993, 1.442695
        %v2017 = vpow.pop %v2016
        %v2018 = vmul.f32 %v1994, 1.442695
        %v2019 = vpow.pop %v2018
        %v2020 = vmul.f32 %v1995, 1.442695
        %v2021 = vpow.pop %v2020
        %v2022 = vmul.f32 %v1996, 1.442695
        %v2023 = vpow.pop %v2022
        %v2024 = vmul.f32 %v1997, 1.442695
        %v2025 = vpow.pop %v2024
        %v2026 = vmul.f32 %v1998, 1.442695
        %v2027 = vpow.pop %v2026
        %v2028 = vmul.f32 %v1999, 1.442695
        %v2029 = vpow.pop %v2028
        %v2030 = vmul.f32 %v2000, 1.442695
        %v2031 = vpow.pop %v2030
        %v2032 = vmul.f32 %v2001, 1.442695
        %v2033 = vpow.pop %v2032
        %2034 = vadd.xlane.f32.xlu0 %v2003
        %v2035 = vpop.xlane.xlu0 %2034
        %2036 = vadd.xlane.f32.xlu0 %v2005
        %v2037 = vpop.xlane.xlu0 %2036
        %2038 = vadd.xlane.f32.xlu0 %v2007
        %v2039 = vpop.xlane.xlu0 %2038
        %2040 = vadd.xlane.f32.xlu0 %v2009
        %v2041 = vpop.xlane.xlu0 %2040
        %2042 = vadd.xlane.f32.xlu0 %v2011
        %v2043 = vpop.xlane.xlu0 %2042
        %2044 = vadd.xlane.f32.xlu0 %v2013
        %v2045 = vpop.xlane.xlu0 %2044
        %2046 = vadd.xlane.f32.xlu0 %v2015
        %v2047 = vpop.xlane.xlu0 %2046
        %2048 = vadd.xlane.f32.xlu0 %v2017
        %v2049 = vpop.xlane.xlu0 %2048
        %2050 = vadd.xlane.f32.xlu0 %v2019
        %v2051 = vpop.xlane.xlu0 %2050
        %2052 = vadd.xlane.f32.xlu0 %v2021
        %v2053 = vpop.xlane.xlu0 %2052
        %2054 = vadd.xlane.f32.xlu0 %v2023
        %v2055 = vpop.xlane.xlu0 %2054
        %2056 = vadd.xlane.f32.xlu0 %v2025
        %v2057 = vpop.xlane.xlu0 %2056
        %2058 = vadd.xlane.f32.xlu0 %v2027
        %v2059 = vpop.xlane.xlu0 %2058
        %2060 = vadd.xlane.f32.xlu0 %v2029
        %v2061 = vpop.xlane.xlu0 %2060
        %2062 = vadd.xlane.f32.xlu0 %v2031
        %v2063 = vpop.xlane.xlu0 %2062
        %2064 = vadd.xlane.f32.xlu0 %v2033
        %v2065 = vpop.xlane.xlu0 %2064
        %v2066 = vrcp.pop %v2035
        %v2067 = vrcp.pop %v2037
        %v2068 = vrcp.pop %v2039
        %v2069 = vrcp.pop %v2041
        %v2070 = vrcp.pop %v2043
        %v2071 = vrcp.pop %v2045
        %v2072 = vrcp.pop %v2047
        %v2073 = vrcp.pop %v2049
        %v2074 = vrcp.pop %v2051
        %v2075 = vrcp.pop %v2053
        %v2076 = vrcp.pop %v2055
        %v2077 = vrcp.pop %v2057
        %v2078 = vrcp.pop %v2059
        %v2079 = vrcp.pop %v2061
        %v2080 = vrcp.pop %v2063
        %v2081 = vrcp.pop %v2065
        %v2082 = vmul.f32 %v2003, %v2066
        %v2083 = vmul.f32 %v2005, %v2067
        %v2084 = vmul.f32 %v2007, %v2068
        %v2085 = vmul.f32 %v2009, %v2069
        %v2086 = vmul.f32 %v2011, %v2070
        %v2087 = vmul.f32 %v2013, %v2071
        %v2088 = vmul.f32 %v2015, %v2072
        %v2089 = vmul.f32 %v2017, %v2073
        %v2090 = vmul.f32 %v2019, %v2074
        %v2091 = vmul.f32 %v2021, %v2075
        %v2092 = vmul.f32 %v2023, %v2076
        %v2093 = vmul.f32 %v2025, %v2077
        %v2094 = vmul.f32 %v2027, %v2078
        %v2095 = vmul.f32 %v2029, %v2079
        %v2096 = vmul.f32 %v2031, %v2080
        %v2097 = vmul.f32 %v2033, %v2081
        %v2098 = vpack.c.bf16 %v2083, %v2082
        %v2099 = vpack.c.bf16 %v2085, %v2084
        %v2100 = vpack.c.bf16 %v2087, %v2086
        %v2101 = vpack.c.bf16 %v2089, %v2088
        %v2102 = vpack.c.bf16 %v2091, %v2090
        %v2103 = vpack.c.bf16 %v2093, %v2092
        %v2104 = vpack.c.bf16 %v2095, %v2094
        %v2105 = vpack.c.bf16 %v2097, %v2096
        %v2114 = vunpack.c.l.b16 %v2098
        %v2115 = vunpack.c.h.b16 %v2098
        %v2116 = vunpack.c.l.b16 %v2099
        %v2117 = vunpack.c.h.b16 %v2099
        %v2118 = vunpack.c.l.b16 %v2100
        %v2119 = vunpack.c.h.b16 %v2100
        %v2120 = vunpack.c.l.b16 %v2101
        %v2121 = vunpack.c.h.b16 %v2101
        %v2122 = vunpack.c.l.b16 %v2102
        %v2123 = vunpack.c.h.b16 %v2102
        %v2124 = vunpack.c.l.b16 %v2103
        %v2125 = vunpack.c.h.b16 %v2103
        %v2126 = vunpack.c.l.b16 %v2104
        %v2127 = vunpack.c.h.b16 %v2104
        %v2128 = vunpack.c.l.b16 %v2105
        %v2129 = vunpack.c.h.b16 %v2105
        %v2130 = vpack.c.b16 %v2114, %v2114
        %v2131 = vpack.c.b16 %v2115, %v2115
        %v2132 = vpack.c.b16 %v2116, %v2116
        %v2133 = vpack.c.b16 %v2117, %v2117
        %v2134 = vpack.c.b16 %v2118, %v2118
        %v2135 = vpack.c.b16 %v2119, %v2119
        %v2136 = vpack.c.b16 %v2120, %v2120
        %v2137 = vpack.c.b16 %v2121, %v2121
        %v2138 = vpack.c.b16 %v2122, %v2122
        %v2139 = vpack.c.b16 %v2123, %v2123
        %v2140 = vpack.c.b16 %v2124, %v2124
        %v2141 = vpack.c.b16 %v2125, %v2125
        %v2142 = vpack.c.b16 %v2126, %v2126
        %v2143 = vpack.c.b16 %v2127, %v2127
        %v2144 = vpack.c.b16 %v2128, %v2128
        %v2145 = vpack.c.b16 %v2129, %v2129
        %s2162 = scalar_lea.vmem %s266, 128 [#allocation3]
        %2163 = vst [vmem:[%s2162] sm:$0xf] %v2130
        %2164 = vst [vmem:[%s2162 + $0x4] sm:$0xf] %v2131
        %2165 = vst [vmem:[%s2162 + $0x8] sm:$0xf] %v2132
        %2166 = vst [vmem:[%s2162 + $0xc] sm:$0xf] %v2133
        %2167 = vst [vmem:[%s2162 + $0x10] sm:$0xf] %v2134
        %2168 = vst [vmem:[%s2162 + $0x14] sm:$0xf] %v2135
        %2169 = vst [vmem:[%s2162 + $0x18] sm:$0xf] %v2136
        %2170 = vst [vmem:[%s2162 + $0x1c] sm:$0xf] %v2137
        %2171 = vst [vmem:[%s2162 + $0x20] sm:$0xf] %v2138
        %2172 = vst [vmem:[%s2162 + $0x24] sm:$0xf] %v2139
        %2173 = vst [vmem:[%s2162 + $0x28] sm:$0xf] %v2140
        %2174 = vst [vmem:[%s2162 + $0x2c] sm:$0xf] %v2141
        %2175 = vst [vmem:[%s2162 + $0x30] sm:$0xf] %v2142
        %2176 = vst [vmem:[%s2162 + $0x34] sm:$0xf] %v2143
        %2177 = vst [vmem:[%s2162 + $0x38] sm:$0xf] %v2144
        %2178 = vst [vmem:[%s2162 + $0x3c] sm:$0xf] %v2145
        %2179 = vrot.lane.b32.xlu0 %v487, 48
        %v2180 = vpop.permute.xlu0 %2179
        %2181 = vrot.lane.b32.xlu0 %v488, 48
        %v2182 = vpop.permute.xlu0 %2181
        %2183 = vrot.lane.b32.xlu0 %v489, 48
        %v2184 = vpop.permute.xlu0 %2183
        %2185 = vrot.lane.b32.xlu0 %v490, 48
        %v2186 = vpop.permute.xlu0 %2185
        %2187 = vrot.lane.b32.xlu0 %v491, 48
        %v2188 = vpop.permute.xlu0 %2187
        %2189 = vrot.lane.b32.xlu0 %v492, 48
        %v2190 = vpop.permute.xlu0 %2189
        %2191 = vrot.lane.b32.xlu0 %v493, 48
        %v2192 = vpop.permute.xlu0 %2191
        %2193 = vrot.lane.b32.xlu0 %v494, 48
        %v2194 = vpop.permute.xlu0 %2193
        %2203 = vmatprep.subr.bf16.mxu0 0
        %2204 = vmatpush1.bf16.msra.mxu0 %v2194
        %2205 = vmatprep.subr.bf16.mxu0 0
        %2206 = vmatpush1.bf16.msra.mxu0 %v2192
        %2207 = vmatprep.subr.bf16.mxu0 0
        %2208 = vmatpush1.bf16.msra.mxu0 %v2190
        %2209 = vmatprep.subr.bf16.mxu0 0
        %2210 = vmatpush1.bf16.msra.mxu0 %v2188
        %2211 = vmatprep.subr.bf16.mxu0 0
        %2212 = vmatpush1.bf16.msra.mxu0 %v2186
        %2213 = vmatprep.subr.bf16.mxu0 0
        %2214 = vmatpush1.bf16.msra.mxu0 %v2184
        %2215 = vmatprep.subr.bf16.mxu0 0
        %2216 = vmatpush1.bf16.msra.mxu0 %v2182
        %2217 = vmatprep.subr.bf16.mxu0 0
        %2218 = vmatpush1.bf16.msra.mxu0 %v2180
        %2219 = vmatprep.subr.bf16.mxu0 0
        %2220 = vmatpush2.bf16.msra.mxu0 0
        %2221 = vmatprep.subr.bf16.mxu0 0
        %2222 = vmatpush2.bf16.msra.mxu0 0
        %2223 = vmatprep.subr.bf16.mxu0 0
        %2224 = vmatpush2.bf16.msra.mxu0 0
        %2225 = vmatprep.subr.bf16.mxu0 0
        %2226 = vmatpush2.bf16.msra.mxu0 0
        %2227 = vmatprep.subr.bf16.mxu0 0
        %2228 = vmatpush2.bf16.msra.mxu0 0
        %2229 = vmatprep.subr.bf16.mxu0 0
        %2230 = vmatpush2.bf16.msra.mxu0 0
        %2231 = vmatprep.subr.bf16.mxu0 0
        %2232 = vmatpush2.bf16.msra.mxu0 0
        %2233 = vmatprep.subr.bf16.mxu0 0
        %2234 = vmatpush2.bf16.msra.mxu0 0
        %2235 = vmatprep.mubr.bf16.mxu0 0
        %2236 = vmatmul.mubr.bf16.gmra.mxu0 %v2098
        %v2237 = vpop.f32.mrf.mxu0
        %v2238 = vadd.f32 0.0, %v2237
        %v2239 = vpop.f32.mrf.mxu0
        %v2240 = vpop.f32.mrf.mxu0
        %v2241 = vadd.f32 0.0, %v2240
        %v2242 = vpop.f32.mrf.mxu0
        %2243 = vmatprep.mubr.bf16.mxu0 0
        %2244 = vmatmul.mubr.bf16.gmra.mxu0 %v2099
        %v2245 = vpop.f32.mrf.mxu0
        %v2246 = vadd.f32 0.0, %v2245
        %v2247 = vpop.f32.mrf.mxu0
        %v2248 = vpop.f32.mrf.mxu0
        %v2249 = vadd.f32 0.0, %v2248
        %v2250 = vpop.f32.mrf.mxu0
        %2251 = vmatprep.mubr.bf16.mxu0 0
        %2252 = vmatmul.mubr.bf16.gmra.mxu0 %v2100
        %v2253 = vpop.f32.mrf.mxu0
        %v2254 = vadd.f32 0.0, %v2253
        %v2255 = vpop.f32.mrf.mxu0
        %v2256 = vpop.f32.mrf.mxu0
        %v2257 = vadd.f32 0.0, %v2256
        %v2258 = vpop.f32.mrf.mxu0
        %2259 = vmatprep.mubr.bf16.mxu0 0
        %2260 = vmatmul.mubr.bf16.gmra.mxu0 %v2101
        %v2261 = vpop.f32.mrf.mxu0
        %v2262 = vadd.f32 0.0, %v2261
        %v2263 = vpop.f32.mrf.mxu0
        %v2264 = vpop.f32.mrf.mxu0
        %v2265 = vadd.f32 0.0, %v2264
        %v2266 = vpop.f32.mrf.mxu0
        %2267 = vmatprep.mubr.bf16.mxu0 0
        %2268 = vmatmul.mubr.bf16.gmra.mxu0 %v2102
        %v2269 = vpop.f32.mrf.mxu0
        %v2270 = vadd.f32 0.0, %v2269
        %v2271 = vpop.f32.mrf.mxu0
        %v2272 = vpop.f32.mrf.mxu0
        %v2273 = vadd.f32 0.0, %v2272
        %v2274 = vpop.f32.mrf.mxu0
        %2275 = vmatprep.mubr.bf16.mxu0 0
        %2276 = vmatmul.mubr.bf16.gmra.mxu0 %v2103
        %v2277 = vpop.f32.mrf.mxu0
        %v2278 = vadd.f32 0.0, %v2277
        %v2279 = vpop.f32.mrf.mxu0
        %v2280 = vpop.f32.mrf.mxu0
        %v2281 = vadd.f32 0.0, %v2280
        %v2282 = vpop.f32.mrf.mxu0
        %2283 = vmatprep.mubr.bf16.mxu0 0
        %2284 = vmatmul.mubr.bf16.gmra.mxu0 %v2104
        %v2285 = vpop.f32.mrf.mxu0
        %v2286 = vadd.f32 0.0, %v2285
        %v2287 = vpop.f32.mrf.mxu0
        %v2288 = vpop.f32.mrf.mxu0
        %v2289 = vadd.f32 0.0, %v2288
        %v2290 = vpop.f32.mrf.mxu0
        %2291 = vmatprep.mubr.bf16.mxu0 0
        %2292 = vmatmul.mubr.bf16.gmra.mxu0 %v2105
        %v2293 = vpop.f32.mrf.mxu0
        %v2294 = vadd.f32 0.0, %v2293
        %v2295 = vpop.f32.mrf.mxu0
        %v2296 = vpop.f32.mrf.mxu0
        %v2297 = vadd.f32 0.0, %v2296
        %v2298 = vpop.f32.mrf.mxu0
        %2299 = vdwg.mxu0
        %v2300 = vpack.c.bf16 %v2241, %v2238
        %v2301 = vpack.c.bf16 %v2249, %v2246
        %v2302 = vpack.c.bf16 %v2257, %v2254
        %v2303 = vpack.c.bf16 %v2265, %v2262
        %v2304 = vpack.c.bf16 %v2273, %v2270
        %v2305 = vpack.c.bf16 %v2281, %v2278
        %v2306 = vpack.c.bf16 %v2289, %v2286
        %v2307 = vpack.c.bf16 %v2297, %v2294
        %v2316 = vunpack.c.l.b16 %v2300
        %v2317 = vunpack.c.h.b16 %v2300
        %v2318 = vunpack.c.l.b16 %v2301
        %v2319 = vunpack.c.h.b16 %v2301
        %v2320 = vunpack.c.l.b16 %v2302
        %v2321 = vunpack.c.h.b16 %v2302
        %v2322 = vunpack.c.l.b16 %v2303
        %v2323 = vunpack.c.h.b16 %v2303
        %v2324 = vunpack.c.l.b16 %v2304
        %v2325 = vunpack.c.h.b16 %v2304
        %v2326 = vunpack.c.l.b16 %v2305
        %v2327 = vunpack.c.h.b16 %v2305
        %v2328 = vunpack.c.l.b16 %v2306
        %v2329 = vunpack.c.h.b16 %v2306
        %v2330 = vunpack.c.l.b16 %v2307
        %v2331 = vunpack.c.h.b16 %v2307
        %v2332 = vpack.c.b16 %v2316, %v2316
        %v2333 = vpack.c.b16 %v2317, %v2317
        %v2334 = vpack.c.b16 %v2318, %v2318
        %v2335 = vpack.c.b16 %v2319, %v2319
        %v2336 = vpack.c.b16 %v2320, %v2320
        %v2337 = vpack.c.b16 %v2321, %v2321
        %v2338 = vpack.c.b16 %v2322, %v2322
        %v2339 = vpack.c.b16 %v2323, %v2323
        %v2340 = vpack.c.b16 %v2324, %v2324
        %v2341 = vpack.c.b16 %v2325, %v2325
        %v2342 = vpack.c.b16 %v2326, %v2326
        %v2343 = vpack.c.b16 %v2327, %v2327
        %v2344 = vpack.c.b16 %v2328, %v2328
        %v2345 = vpack.c.b16 %v2329, %v2329
        %v2346 = vpack.c.b16 %v2330, %v2330
        %v2347 = vpack.c.b16 %v2331, %v2331
        %2348 = vrot.lane.b32.xlu0 %v2332, 16
        %v2349 = vpop.permute.xlu0 %2348
        %2350 = vrot.lane.b32.xlu0 %v2333, 16
        %v2351 = vpop.permute.xlu0 %2350
        %2352 = vrot.lane.b32.xlu0 %v2334, 16
        %v2353 = vpop.permute.xlu0 %2352
        %2354 = vrot.lane.b32.xlu0 %v2335, 16
        %v2355 = vpop.permute.xlu0 %2354
        %2356 = vrot.lane.b32.xlu0 %v2336, 16
        %v2357 = vpop.permute.xlu0 %2356
        %2358 = vrot.lane.b32.xlu0 %v2337, 16
        %v2359 = vpop.permute.xlu0 %2358
        %2360 = vrot.lane.b32.xlu0 %v2338, 16
        %v2361 = vpop.permute.xlu0 %2360
        %2362 = vrot.lane.b32.xlu0 %v2339, 16
        %v2363 = vpop.permute.xlu0 %2362
        %2364 = vrot.lane.b32.xlu0 %v2340, 16
        %v2365 = vpop.permute.xlu0 %2364
        %2366 = vrot.lane.b32.xlu0 %v2341, 16
        %v2367 = vpop.permute.xlu0 %2366
        %2368 = vrot.lane.b32.xlu0 %v2342, 16
        %v2369 = vpop.permute.xlu0 %2368
        %2370 = vrot.lane.b32.xlu0 %v2343, 16
        %v2371 = vpop.permute.xlu0 %2370
        %2372 = vrot.lane.b32.xlu0 %v2344, 16
        %v2373 = vpop.permute.xlu0 %2372
        %2374 = vrot.lane.b32.xlu0 %v2345, 16
        %v2375 = vpop.permute.xlu0 %2374
        %2376 = vrot.lane.b32.xlu0 %v2346, 16
        %v2377 = vpop.permute.xlu0 %2376
        %2378 = vrot.lane.b32.xlu0 %v2347, 16
        %v2379 = vpop.permute.xlu0 %2378
        %vm2396 = vcmask 191616
        %2397 = vst.msk [vmem:[#allocation2] sm:$0xf] %vm2396, %v2349
        %2398 = vst.msk [vmem:[#allocation2 + $0x4] sm:$0xf] %vm2396, %v2351
        %2399 = vst.msk [vmem:[#allocation2 + $0x8] sm:$0xf] %vm2396, %v2353
        %2400 = vst.msk [vmem:[#allocation2 + $0xc] sm:$0xf] %vm2396, %v2355
        %2401 = vst.msk [vmem:[#allocation2 + $0x10] sm:$0xf] %vm2396, %v2357
        %2402 = vst.msk [vmem:[#allocation2 + $0x14] sm:$0xf] %vm2396, %v2359
        %2403 = vst.msk [vmem:[#allocation2 + $0x18] sm:$0xf] %vm2396, %v2361
        %2404 = vst.msk [vmem:[#allocation2 + $0x1c] sm:$0xf] %vm2396, %v2363
        %2405 = vst.msk [vmem:[#allocation2 + $0x20] sm:$0xf] %vm2396, %v2365
        %2406 = vst.msk [vmem:[#allocation2 + $0x24] sm:$0xf] %vm2396, %v2367
        %2407 = vst.msk [vmem:[#allocation2 + $0x28] sm:$0xf] %vm2396, %v2369
        %2408 = vst.msk [vmem:[#allocation2 + $0x2c] sm:$0xf] %vm2396, %v2371
        %2409 = vst.msk [vmem:[#allocation2 + $0x30] sm:$0xf] %vm2396, %v2373
        %2410 = vst.msk [vmem:[#allocation2 + $0x34] sm:$0xf] %vm2396, %v2375
        %2411 = vst.msk [vmem:[#allocation2 + $0x38] sm:$0xf] %vm2396, %v2377
        %2412 = vst.msk [vmem:[#allocation2 + $0x3c] sm:$0xf] %vm2396, %v2379
        %2413 = vrot.lane.b32.xlu0 %v487, 104
        %v2414 = vpop.permute.xlu0 %2413
        %2415 = vrot.lane.b32.xlu0 %v488, 104
        %v2416 = vpop.permute.xlu0 %2415
        %2417 = vrot.lane.b32.xlu0 %v489, 104
        %v2418 = vpop.permute.xlu0 %2417
        %2419 = vrot.lane.b32.xlu0 %v490, 104
        %v2420 = vpop.permute.xlu0 %2419
        %2421 = vrot.lane.b32.xlu0 %v491, 104
        %v2422 = vpop.permute.xlu0 %2421
        %2423 = vrot.lane.b32.xlu0 %v492, 104
        %v2424 = vpop.permute.xlu0 %2423
        %2425 = vrot.lane.b32.xlu0 %v493, 104
        %v2426 = vpop.permute.xlu0 %2425
        %2427 = vrot.lane.b32.xlu0 %v494, 104
        %v2428 = vpop.permute.xlu0 %2427
        %2429 = vrot.lane.b32.xlu0 %v487, 72
        %v2430 = vpop.permute.xlu0 %2429
        %2431 = vrot.lane.b32.xlu0 %v488, 72
        %v2432 = vpop.permute.xlu0 %2431
        %2433 = vrot.lane.b32.xlu0 %v489, 72
        %v2434 = vpop.permute.xlu0 %2433
        %2435 = vrot.lane.b32.xlu0 %v490, 72
        %v2436 = vpop.permute.xlu0 %2435
        %2437 = vrot.lane.b32.xlu0 %v491, 72
        %v2438 = vpop.permute.xlu0 %2437
        %2439 = vrot.lane.b32.xlu0 %v492, 72
        %v2440 = vpop.permute.xlu0 %2439
        %2441 = vrot.lane.b32.xlu0 %v493, 72
        %v2442 = vpop.permute.xlu0 %2441
        %2443 = vrot.lane.b32.xlu0 %v494, 72
        %v2444 = vpop.permute.xlu0 %2443
        %v2446 = vsel %vm519, %v2414, 0
        %v2449 = vsel %vm519, %v2416, 0
        %v2452 = vsel %vm519, %v2418, 0
        %v2455 = vsel %vm519, %v2420, 0
        %v2458 = vsel %vm519, %v2422, 0
        %v2461 = vsel %vm519, %v2424, 0
        %v2464 = vsel %vm519, %v2426, 0
        %v2467 = vsel %vm519, %v2428, 0
        %v2470 = vsel %vm519, %v2430, 0
        %v2473 = vsel %vm519, %v2432, 0
        %v2476 = vsel %vm519, %v2434, 0
        %v2479 = vsel %vm519, %v2436, 0
        %v2482 = vsel %vm519, %v2438, 0
        %v2485 = vsel %vm519, %v2440, 0
        %v2488 = vsel %vm519, %v2442, 0
        %v2491 = vsel %vm519, %v2444, 0
        %2493 = vmatprep.subr.bf16.mxu0 0
        %2494 = vmatpush1.bf16.xpose.msra.mxu0 %v2491
        %2495 = vmatprep.subr.bf16.mxu0 0
        %2496 = vmatpush1.bf16.xpose.msra.mxu0 %v2488
        %2497 = vmatprep.subr.bf16.mxu0 0
        %2498 = vmatpush1.bf16.xpose.msra.mxu0 %v2485
        %2499 = vmatprep.subr.bf16.mxu0 0
        %2500 = vmatpush1.bf16.xpose.msra.mxu0 %v2482
        %2501 = vmatprep.subr.bf16.mxu0 0
        %2502 = vmatpush1.bf16.xpose.msra.mxu0 %v2479
        %2503 = vmatprep.subr.bf16.mxu0 0
        %2504 = vmatpush1.bf16.xpose.msra.mxu0 %v2476
        %2505 = vmatprep.subr.bf16.mxu0 0
        %2506 = vmatpush1.bf16.xpose.msra.mxu0 %v2473
        %2507 = vmatprep.subr.bf16.mxu0 0
        %2508 = vmatpush1.bf16.xpose.msra.mxu0 %v2470
        %2509 = vmatprep.subr.bf16.mxu0 0
        %2510 = vmatpush2.bf16.xpose.msra.mxu0 0
        %2511 = vmatprep.subr.bf16.mxu0 0
        %2512 = vmatpush2.bf16.xpose.msra.mxu0 0
        %2513 = vmatprep.subr.bf16.mxu0 0
        %2514 = vmatpush2.bf16.xpose.msra.mxu0 0
        %2515 = vmatprep.subr.bf16.mxu0 0
        %2516 = vmatpush2.bf16.xpose.msra.mxu0 0
        %2517 = vmatprep.subr.bf16.mxu0 0
        %2518 = vmatpush2.bf16.xpose.msra.mxu0 0
        %2519 = vmatprep.subr.bf16.mxu0 0
        %2520 = vmatpush2.bf16.xpose.msra.mxu0 0
        %2521 = vmatprep.subr.bf16.mxu0 0
        %2522 = vmatpush2.bf16.xpose.msra.mxu0 0
        %2523 = vmatprep.subr.bf16.mxu0 0
        %2524 = vmatpush2.bf16.xpose.msra.mxu0 0
        %2525 = vmatprep.mubr.bf16.mxu0 0
        %2526 = vmatmul.mubr.bf16.gmra.mxu0 %v2446
        %v2527 = vpop.f32.mrf.mxu0
        %v2528 = vadd.f32 0.0, %v2527
        %v2529 = vpop.f32.mrf.mxu0
        %v2530 = vpop.f32.mrf.mxu0
        %v2531 = vadd.f32 0.0, %v2530
        %v2532 = vpop.f32.mrf.mxu0
        %2533 = vmatprep.mubr.bf16.mxu0 0
        %2534 = vmatmul.mubr.bf16.gmra.mxu0 %v2449
        %v2535 = vpop.f32.mrf.mxu0
        %v2536 = vadd.f32 0.0, %v2535
        %v2537 = vpop.f32.mrf.mxu0
        %v2538 = vpop.f32.mrf.mxu0
        %v2539 = vadd.f32 0.0, %v2538
        %v2540 = vpop.f32.mrf.mxu0
        %2541 = vmatprep.mubr.bf16.mxu0 0
        %2542 = vmatmul.mubr.bf16.gmra.mxu0 %v2452
        %v2543 = vpop.f32.mrf.mxu0
        %v2544 = vadd.f32 0.0, %v2543
        %v2545 = vpop.f32.mrf.mxu0
        %v2546 = vpop.f32.mrf.mxu0
        %v2547 = vadd.f32 0.0, %v2546
        %v2548 = vpop.f32.mrf.mxu0
        %2549 = vmatprep.mubr.bf16.mxu0 0
        %2550 = vmatmul.mubr.bf16.gmra.mxu0 %v2455
        %v2551 = vpop.f32.mrf.mxu0
        %v2552 = vadd.f32 0.0, %v2551
        %v2553 = vpop.f32.mrf.mxu0
        %v2554 = vpop.f32.mrf.mxu0
        %v2555 = vadd.f32 0.0, %v2554
        %v2556 = vpop.f32.mrf.mxu0
        %2557 = vmatprep.mubr.bf16.mxu0 0
        %2558 = vmatmul.mubr.bf16.gmra.mxu0 %v2458
        %v2559 = vpop.f32.mrf.mxu0
        %v2560 = vadd.f32 0.0, %v2559
        %v2561 = vpop.f32.mrf.mxu0
        %v2562 = vpop.f32.mrf.mxu0
        %v2563 = vadd.f32 0.0, %v2562
        %v2564 = vpop.f32.mrf.mxu0
        %2565 = vmatprep.mubr.bf16.mxu0 0
        %2566 = vmatmul.mubr.bf16.gmra.mxu0 %v2461
        %v2567 = vpop.f32.mrf.mxu0
        %v2568 = vadd.f32 0.0, %v2567
        %v2569 = vpop.f32.mrf.mxu0
        %v2570 = vpop.f32.mrf.mxu0
        %v2571 = vadd.f32 0.0, %v2570
        %v2572 = vpop.f32.mrf.mxu0
        %2573 = vmatprep.mubr.bf16.mxu0 0
        %2574 = vmatmul.mubr.bf16.gmra.mxu0 %v2464
        %v2575 = vpop.f32.mrf.mxu0
        %v2576 = vadd.f32 0.0, %v2575
        %v2577 = vpop.f32.mrf.mxu0
        %v2578 = vpop.f32.mrf.mxu0
        %v2579 = vadd.f32 0.0, %v2578
        %v2580 = vpop.f32.mrf.mxu0
        %2581 = vmatprep.mubr.bf16.mxu0 0
        %2582 = vmatmul.mubr.bf16.gmra.mxu0 %v2467
        %v2583 = vpop.f32.mrf.mxu0
        %v2584 = vadd.f32 0.0, %v2583
        %v2585 = vpop.f32.mrf.mxu0
        %v2586 = vpop.f32.mrf.mxu0
        %v2587 = vadd.f32 0.0, %v2586
        %v2588 = vpop.f32.mrf.mxu0
        %2589 = vdwg.mxu0
        %v2590 = vsel %vm666, %v2528, -1e+30
        %v2591 = vsel %vm666, %v2531, -1e+30
        %v2592 = vsel %vm666, %v2536, -1e+30
        %v2593 = vsel %vm666, %v2539, -1e+30
        %v2594 = vsel %vm666, %v2544, -1e+30
        %v2595 = vsel %vm666, %v2547, -1e+30
        %v2596 = vsel %vm666, %v2552, -1e+30
        %v2597 = vsel %vm666, %v2555, -1e+30
        %v2598 = vsel %vm666, %v2560, -1e+30
        %v2599 = vsel %vm666, %v2563, -1e+30
        %v2600 = vsel %vm666, %v2568, -1e+30
        %v2601 = vsel %vm666, %v2571, -1e+30
        %v2602 = vsel %vm666, %v2576, -1e+30
        %v2603 = vsel %vm666, %v2579, -1e+30
        %v2604 = vsel %vm666, %v2584, -1e+30
        %v2605 = vsel %vm666, %v2587, -1e+30
        %2606 = vmax.xlane.f32.xlu0 %v2590
        %v2607 = vpop.xlane.xlu0 %2606
        %2608 = vmax.xlane.f32.xlu0 %v2591
        %v2609 = vpop.xlane.xlu0 %2608
        %2610 = vmax.xlane.f32.xlu0 %v2592
        %v2611 = vpop.xlane.xlu0 %2610
        %2612 = vmax.xlane.f32.xlu0 %v2593
        %v2613 = vpop.xlane.xlu0 %2612
        %2614 = vmax.xlane.f32.xlu0 %v2594
        %v2615 = vpop.xlane.xlu0 %2614
        %2616 = vmax.xlane.f32.xlu0 %v2595
        %v2617 = vpop.xlane.xlu0 %2616
        %2618 = vmax.xlane.f32.xlu0 %v2596
        %v2619 = vpop.xlane.xlu0 %2618
        %2620 = vmax.xlane.f32.xlu0 %v2597
        %v2621 = vpop.xlane.xlu0 %2620
        %2622 = vmax.xlane.f32.xlu0 %v2598
        %v2623 = vpop.xlane.xlu0 %2622
        %2624 = vmax.xlane.f32.xlu0 %v2599
        %v2625 = vpop.xlane.xlu0 %2624
        %2626 = vmax.xlane.f32.xlu0 %v2600
        %v2627 = vpop.xlane.xlu0 %2626
        %2628 = vmax.xlane.f32.xlu0 %v2601
        %v2629 = vpop.xlane.xlu0 %2628
        %2630 = vmax.xlane.f32.xlu0 %v2602
        %v2631 = vpop.xlane.xlu0 %2630
        %2632 = vmax.xlane.f32.xlu0 %v2603
        %v2633 = vpop.xlane.xlu0 %2632
        %2634 = vmax.xlane.f32.xlu0 %v2604
        %v2635 = vpop.xlane.xlu0 %2634
        %2636 = vmax.xlane.f32.xlu0 %v2605
        %v2637 = vpop.xlane.xlu0 %2636
        %v2638 = vsub.f32 %v2590, %v2607
        %v2639 = vsub.f32 %v2591, %v2609
        %v2640 = vsub.f32 %v2592, %v2611
        %v2641 = vsub.f32 %v2593, %v2613
        %v2642 = vsub.f32 %v2594, %v2615
        %v2643 = vsub.f32 %v2595, %v2617
        %v2644 = vsub.f32 %v2596, %v2619
        %v2645 = vsub.f32 %v2597, %v2621
        %v2646 = vsub.f32 %v2598, %v2623
        %v2647 = vsub.f32 %v2599, %v2625
        %v2648 = vsub.f32 %v2600, %v2627
        %v2649 = vsub.f32 %v2601, %v2629
        %v2650 = vsub.f32 %v2602, %v2631
        %v2651 = vsub.f32 %v2603, %v2633
        %v2652 = vsub.f32 %v2604, %v2635
        %v2653 = vsub.f32 %v2605, %v2637
        %v2654 = vmul.f32 %v2638, 1.442695
        %v2655 = vpow.pop %v2654
        %v2656 = vmul.f32 %v2639, 1.442695
        %v2657 = vpow.pop %v2656
        %v2658 = vmul.f32 %v2640, 1.442695
        %v2659 = vpow.pop %v2658
        %v2660 = vmul.f32 %v2641, 1.442695
        %v2661 = vpow.pop %v2660
        %v2662 = vmul.f32 %v2642, 1.442695
        %v2663 = vpow.pop %v2662
        %v2664 = vmul.f32 %v2643, 1.442695
        %v2665 = vpow.pop %v2664
        %v2666 = vmul.f32 %v2644, 1.442695
        %v2667 = vpow.pop %v2666
        %v2668 = vmul.f32 %v2645, 1.442695
        %v2669 = vpow.pop %v2668
        %v2670 = vmul.f32 %v2646, 1.442695
        %v2671 = vpow.pop %v2670
        %v2672 = vmul.f32 %v2647, 1.442695
        %v2673 = vpow.pop %v2672
        %v2674 = vmul.f32 %v2648, 1.442695
        %v2675 = vpow.pop %v2674
        %v2676 = vmul.f32 %v2649, 1.442695
        %v2677 = vpow.pop %v2676
        %v2678 = vmul.f32 %v2650, 1.442695
        %v2679 = vpow.pop %v2678
        %v2680 = vmul.f32 %v2651, 1.442695
        %v2681 = vpow.pop %v2680
        %v2682 = vmul.f32 %v2652, 1.442695
        %v2683 = vpow.pop %v2682
        %v2684 = vmul.f32 %v2653, 1.442695
        %v2685 = vpow.pop %v2684
        %2686 = vadd.xlane.f32.xlu0 %v2655
        %v2687 = vpop.xlane.xlu0 %2686
        %2688 = vadd.xlane.f32.xlu0 %v2657
        %v2689 = vpop.xlane.xlu0 %2688
        %2690 = vadd.xlane.f32.xlu0 %v2659
        %v2691 = vpop.xlane.xlu0 %2690
        %2692 = vadd.xlane.f32.xlu0 %v2661
        %v2693 = vpop.xlane.xlu0 %2692
        %2694 = vadd.xlane.f32.xlu0 %v2663
        %v2695 = vpop.xlane.xlu0 %2694
        %2696 = vadd.xlane.f32.xlu0 %v2665
        %v2697 = vpop.xlane.xlu0 %2696
        %2698 = vadd.xlane.f32.xlu0 %v2667
        %v2699 = vpop.xlane.xlu0 %2698
        %2700 = vadd.xlane.f32.xlu0 %v2669
        %v2701 = vpop.xlane.xlu0 %2700
        %2702 = vadd.xlane.f32.xlu0 %v2671
        %v2703 = vpop.xlane.xlu0 %2702
        %2704 = vadd.xlane.f32.xlu0 %v2673
        %v2705 = vpop.xlane.xlu0 %2704
        %2706 = vadd.xlane.f32.xlu0 %v2675
        %v2707 = vpop.xlane.xlu0 %2706
        %2708 = vadd.xlane.f32.xlu0 %v2677
        %v2709 = vpop.xlane.xlu0 %2708
        %2710 = vadd.xlane.f32.xlu0 %v2679
        %v2711 = vpop.xlane.xlu0 %2710
        %2712 = vadd.xlane.f32.xlu0 %v2681
        %v2713 = vpop.xlane.xlu0 %2712
        %2714 = vadd.xlane.f32.xlu0 %v2683
        %v2715 = vpop.xlane.xlu0 %2714
        %2716 = vadd.xlane.f32.xlu0 %v2685
        %v2717 = vpop.xlane.xlu0 %2716
        %v2718 = vrcp.pop %v2687
        %v2719 = vrcp.pop %v2689
        %v2720 = vrcp.pop %v2691
        %v2721 = vrcp.pop %v2693
        %v2722 = vrcp.pop %v2695
        %v2723 = vrcp.pop %v2697
        %v2724 = vrcp.pop %v2699
        %v2725 = vrcp.pop %v2701
        %v2726 = vrcp.pop %v2703
        %v2727 = vrcp.pop %v2705
        %v2728 = vrcp.pop %v2707
        %v2729 = vrcp.pop %v2709
        %v2730 = vrcp.pop %v2711
        %v2731 = vrcp.pop %v2713
        %v2732 = vrcp.pop %v2715
        %v2733 = vrcp.pop %v2717
        %v2734 = vmul.f32 %v2655, %v2718
        %v2735 = vmul.f32 %v2657, %v2719
        %v2736 = vmul.f32 %v2659, %v2720
        %v2737 = vmul.f32 %v2661, %v2721
        %v2738 = vmul.f32 %v2663, %v2722
        %v2739 = vmul.f32 %v2665, %v2723
        %v2740 = vmul.f32 %v2667, %v2724
        %v2741 = vmul.f32 %v2669, %v2725
        %v2742 = vmul.f32 %v2671, %v2726
        %v2743 = vmul.f32 %v2673, %v2727
        %v2744 = vmul.f32 %v2675, %v2728
        %v2745 = vmul.f32 %v2677, %v2729
        %v2746 = vmul.f32 %v2679, %v2730
        %v2747 = vmul.f32 %v2681, %v2731
        %v2748 = vmul.f32 %v2683, %v2732
        %v2749 = vmul.f32 %v2685, %v2733
        %v2750 = vpack.c.bf16 %v2735, %v2734
        %v2751 = vpack.c.bf16 %v2737, %v2736
        %v2752 = vpack.c.bf16 %v2739, %v2738
        %v2753 = vpack.c.bf16 %v2741, %v2740
        %v2754 = vpack.c.bf16 %v2743, %v2742
        %v2755 = vpack.c.bf16 %v2745, %v2744
        %v2756 = vpack.c.bf16 %v2747, %v2746
        %v2757 = vpack.c.bf16 %v2749, %v2748
        %v2766 = vunpack.c.l.b16 %v2750
        %v2767 = vunpack.c.h.b16 %v2750
        %v2768 = vunpack.c.l.b16 %v2751
        %v2769 = vunpack.c.h.b16 %v2751
        %v2770 = vunpack.c.l.b16 %v2752
        %v2771 = vunpack.c.h.b16 %v2752
        %v2772 = vunpack.c.l.b16 %v2753
        %v2773 = vunpack.c.h.b16 %v2753
        %v2774 = vunpack.c.l.b16 %v2754
        %v2775 = vunpack.c.h.b16 %v2754
        %v2776 = vunpack.c.l.b16 %v2755
        %v2777 = vunpack.c.h.b16 %v2755
        %v2778 = vunpack.c.l.b16 %v2756
        %v2779 = vunpack.c.h.b16 %v2756
        %v2780 = vunpack.c.l.b16 %v2757
        %v2781 = vunpack.c.h.b16 %v2757
        %v2782 = vpack.c.b16 %v2766, %v2766
        %v2783 = vpack.c.b16 %v2767, %v2767
        %v2784 = vpack.c.b16 %v2768, %v2768
        %v2785 = vpack.c.b16 %v2769, %v2769
        %v2786 = vpack.c.b16 %v2770, %v2770
        %v2787 = vpack.c.b16 %v2771, %v2771
        %v2788 = vpack.c.b16 %v2772, %v2772
        %v2789 = vpack.c.b16 %v2773, %v2773
        %v2790 = vpack.c.b16 %v2774, %v2774
        %v2791 = vpack.c.b16 %v2775, %v2775
        %v2792 = vpack.c.b16 %v2776, %v2776
        %v2793 = vpack.c.b16 %v2777, %v2777
        %v2794 = vpack.c.b16 %v2778, %v2778
        %v2795 = vpack.c.b16 %v2779, %v2779
        %v2796 = vpack.c.b16 %v2780, %v2780
        %v2797 = vpack.c.b16 %v2781, %v2781
        %s2814 = scalar_lea.vmem %s266, 192 [#allocation3]
        %2815 = vst [vmem:[%s2814] sm:$0xf] %v2782
        %2816 = vst [vmem:[%s2814 + $0x4] sm:$0xf] %v2783
        %2817 = vst [vmem:[%s2814 + $0x8] sm:$0xf] %v2784
        %2818 = vst [vmem:[%s2814 + $0xc] sm:$0xf] %v2785
        %2819 = vst [vmem:[%s2814 + $0x10] sm:$0xf] %v2786
        %2820 = vst [vmem:[%s2814 + $0x14] sm:$0xf] %v2787
        %2821 = vst [vmem:[%s2814 + $0x18] sm:$0xf] %v2788
        %2822 = vst [vmem:[%s2814 + $0x1c] sm:$0xf] %v2789
        %2823 = vst [vmem:[%s2814 + $0x20] sm:$0xf] %v2790
        %2824 = vst [vmem:[%s2814 + $0x24] sm:$0xf] %v2791
        %2825 = vst [vmem:[%s2814 + $0x28] sm:$0xf] %v2792
        %2826 = vst [vmem:[%s2814 + $0x2c] sm:$0xf] %v2793
        %2827 = vst [vmem:[%s2814 + $0x30] sm:$0xf] %v2794
        %2828 = vst [vmem:[%s2814 + $0x34] sm:$0xf] %v2795
        %2829 = vst [vmem:[%s2814 + $0x38] sm:$0xf] %v2796
        %2830 = vst [vmem:[%s2814 + $0x3c] sm:$0xf] %v2797
        %2831 = vrot.lane.b32.xlu0 %v487, 40
        %v2832 = vpop.permute.xlu0 %2831
        %2833 = vrot.lane.b32.xlu0 %v488, 40
        %v2834 = vpop.permute.xlu0 %2833
        %2835 = vrot.lane.b32.xlu0 %v489, 40
        %v2836 = vpop.permute.xlu0 %2835
        %2837 = vrot.lane.b32.xlu0 %v490, 40
        %v2838 = vpop.permute.xlu0 %2837
        %2839 = vrot.lane.b32.xlu0 %v491, 40
        %v2840 = vpop.permute.xlu0 %2839
        %2841 = vrot.lane.b32.xlu0 %v492, 40
        %v2842 = vpop.permute.xlu0 %2841
        %2843 = vrot.lane.b32.xlu0 %v493, 40
        %v2844 = vpop.permute.xlu0 %2843
        %2845 = vrot.lane.b32.xlu0 %v494, 40
        %v2846 = vpop.permute.xlu0 %2845
        %2855 = vmatprep.subr.bf16.mxu0 0
        %2856 = vmatpush1.bf16.msra.mxu0 %v2846
        %2857 = vmatprep.subr.bf16.mxu0 0
        %2858 = vmatpush1.bf16.msra.mxu0 %v2844
        %2859 = vmatprep.subr.bf16.mxu0 0
        %2860 = vmatpush1.bf16.msra.mxu0 %v2842
        %2861 = vmatprep.subr.bf16.mxu0 0
        %2862 = vmatpush1.bf16.msra.mxu0 %v2840
        %2863 = vmatprep.subr.bf16.mxu0 0
        %2864 = vmatpush1.bf16.msra.mxu0 %v2838
        %2865 = vmatprep.subr.bf16.mxu0 0
        %2866 = vmatpush1.bf16.msra.mxu0 %v2836
        %2867 = vmatprep.subr.bf16.mxu0 0
        %2868 = vmatpush1.bf16.msra.mxu0 %v2834
        %2869 = vmatprep.subr.bf16.mxu0 0
        %2870 = vmatpush1.bf16.msra.mxu0 %v2832
        %2871 = vmatprep.subr.bf16.mxu0 0
        %2872 = vmatpush2.bf16.msra.mxu0 0
        %2873 = vmatprep.subr.bf16.mxu0 0
        %2874 = vmatpush2.bf16.msra.mxu0 0
        %2875 = vmatprep.subr.bf16.mxu0 0
        %2876 = vmatpush2.bf16.msra.mxu0 0
        %2877 = vmatprep.subr.bf16.mxu0 0
        %2878 = vmatpush2.bf16.msra.mxu0 0
        %2879 = vmatprep.subr.bf16.mxu0 0
        %2880 = vmatpush2.bf16.msra.mxu0 0
        %2881 = vmatprep.subr.bf16.mxu0 0
        %2882 = vmatpush2.bf16.msra.mxu0 0
        %2883 = vmatprep.subr.bf16.mxu0 0
        %2884 = vmatpush2.bf16.msra.mxu0 0
        %2885 = vmatprep.subr.bf16.mxu0 0
        %2886 = vmatpush2.bf16.msra.mxu0 0
        %2887 = vmatprep.mubr.bf16.mxu0 0
        %2888 = vmatmul.mubr.bf16.gmra.mxu0 %v2750
        %v2889 = vpop.f32.mrf.mxu0
        %v2890 = vadd.f32 0.0, %v2889
        %v2891 = vpop.f32.mrf.mxu0
        %v2892 = vpop.f32.mrf.mxu0
        %v2893 = vadd.f32 0.0, %v2892
        %v2894 = vpop.f32.mrf.mxu0
        %2895 = vmatprep.mubr.bf16.mxu0 0
        %2896 = vmatmul.mubr.bf16.gmra.mxu0 %v2751
        %v2897 = vpop.f32.mrf.mxu0
        %v2898 = vadd.f32 0.0, %v2897
        %v2899 = vpop.f32.mrf.mxu0
        %v2900 = vpop.f32.mrf.mxu0
        %v2901 = vadd.f32 0.0, %v2900
        %v2902 = vpop.f32.mrf.mxu0
        %2903 = vmatprep.mubr.bf16.mxu0 0
        %2904 = vmatmul.mubr.bf16.gmra.mxu0 %v2752
        %v2905 = vpop.f32.mrf.mxu0
        %v2906 = vadd.f32 0.0, %v2905
        %v2907 = vpop.f32.mrf.mxu0
        %v2908 = vpop.f32.mrf.mxu0
        %v2909 = vadd.f32 0.0, %v2908
        %v2910 = vpop.f32.mrf.mxu0
        %2911 = vmatprep.mubr.bf16.mxu0 0
        %2912 = vmatmul.mubr.bf16.gmra.mxu0 %v2753
        %v2913 = vpop.f32.mrf.mxu0
        %v2914 = vadd.f32 0.0, %v2913
        %v2915 = vpop.f32.mrf.mxu0
        %v2916 = vpop.f32.mrf.mxu0
        %v2917 = vadd.f32 0.0, %v2916
        %v2918 = vpop.f32.mrf.mxu0
        %2919 = vmatprep.mubr.bf16.mxu0 0
        %2920 = vmatmul.mubr.bf16.gmra.mxu0 %v2754
        %v2921 = vpop.f32.mrf.mxu0
        %v2922 = vadd.f32 0.0, %v2921
        %v2923 = vpop.f32.mrf.mxu0
        %v2924 = vpop.f32.mrf.mxu0
        %v2925 = vadd.f32 0.0, %v2924
        %v2926 = vpop.f32.mrf.mxu0
        %2927 = vmatprep.mubr.bf16.mxu0 0
        %2928 = vmatmul.mubr.bf16.gmra.mxu0 %v2755
        %v2929 = vpop.f32.mrf.mxu0
        %v2930 = vadd.f32 0.0, %v2929
        %v2931 = vpop.f32.mrf.mxu0
        %v2932 = vpop.f32.mrf.mxu0
        %v2933 = vadd.f32 0.0, %v2932
        %v2934 = vpop.f32.mrf.mxu0
        %2935 = vmatprep.mubr.bf16.mxu0 0
        %2936 = vmatmul.mubr.bf16.gmra.mxu0 %v2756
        %v2937 = vpop.f32.mrf.mxu0
        %v2938 = vadd.f32 0.0, %v2937
        %v2939 = vpop.f32.mrf.mxu0
        %v2940 = vpop.f32.mrf.mxu0
        %v2941 = vadd.f32 0.0, %v2940
        %v2942 = vpop.f32.mrf.mxu0
        %2943 = vmatprep.mubr.bf16.mxu0 0
        %2944 = vmatmul.mubr.bf16.gmra.mxu0 %v2757
        %v2945 = vpop.f32.mrf.mxu0
        %v2946 = vadd.f32 0.0, %v2945
        %v2947 = vpop.f32.mrf.mxu0
        %v2948 = vpop.f32.mrf.mxu0
        %v2949 = vadd.f32 0.0, %v2948
        %v2950 = vpop.f32.mrf.mxu0
        %2951 = vdwg.mxu0
        %v2952 = vpack.c.bf16 %v2893, %v2890
        %v2953 = vpack.c.bf16 %v2901, %v2898
        %v2954 = vpack.c.bf16 %v2909, %v2906
        %v2955 = vpack.c.bf16 %v2917, %v2914
        %v2956 = vpack.c.bf16 %v2925, %v2922
        %v2957 = vpack.c.bf16 %v2933, %v2930
        %v2958 = vpack.c.bf16 %v2941, %v2938
        %v2959 = vpack.c.bf16 %v2949, %v2946
        %v2968 = vunpack.c.l.b16 %v2952
        %v2969 = vunpack.c.h.b16 %v2952
        %v2970 = vunpack.c.l.b16 %v2953
        %v2971 = vunpack.c.h.b16 %v2953
        %v2972 = vunpack.c.l.b16 %v2954
        %v2973 = vunpack.c.h.b16 %v2954
        %v2974 = vunpack.c.l.b16 %v2955
        %v2975 = vunpack.c.h.b16 %v2955
        %v2976 = vunpack.c.l.b16 %v2956
        %v2977 = vunpack.c.h.b16 %v2956
        %v2978 = vunpack.c.l.b16 %v2957
        %v2979 = vunpack.c.h.b16 %v2957
        %v2980 = vunpack.c.l.b16 %v2958
        %v2981 = vunpack.c.h.b16 %v2958
        %v2982 = vunpack.c.l.b16 %v2959
        %v2983 = vunpack.c.h.b16 %v2959
        %v2984 = vpack.c.b16 %v2968, %v2968
        %v2985 = vpack.c.b16 %v2969, %v2969
        %v2986 = vpack.c.b16 %v2970, %v2970
        %v2987 = vpack.c.b16 %v2971, %v2971
        %v2988 = vpack.c.b16 %v2972, %v2972
        %v2989 = vpack.c.b16 %v2973, %v2973
        %v2990 = vpack.c.b16 %v2974, %v2974
        %v2991 = vpack.c.b16 %v2975, %v2975
        %v2992 = vpack.c.b16 %v2976, %v2976
        %v2993 = vpack.c.b16 %v2977, %v2977
        %v2994 = vpack.c.b16 %v2978, %v2978
        %v2995 = vpack.c.b16 %v2979, %v2979
        %v2996 = vpack.c.b16 %v2980, %v2980
        %v2997 = vpack.c.b16 %v2981, %v2981
        %v2998 = vpack.c.b16 %v2982, %v2982
        %v2999 = vpack.c.b16 %v2983, %v2983
        %3000 = vrot.lane.b32.xlu0 %v2984, 24
        %v3001 = vpop.permute.xlu0 %3000
        %3002 = vrot.lane.b32.xlu0 %v2985, 24
        %v3003 = vpop.permute.xlu0 %3002
        %3004 = vrot.lane.b32.xlu0 %v2986, 24
        %v3005 = vpop.permute.xlu0 %3004
        %3006 = vrot.lane.b32.xlu0 %v2987, 24
        %v3007 = vpop.permute.xlu0 %3006
        %3008 = vrot.lane.b32.xlu0 %v2988, 24
        %v3009 = vpop.permute.xlu0 %3008
        %3010 = vrot.lane.b32.xlu0 %v2989, 24
        %v3011 = vpop.permute.xlu0 %3010
        %3012 = vrot.lane.b32.xlu0 %v2990, 24
        %v3013 = vpop.permute.xlu0 %3012
        %3014 = vrot.lane.b32.xlu0 %v2991, 24
        %v3015 = vpop.permute.xlu0 %3014
        %3016 = vrot.lane.b32.xlu0 %v2992, 24
        %v3017 = vpop.permute.xlu0 %3016
        %3018 = vrot.lane.b32.xlu0 %v2993, 24
        %v3019 = vpop.permute.xlu0 %3018
        %3020 = vrot.lane.b32.xlu0 %v2994, 24
        %v3021 = vpop.permute.xlu0 %3020
        %3022 = vrot.lane.b32.xlu0 %v2995, 24
        %v3023 = vpop.permute.xlu0 %3022
        %3024 = vrot.lane.b32.xlu0 %v2996, 24
        %v3025 = vpop.permute.xlu0 %3024
        %3026 = vrot.lane.b32.xlu0 %v2997, 24
        %v3027 = vpop.permute.xlu0 %3026
        %3028 = vrot.lane.b32.xlu0 %v2998, 24
        %v3029 = vpop.permute.xlu0 %3028
        %3030 = vrot.lane.b32.xlu0 %v2999, 24
        %v3031 = vpop.permute.xlu0 %3030
        %vm3048 = vcmask 257216
        %3049 = vst.msk [vmem:[#allocation2] sm:$0xf] %vm3048, %v3001
        %3050 = vst.msk [vmem:[#allocation2 + $0x4] sm:$0xf] %vm3048, %v3003
        %3051 = vst.msk [vmem:[#allocation2 + $0x8] sm:$0xf] %vm3048, %v3005
        %3052 = vst.msk [vmem:[#allocation2 + $0xc] sm:$0xf] %vm3048, %v3007
        %3053 = vst.msk [vmem:[#allocation2 + $0x10] sm:$0xf] %vm3048, %v3009
        %3054 = vst.msk [vmem:[#allocation2 + $0x14] sm:$0xf] %vm3048, %v3011
        %3055 = vst.msk [vmem:[#allocation2 + $0x18] sm:$0xf] %vm3048, %v3013
        %3056 = vst.msk [vmem:[#allocation2 + $0x1c] sm:$0xf] %vm3048, %v3015
        %3057 = vst.msk [vmem:[#allocation2 + $0x20] sm:$0xf] %vm3048, %v3017
        %3058 = vst.msk [vmem:[#allocation2 + $0x24] sm:$0xf] %vm3048, %v3019
        %3059 = vst.msk [vmem:[#allocation2 + $0x28] sm:$0xf] %vm3048, %v3021
        %3060 = vst.msk [vmem:[#allocation2 + $0x2c] sm:$0xf] %vm3048, %v3023
        %3061 = vst.msk [vmem:[#allocation2 + $0x30] sm:$0xf] %vm3048, %v3025
        %3062 = vst.msk [vmem:[#allocation2 + $0x34] sm:$0xf] %vm3048, %v3027
        %3063 = vst.msk [vmem:[#allocation2 + $0x38] sm:$0xf] %vm3048, %v3029
        %3064 = vst.msk [vmem:[#allocation2 + $0x3c] sm:$0xf] %vm3048, %v3031
        %v3065 = vld [vmem:[#allocation2] sm:$0xf]
        %v3066 = vld [vmem:[#allocation2 + $0x4] sm:$0xf]
        %v3067 = vld [vmem:[#allocation2 + $0x8] sm:$0xf]
        %v3068 = vld [vmem:[#allocation2 + $0xc] sm:$0xf]
        %v3069 = vld [vmem:[#allocation2 + $0x10] sm:$0xf]
        %v3070 = vld [vmem:[#allocation2 + $0x14] sm:$0xf]
        %v3071 = vld [vmem:[#allocation2 + $0x18] sm:$0xf]
        %v3072 = vld [vmem:[#allocation2 + $0x1c] sm:$0xf]
        %v3073 = vld [vmem:[#allocation2 + $0x20] sm:$0xf]
        %v3074 = vld [vmem:[#allocation2 + $0x24] sm:$0xf]
        %v3075 = vld [vmem:[#allocation2 + $0x28] sm:$0xf]
        %v3076 = vld [vmem:[#allocation2 + $0x2c] sm:$0xf]
        %v3077 = vld [vmem:[#allocation2 + $0x30] sm:$0xf]
        %v3078 = vld [vmem:[#allocation2 + $0x34] sm:$0xf]
        %v3079 = vld [vmem:[#allocation2 + $0x38] sm:$0xf]
        %v3080 = vld [vmem:[#allocation2 + $0x3c] sm:$0xf]
        %s3081 = smul.addr %s295, 4
        %s3082 = scalar_lea.vmem %s3, %s3081
        %v3083 = vld [vmem:[%s3082] sm:$0xf]
        %v3084 = vld [vmem:[%s3082 + $0x4] sm:$0xf]
        %v3085 = vld [vmem:[%s3082 + $0x8] sm:$0xf]
        %v3086 = vld [vmem:[%s3082 + $0xc] sm:$0xf]
        %v3087 = vld [vmem:[%s4] sm:$0x1]
        %v3089 = vlaneseq
        %v3090 = vshrl.u32 %v3089, 7
        %v3091 = vsub.s32 0, %v3090
        %v3092 = vrot.slane %v3087, %v3091
        %v3110 = vunpack.c.l.b16 %v3065
        %v3111 = vunpack.c.l.b16 %v3066
        %v3112 = vunpack.c.l.b16 %v3067
        %v3113 = vunpack.c.l.b16 %v3068
        %v3114 = vunpack.c.l.b16 %v3069
        %v3115 = vunpack.c.l.b16 %v3070
        %v3116 = vunpack.c.l.b16 %v3071
        %v3117 = vunpack.c.l.b16 %v3072
        %v3118 = vunpack.c.l.b16 %v3073
        %v3119 = vunpack.c.l.b16 %v3074
        %v3120 = vunpack.c.l.b16 %v3075
        %v3121 = vunpack.c.l.b16 %v3076
        %v3122 = vunpack.c.l.b16 %v3077
        %v3123 = vunpack.c.l.b16 %v3078
        %v3124 = vunpack.c.l.b16 %v3079
        %v3125 = vunpack.c.l.b16 %v3080
        %v3126 = vpack.c.b16 %v3111, %v3110
        %v3127 = vpack.c.b16 %v3113, %v3112
        %v3128 = vpack.c.b16 %v3115, %v3114
        %v3129 = vpack.c.b16 %v3117, %v3116
        %v3130 = vpack.c.b16 %v3119, %v3118
        %v3131 = vpack.c.b16 %v3121, %v3120
        %v3132 = vpack.c.b16 %v3123, %v3122
        %v3133 = vpack.c.b16 %v3125, %v3124
        %v3138 = vunpack.c.l.b16 %v3083
        %v3139 = vunpack.c.l.b16 %v3084
        %v3140 = vunpack.c.l.b16 %v3085
        %v3141 = vunpack.c.l.b16 %v3086
        %v3142 = vpack.c.b16 %v3139, %v3138
        %v3143 = vpack.c.b16 %v3141, %v3140
        %v3147 = vsel %vm362, %v3126, 0
        %v3150 = vsel %vm362, %v3127, 0
        %v3153 = vsel %vm362, %v3128, 0
        %v3156 = vsel %vm362, %v3129, 0
        %v3159 = vsel %vm362, %v3130, 0
        %v3162 = vsel %vm362, %v3131, 0
        %v3165 = vsel %vm362, %v3132, 0
        %v3168 = vsel %vm362, %v3133, 0
        %3170 = vmatprep.subr.bf16.mxu0 0
        %3171 = vmatpush1.bf16.msra.mxu0 0
        %3172 = vmatprep.subr.bf16.mxu0 0
        %3173 = vmatpush1.bf16.msra.mxu0 0
        %3174 = vmatprep.subr.bf16.mxu0 0
        %3175 = vmatpush1.bf16.msra.mxu0 0
        %3176 = vmatprep.subr.bf16.mxu0 0
        %3177 = vmatpush1.bf16.msra.mxu0 0
        %3178 = vmatprep.subr.bf16.mxu0 0
        %3179 = vmatpush1.bf16.msra.mxu0 0
        %3180 = vmatprep.subr.bf16.mxu0 0
        %3181 = vmatpush1.bf16.msra.mxu0 0
        %3182 = vmatprep.subr.bf16.mxu0 0
        %3183 = vmatpush1.bf16.msra.mxu0 %v3143
        %3184 = vmatprep.subr.bf16.mxu0 0
        %3185 = vmatpush1.bf16.msra.mxu0 %v3142
        %3186 = vmatprep.subr.bf16.mxu0 0
        %3187 = vmatpush2.bf16.msra.mxu0 0
        %3188 = vmatprep.subr.bf16.mxu0 0
        %3189 = vmatpush2.bf16.msra.mxu0 0
        %3190 = vmatprep.subr.bf16.mxu0 0
        %3191 = vmatpush2.bf16.msra.mxu0 0
        %3192 = vmatprep.subr.bf16.mxu0 0
        %3193 = vmatpush2.bf16.msra.mxu0 0
        %3194 = vmatprep.subr.bf16.mxu0 0
        %3195 = vmatpush2.bf16.msra.mxu0 0
        %3196 = vmatprep.subr.bf16.mxu0 0
        %3197 = vmatpush2.bf16.msra.mxu0 0
        %3198 = vmatprep.subr.bf16.mxu0 0
        %3199 = vmatpush2.bf16.msra.mxu0 0
        %3200 = vmatprep.subr.bf16.mxu0 0
        %3201 = vmatpush2.bf16.msra.mxu0 0
        %3202 = vmatprep.mubr.bf16.mxu0 0
        %3203 = vmatmul.mubr.bf16.gmra.mxu0 %v3147
        %v3204 = vpop.f32.mrf.mxu0
        %v3205 = vadd.f32 %v3092, %v3204
        %v3206 = vpop.f32.mrf.mxu0
        %v3207 = vpop.f32.mrf.mxu0
        %v3208 = vadd.f32 %v3092, %v3207
        %v3209 = vpop.f32.mrf.mxu0
        %3210 = vmatprep.mubr.bf16.mxu0 0
        %3211 = vmatmul.mubr.bf16.gmra.mxu0 %v3150
        %v3212 = vpop.f32.mrf.mxu0
        %v3213 = vadd.f32 %v3092, %v3212
        %v3214 = vpop.f32.mrf.mxu0
        %v3215 = vpop.f32.mrf.mxu0
        %v3216 = vadd.f32 %v3092, %v3215
        %v3217 = vpop.f32.mrf.mxu0
        %3218 = vmatprep.mubr.bf16.mxu0 0
        %3219 = vmatmul.mubr.bf16.gmra.mxu0 %v3153
        %v3220 = vpop.f32.mrf.mxu0
        %v3221 = vadd.f32 %v3092, %v3220
        %v3222 = vpop.f32.mrf.mxu0
        %v3223 = vpop.f32.mrf.mxu0
        %v3224 = vadd.f32 %v3092, %v3223
        %v3225 = vpop.f32.mrf.mxu0
        %3226 = vmatprep.mubr.bf16.mxu0 0
        %3227 = vmatmul.mubr.bf16.gmra.mxu0 %v3156
        %v3228 = vpop.f32.mrf.mxu0
        %v3229 = vadd.f32 %v3092, %v3228
        %v3230 = vpop.f32.mrf.mxu0
        %v3231 = vpop.f32.mrf.mxu0
        %v3232 = vadd.f32 %v3092, %v3231
        %v3233 = vpop.f32.mrf.mxu0
        %3234 = vmatprep.mubr.bf16.mxu0 0
        %3235 = vmatmul.mubr.bf16.gmra.mxu0 %v3159
        %v3236 = vpop.f32.mrf.mxu0
        %v3237 = vadd.f32 %v3092, %v3236
        %v3238 = vpop.f32.mrf.mxu0
        %v3239 = vpop.f32.mrf.mxu0
        %v3240 = vadd.f32 %v3092, %v3239
        %v3241 = vpop.f32.mrf.mxu0
        %3242 = vmatprep.mubr.bf16.mxu0 0
        %3243 = vmatmul.mubr.bf16.gmra.mxu0 %v3162
        %v3244 = vpop.f32.mrf.mxu0
        %v3245 = vadd.f32 %v3092, %v3244
        %v3246 = vpop.f32.mrf.mxu0
        %v3247 = vpop.f32.mrf.mxu0
        %v3248 = vadd.f32 %v3092, %v3247
        %v3249 = vpop.f32.mrf.mxu0
        %3250 = vmatprep.mubr.bf16.mxu0 0
        %3251 = vmatmul.mubr.bf16.gmra.mxu0 %v3165
        %v3252 = vpop.f32.mrf.mxu0
        %v3253 = vadd.f32 %v3092, %v3252
        %v3254 = vpop.f32.mrf.mxu0
        %v3255 = vpop.f32.mrf.mxu0
        %v3256 = vadd.f32 %v3092, %v3255
        %v3257 = vpop.f32.mrf.mxu0
        %3258 = vmatprep.mubr.bf16.mxu0 0
        %3259 = vmatmul.mubr.bf16.gmra.mxu0 %v3168
        %v3260 = vpop.f32.mrf.mxu0
        %v3261 = vadd.f32 %v3092, %v3260
        %v3262 = vpop.f32.mrf.mxu0
        %v3263 = vpop.f32.mrf.mxu0
        %v3264 = vadd.f32 %v3092, %v3263
        %v3265 = vpop.f32.mrf.mxu0
        %3266 = vdwg.mxu0
        %3267 = vst.msk [vmem:[%s276] sm:$0xff] %vm362, %v3205
        %3268 = vst.msk [vmem:[%s276 + $0x8] sm:$0xff] %vm362, %v3208
        %3269 = vst.msk [vmem:[%s276 + $0x10] sm:$0xff] %vm362, %v3213
        %3270 = vst.msk [vmem:[%s276 + $0x18] sm:$0xff] %vm362, %v3216
        %3271 = vst.msk [vmem:[%s276 + $0x20] sm:$0xff] %vm362, %v3221
        %3272 = vst.msk [vmem:[%s276 + $0x28] sm:$0xff] %vm362, %v3224
        %3273 = vst.msk [vmem:[%s276 + $0x30] sm:$0xff] %vm362, %v3229
        %3274 = vst.msk [vmem:[%s276 + $0x38] sm:$0xff] %vm362, %v3232
        %3275 = vst.msk [vmem:[%s276 + $0x40] sm:$0xff] %vm362, %v3237
        %3276 = vst.msk [vmem:[%s276 + $0x48] sm:$0xff] %vm362, %v3240
        %3277 = vst.msk [vmem:[%s276 + $0x50] sm:$0xff] %vm362, %v3245
        %3278 = vst.msk [vmem:[%s276 + $0x58] sm:$0xff] %vm362, %v3248
        %3279 = vst.msk [vmem:[%s276 + $0x60] sm:$0xff] %vm362, %v3253
        %3280 = vst.msk [vmem:[%s276 + $0x68] sm:$0xff] %vm362, %v3256
        %3281 = vst.msk [vmem:[%s276 + $0x70] sm:$0xff] %vm362, %v3261
        %3282 = vst.msk [vmem:[%s276 + $0x78] sm:$0xff] %vm362, %v3264
        %p3283 = scmp.lt.s32.totalorder %s25, 1
        %s3284 = scalar_select %p3283, %s25, 1
        %s3285 = smul.addr %s3284, 16
        %s3286 = smul.addr %s3285, 8
        %s3287 = scalar_lea.vmem %s5, %s3286
        %s3288 = sand.u32 %s179, 1
        %s3289 = scalar_lea.sflag [#allocation4], %s3288
        %s3290 = sand.u32 %s179, 1
        %s3291 = smul.addr %s3290, 256
        %s3292 = scalar_lea.vmem [#allocation3], %s3291
        // Predicated region
        $region41: #{tpu_custom_call.1} parent=39 // pred_check
          %p3293 = pneg %p161
        $region42: #{tpu_custom_call.1} parent=39 // pred_check_branch
          %3295 = sbr.rel (%p3293) target = $region44
        $region43: #{tpu_custom_call.1} parent=39 // pred_region
          _
        $region44: #{tpu_custom_call.1} parent=39 // pred_fallthru
          _
        // Predicated region
        $region45: #{tpu_custom_call.1} parent=39 // pred_check
          %p3296 = pneg %p189
        $region46: #{tpu_custom_call.1} parent=39 // pred_check_branch
          %3298 = sbr.rel (%p3296) target = $region48
        $region47: #{tpu_custom_call.1} parent=39 // pred_region
          %s3299 = smul.u32 4, %s26
          %s3301 = ssub.s32 4096, 4096
          %3302 = vsyncadd %s3289, %s3301
          %s3303 = smul.addr %s3299, 16
          %s3304 = smul.addr %s25, 64
          %s3305 = sadd.s32 %s3303, %s3304
          %s3306 = smul.addr %s3305, 64
          %s3307 = scalar_lea.hbm %s6, %s3306
          %s3308 = sshll.u32 %s3292, 4
          %s3309 = int_to_ptr.vmem [resolvable:$true] %s3308
          %3314 = dma.vmem_to_hbm [thread:$0]  %s3309, 4096, %s3307, %s3289, 64, 64, 4
        $region48: #{tpu_custom_call.1} parent=39 // pred_fallthru
          _
      $region40: #{tpu_custom_call.1} parent=5 // pred_fallthru
        _
      %p3315 = scmp.le.s32.totalorder 2, %s16
      // Predicated region
      $region49: #{tpu_custom_call.1} parent=5 // pred_check
        %p3316 = pneg %p3315
      $region50: #{tpu_custom_call.1} parent=5 // pred_check_branch
        %3318 = sbr.rel (%p3316) target = $region52
      $region51: #{tpu_custom_call.1} parent=5 // pred_region
        %s3319 = ssub.s32 %s16, 2
        // Predicated region
        $region53: #{tpu_custom_call.1} parent=51 // pred_check
          %p3320 = pneg %p167
        $region54: #{tpu_custom_call.1} parent=51 // pred_check_branch
          %3322 = sbr.rel (%p3320) target = $region56
        $region55: #{tpu_custom_call.1} parent=51 // pred_region
          %p3323 = scmp.lt.s32.totalorder %s27, 1
          %s3324 = scalar_select %p3323, %s27, 1
          %s3325 = smul.addr %s3324, 16
          %s3326 = smul.addr %s3325, 8
          %s3327 = scalar_lea.vmem %s5, %s3326
        $region56: #{tpu_custom_call.1} parent=51 // pred_fallthru
          _
        // Predicated region
        $region57: #{tpu_custom_call.1} parent=51 // pred_check
          %p3328 = pneg %p195
        $region58: #{tpu_custom_call.1} parent=51 // pred_check_branch
          %3330 = sbr.rel (%p3328) target = $region60
        $region59: #{tpu_custom_call.1} parent=51 // pred_region
          %s3331 = sand.u32 %s180, 1
          %s3332 = scalar_lea.sflag [#allocation4], %s3331
          %s3333 = sand.u32 %s180, 1
          %s3334 = smul.addr %s3333, 256
          %s3335 = scalar_lea.vmem [#allocation3], %s3334
          %3336 = dma.done %s3332, 4096
        $region60: #{tpu_custom_call.1} parent=51 // pred_fallthru
          _
      $region52: #{tpu_custom_call.1} parent=5 // pred_fallthru
        _
    $region6: #{tpu_custom_call.1} parent=1 // loop_footer
      %s20 = sadd.s32 1, %s16
    $region7: #{tpu_custom_call.1} parent=1 // loop_footer_branch
      %15 = sbr.rel target = $region3
    $region8: #{tpu_custom_call.1} parent=1 // loop_exit
      _
    %3337 = vsyncpa [#allocation4], 1
    %s3338 = scalar_lea.sflag [#allocation4], 1
    %3339 = vsyncpa %s3338, 1

// kernel: tpu_custom_call.1
$region0: #{tpu_custom_call.1}
  #allocation0 [shape = 'u32[]', space=smem, size = 0x4, offset = 0x4, fixed_abs, tag = 'smem constant byte address 0x4 - core index']
  #allocation1 [shape = 'u32[144,128]{1,0:T(1,128)}', space=vmem, size = 0x12000, scoped, tag = 'internal scratch']
  #allocation2 [shape = 'bf16[128,32]{1,0:T(8,128)(2,1)}', space=vmem, size = 0x8000, scoped, tag = 'scratch operand']
  %s0 = inlined_call_operand.vmem [shape: bf16[2,128,32], index: 0, kind: input, shape index: {}]
  %s1 = inlined_call_operand.vmem [shape: bf16[1,32,96], index: 1, kind: input, shape index: {}]
  %s2 = inlined_call_operand.vmem [shape: f32[1,1,96], index: 2, kind: input, shape index: {}]
  %s3 = inlined_call_operand.vmem [shape: bf16[1,32,32], index: 3, kind: input, shape index: {}]
  %s4 = inlined_call_operand.vmem [shape: f32[1,32], index: 4, kind: input, shape index: {}]
  %s5 = inlined_call_operand.vmem [shape: f32[2,128,32], index: 5, kind: output, shape index: {0}]
  %s6 = inlined_call_operand.hbm [shape: bf16[2,4,128,128], index: 6, kind: output, shape index: {1}]
  %7 = xla_tuple %s5, %s6
  %s8 = sld [smem:[#allocation0]]
  $region61: #{tpu_custom_call.1} parent=0
    _
  %s10 = ssub.s32 1, %s8
  %s11 = scalar_select 0, %s10, %s8
  $region1: #{tpu_custom_call.1} parent=0
    #allocation3 [shape = 'u8[262144]{0}', space=vmem, size = 0x40000, scoped, tag = 'output window, operand 1']
    #allocation4 [shape = 's32[2]{0}', space=sflag, size = 0x8, scoped, tag = 'scoped memory for tpu_custom_call.1']
    %12 = vsyncpa [#allocation4], 0
    %s13 = scalar_lea.sflag [#allocation4], 1
    %14 = vsyncpa %s13, 0
    loop: start=0, step=1, limit=4
    $region2: #{tpu_custom_call.1} parent=1 // loop_pre_header
      _
    $region3: #{tpu_custom_call.1} parent=1 // loop_header
      %s16 = sphi 0, %s20
      %p17 = scmp.ge.s32.totalorder %s16, 4
      %s23 = sphi 0, %s35
      %s24 = sphi 0, %s31
      %s25 = sphi 0, %s23
      %s26 = sphi 0, %s24
      %s27 = sphi 0, %s25
      %s28 = sphi 0, %s26
      %s38 = sphi 0, %s40
      %s41 = sphi 0, %s38
      %s42 = sphi 0, %s41
      %s58 = sphi 0, %s42
      %s62 = sphi 0, %s62
      %s64 = sphi 0, %s62
      %s65 = sphi 0, %s64
      %s79 = sphi 0, %s65
      %s83 = sphi 0, %s83
      %s85 = sphi 0, %s83
      %s86 = sphi 0, %s85
      %s100 = sphi 0, %s86
      %s104 = sphi 0, %s104
      %s106 = sphi 0, %s104
      %s107 = sphi 0, %s106
      %s121 = sphi 0, %s107
      %s125 = sphi 0, %s125
      %s127 = sphi 0, %s125
      %s128 = sphi 0, %s127
      %s142 = sphi 0, %s128
      %s148 = sphi 0, %s150
      %s151 = sphi 0, %s148
      %s152 = sphi 0, %s151
      %s168 = sphi 0, %s152
      %s176 = sphi 0, %s178
      %s179 = sphi 0, %s176
      %s180 = sphi 0, %s179
      %s196 = sphi 0, %s180
    $region4: #{tpu_custom_call.1} parent=1 // loop_header_branch
      %19 = sbr.rel (%p17) target = $region8
    $region5: #{tpu_custom_call.1} parent=1 // loop_body
      %s21 = ssub.s32 %s16, 1
      %s22 = ssub.s32 %s16, 2
      %s29 = sadd.s32 1, %s24
      %p30 = scmp.ge.s32.totalorder %s29, 1
      %s31 = scalar_select %p30, 0, %s29
      %s32 = sadd.s32 1, %s23
      %s33 = scalar_select %p30, %s32, %s23
      %p34 = scmp.ge.s32.totalorder %s33, 2
      %s35 = scalar_select %p34, 0, %s33
      %s36 = ssub.s32 %s23, %s35
      %p37 = scmp.eq.s32.totalorder %s36, 0
      %s39 = sadd.s32 %s38, 1
      %s40 = scalar_select %p37, %s38, %s39
      %p43 = pneg %p37
      %p44 = scmp.eq.s32.totalorder %s16, 1
      %p45 = por %p43, %p44
      %p46 = scmp.ne.s32.totalorder %s38, %s41
      %p47 = scmp.eq.s32.totalorder %s16, 0
      %p48 = por %p46, %p47
      %p49 = scmp.ne.s32.totalorder %s38, %s41
      %p50 = scmp.eq.s32.totalorder %s21, 1
      %p51 = por %p49, %p50
      %p52 = scmp.ne.s32.totalorder %s41, %s42
      %p53 = scmp.eq.s32.totalorder %s21, 0
      %p54 = por %p52, %p53
      %p55 = scmp.ne.s32.totalorder %s41, %s42
      %p56 = scmp.eq.s32.totalorder %s22, 1
      %p57 = por %p55, %p56
      %p59 = scmp.ne.s32.totalorder %s42, %s58
      %p60 = scmp.eq.s32.totalorder %s22, 0
      %p61 = por %p59, %p60
      %s63 = sadd.s32 %s62, 1
      %p66 = scmp.eq.s32.totalorder %s16, 1
      %p67 = scmp.ne.s32.totalorder %s62, %s64
      %p68 = scmp.eq.s32.totalorder %s16, 0
      %p69 = por %p67, %p68
      %p70 = scmp.ne.s32.totalorder %s62, %s64
      %p71 = scmp.eq.s32.totalorder %s21, 1
      %p72 = por %p70, %p71
      %p73 = scmp.ne.s32.totalorder %s64, %s65
      %p74 = scmp.eq.s32.totalorder %s21, 0
      %p75 = por %p73, %p74
      %p76 = scmp.ne.s32.totalorder %s64, %s65
      %p77 = scmp.eq.s32.totalorder %s22, 1
      %p78 = por %p76, %p77
      %p80 = scmp.ne.s32.totalorder %s65, %s79
      %p81 = scmp.eq.s32.totalorder %s22, 0
      %p82 = por %p80, %p81
      %s84 = sadd.s32 %s83, 1
      %p87 = scmp.eq.s32.totalorder %s16, 1
      %p88 = scmp.ne.s32.totalorder %s83, %s85
      %p89 = scmp.eq.s32.totalorder %s16, 0
      %p90 = por %p88, %p89
      %p91 = scmp.ne.s32.totalorder %s83, %s85
      %p92 = scmp.eq.s32.totalorder %s21, 1
      %p93 = por %p91, %p92
      %p94 = scmp.ne.s32.totalorder %s85, %s86
      %p95 = scmp.eq.s32.totalorder %s21, 0
      %p96 = por %p94, %p95
      %p97 = scmp.ne.s32.totalorder %s85, %s86
      %p98 = scmp.eq.s32.totalorder %s22, 1
      %p99 = por %p97, %p98
      %p101 = scmp.ne.s32.totalorder %s86, %s100
      %p102 = scmp.eq.s32.totalorder %s22, 0
      %p103 = por %p101, %p102
      %s105 = sadd.s32 %s104, 1
      %p108 = scmp.eq.s32.totalorder %s16, 1
      %p109 = scmp.ne.s32.totalorder %s104, %s106
      %p110 = scmp.eq.s32.totalorder %s16, 0
      %p111 = por %p109, %p110
      %p112 = scmp.ne.s32.totalorder %s104, %s106
      %p113 = scmp.eq.s32.totalorder %s21, 1
      %p114 = por %p112, %p113
      %p115 = scmp.ne.s32.totalorder %s106, %s107
      %p116 = scmp.eq.s32.totalorder %s21, 0
      %p117 = por %p115, %p116
      %p118 = scmp.ne.s32.totalorder %s106, %s107
      %p119 = scmp.eq.s32.totalorder %s22, 1
      %p120 = por %p118, %p119
      %p122 = scmp.ne.s32.totalorder %s107, %s121
      %p123 = scmp.eq.s32.totalorder %s22, 0
      %p124 = por %p122, %p123
      %s126 = sadd.s32 %s125, 1
      %p129 = scmp.eq.s32.totalorder %s16, 1
      %p130 = scmp.ne.s32.totalorder %s125, %s127
      %p131 = scmp.eq.s32.totalorder %s16, 0
      %p132 = por %p130, %p131
      %p133 = scmp.ne.s32.totalorder %s125, %s127
      %p134 = scmp.eq.s32.totalorder %s21, 1
      %p135 = por %p133, %p134
      %p136 = scmp.ne.s32.totalorder %s127, %s128
      %p137 = scmp.eq.s32.totalorder %s21, 0
      %p138 = por %p136, %p137
      %p139 = scmp.ne.s32.totalorder %s127, %s128
      %p140 = scmp.eq.s32.totalorder %s22, 1
      %p141 = por %p139, %p140
      %p143 = scmp.ne.s32.totalorder %s128, %s142
      %p144 = scmp.eq.s32.totalorder %s22, 0
      %p145 = por %p143, %p144
      %s146 = ssub.s32 %s23, %s35
      %p147 = scmp.eq.s32.totalorder %s146, 0
      %s149 = sadd.s32 %s148, 1
      %s150 = scalar_select %p147, %s148, %s149
      %p153 = pneg %p147
      %p154 = scmp.eq.s32.totalorder %s16, 1
      %p155 = por %p153, %p154
      %p156 = scmp.ne.s32.totalorder %s148, %s151
      %p157 = scmp.eq.s32.totalorder %s16, 0
      %p158 = por %p156, %p157
      %p159 = scmp.ne.s32.totalorder %s148, %s151
      %p160 = scmp.eq.s32.totalorder %s21, 1
      %p161 = por %p159, %p160
      %p162 = scmp.ne.s32.totalorder %s151, %s152
      %p163 = scmp.eq.s32.totalorder %s21, 0
      %p164 = por %p162, %p163
      %p165 = scmp.ne.s32.totalorder %s151, %s152
      %p166 = scmp.eq.s32.totalorder %s22, 1
      %p167 = por %p165, %p166
      %p169 = scmp.ne.s32.totalorder %s152, %s168
      %p170 = scmp.eq.s32.totalorder %s22, 0
      %p171 = por %p169, %p170
      %s172 = ssub.s32 %s23, %s35
      %s173 = ssub.s32 %s24, %s31
      %s174 = sor.u32 %s172, %s173
      %p175 = scmp.eq.s32.totalorder %s174, 0
      %s177 = sadd.s32 %s176, 1
      %s178 = scalar_select %p175, %s176, %s177
      %p181 = pneg %p175
      %p182 = scmp.eq.s32.totalorder %s16, 1
      %p183 = por %p181, %p182
      %p184 = scmp.ne.s32.totalorder %s176, %s179
      %p185 = scmp.eq.s32.totalorder %s16, 0
      %p186 = por %p184, %p185
      %p187 = scmp.ne.s32.totalorder %s176, %s179
      %p188 = scmp.eq.s32.totalorder %s21, 1
      %p189 = por %p187, %p188
      %p190 = scmp.ne.s32.totalorder %s179, %s180
      %p191 = scmp.eq.s32.totalorder %s21, 0
      %p192 = por %p190, %p191
      %p193 = scmp.ne.s32.totalorder %s179, %s180
      %p194 = scmp.eq.s32.totalorder %s22, 1
      %p195 = por %p193, %p194
      %p197 = scmp.ne.s32.totalorder %s180, %s196
      %p198 = scmp.eq.s32.totalorder %s22, 0
      %p199 = por %p197, %p198
      %p200 = scmp.le.s32.totalorder 1, %s16
      %p201 = scmp.lt.s32.totalorder %s16, 3
      %p202 = pnand %p200, %p201
      %p203 = pneg %p202
      // Predicated region
      $region9: #{tpu_custom_call.1} parent=5 // pred_check
        _
      $region10: #{tpu_custom_call.1} parent=5 // pred_check_branch
        %205 = sbr.rel (%p202) target = $region12
      $region11: #{tpu_custom_call.1} parent=5 // pred_region
        %s206 = ssub.s32 %s16, 1
        // Predicated region
        $region13: #{tpu_custom_call.1} parent=11 // pred_check
          %p207 = pneg %p75
        $region14: #{tpu_custom_call.1} parent=11 // pred_check_branch
          %209 = sbr.rel (%p207) target = $region16
        $region15: #{tpu_custom_call.1} parent=11 // pred_region
          _
        $region16: #{tpu_custom_call.1} parent=11 // pred_fallthru
          _
        // Predicated region
        $region17: #{tpu_custom_call.1} parent=11 // pred_check
          %p210 = pneg %p96
        $region18: #{tpu_custom_call.1} parent=11 // pred_check_branch
          %212 = sbr.rel (%p210) target = $region20
        $region19: #{tpu_custom_call.1} parent=11 // pred_region
          _
        $region20: #{tpu_custom_call.1} parent=11 // pred_fallthru
          _
        // Predicated region
        $region21: #{tpu_custom_call.1} parent=11 // pred_check
          %p213 = pneg %p117
        $region22: #{tpu_custom_call.1} parent=11 // pred_check_branch
          %215 = sbr.rel (%p213) target = $region24
        $region23: #{tpu_custom_call.1} parent=11 // pred_region
          _
        $region24: #{tpu_custom_call.1} parent=11 // pred_fallthru
          _
        // Predicated region
        $region25: #{tpu_custom_call.1} parent=11 // pred_check
          %p216 = pneg %p138
        $region26: #{tpu_custom_call.1} parent=11 // pred_check_branch
          %218 = sbr.rel (%p216) target = $region28
        $region27: #{tpu_custom_call.1} parent=11 // pred_region
          _
        $region28: #{tpu_custom_call.1} parent=11 // pred_fallthru
          _
      $region12: #{tpu_custom_call.1} parent=5 // pred_fallthru
        _
      %p219 = scmp.lt.s32.totalorder %s16, 2
      // Predicated region
      $region29: #{tpu_custom_call.1} parent=5 // pred_check
        %p220 = pneg %p219
      $region30: #{tpu_custom_call.1} parent=5 // pred_check_branch
        %222 = sbr.rel (%p220) target = $region32
      $region31: #{tpu_custom_call.1} parent=5 // pred_region
        // Predicated region
        $region33: #{tpu_custom_call.1} parent=31 // pred_check
          %p223 = pneg %p48
        $region34: #{tpu_custom_call.1} parent=31 // pred_check_branch
          %225 = sbr.rel (%p223) target = $region36
        $region35: #{tpu_custom_call.1} parent=31 // pred_region
          %p226 = scmp.lt.s32.totalorder %s23, 1
          %s227 = scalar_select %p226, %s23, 1
          %s228 = smul.addr %s227, 16
          %s229 = smul.addr %s228, 4
          %s230 = scalar_lea.vmem %s0, %s229
        $region36: #{tpu_custom_call.1} parent=31 // pred_fallthru
          _
      $region32: #{tpu_custom_call.1} parent=5 // pred_fallthru
        _
      %p231 = scmp.le.s32.totalorder 1, %s16
      %p232 = scmp.lt.s32.totalorder %s16, 3
      %p233 = pnand %p231, %p232
      %p234 = pneg %p233
      // Predicated region
      $region37: #{tpu_custom_call.1} parent=5 // pred_check
        _
      $region38: #{tpu_custom_call.1} parent=5 // pred_check_branch
        %236 = sbr.rel (%p233) target = $region40
      $region39: #{tpu_custom_call.1} parent=5 // pred_region
        %s237 = ssub.s32 %s16, 1
        %p238 = scmp.lt.s32.totalorder %s25, 1
        %s239 = scalar_select %p238, %s25, 1
        %s240 = smul.addr %s239, 16
        %s241 = smul.addr %s240, 4
        %s242 = scalar_lea.vmem %s0, %s241
        %p243 = pneg %p54
        %p244 = pneg %p51
        %p245 = pneg %p75
        %p246 = pneg %p72
        %p247 = pneg %p96
        %p248 = pneg %p93
        %p249 = pneg %p117
        %p250 = pneg %p114
        %p251 = pneg %p138
        %p252 = pneg %p135
        %p253 = pneg %p164
        %p254 = pneg %p161
        %p255 = scmp.lt.s32.totalorder %s25, 1
        %s256 = scalar_select %p255, %s25, 1
        %s257 = smul.addr %s256, 16
        %s258 = smul.addr %s257, 8
        %s259 = scalar_lea.vmem %s5, %s258
        %p260 = pneg %p192
        %p261 = pneg %p189
        %s262 = sand.u32 %s179, 1
        %s263 = scalar_lea.sflag [#allocation4], %s262
        %s264 = sand.u32 %s179, 1
        %s265 = smul.addr %s264, 256
        %s266 = scalar_lea.vmem [#allocation3], %s265
        %p267 = scmp.lt.s32.totalorder %s25, 1
        %s268 = scalar_select %p267, %s25, 1
        %s269 = smul.addr %s268, 16
        %s270 = smul.addr %s269, 4
        %s271 = scalar_lea.vmem %s0, %s270
        %p272 = scmp.lt.s32.totalorder %s25, 1
        %s273 = scalar_select %p272, %s25, 1
        %s274 = smul.addr %s273, 16
        %s275 = smul.addr %s274, 8
        %s276 = scalar_lea.vmem %s5, %s275
        %s277 = smul.u32 4, %s26
        %v279 = vld [vmem:[%s271] sm:$0xf]
        %v280 = vld [vmem:[%s271 + $0x4] sm:$0xf]
        %v281 = vld [vmem:[%s271 + $0x8] sm:$0xf]
        %v282 = vld [vmem:[%s271 + $0xc] sm:$0xf]
        %v283 = vld [vmem:[%s271 + $0x10] sm:$0xf]
        %v284 = vld [vmem:[%s271 + $0x14] sm:$0xf]
        %v285 = vld [vmem:[%s271 + $0x18] sm:$0xf]
        %v286 = vld [vmem:[%s271 + $0x1c] sm:$0xf]
        %v287 = vld [vmem:[%s271 + $0x20] sm:$0xf]
        %v288 = vld [vmem:[%s271 + $0x24] sm:$0xf]
        %v289 = vld [vmem:[%s271 + $0x28] sm:$0xf]
        %v290 = vld [vmem:[%s271 + $0x2c] sm:$0xf]
        %v291 = vld [vmem:[%s271 + $0x30] sm:$0xf]
        %v292 = vld [vmem:[%s271 + $0x34] sm:$0xf]
        %v293 = vld [vmem:[%s271 + $0x38] sm:$0xf]
        %v294 = vld [vmem:[%s271 + $0x3c] sm:$0xf]
        %s295 = smul.u32 %s26, 4
        %s296 = smul.addr %s295, 4
        %s297 = scalar_lea.vmem %s1, %s296
        %v298 = vld [vmem:[%s297] sm:$0xf]
        %v299 = vld [vmem:[%s297 + $0x4] sm:$0xf]
        %v300 = vld [vmem:[%s297 + $0x8] sm:$0xf]
        %v301 = vld [vmem:[%s297 + $0xc] sm:$0xf]
        %s302 = scalar_lea.vmem %s2, %s26
        %v303 = vld [vmem:[%s302] sm:$0x1]
        %v305 = vlaneseq
        %v306 = vshrl.u32 %v305, 7
        %v307 = vsub.s32 0, %v306
        %v308 = vrot.slane %v303, %v307
        %v326 = vunpack.c.l.b16 %v279
        %v327 = vunpack.c.l.b16 %v280
        %v328 = vunpack.c.l.b16 %v281
        %v329 = vunpack.c.l.b16 %v282
        %v330 = vunpack.c.l.b16 %v283
        %v331 = vunpack.c.l.b16 %v284
        %v332 = vunpack.c.l.b16 %v285
        %v333 = vunpack.c.l.b16 %v286
        %v334 = vunpack.c.l.b16 %v287
        %v335 = vunpack.c.l.b16 %v288
        %v336 = vunpack.c.l.b16 %v289
        %v337 = vunpack.c.l.b16 %v290
        %v338 = vunpack.c.l.b16 %v291
        %v339 = vunpack.c.l.b16 %v292
        %v340 = vunpack.c.l.b16 %v293
        %v341 = vunpack.c.l.b16 %v294
        %v342 = vpack.c.b16 %v327, %v326
        %v343 = vpack.c.b16 %v329, %v328
        %v344 = vpack.c.b16 %v331, %v330
        %v345 = vpack.c.b16 %v333, %v332
        %v346 = vpack.c.b16 %v335, %v334
        %v347 = vpack.c.b16 %v337, %v336
        %v348 = vpack.c.b16 %v339, %v338
        %v349 = vpack.c.b16 %v341, %v340
        %v354 = vunpack.c.l.b16 %v298
        %v355 = vunpack.c.l.b16 %v299
        %v356 = vunpack.c.l.b16 %v300
        %v357 = vunpack.c.l.b16 %v301
        %v358 = vpack.c.b16 %v355, %v354
        %v359 = vpack.c.b16 %v357, %v356
        %vm362 = vcmask 261120
        %v364 = vsel %vm362, %v342, 0
        %v367 = vsel %vm362, %v343, 0
        %v370 = vsel %vm362, %v344, 0
        %v373 = vsel %vm362, %v345, 0
        %v376 = vsel %vm362, %v346, 0
        %v379 = vsel %vm362, %v347, 0
        %v382 = vsel %vm362, %v348, 0
        %v385 = vsel %vm362, %v349, 0
        %387 = vmatprep.subr.bf16.mxu0 0
        %388 = vmatpush1.bf16.msra.mxu0 0
        %389 = vmatprep.subr.bf16.mxu0 0
        %390 = vmatpush1.bf16.msra.mxu0 0
        %391 = vmatprep.subr.bf16.mxu0 0
        %392 = vmatpush1.bf16.msra.mxu0 0
        %393 = vmatprep.subr.bf16.mxu0 0
        %394 = vmatpush1.bf16.msra.mxu0 0
        %395 = vmatprep.subr.bf16.mxu0 0
        %396 = vmatpush1.bf16.msra.mxu0 0
        %397 = vmatprep.subr.bf16.mxu0 0
        %398 = vmatpush1.bf16.msra.mxu0 0
        %399 = vmatprep.subr.bf16.mxu0 0
        %400 = vmatpush1.bf16.msra.mxu0 %v359
        %401 = vmatprep.subr.bf16.mxu0 0
        %402 = vmatpush1.bf16.msra.mxu0 %v358
        %403 = vmatprep.subr.bf16.mxu0 0
        %404 = vmatpush2.bf16.msra.mxu0 0
        %405 = vmatprep.subr.bf16.mxu0 0
        %406 = vmatpush2.bf16.msra.mxu0 0
        %407 = vmatprep.subr.bf16.mxu0 0
        %408 = vmatpush2.bf16.msra.mxu0 0
        %409 = vmatprep.subr.bf16.mxu0 0
        %410 = vmatpush2.bf16.msra.mxu0 0
        %411 = vmatprep.subr.bf16.mxu0 0
        %412 = vmatpush2.bf16.msra.mxu0 0
        %413 = vmatprep.subr.bf16.mxu0 0
        %414 = vmatpush2.bf16.msra.mxu0 0
        %415 = vmatprep.subr.bf16.mxu0 0
        %416 = vmatpush2.bf16.msra.mxu0 0
        %417 = vmatprep.subr.bf16.mxu0 0
        %418 = vmatpush2.bf16.msra.mxu0 0
        %419 = vmatprep.mubr.bf16.mxu0 0
        %420 = vmatmul.mubr.bf16.gmra.mxu0 %v364
        %v421 = vpop.f32.mrf.mxu0
        %v422 = vadd.f32 %v308, %v421
        %v423 = vpop.f32.mrf.mxu0
        %v424 = vpop.f32.mrf.mxu0
        %v425 = vadd.f32 %v308, %v424
        %v426 = vpop.f32.mrf.mxu0
        %427 = vmatprep.mubr.bf16.mxu0 0
        %428 = vmatmul.mubr.bf16.gmra.mxu0 %v367
        %v429 = vpop.f32.mrf.mxu0
        %v430 = vadd.f32 %v308, %v429
        %v431 = vpop.f32.mrf.mxu0
        %v432 = vpop.f32.mrf.mxu0
        %v433 = vadd.f32 %v308, %v432
        %v434 = vpop.f32.mrf.mxu0
        %435 = vmatprep.mubr.bf16.mxu0 0
        %436 = vmatmul.mubr.bf16.gmra.mxu0 %v370
        %v437 = vpop.f32.mrf.mxu0
        %v438 = vadd.f32 %v308, %v437
        %v439 = vpop.f32.mrf.mxu0
        %v440 = vpop.f32.mrf.mxu0
        %v441 = vadd.f32 %v308, %v440
        %v442 = vpop.f32.mrf.mxu0
        %443 = vmatprep.mubr.bf16.mxu0 0
        %444 = vmatmul.mubr.bf16.gmra.mxu0 %v373
        %v445 = vpop.f32.mrf.mxu0
        %v446 = vadd.f32 %v308, %v445
        %v447 = vpop.f32.mrf.mxu0
        %v448 = vpop.f32.mrf.mxu0
        %v449 = vadd.f32 %v308, %v448
        %v450 = vpop.f32.mrf.mxu0
        %451 = vmatprep.mubr.bf16.mxu0 0
        %452 = vmatmul.mubr.bf16.gmra.mxu0 %v376
        %v453 = vpop.f32.mrf.mxu0
        %v454 = vadd.f32 %v308, %v453
        %v455 = vpop.f32.mrf.mxu0
        %v456 = vpop.f32.mrf.mxu0
        %v457 = vadd.f32 %v308, %v456
        %v458 = vpop.f32.mrf.mxu0
        %459 = vmatprep.mubr.bf16.mxu0 0
        %460 = vmatmul.mubr.bf16.gmra.mxu0 %v379
        %v461 = vpop.f32.mrf.mxu0
        %v462 = vadd.f32 %v308, %v461
        %v463 = vpop.f32.mrf.mxu0
        %v464 = vpop.f32.mrf.mxu0
        %v465 = vadd.f32 %v308, %v464
        %v466 = vpop.f32.mrf.mxu0
        %467 = vmatprep.mubr.bf16.mxu0 0
        %468 = vmatmul.mubr.bf16.gmra.mxu0 %v382
        %v469 = vpop.f32.mrf.mxu0
        %v470 = vadd.f32 %v308, %v469
        %v471 = vpop.f32.mrf.mxu0
        %v472 = vpop.f32.mrf.mxu0
        %v473 = vadd.f32 %v308, %v472
        %v474 = vpop.f32.mrf.mxu0
        %475 = vmatprep.mubr.bf16.mxu0 0
        %476 = vmatmul.mubr.bf16.gmra.mxu0 %v385
        %v477 = vpop.f32.mrf.mxu0
        %v478 = vadd.f32 %v308, %v477
        %v479 = vpop.f32.mrf.mxu0
        %v480 = vpop.f32.mrf.mxu0
        %v481 = vadd.f32 %v308, %v480
        %v482 = vpop.f32.mrf.mxu0
        %483 = vdwg.mxu0
        %v484 = vlaneseq
        %v485 = vand.u32 %v484, 127
        %vm486 = vcmp.lt.s32.totalorder %v485, 8
        %v487 = vpack.c.bf16 %v425, %v422
        %v488 = vpack.c.bf16 %v433, %v430
        %v489 = vpack.c.bf16 %v441, %v438
        %v490 = vpack.c.bf16 %v449, %v446
        %v491 = vpack.c.bf16 %v457, %v454
        %v492 = vpack.c.bf16 %v465, %v462
        %v493 = vpack.c.bf16 %v473, %v470
        %v494 = vpack.c.bf16 %v481, %v478
        %503 = vrot.lane.b32.xlu0 %v487, 96
        %v504 = vpop.permute.xlu0 %503
        %505 = vrot.lane.b32.xlu0 %v488, 96
        %v506 = vpop.permute.xlu0 %505
        %507 = vrot.lane.b32.xlu0 %v489, 96
        %v508 = vpop.permute.xlu0 %507
        %509 = vrot.lane.b32.xlu0 %v490, 96
        %v510 = vpop.permute.xlu0 %509
        %511 = vrot.lane.b32.xlu0 %v491, 96
        %v512 = vpop.permute.xlu0 %511
        %513 = vrot.lane.b32.xlu0 %v492, 96
        %v514 = vpop.permute.xlu0 %513
        %515 = vrot.lane.b32.xlu0 %v493, 96
        %v516 = vpop.permute.xlu0 %515
        %517 = vrot.lane.b32.xlu0 %v494, 96
        %v518 = vpop.permute.xlu0 %517
        %vm519 = vcmask 64512
        %v521 = vsel %vm519, %v487, 0
        %v524 = vsel %vm519, %v488, 0
        %v527 = vsel %vm519, %v489, 0
        %v530 = vsel %vm519, %v490, 0
        %v533 = vsel %vm519, %v491, 0
        %v536 = vsel %vm519, %v492, 0
        %v539 = vsel %vm519, %v493, 0
        %v542 = vsel %vm519, %v494, 0
        %v545 = vsel %vm519, %v504, 0
        %v548 = vsel %vm519, %v506, 0
        %v551 = vsel %vm519, %v508, 0
        %v554 = vsel %vm519, %v510, 0
        %v557 = vsel %vm519, %v512, 0
        %v560 = vsel %vm519, %v514, 0
        %v563 = vsel %vm519, %v516, 0
        %v566 = vsel %vm519, %v518, 0
        %568 = vmatprep.subr.bf16.mxu0 0
        %569 = vmatpush1.bf16.xpose.msra.mxu0 %v566
        %570 = vmatprep.subr.bf16.mxu0 0
        %571 = vmatpush1.bf16.xpose.msra.mxu0 %v563
        %572 = vmatprep.subr.bf16.mxu0 0
        %573 = vmatpush1.bf16.xpose.msra.mxu0 %v560
        %574 = vmatprep.subr.bf16.mxu0 0
        %575 = vmatpush1.bf16.xpose.msra.mxu0 %v557
        %576 = vmatprep.subr.bf16.mxu0 0
        %577 = vmatpush1.bf16.xpose.msra.mxu0 %v554
        %578 = vmatprep.subr.bf16.mxu0 0
        %579 = vmatpush1.bf16.xpose.msra.mxu0 %v551
        %580 = vmatprep.subr.bf16.mxu0 0
        %581 = vmatpush1.bf16.xpose.msra.mxu0 %v548
        %582 = vmatprep.subr.bf16.mxu0 0
        %583 = vmatpush1.bf16.xpose.msra.mxu0 %v545
        %584 = vmatprep.subr.bf16.mxu0 0
        %585 = vmatpush2.bf16.xpose.msra.mxu0 0
        %586 = vmatprep.subr.bf16.mxu0 0
        %587 = vmatpush2.bf16.xpose.msra.mxu0 0
        %588 = vmatprep.subr.bf16.mxu0 0
        %589 = vmatpush2.bf16.xpose.msra.mxu0 0
        %590 = vmatprep.subr.bf16.mxu0 0
        %591 = vmatpush2.bf16.xpose.msra.mxu0 0
        %592 = vmatprep.subr.bf16.mxu0 0
        %593 = vmatpush2.bf16.xpose.msra.mxu0 0
        %594 = vmatprep.subr.bf16.mxu0 0
        %595 = vmatpush2.bf16.xpose.msra.mxu0 0
        %596 = vmatprep.subr.bf16.mxu0 0
        %597 = vmatpush2.bf16.xpose.msra.mxu0 0
        %598 = vmatprep.subr.bf16.mxu0 0
        %599 = vmatpush2.bf16.xpose.msra.mxu0 0
        %600 = vmatprep.mubr.bf16.mxu0 0
        %601 = vmatmul.mubr.bf16.gmra.mxu0 %v521
        %v602 = vpop.f32.mrf.mxu0
        %v603 = vadd.f32 0.0, %v602
        %v604 = vpop.f32.mrf.mxu0
        %v605 = vpop.f32.mrf.mxu0
        %v606 = vadd.f32 0.0, %v605
        %v607 = vpop.f32.mrf.mxu0
        %608 = vmatprep.mubr.bf16.mxu0 0
        %609 = vmatmul.mubr.bf16.gmra.mxu0 %v524
        %v610 = vpop.f32.mrf.mxu0
        %v611 = vadd.f32 0.0, %v610
        %v612 = vpop.f32.mrf.mxu0
        %v613 = vpop.f32.mrf.mxu0
        %v614 = vadd.f32 0.0, %v613
        %v615 = vpop.f32.mrf.mxu0
        %616 = vmatprep.mubr.bf16.mxu0 0
        %617 = vmatmul.mubr.bf16.gmra.mxu0 %v527
        %v618 = vpop.f32.mrf.mxu0
        %v619 = vadd.f32 0.0, %v618
        %v620 = vpop.f32.mrf.mxu0
        %v621 = vpop.f32.mrf.mxu0
        %v622 = vadd.f32 0.0, %v621
        %v623 = vpop.f32.mrf.mxu0
        %624 = vmatprep.mubr.bf16.mxu0 0
        %625 = vmatmul.mubr.bf16.gmra.mxu0 %v530
        %v626 = vpop.f32.mrf.mxu0
        %v627 = vadd.f32 0.0, %v626
        %v628 = vpop.f32.mrf.mxu0
        %v629 = vpop.f32.mrf.mxu0
        %v630 = vadd.f32 0.0, %v629
        %v631 = vpop.f32.mrf.mxu0
        %632 = vmatprep.mubr.bf16.mxu0 0
        %633 = vmatmul.mubr.bf16.gmra.mxu0 %v533
        %v634 = vpop.f32.mrf.mxu0
        %v635 = vadd.f32 0.0, %v634
        %v636 = vpop.f32.mrf.mxu0
        %v637 = vpop.f32.mrf.mxu0
        %v638 = vadd.f32 0.0, %v637
        %v639 = vpop.f32.mrf.mxu0
        %640 = vmatprep.mubr.bf16.mxu0 0
        %641 = vmatmul.mubr.bf16.gmra.mxu0 %v536
        %v642 = vpop.f32.mrf.mxu0
        %v643 = vadd.f32 0.0, %v642
        %v644 = vpop.f32.mrf.mxu0
        %v645 = vpop.f32.mrf.mxu0
        %v646 = vadd.f32 0.0, %v645
        %v647 = vpop.f32.mrf.mxu0
        %648 = vmatprep.mubr.bf16.mxu0 0
        %649 = vmatmul.mubr.bf16.gmra.mxu0 %v539
        %v650 = vpop.f32.mrf.mxu0
        %v651 = vadd.f32 0.0, %v650
        %v652 = vpop.f32.mrf.mxu0
        %v653 = vpop.f32.mrf.mxu0
        %v654 = vadd.f32 0.0, %v653
        %v655 = vpop.f32.mrf.mxu0
        %656 = vmatprep.mubr.bf16.mxu0 0
        %657 = vmatmul.mubr.bf16.gmra.mxu0 %v542
        %v658 = vpop.f32.mrf.mxu0
        %v659 = vadd.f32 0.0, %v658
        %v660 = vpop.f32.mrf.mxu0
        %v661 = vpop.f32.mrf.mxu0
        %v662 = vadd.f32 0.0, %v661
        %v663 = vpop.f32.mrf.mxu0
        %664 = vdwg.mxu0
        %v665 = vsel %vm486, 1, 0
        %vm666 = vcmp.eq.s32.totalorder %v665, 1
        %v667 = vsel %vm666, %v603, -1e+30
        %v668 = vsel %vm666, %v606, -1e+30
        %v669 = vsel %vm666, %v611, -1e+30
        %v670 = vsel %vm666, %v614, -1e+30
        %v671 = vsel %vm666, %v619, -1e+30
        %v672 = vsel %vm666, %v622, -1e+30
        %v673 = vsel %vm666, %v627, -1e+30
        %v674 = vsel %vm666, %v630, -1e+30
        %v675 = vsel %vm666, %v635, -1e+30
        %v676 = vsel %vm666, %v638, -1e+30
        %v677 = vsel %vm666, %v643, -1e+30
        %v678 = vsel %vm666, %v646, -1e+30
        %v679 = vsel %vm666, %v651, -1e+30
        %v680 = vsel %vm666, %v654, -1e+30
        %v681 = vsel %vm666, %v659, -1e+30
        %v682 = vsel %vm666, %v662, -1e+30
        %683 = vmax.xlane.f32.xlu0 %v667
        %v684 = vpop.xlane.xlu0 %683
        %685 = vmax.xlane.f32.xlu0 %v668
        %v686 = vpop.xlane.xlu0 %685
        %687 = vmax.xlane.f32.xlu0 %v669
        %v688 = vpop.xlane.xlu0 %687
        %689 = vmax.xlane.f32.xlu0 %v670
        %v690 = vpop.xlane.xlu0 %689
        %691 = vmax.xlane.f32.xlu0 %v671
        %v692 = vpop.xlane.xlu0 %691
        %693 = vmax.xlane.f32.xlu0 %v672
        %v694 = vpop.xlane.xlu0 %693
        %695 = vmax.xlane.f32.xlu0 %v673
        %v696 = vpop.xlane.xlu0 %695
        %697 = vmax.xlane.f32.xlu0 %v674
        %v698 = vpop.xlane.xlu0 %697
        %699 = vmax.xlane.f32.xlu0 %v675
        %v700 = vpop.xlane.xlu0 %699
        %701 = vmax.xlane.f32.xlu0 %v676
        %v702 = vpop.xlane.xlu0 %701
        %703 = vmax.xlane.f32.xlu0 %v677
        %v704 = vpop.xlane.xlu0 %703
        %705 = vmax.xlane.f32.xlu0 %v678
        %v706 = vpop.xlane.xlu0 %705
        %707 = vmax.xlane.f32.xlu0 %v679
        %v708 = vpop.xlane.xlu0 %707
        %709 = vmax.xlane.f32.xlu0 %v680
        %v710 = vpop.xlane.xlu0 %709
        %711 = vmax.xlane.f32.xlu0 %v681
        %v712 = vpop.xlane.xlu0 %711
        %713 = vmax.xlane.f32.xlu0 %v682
        %v714 = vpop.xlane.xlu0 %713
        %v715 = vsub.f32 %v667, %v684
        %v716 = vsub.f32 %v668, %v686
        %v717 = vsub.f32 %v669, %v688
        %v718 = vsub.f32 %v670, %v690
        %v719 = vsub.f32 %v671, %v692
        %v720 = vsub.f32 %v672, %v694
        %v721 = vsub.f32 %v673, %v696
        %v722 = vsub.f32 %v674, %v698
        %v723 = vsub.f32 %v675, %v700
        %v724 = vsub.f32 %v676, %v702
        %v725 = vsub.f32 %v677, %v704
        %v726 = vsub.f32 %v678, %v706
        %v727 = vsub.f32 %v679, %v708
        %v728 = vsub.f32 %v680, %v710
        %v729 = vsub.f32 %v681, %v712
        %v730 = vsub.f32 %v682, %v714
        %v731 = vmul.f32 %v715, 1.442695
        %v732 = vpow.pop %v731
        %v733 = vmul.f32 %v716, 1.442695
        %v734 = vpow.pop %v733
        %v735 = vmul.f32 %v717, 1.442695
        %v736 = vpow.pop %v735
        %v737 = vmul.f32 %v718, 1.442695
        %v738 = vpow.pop %v737
        %v739 = vmul.f32 %v719, 1.442695
        %v740 = vpow.pop %v739
        %v741 = vmul.f32 %v720, 1.442695
        %v742 = vpow.pop %v741
        %v743 = vmul.f32 %v721, 1.442695
        %v744 = vpow.pop %v743
        %v745 = vmul.f32 %v722, 1.442695
        %v746 = vpow.pop %v745
        %v747 = vmul.f32 %v723, 1.442695
        %v748 = vpow.pop %v747
        %v749 = vmul.f32 %v724, 1.442695
        %v750 = vpow.pop %v749
        %v751 = vmul.f32 %v725, 1.442695
        %v752 = vpow.pop %v751
        %v753 = vmul.f32 %v726, 1.442695
        %v754 = vpow.pop %v753
        %v755 = vmul.f32 %v727, 1.442695
        %v756 = vpow.pop %v755
        %v757 = vmul.f32 %v728, 1.442695
        %v758 = vpow.pop %v757
        %v759 = vmul.f32 %v729, 1.442695
        %v760 = vpow.pop %v759
        %v761 = vmul.f32 %v730, 1.442695
        %v762 = vpow.pop %v761
        %763 = vadd.xlane.f32.xlu0 %v732
        %v764 = vpop.xlane.xlu0 %763
        %765 = vadd.xlane.f32.xlu0 %v734
        %v766 = vpop.xlane.xlu0 %765
        %767 = vadd.xlane.f32.xlu0 %v736
        %v768 = vpop.xlane.xlu0 %767
        %769 = vadd.xlane.f32.xlu0 %v738
        %v770 = vpop.xlane.xlu0 %769
        %771 = vadd.xlane.f32.xlu0 %v740
        %v772 = vpop.xlane.xlu0 %771
        %773 = vadd.xlane.f32.xlu0 %v742
        %v774 = vpop.xlane.xlu0 %773
        %775 = vadd.xlane.f32.xlu0 %v744
        %v776 = vpop.xlane.xlu0 %775
        %777 = vadd.xlane.f32.xlu0 %v746
        %v778 = vpop.xlane.xlu0 %777
        %779 = vadd.xlane.f32.xlu0 %v748
        %v780 = vpop.xlane.xlu0 %779
        %781 = vadd.xlane.f32.xlu0 %v750
        %v782 = vpop.xlane.xlu0 %781
        %783 = vadd.xlane.f32.xlu0 %v752
        %v784 = vpop.xlane.xlu0 %783
        %785 = vadd.xlane.f32.xlu0 %v754
        %v786 = vpop.xlane.xlu0 %785
        %787 = vadd.xlane.f32.xlu0 %v756
        %v788 = vpop.xlane.xlu0 %787
        %789 = vadd.xlane.f32.xlu0 %v758
        %v790 = vpop.xlane.xlu0 %789
        %791 = vadd.xlane.f32.xlu0 %v760
        %v792 = vpop.xlane.xlu0 %791
        %793 = vadd.xlane.f32.xlu0 %v762
        %v794 = vpop.xlane.xlu0 %793
        %v795 = vrcp.pop %v764
        %v796 = vrcp.pop %v766
        %v797 = vrcp.pop %v768
        %v798 = vrcp.pop %v770
        %v799 = vrcp.pop %v772
        %v800 = vrcp.pop %v774
        %v801 = vrcp.pop %v776
        %v802 = vrcp.pop %v778
        %v803 = vrcp.pop %v780
        %v804 = vrcp.pop %v782
        %v805 = vrcp.pop %v784
        %v806 = vrcp.pop %v786
        %v807 = vrcp.pop %v788
        %v808 = vrcp.pop %v790
        %v809 = vrcp.pop %v792
        %v810 = vrcp.pop %v794
        %v811 = vmul.f32 %v732, %v795
        %v812 = vmul.f32 %v734, %v796
        %v813 = vmul.f32 %v736, %v797
        %v814 = vmul.f32 %v738, %v798
        %v815 = vmul.f32 %v740, %v799
        %v816 = vmul.f32 %v742, %v800
        %v817 = vmul.f32 %v744, %v801
        %v818 = vmul.f32 %v746, %v802
        %v819 = vmul.f32 %v748, %v803
        %v820 = vmul.f32 %v750, %v804
        %v821 = vmul.f32 %v752, %v805
        %v822 = vmul.f32 %v754, %v806
        %v823 = vmul.f32 %v756, %v807
        %v824 = vmul.f32 %v758, %v808
        %v825 = vmul.f32 %v760, %v809
        %v826 = vmul.f32 %v762, %v810
        %v827 = vpack.c.bf16 %v812, %v811
        %v828 = vpack.c.bf16 %v814, %v813
        %v829 = vpack.c.bf16 %v816, %v815
        %v830 = vpack.c.bf16 %v818, %v817
        %v831 = vpack.c.bf16 %v820, %v819
        %v832 = vpack.c.bf16 %v822, %v821
        %v833 = vpack.c.bf16 %v824, %v823
        %v834 = vpack.c.bf16 %v826, %v825
        %v843 = vunpack.c.l.b16 %v827
        %v844 = vunpack.c.h.b16 %v827
        %v845 = vunpack.c.l.b16 %v828
        %v846 = vunpack.c.h.b16 %v828
        %v847 = vunpack.c.l.b16 %v829
        %v848 = vunpack.c.h.b16 %v829
        %v849 = vunpack.c.l.b16 %v830
        %v850 = vunpack.c.h.b16 %v830
        %v851 = vunpack.c.l.b16 %v831
        %v852 = vunpack.c.h.b16 %v831
        %v853 = vunpack.c.l.b16 %v832
        %v854 = vunpack.c.h.b16 %v832
        %v855 = vunpack.c.l.b16 %v833
        %v856 = vunpack.c.h.b16 %v833
        %v857 = vunpack.c.l.b16 %v834
        %v858 = vunpack.c.h.b16 %v834
        %v859 = vpack.c.b16 %v843, %v843
        %v860 = vpack.c.b16 %v844, %v844
        %v861 = vpack.c.b16 %v845, %v845
        %v862 = vpack.c.b16 %v846, %v846
        %v863 = vpack.c.b16 %v847, %v847
        %v864 = vpack.c.b16 %v848, %v848
        %v865 = vpack.c.b16 %v849, %v849
        %v866 = vpack.c.b16 %v850, %v850
        %v867 = vpack.c.b16 %v851, %v851
        %v868 = vpack.c.b16 %v852, %v852
        %v869 = vpack.c.b16 %v853, %v853
        %v870 = vpack.c.b16 %v854, %v854
        %v871 = vpack.c.b16 %v855, %v855
        %v872 = vpack.c.b16 %v856, %v856
        %v873 = vpack.c.b16 %v857, %v857
        %v874 = vpack.c.b16 %v858, %v858
        %891 = vst [vmem:[%s266] sm:$0xf] %v859
        %892 = vst [vmem:[%s266 + $0x4] sm:$0xf] %v860
        %893 = vst [vmem:[%s266 + $0x8] sm:$0xf] %v861
        %894 = vst [vmem:[%s266 + $0xc] sm:$0xf] %v862
        %895 = vst [vmem:[%s266 + $0x10] sm:$0xf] %v863
        %896 = vst [vmem:[%s266 + $0x14] sm:$0xf] %v864
        %897 = vst [vmem:[%s266 + $0x18] sm:$0xf] %v865
        %898 = vst [vmem:[%s266 + $0x1c] sm:$0xf] %v866
        %899 = vst [vmem:[%s266 + $0x20] sm:$0xf] %v867
        %900 = vst [vmem:[%s266 + $0x24] sm:$0xf] %v868
        %901 = vst [vmem:[%s266 + $0x28] sm:$0xf] %v869
        %902 = vst [vmem:[%s266 + $0x2c] sm:$0xf] %v870
        %903 = vst [vmem:[%s266 + $0x30] sm:$0xf] %v871
        %904 = vst [vmem:[%s266 + $0x34] sm:$0xf] %v872
        %905 = vst [vmem:[%s266 + $0x38] sm:$0xf] %v873
        %906 = vst [vmem:[%s266 + $0x3c] sm:$0xf] %v874
        %907 = vrot.lane.b32.xlu0 %v487, 64
        %v908 = vpop.permute.xlu0 %907
        %909 = vrot.lane.b32.xlu0 %v488, 64
        %v910 = vpop.permute.xlu0 %909
        %911 = vrot.lane.b32.xlu0 %v489, 64
        %v912 = vpop.permute.xlu0 %911
        %913 = vrot.lane.b32.xlu0 %v490, 64
        %v914 = vpop.permute.xlu0 %913
        %915 = vrot.lane.b32.xlu0 %v491, 64
        %v916 = vpop.permute.xlu0 %915
        %917 = vrot.lane.b32.xlu0 %v492, 64
        %v918 = vpop.permute.xlu0 %917
        %919 = vrot.lane.b32.xlu0 %v493, 64
        %v920 = vpop.permute.xlu0 %919
        %921 = vrot.lane.b32.xlu0 %v494, 64
        %v922 = vpop.permute.xlu0 %921
        %931 = vmatprep.subr.bf16.mxu0 0
        %932 = vmatpush1.bf16.msra.mxu0 %v922
        %933 = vmatprep.subr.bf16.mxu0 0
        %934 = vmatpush1.bf16.msra.mxu0 %v920
        %935 = vmatprep.subr.bf16.mxu0 0
        %936 = vmatpush1.bf16.msra.mxu0 %v918
        %937 = vmatprep.subr.bf16.mxu0 0
        %938 = vmatpush1.bf16.msra.mxu0 %v916
        %939 = vmatprep.subr.bf16.mxu0 0
        %940 = vmatpush1.bf16.msra.mxu0 %v914
        %941 = vmatprep.subr.bf16.mxu0 0
        %942 = vmatpush1.bf16.msra.mxu0 %v912
        %943 = vmatprep.subr.bf16.mxu0 0
        %944 = vmatpush1.bf16.msra.mxu0 %v910
        %945 = vmatprep.subr.bf16.mxu0 0
        %946 = vmatpush1.bf16.msra.mxu0 %v908
        %947 = vmatprep.subr.bf16.mxu0 0
        %948 = vmatpush2.bf16.msra.mxu0 0
        %949 = vmatprep.subr.bf16.mxu0 0
        %950 = vmatpush2.bf16.msra.mxu0 0
        %951 = vmatprep.subr.bf16.mxu0 0
        %952 = vmatpush2.bf16.msra.mxu0 0
        %953 = vmatprep.subr.bf16.mxu0 0
        %954 = vmatpush2.bf16.msra.mxu0 0
        %955 = vmatprep.subr.bf16.mxu0 0
        %956 = vmatpush2.bf16.msra.mxu0 0
        %957 = vmatprep.subr.bf16.mxu0 0
        %958 = vmatpush2.bf16.msra.mxu0 0
        %959 = vmatprep.subr.bf16.mxu0 0
        %960 = vmatpush2.bf16.msra.mxu0 0
        %961 = vmatprep.subr.bf16.mxu0 0
        %962 = vmatpush2.bf16.msra.mxu0 0
        %963 = vmatprep.mubr.bf16.mxu0 0
        %964 = vmatmul.mubr.bf16.gmra.mxu0 %v827
        %v965 = vpop.f32.mrf.mxu0
        %v966 = vadd.f32 0.0, %v965
        %v967 = vpop.f32.mrf.mxu0
        %v968 = vpop.f32.mrf.mxu0
        %v969 = vadd.f32 0.0, %v968
        %v970 = vpop.f32.mrf.mxu0
        %971 = vmatprep.mubr.bf16.mxu0 0
        %972 = vmatmul.mubr.bf16.gmra.mxu0 %v828
        %v973 = vpop.f32.mrf.mxu0
        %v974 = vadd.f32 0.0, %v973
        %v975 = vpop.f32.mrf.mxu0
        %v976 = vpop.f32.mrf.mxu0
        %v977 = vadd.f32 0.0, %v976
        %v978 = vpop.f32.mrf.mxu0
        %979 = vmatprep.mubr.bf16.mxu0 0
        %980 = vmatmul.mubr.bf16.gmra.mxu0 %v829
        %v981 = vpop.f32.mrf.mxu0
        %v982 = vadd.f32 0.0, %v981
        %v983 = vpop.f32.mrf.mxu0
        %v984 = vpop.f32.mrf.mxu0
        %v985 = vadd.f32 0.0, %v984
        %v986 = vpop.f32.mrf.mxu0
        %987 = vmatprep.mubr.bf16.mxu0 0
        %988 = vmatmul.mubr.bf16.gmra.mxu0 %v830
        %v989 = vpop.f32.mrf.mxu0
        %v990 = vadd.f32 0.0, %v989
        %v991 = vpop.f32.mrf.mxu0
        %v992 = vpop.f32.mrf.mxu0
        %v993 = vadd.f32 0.0, %v992
        %v994 = vpop.f32.mrf.mxu0
        %995 = vmatprep.mubr.bf16.mxu0 0
        %996 = vmatmul.mubr.bf16.gmra.mxu0 %v831
        %v997 = vpop.f32.mrf.mxu0
        %v998 = vadd.f32 0.0, %v997
        %v999 = vpop.f32.mrf.mxu0
        %v1000 = vpop.f32.mrf.mxu0
        %v1001 = vadd.f32 0.0, %v1000
        %v1002 = vpop.f32.mrf.mxu0
        %1003 = vmatprep.mubr.bf16.mxu0 0
        %1004 = vmatmul.mubr.bf16.gmra.mxu0 %v832
        %v1005 = vpop.f32.mrf.mxu0
        %v1006 = vadd.f32 0.0, %v1005
        %v1007 = vpop.f32.mrf.mxu0
        %v1008 = vpop.f32.mrf.mxu0
        %v1009 = vadd.f32 0.0, %v1008
        %v1010 = vpop.f32.mrf.mxu0
        %1011 = vmatprep.mubr.bf16.mxu0 0
        %1012 = vmatmul.mubr.bf16.gmra.mxu0 %v833
        %v1013 = vpop.f32.mrf.mxu0
        %v1014 = vadd.f32 0.0, %v1013
        %v1015 = vpop.f32.mrf.mxu0
        %v1016 = vpop.f32.mrf.mxu0
        %v1017 = vadd.f32 0.0, %v1016
        %v1018 = vpop.f32.mrf.mxu0
        %1019 = vmatprep.mubr.bf16.mxu0 0
        %1020 = vmatmul.mubr.bf16.gmra.mxu0 %v834
        %v1021 = vpop.f32.mrf.mxu0
        %v1022 = vadd.f32 0.0, %v1021
        %v1023 = vpop.f32.mrf.mxu0
        %v1024 = vpop.f32.mrf.mxu0
        %v1025 = vadd.f32 0.0, %v1024
        %v1026 = vpop.f32.mrf.mxu0
        %1027 = vdwg.mxu0
        %v1028 = vpack.c.bf16 %v969, %v966
        %v1029 = vpack.c.bf16 %v977, %v974
        %v1030 = vpack.c.bf16 %v985, %v982
        %v1031 = vpack.c.bf16 %v993, %v990
        %v1032 = vpack.c.bf16 %v1001, %v998
        %v1033 = vpack.c.bf16 %v1009, %v1006
        %v1034 = vpack.c.bf16 %v1017, %v1014
        %v1035 = vpack.c.bf16 %v1025, %v1022
        %v1044 = vunpack.c.l.b16 %v1028
        %v1045 = vunpack.c.h.b16 %v1028
        %v1046 = vunpack.c.l.b16 %v1029
        %v1047 = vunpack.c.h.b16 %v1029
        %v1048 = vunpack.c.l.b16 %v1030
        %v1049 = vunpack.c.h.b16 %v1030
        %v1050 = vunpack.c.l.b16 %v1031
        %v1051 = vunpack.c.h.b16 %v1031
        %v1052 = vunpack.c.l.b16 %v1032
        %v1053 = vunpack.c.h.b16 %v1032
        %v1054 = vunpack.c.l.b16 %v1033
        %v1055 = vunpack.c.h.b16 %v1033
        %v1056 = vunpack.c.l.b16 %v1034
        %v1057 = vunpack.c.h.b16 %v1034
        %v1058 = vunpack.c.l.b16 %v1035
        %v1059 = vunpack.c.h.b16 %v1035
        %v1060 = vpack.c.b16 %v1044, %v1044
        %v1061 = vpack.c.b16 %v1045, %v1045
        %v1062 = vpack.c.b16 %v1046, %v1046
        %v1063 = vpack.c.b16 %v1047, %v1047
        %v1064 = vpack.c.b16 %v1048, %v1048
        %v1065 = vpack.c.b16 %v1049, %v1049
        %v1066 = vpack.c.b16 %v1050, %v1050
        %v1067 = vpack.c.b16 %v1051, %v1051
        %v1068 = vpack.c.b16 %v1052, %v1052
        %v1069 = vpack.c.b16 %v1053, %v1053
        %v1070 = vpack.c.b16 %v1054, %v1054
        %v1071 = vpack.c.b16 %v1055, %v1055
        %v1072 = vpack.c.b16 %v1056, %v1056
        %v1073 = vpack.c.b16 %v1057, %v1057
        %v1074 = vpack.c.b16 %v1058, %v1058
        %v1075 = vpack.c.b16 %v1059, %v1059
        %vm1092 = vcmask 60416
        %1093 = vst.msk [vmem:[#allocation2] sm:$0xf] %vm1092, %v1060
        %1094 = vst.msk [vmem:[#allocation2 + $0x4] sm:$0xf] %vm1092, %v1061
        %1095 = vst.msk [vmem:[#allocation2 + $0x8] sm:$0xf] %vm1092, %v1062
        %1096 = vst.msk [vmem:[#allocation2 + $0xc] sm:$0xf] %vm1092, %v1063
        %1097 = vst.msk [vmem:[#allocation2 + $0x10] sm:$0xf] %vm1092, %v1064
        %1098 = vst.msk [vmem:[#allocation2 + $0x14] sm:$0xf] %vm1092, %v1065
        %1099 = vst.msk [vmem:[#allocation2 + $0x18] sm:$0xf] %vm1092, %v1066
        %1100 = vst.msk [vmem:[#allocation2 + $0x1c] sm:$0xf] %vm1092, %v1067
        %1101 = vst.msk [vmem:[#allocation2 + $0x20] sm:$0xf] %vm1092, %v1068
        %1102 = vst.msk [vmem:[#allocation2 + $0x24] sm:$0xf] %vm1092, %v1069
        %1103 = vst.msk [vmem:[#allocation2 + $0x28] sm:$0xf] %vm1092, %v1070
        %1104 = vst.msk [vmem:[#allocation2 + $0x2c] sm:$0xf] %vm1092, %v1071
        %1105 = vst.msk [vmem:[#allocation2 + $0x30] sm:$0xf] %vm1092, %v1072
        %1106 = vst.msk [vmem:[#allocation2 + $0x34] sm:$0xf] %vm1092, %v1073
        %1107 = vst.msk [vmem:[#allocation2 + $0x38] sm:$0xf] %vm1092, %v1074
        %1108 = vst.msk [vmem:[#allocation2 + $0x3c] sm:$0xf] %vm1092, %v1075
        %1109 = vrot.lane.b32.xlu0 %v487, 120
        %v1110 = vpop.permute.xlu0 %1109
        %1111 = vrot.lane.b32.xlu0 %v488, 120
        %v1112 = vpop.permute.xlu0 %1111
        %1113 = vrot.lane.b32.xlu0 %v489, 120
        %v1114 = vpop.permute.xlu0 %1113
        %1115 = vrot.lane.b32.xlu0 %v490, 120
        %v1116 = vpop.permute.xlu0 %1115
        %1117 = vrot.lane.b32.xlu0 %v491, 120
        %v1118 = vpop.permute.xlu0 %1117
        %1119 = vrot.lane.b32.xlu0 %v492, 120
        %v1120 = vpop.permute.xlu0 %1119
        %1121 = vrot.lane.b32.xlu0 %v493, 120
        %v1122 = vpop.permute.xlu0 %1121
        %1123 = vrot.lane.b32.xlu0 %v494, 120
        %v1124 = vpop.permute.xlu0 %1123
        %1125 = vrot.lane.b32.xlu0 %v487, 88
        %v1126 = vpop.permute.xlu0 %1125
        %1127 = vrot.lane.b32.xlu0 %v488, 88
        %v1128 = vpop.permute.xlu0 %1127
        %1129 = vrot.lane.b32.xlu0 %v489, 88
        %v1130 = vpop.permute.xlu0 %1129
        %1131 = vrot.lane.b32.xlu0 %v490, 88
        %v1132 = vpop.permute.xlu0 %1131
        %1133 = vrot.lane.b32.xlu0 %v491, 88
        %v1134 = vpop.permute.xlu0 %1133
        %1135 = vrot.lane.b32.xlu0 %v492, 88
        %v1136 = vpop.permute.xlu0 %1135
        %1137 = vrot.lane.b32.xlu0 %v493, 88
        %v1138 = vpop.permute.xlu0 %1137
        %1139 = vrot.lane.b32.xlu0 %v494, 88
        %v1140 = vpop.permute.xlu0 %1139
        %v1142 = vsel %vm519, %v1110, 0
        %v1145 = vsel %vm519, %v1112, 0
        %v1148 = vsel %vm519, %v1114, 0
        %v1151 = vsel %vm519, %v1116, 0
        %v1154 = vsel %vm519, %v1118, 0
        %v1157 = vsel %vm519, %v1120, 0
        %v1160 = vsel %vm519, %v1122, 0
        %v1163 = vsel %vm519, %v1124, 0
        %v1166 = vsel %vm519, %v1126, 0
        %v1169 = vsel %vm519, %v1128, 0
        %v1172 = vsel %vm519, %v1130, 0
        %v1175 = vsel %vm519, %v1132, 0
        %v1178 = vsel %vm519, %v1134, 0
        %v1181 = vsel %vm519, %v1136, 0
        %v1184 = vsel %vm519, %v1138, 0
        %v1187 = vsel %vm519, %v1140, 0
        %1189 = vmatprep.subr.bf16.mxu0 0
        %1190 = vmatpush1.bf16.xpose.msra.mxu0 %v1187
        %1191 = vmatprep.subr.bf16.mxu0 0
        %1192 = vmatpush1.bf16.xpose.msra.mxu0 %v1184
        %1193 = vmatprep.subr.bf16.mxu0 0
        %1194 = vmatpush1.bf16.xpose.msra.mxu0 %v1181
        %1195 = vmatprep.subr.bf16.mxu0 0
        %1196 = vmatpush1.bf16.xpose.msra.mxu0 %v1178
        %1197 = vmatprep.subr.bf16.mxu0 0
        %1198 = vmatpush1.bf16.xpose.msra.mxu0 %v1175
        %1199 = vmatprep.subr.bf16.mxu0 0
        %1200 = vmatpush1.bf16.xpose.msra.mxu0 %v1172
        %1201 = vmatprep.subr.bf16.mxu0 0
        %1202 = vmatpush1.bf16.xpose.msra.mxu0 %v1169
        %1203 = vmatprep.subr.bf16.mxu0 0
        %1204 = vmatpush1.bf16.xpose.msra.mxu0 %v1166
        %1205 = vmatprep.subr.bf16.mxu0 0
        %1206 = vmatpush2.bf16.xpose.msra.mxu0 0
        %1207 = vmatprep.subr.bf16.mxu0 0
        %1208 = vmatpush2.bf16.xpose.msra.mxu0 0
        %1209 = vmatprep.subr.bf16.mxu0 0
        %1210 = vmatpush2.bf16.xpose.msra.mxu0 0
        %1211 = vmatprep.subr.bf16.mxu0 0
        %1212 = vmatpush2.bf16.xpose.msra.mxu0 0
        %1213 = vmatprep.subr.bf16.mxu0 0
        %1214 = vmatpush2.bf16.xpose.msra.mxu0 0
        %1215 = vmatprep.subr.bf16.mxu0 0
        %1216 = vmatpush2.bf16.xpose.msra.mxu0 0
        %1217 = vmatprep.subr.bf16.mxu0 0
        %1218 = vmatpush2.bf16.xpose.msra.mxu0 0
        %1219 = vmatprep.subr.bf16.mxu0 0
        %1220 = vmatpush2.bf16.xpose.msra.mxu0 0
        %1221 = vmatprep.mubr.bf16.mxu0 0
        %1222 = vmatmul.mubr.bf16.gmra.mxu0 %v1142
        %v1223 = vpop.f32.mrf.mxu0
        %v1224 = vadd.f32 0.0, %v1223
        %v1225 = vpop.f32.mrf.mxu0
        %v1226 = vpop.f32.mrf.mxu0
        %v1227 = vadd.f32 0.0, %v1226
        %v1228 = vpop.f32.mrf.mxu0
        %1229 = vmatprep.mubr.bf16.mxu0 0
        %1230 = vmatmul.mubr.bf16.gmra.mxu0 %v1145
        %v1231 = vpop.f32.mrf.mxu0
        %v1232 = vadd.f32 0.0, %v1231
        %v1233 = vpop.f32.mrf.mxu0
        %v1234 = vpop.f32.mrf.mxu0
        %v1235 = vadd.f32 0.0, %v1234
        %v1236 = vpop.f32.mrf.mxu0
        %1237 = vmatprep.mubr.bf16.mxu0 0
        %1238 = vmatmul.mubr.bf16.gmra.mxu0 %v1148
        %v1239 = vpop.f32.mrf.mxu0
        %v1240 = vadd.f32 0.0, %v1239
        %v1241 = vpop.f32.mrf.mxu0
        %v1242 = vpop.f32.mrf.mxu0
        %v1243 = vadd.f32 0.0, %v1242
        %v1244 = vpop.f32.mrf.mxu0
        %1245 = vmatprep.mubr.bf16.mxu0 0
        %1246 = vmatmul.mubr.bf16.gmra.mxu0 %v1151
        %v1247 = vpop.f32.mrf.mxu0
        %v1248 = vadd.f32 0.0, %v1247
        %v1249 = vpop.f32.mrf.mxu0
        %v1250 = vpop.f32.mrf.mxu0
        %v1251 = vadd.f32 0.0, %v1250
        %v1252 = vpop.f32.mrf.mxu0
        %1253 = vmatprep.mubr.bf16.mxu0 0
        %1254 = vmatmul.mubr.bf16.gmra.mxu0 %v1154
        %v1255 = vpop.f32.mrf.mxu0
        %v1256 = vadd.f32 0.0, %v1255
        %v1257 = vpop.f32.mrf.mxu0
        %v1258 = vpop.f32.mrf.mxu0
        %v1259 = vadd.f32 0.0, %v1258
        %v1260 = vpop.f32.mrf.mxu0
        %1261 = vmatprep.mubr.bf16.mxu0 0
        %1262 = vmatmul.mubr.bf16.gmra.mxu0 %v1157
        %v1263 = vpop.f32.mrf.mxu0
        %v1264 = vadd.f32 0.0, %v1263
        %v1265 = vpop.f32.mrf.mxu0
        %v1266 = vpop.f32.mrf.mxu0
        %v1267 = vadd.f32 0.0, %v1266
        %v1268 = vpop.f32.mrf.mxu0
        %1269 = vmatprep.mubr.bf16.mxu0 0
        %1270 = vmatmul.mubr.bf16.gmra.mxu0 %v1160
        %v1271 = vpop.f32.mrf.mxu0
        %v1272 = vadd.f32 0.0, %v1271
        %v1273 = vpop.f32.mrf.mxu0
        %v1274 = vpop.f32.mrf.mxu0
        %v1275 = vadd.f32 0.0, %v1274
        %v1276 = vpop.f32.mrf.mxu0
        %1277 = vmatprep.mubr.bf16.mxu0 0
        %1278 = vmatmul.mubr.bf16.gmra.mxu0 %v1163
        %v1279 = vpop.f32.mrf.mxu0
        %v1280 = vadd.f32 0.0, %v1279
        %v1281 = vpop.f32.mrf.mxu0
        %v1282 = vpop.f32.mrf.mxu0
        %v1283 = vadd.f32 0.0, %v1282
        %v1284 = vpop.f32.mrf.mxu0
        %1285 = vdwg.mxu0
        %v1286 = vsel %vm666, %v1224, -1e+30
        %v1287 = vsel %vm666, %v1227, -1e+30
        %v1288 = vsel %vm666, %v1232, -1e+30
        %v1289 = vsel %vm666, %v1235, -1e+30
        %v1290 = vsel %vm666, %v1240, -1e+30
        %v1291 = vsel %vm666, %v1243, -1e+30
        %v1292 = vsel %vm666, %v1248, -1e+30
        %v1293 = vsel %vm666, %v1251, -1e+30
        %v1294 = vsel %vm666, %v1256, -1e+30
        %v1295 = vsel %vm666, %v1259, -1e+30
        %v1296 = vsel %vm666, %v1264, -1e+30
        %v1297 = vsel %vm666, %v1267, -1e+30
        %v1298 = vsel %vm666, %v1272, -1e+30
        %v1299 = vsel %vm666, %v1275, -1e+30
        %v1300 = vsel %vm666, %v1280, -1e+30
        %v1301 = vsel %vm666, %v1283, -1e+30
        %1302 = vmax.xlane.f32.xlu0 %v1286
        %v1303 = vpop.xlane.xlu0 %1302
        %1304 = vmax.xlane.f32.xlu0 %v1287
        %v1305 = vpop.xlane.xlu0 %1304
        %1306 = vmax.xlane.f32.xlu0 %v1288
        %v1307 = vpop.xlane.xlu0 %1306
        %1308 = vmax.xlane.f32.xlu0 %v1289
        %v1309 = vpop.xlane.xlu0 %1308
        %1310 = vmax.xlane.f32.xlu0 %v1290
        %v1311 = vpop.xlane.xlu0 %1310
        %1312 = vmax.xlane.f32.xlu0 %v1291
        %v1313 = vpop.xlane.xlu0 %1312
        %1314 = vmax.xlane.f32.xlu0 %v1292
        %v1315 = vpop.xlane.xlu0 %1314
        %1316 = vmax.xlane.f32.xlu0 %v1293
        %v1317 = vpop.xlane.xlu0 %1316
        %1318 = vmax.xlane.f32.xlu0 %v1294
        %v1319 = vpop.xlane.xlu0 %1318
        %1320 = vmax.xlane.f32.xlu0 %v1295
        %v1321 = vpop.xlane.xlu0 %1320
        %1322 = vmax.xlane.f32.xlu0 %v1296
        %v1323 = vpop.xlane.xlu0 %1322
        %1324 = vmax.xlane.f32.xlu0 %v1297
        %v1325 = vpop.xlane.xlu0 %1324
        %1326 = vmax.xlane.f32.xlu0 %v1298
        %v1327 = vpop.xlane.xlu0 %1326
        %1328 = vmax.xlane.f32.xlu0 %v1299
        %v1329 = vpop.xlane.xlu0 %1328
        %1330 = vmax.xlane.f32.xlu0 %v1300
        %v1331 = vpop.xlane.xlu0 %1330
        %1332 = vmax.xlane.f32.xlu0 %v1301
        %v1333 = vpop.xlane.xlu0 %1332
        %v1334 = vsub.f32 %v1286, %v1303
        %v1335 = vsub.f32 %v1287, %v1305
        %v1336 = vsub.f32 %v1288, %v1307
        %v1337 = vsub.f32 %v1289, %v1309
        %v1338 = vsub.f32 %v1290, %v1311
        %v1339 = vsub.f32 %v1291, %v1313
        %v1340 = vsub.f32 %v1292, %v1315
        %v1341 = vsub.f32 %v1293, %v1317
        %v1342 = vsub.f32 %v1294, %v1319
        %v1343 = vsub.f32 %v1295, %v1321
        %v1344 = vsub.f32 %v1296, %v1323
        %v1345 = vsub.f32 %v1297, %v1325
        %v1346 = vsub.f32 %v1298, %v1327
        %v1347 = vsub.f32 %v1299, %v1329
        %v1348 = vsub.f32 %v1300, %v1331
        %v1349 = vsub.f32 %v1301, %v1333
        %v1350 = vmul.f32 %v1334, 1.442695
        %v1351 = vpow.pop %v1350
        %v1352 = vmul.f32 %v1335, 1.442695
        %v1353 = vpow.pop %v1352
        %v1354 = vmul.f32 %v1336, 1.442695
        %v1355 = vpow.pop %v1354
        %v1356 = vmul.f32 %v1337, 1.442695
        %v1357 = vpow.pop %v1356
        %v1358 = vmul.f32 %v1338, 1.442695
        %v1359 = vpow.pop %v1358
        %v1360 = vmul.f32 %v1339, 1.442695
        %v1361 = vpow.pop %v1360
        %v1362 = vmul.f32 %v1340, 1.442695
        %v1363 = vpow.pop %v1362
        %v1364 = vmul.f32 %v1341, 1.442695
        %v1365 = vpow.pop %v1364
        %v1366 = vmul.f32 %v1342, 1.442695
        %v1367 = vpow.pop %v1366
        %v1368 = vmul.f32 %v1343, 1.442695
        %v1369 = vpow.pop %v1368
        %v1370 = vmul.f32 %v1344, 1.442695
        %v1371 = vpow.pop %v1370
        %v1372 = vmul.f32 %v1345, 1.442695
        %v1373 = vpow.pop %v1372
        %v1374 = vmul.f32 %v1346, 1.442695
        %v1375 = vpow.pop %v1374
        %v1376 = vmul.f32 %v1347, 1.442695
        %v1377 = vpow.pop %v1376
        %v1378 = vmul.f32 %v1348, 1.442695
        %v1379 = vpow.pop %v1378
        %v1380 = vmul.f32 %v1349, 1.442695
        %v1381 = vpow.pop %v1380
        %1382 = vadd.xlane.f32.xlu0 %v1351
        %v1383 = vpop.xlane.xlu0 %1382
        %1384 = vadd.xlane.f32.xlu0 %v1353
        %v1385 = vpop.xlane.xlu0 %1384
        %1386 = vadd.xlane.f32.xlu0 %v1355
        %v1387 = vpop.xlane.xlu0 %1386
        %1388 = vadd.xlane.f32.xlu0 %v1357
        %v1389 = vpop.xlane.xlu0 %1388
        %1390 = vadd.xlane.f32.xlu0 %v1359
        %v1391 = vpop.xlane.xlu0 %1390
        %1392 = vadd.xlane.f32.xlu0 %v1361
        %v1393 = vpop.xlane.xlu0 %1392
        %1394 = vadd.xlane.f32.xlu0 %v1363
        %v1395 = vpop.xlane.xlu0 %1394
        %1396 = vadd.xlane.f32.xlu0 %v1365
        %v1397 = vpop.xlane.xlu0 %1396
        %1398 = vadd.xlane.f32.xlu0 %v1367
        %v1399 = vpop.xlane.xlu0 %1398
        %1400 = vadd.xlane.f32.xlu0 %v1369
        %v1401 = vpop.xlane.xlu0 %1400
        %1402 = vadd.xlane.f32.xlu0 %v1371
        %v1403 = vpop.xlane.xlu0 %1402
        %1404 = vadd.xlane.f32.xlu0 %v1373
        %v1405 = vpop.xlane.xlu0 %1404
        %1406 = vadd.xlane.f32.xlu0 %v1375
        %v1407 = vpop.xlane.xlu0 %1406
        %1408 = vadd.xlane.f32.xlu0 %v1377
        %v1409 = vpop.xlane.xlu0 %1408
        %1410 = vadd.xlane.f32.xlu0 %v1379
        %v1411 = vpop.xlane.xlu0 %1410
        %1412 = vadd.xlane.f32.xlu0 %v1381
        %v1413 = vpop.xlane.xlu0 %1412
        %v1414 = vrcp.pop %v1383
        %v1415 = vrcp.pop %v1385
        %v1416 = vrcp.pop %v1387
        %v1417 = vrcp.pop %v1389
        %v1418 = vrcp.pop %v1391
        %v1419 = vrcp.pop %v1393
        %v1420 = vrcp.pop %v1395
        %v1421 = vrcp.pop %v1397
        %v1422 = vrcp.pop %v1399
        %v1423 = vrcp.pop %v1401
        %v1424 = vrcp.pop %v1403
        %v1425 = vrcp.pop %v1405
        %v1426 = vrcp.pop %v1407
        %v1427 = vrcp.pop %v1409
        %v1428 = vrcp.pop %v1411
        %v1429 = vrcp.pop %v1413
        %v1430 = vmul.f32 %v1351, %v1414
        %v1431 = vmul.f32 %v1353, %v1415
        %v1432 = vmul.f32 %v1355, %v1416
        %v1433 = vmul.f32 %v1357, %v1417
        %v1434 = vmul.f32 %v1359, %v1418
        %v1435 = vmul.f32 %v1361, %v1419
        %v1436 = vmul.f32 %v1363, %v1420
        %v1437 = vmul.f32 %v1365, %v1421
        %v1438 = vmul.f32 %v1367, %v1422
        %v1439 = vmul.f32 %v1369, %v1423
        %v1440 = vmul.f32 %v1371, %v1424
        %v1441 = vmul.f32 %v1373, %v1425
        %v1442 = vmul.f32 %v1375, %v1426
        %v1443 = vmul.f32 %v1377, %v1427
        %v1444 = vmul.f32 %v1379, %v1428
        %v1445 = vmul.f32 %v1381, %v1429
        %v1446 = vpack.c.bf16 %v1431, %v1430
        %v1447 = vpack.c.bf16 %v1433, %v1432
        %v1448 = vpack.c.bf16 %v1435, %v1434
        %v1449 = vpack.c.bf16 %v1437, %v1436
        %v1450 = vpack.c.bf16 %v1439, %v1438
        %v1451 = vpack.c.bf16 %v1441, %v1440
        %v1452 = vpack.c.bf16 %v1443, %v1442
        %v1453 = vpack.c.bf16 %v1445, %v1444
        %v1462 = vunpack.c.l.b16 %v1446
        %v1463 = vunpack.c.h.b16 %v1446
        %v1464 = vunpack.c.l.b16 %v1447
        %v1465 = vunpack.c.h.b16 %v1447
        %v1466 = vunpack.c.l.b16 %v1448
        %v1467 = vunpack.c.h.b16 %v1448
        %v1468 = vunpack.c.l.b16 %v1449
        %v1469 = vunpack.c.h.b16 %v1449
        %v1470 = vunpack.c.l.b16 %v1450
        %v1471 = vunpack.c.h.b16 %v1450
        %v1472 = vunpack.c.l.b16 %v1451
        %v1473 = vunpack.c.h.b16 %v1451
        %v1474 = vunpack.c.l.b16 %v1452
        %v1475 = vunpack.c.h.b16 %v1452
        %v1476 = vunpack.c.l.b16 %v1453
        %v1477 = vunpack.c.h.b16 %v1453
        %v1478 = vpack.c.b16 %v1462, %v1462
        %v1479 = vpack.c.b16 %v1463, %v1463
        %v1480 = vpack.c.b16 %v1464, %v1464
        %v1481 = vpack.c.b16 %v1465, %v1465
        %v1482 = vpack.c.b16 %v1466, %v1466
        %v1483 = vpack.c.b16 %v1467, %v1467
        %v1484 = vpack.c.b16 %v1468, %v1468
        %v1485 = vpack.c.b16 %v1469, %v1469
        %v1486 = vpack.c.b16 %v1470, %v1470
        %v1487 = vpack.c.b16 %v1471, %v1471
        %v1488 = vpack.c.b16 %v1472, %v1472
        %v1489 = vpack.c.b16 %v1473, %v1473
        %v1490 = vpack.c.b16 %v1474, %v1474
        %v1491 = vpack.c.b16 %v1475, %v1475
        %v1492 = vpack.c.b16 %v1476, %v1476
        %v1493 = vpack.c.b16 %v1477, %v1477
        %s1510 = scalar_lea.vmem %s266, 64 [#allocation3]
        %1511 = vst [vmem:[%s1510] sm:$0xf] %v1478
        %1512 = vst [vmem:[%s1510 + $0x4] sm:$0xf] %v1479
        %1513 = vst [vmem:[%s1510 + $0x8] sm:$0xf] %v1480
        %1514 = vst [vmem:[%s1510 + $0xc] sm:$0xf] %v1481
        %1515 = vst [vmem:[%s1510 + $0x10] sm:$0xf] %v1482
        %1516 = vst [vmem:[%s1510 + $0x14] sm:$0xf] %v1483
        %1517 = vst [vmem:[%s1510 + $0x18] sm:$0xf] %v1484
        %1518 = vst [vmem:[%s1510 + $0x1c] sm:$0xf] %v1485
        %1519 = vst [vmem:[%s1510 + $0x20] sm:$0xf] %v1486
        %1520 = vst [vmem:[%s1510 + $0x24] sm:$0xf] %v1487
        %1521 = vst [vmem:[%s1510 + $0x28] sm:$0xf] %v1488
        %1522 = vst [vmem:[%s1510 + $0x2c] sm:$0xf] %v1489
        %1523 = vst [vmem:[%s1510 + $0x30] sm:$0xf] %v1490
        %1524 = vst [vmem:[%s1510 + $0x34] sm:$0xf] %v1491
        %1525 = vst [vmem:[%s1510 + $0x38] sm:$0xf] %v1492
        %1526 = vst [vmem:[%s1510 + $0x3c] sm:$0xf] %v1493
        %1527 = vrot.lane.b32.xlu0 %v487, 56
        %v1528 = vpop.permute.xlu0 %1527
        %1529 = vrot.lane.b32.xlu0 %v488, 56
        %v1530 = vpop.permute.xlu0 %1529
        %1531 = vrot.lane.b32.xlu0 %v489, 56
        %v1532 = vpop.permute.xlu0 %1531
        %1533 = vrot.lane.b32.xlu0 %v490, 56
        %v1534 = vpop.permute.xlu0 %1533
        %1535 = vrot.lane.b32.xlu0 %v491, 56
        %v1536 = vpop.permute.xlu0 %1535
        %1537 = vrot.lane.b32.xlu0 %v492, 56
        %v1538 = vpop.permute.xlu0 %1537
        %1539 = vrot.lane.b32.xlu0 %v493, 56
        %v1540 = vpop.permute.xlu0 %1539
        %1541 = vrot.lane.b32.xlu0 %v494, 56
        %v1542 = vpop.permute.xlu0 %1541
        %1551 = vmatprep.subr.bf16.mxu0 0
        %1552 = vmatpush1.bf16.msra.mxu0 %v1542
        %1553 = vmatprep.subr.bf16.mxu0 0
        %1554 = vmatpush1.bf16.msra.mxu0 %v1540
        %1555 = vmatprep.subr.bf16.mxu0 0
        %1556 = vmatpush1.bf16.msra.mxu0 %v1538
        %1557 = vmatprep.subr.bf16.mxu0 0
        %1558 = vmatpush1.bf16.msra.mxu0 %v1536
        %1559 = vmatprep.subr.bf16.mxu0 0
        %1560 = vmatpush1.bf16.msra.mxu0 %v1534
        %1561 = vmatprep.subr.bf16.mxu0 0
        %1562 = vmatpush1.bf16.msra.mxu0 %v1532
        %1563 = vmatprep.subr.bf16.mxu0 0
        %1564 = vmatpush1.bf16.msra.mxu0 %v1530
        %1565 = vmatprep.subr.bf16.mxu0 0
        %1566 = vmatpush1.bf16.msra.mxu0 %v1528
        %1567 = vmatprep.subr.bf16.mxu0 0
        %1568 = vmatpush2.bf16.msra.mxu0 0
        %1569 = vmatprep.subr.bf16.mxu0 0
        %1570 = vmatpush2.bf16.msra.mxu0 0
        %1571 = vmatprep.subr.bf16.mxu0 0
        %1572 = vmatpush2.bf16.msra.mxu0 0
        %1573 = vmatprep.subr.bf16.mxu0 0
        %1574 = vmatpush2.bf16.msra.mxu0 0
        %1575 = vmatprep.subr.bf16.mxu0 0
        %1576 = vmatpush2.bf16.msra.mxu0 0
        %1577 = vmatprep.subr.bf16.mxu0 0
        %1578 = vmatpush2.bf16.msra.mxu0 0
        %1579 = vmatprep.subr.bf16.mxu0 0
        %1580 = vmatpush2.bf16.msra.mxu0 0
        %1581 = vmatprep.subr.bf16.mxu0 0
        %1582 = vmatpush2.bf16.msra.mxu0 0
        %1583 = vmatprep.mubr.bf16.mxu0 0
        %1584 = vmatmul.mubr.bf16.gmra.mxu0 %v1446
        %v1585 = vpop.f32.mrf.mxu0
        %v1586 = vadd.f32 0.0, %v1585
        %v1587 = vpop.f32.mrf.mxu0
        %v1588 = vpop.f32.mrf.mxu0
        %v1589 = vadd.f32 0.0, %v1588
        %v1590 = vpop.f32.mrf.mxu0
        %1591 = vmatprep.mubr.bf16.mxu0 0
        %1592 = vmatmul.mubr.bf16.gmra.mxu0 %v1447
        %v1593 = vpop.f32.mrf.mxu0
        %v1594 = vadd.f32 0.0, %v1593
        %v1595 = vpop.f32.mrf.mxu0
        %v1596 = vpop.f32.mrf.mxu0
        %v1597 = vadd.f32 0.0, %v1596
        %v1598 = vpop.f32.mrf.mxu0
        %1599 = vmatprep.mubr.bf16.mxu0 0
        %1600 = vmatmul.mubr.bf16.gmra.mxu0 %v1448
        %v1601 = vpop.f32.mrf.mxu0
        %v1602 = vadd.f32 0.0, %v1601
        %v1603 = vpop.f32.mrf.mxu0
        %v1604 = vpop.f32.mrf.mxu0
        %v1605 = vadd.f32 0.0, %v1604
        %v1606 = vpop.f32.mrf.mxu0
        %1607 = vmatprep.mubr.bf16.mxu0 0
        %1608 = vmatmul.mubr.bf16.gmra.mxu0 %v1449
        %v1609 = vpop.f32.mrf.mxu0
        %v1610 = vadd.f32 0.0, %v1609
        %v1611 = vpop.f32.mrf.mxu0
        %v1612 = vpop.f32.mrf.mxu0
        %v1613 = vadd.f32 0.0, %v1612
        %v1614 = vpop.f32.mrf.mxu0
        %1615 = vmatprep.mubr.bf16.mxu0 0
        %1616 = vmatmul.mubr.bf16.gmra.mxu0 %v1450
        %v1617 = vpop.f32.mrf.mxu0
        %v1618 = vadd.f32 0.0, %v1617
        %v1619 = vpop.f32.mrf.mxu0
        %v1620 = vpop.f32.mrf.mxu0
        %v1621 = vadd.f32 0.0, %v1620
        %v1622 = vpop.f32.mrf.mxu0
        %1623 = vmatprep.mubr.bf16.mxu0 0
        %1624 = vmatmul.mubr.bf16.gmra.mxu0 %v1451
        %v1625 = vpop.f32.mrf.mxu0
        %v1626 = vadd.f32 0.0, %v1625
        %v1627 = vpop.f32.mrf.mxu0
        %v1628 = vpop.f32.mrf.mxu0
        %v1629 = vadd.f32 0.0, %v1628
        %v1630 = vpop.f32.mrf.mxu0
        %1631 = vmatprep.mubr.bf16.mxu0 0
        %1632 = vmatmul.mubr.bf16.gmra.mxu0 %v1452
        %v1633 = vpop.f32.mrf.mxu0
        %v1634 = vadd.f32 0.0, %v1633
        %v1635 = vpop.f32.mrf.mxu0
        %v1636 = vpop.f32.mrf.mxu0
        %v1637 = vadd.f32 0.0, %v1636
        %v1638 = vpop.f32.mrf.mxu0
        %1639 = vmatprep.mubr.bf16.mxu0 0
        %1640 = vmatmul.mubr.bf16.gmra.mxu0 %v1453
        %v1641 = vpop.f32.mrf.mxu0
        %v1642 = vadd.f32 0.0, %v1641
        %v1643 = vpop.f32.mrf.mxu0
        %v1644 = vpop.f32.mrf.mxu0
        %v1645 = vadd.f32 0.0, %v1644
        %v1646 = vpop.f32.mrf.mxu0
        %1647 = vdwg.mxu0
        %v1648 = vpack.c.bf16 %v1589, %v1586
        %v1649 = vpack.c.bf16 %v1597, %v1594
        %v1650 = vpack.c.bf16 %v1605, %v1602
        %v1651 = vpack.c.bf16 %v1613, %v1610
        %v1652 = vpack.c.bf16 %v1621, %v1618
        %v1653 = vpack.c.bf16 %v1629, %v1626
        %v1654 = vpack.c.bf16 %v1637, %v1634
        %v1655 = vpack.c.bf16 %v1645, %v1642
        %v1664 = vunpack.c.l.b16 %v1648
        %v1665 = vunpack.c.h.b16 %v1648
        %v1666 = vunpack.c.l.b16 %v1649
        %v1667 = vunpack.c.h.b16 %v1649
        %v1668 = vunpack.c.l.b16 %v1650
        %v1669 = vunpack.c.h.b16 %v1650
        %v1670 = vunpack.c.l.b16 %v1651
        %v1671 = vunpack.c.h.b16 %v1651
        %v1672 = vunpack.c.l.b16 %v1652
        %v1673 = vunpack.c.h.b16 %v1652
        %v1674 = vunpack.c.l.b16 %v1653
        %v1675 = vunpack.c.h.b16 %v1653
        %v1676 = vunpack.c.l.b16 %v1654
        %v1677 = vunpack.c.h.b16 %v1654
        %v1678 = vunpack.c.l.b16 %v1655
        %v1679 = vunpack.c.h.b16 %v1655
        %v1680 = vpack.c.b16 %v1664, %v1664
        %v1681 = vpack.c.b16 %v1665, %v1665
        %v1682 = vpack.c.b16 %v1666, %v1666
        %v1683 = vpack.c.b16 %v1667, %v1667
        %v1684 = vpack.c.b16 %v1668, %v1668
        %v1685 = vpack.c.b16 %v1669, %v1669
        %v1686 = vpack.c.b16 %v1670, %v1670
        %v1687 = vpack.c.b16 %v1671, %v1671
        %v1688 = vpack.c.b16 %v1672, %v1672
        %v1689 = vpack.c.b16 %v1673, %v1673
        %v1690 = vpack.c.b16 %v1674, %v1674
        %v1691 = vpack.c.b16 %v1675, %v1675
        %v1692 = vpack.c.b16 %v1676, %v1676
        %v1693 = vpack.c.b16 %v1677, %v1677
        %v1694 = vpack.c.b16 %v1678, %v1678
        %v1695 = vpack.c.b16 %v1679, %v1679
        %1696 = vrot.lane.b32.xlu0 %v1680, 8
        %v1697 = vpop.permute.xlu0 %1696
        %1698 = vrot.lane.b32.xlu0 %v1681, 8
        %v1699 = vpop.permute.xlu0 %1698
        %1700 = vrot.lane.b32.xlu0 %v1682, 8
        %v1701 = vpop.permute.xlu0 %1700
        %1702 = vrot.lane.b32.xlu0 %v1683, 8
        %v1703 = vpop.permute.xlu0 %1702
        %1704 = vrot.lane.b32.xlu0 %v1684, 8
        %v1705 = vpop.permute.xlu0 %1704
        %1706 = vrot.lane.b32.xlu0 %v1685, 8
        %v1707 = vpop.permute.xlu0 %1706
        %1708 = vrot.lane.b32.xlu0 %v1686, 8
        %v1709 = vpop.permute.xlu0 %1708
        %1710 = vrot.lane.b32.xlu0 %v1687, 8
        %v1711 = vpop.permute.xlu0 %1710
        %1712 = vrot.lane.b32.xlu0 %v1688, 8
        %v1713 = vpop.permute.xlu0 %1712
        %1714 = vrot.lane.b32.xlu0 %v1689, 8
        %v1715 = vpop.permute.xlu0 %1714
        %1716 = vrot.lane.b32.xlu0 %v1690, 8
        %v1717 = vpop.permute.xlu0 %1716
        %1718 = vrot.lane.b32.xlu0 %v1691, 8
        %v1719 = vpop.permute.xlu0 %1718
        %1720 = vrot.lane.b32.xlu0 %v1692, 8
        %v1721 = vpop.permute.xlu0 %1720
        %1722 = vrot.lane.b32.xlu0 %v1693, 8
        %v1723 = vpop.permute.xlu0 %1722
        %1724 = vrot.lane.b32.xlu0 %v1694, 8
        %v1725 = vpop.permute.xlu0 %1724
        %1726 = vrot.lane.b32.xlu0 %v1695, 8
        %v1727 = vpop.permute.xlu0 %1726
        %vm1744 = vcmask 126016
        %1745 = vst.msk [vmem:[#allocation2] sm:$0xf] %vm1744, %v1697
        %1746 = vst.msk [vmem:[#allocation2 + $0x4] sm:$0xf] %vm1744, %v1699
        %1747 = vst.msk [vmem:[#allocation2 + $0x8] sm:$0xf] %vm1744, %v1701
        %1748 = vst.msk [vmem:[#allocation2 + $0xc] sm:$0xf] %vm1744, %v1703
        %1749 = vst.msk [vmem:[#allocation2 + $0x10] sm:$0xf] %vm1744, %v1705
        %1750 = vst.msk [vmem:[#allocation2 + $0x14] sm:$0xf] %vm1744, %v1707
        %1751 = vst.msk [vmem:[#allocation2 + $0x18] sm:$0xf] %vm1744, %v1709
        %1752 = vst.msk [vmem:[#allocation2 + $0x1c] sm:$0xf] %vm1744, %v1711
        %1753 = vst.msk [vmem:[#allocation2 + $0x20] sm:$0xf] %vm1744, %v1713
        %1754 = vst.msk [vmem:[#allocation2 + $0x24] sm:$0xf] %vm1744, %v1715
        %1755 = vst.msk [vmem:[#allocation2 + $0x28] sm:$0xf] %vm1744, %v1717
        %1756 = vst.msk [vmem:[#allocation2 + $0x2c] sm:$0xf] %vm1744, %v1719
        %1757 = vst.msk [vmem:[#allocation2 + $0x30] sm:$0xf] %vm1744, %v1721
        %1758 = vst.msk [vmem:[#allocation2 + $0x34] sm:$0xf] %vm1744, %v1723
        %1759 = vst.msk [vmem:[#allocation2 + $0x38] sm:$0xf] %vm1744, %v1725
        %1760 = vst.msk [vmem:[#allocation2 + $0x3c] sm:$0xf] %vm1744, %v1727
        %1761 = vrot.lane.b32.xlu0 %v487, 112
        %v1762 = vpop.permute.xlu0 %1761
        %1763 = vrot.lane.b32.xlu0 %v488, 112
        %v1764 = vpop.permute.xlu0 %1763
        %1765 = vrot.lane.b32.xlu0 %v489, 112
        %v1766 = vpop.permute.xlu0 %1765
        %1767 = vrot.lane.b32.xlu0 %v490, 112
        %v1768 = vpop.permute.xlu0 %1767
        %1769 = vrot.lane.b32.xlu0 %v491, 112
        %v1770 = vpop.permute.xlu0 %1769
        %1771 = vrot.lane.b32.xlu0 %v492, 112
        %v1772 = vpop.permute.xlu0 %1771
        %1773 = vrot.lane.b32.xlu0 %v493, 112
        %v1774 = vpop.permute.xlu0 %1773
        %1775 = vrot.lane.b32.xlu0 %v494, 112
        %v1776 = vpop.permute.xlu0 %1775
        %1777 = vrot.lane.b32.xlu0 %v487, 80
        %v1778 = vpop.permute.xlu0 %1777
        %1779 = vrot.lane.b32.xlu0 %v488, 80
        %v1780 = vpop.permute.xlu0 %1779
        %1781 = vrot.lane.b32.xlu0 %v489, 80
        %v1782 = vpop.permute.xlu0 %1781
        %1783 = vrot.lane.b32.xlu0 %v490, 80
        %v1784 = vpop.permute.xlu0 %1783
        %1785 = vrot.lane.b32.xlu0 %v491, 80
        %v1786 = vpop.permute.xlu0 %1785
        %1787 = vrot.lane.b32.xlu0 %v492, 80
        %v1788 = vpop.permute.xlu0 %1787
        %1789 = vrot.lane.b32.xlu0 %v493, 80
        %v1790 = vpop.permute.xlu0 %1789
        %1791 = vrot.lane.b32.xlu0 %v494, 80
        %v1792 = vpop.permute.xlu0 %1791
        %v1794 = vsel %vm519, %v1762, 0
        %v1797 = vsel %vm519, %v1764, 0
        %v1800 = vsel %vm519, %v1766, 0
        %v1803 = vsel %vm519, %v1768, 0
        %v1806 = vsel %vm519, %v1770, 0
        %v1809 = vsel %vm519, %v1772, 0
        %v1812 = vsel %vm519, %v1774, 0
        %v1815 = vsel %vm519, %v1776, 0
        %v1818 = vsel %vm519, %v1778, 0
        %v1821 = vsel %vm519, %v1780, 0
        %v1824 = vsel %vm519, %v1782, 0
        %v1827 = vsel %vm519, %v1784, 0
        %v1830 = vsel %vm519, %v1786, 0
        %v1833 = vsel %vm519, %v1788, 0
        %v1836 = vsel %vm519, %v1790, 0
        %v1839 = vsel %vm519, %v1792, 0
        %1841 = vmatprep.subr.bf16.mxu0 0
        %1842 = vmatpush1.bf16.xpose.msra.mxu0 %v1839
        %1843 = vmatprep.subr.bf16.mxu0 0
        %1844 = vmatpush1.bf16.xpose.msra.mxu0 %v1836
        %1845 = vmatprep.subr.bf16.mxu0 0
        %1846 = vmatpush1.bf16.xpose.msra.mxu0 %v1833
        %1847 = vmatprep.subr.bf16.mxu0 0
        %1848 = vmatpush1.bf16.xpose.msra.mxu0 %v1830
        %1849 = vmatprep.subr.bf16.mxu0 0
        %1850 = vmatpush1.bf16.xpose.msra.mxu0 %v1827
        %1851 = vmatprep.subr.bf16.mxu0 0
        %1852 = vmatpush1.bf16.xpose.msra.mxu0 %v1824
        %1853 = vmatprep.subr.bf16.mxu0 0
        %1854 = vmatpush1.bf16.xpose.msra.mxu0 %v1821
        %1855 = vmatprep.subr.bf16.mxu0 0
        %1856 = vmatpush1.bf16.xpose.msra.mxu0 %v1818
        %1857 = vmatprep.subr.bf16.mxu0 0
        %1858 = vmatpush2.bf16.xpose.msra.mxu0 0
        %1859 = vmatprep.subr.bf16.mxu0 0
        %1860 = vmatpush2.bf16.xpose.msra.mxu0 0
        %1861 = vmatprep.subr.bf16.mxu0 0
        %1862 = vmatpush2.bf16.xpose.msra.mxu0 0
        %1863 = vmatprep.subr.bf16.mxu0 0
        %1864 = vmatpush2.bf16.xpose.msra.mxu0 0
        %1865 = vmatprep.subr.bf16.mxu0 0
        %1866 = vmatpush2.bf16.xpose.msra.mxu0 0
        %1867 = vmatprep.subr.bf16.mxu0 0
        %1868 = vmatpush2.bf16.xpose.msra.mxu0 0
        %1869 = vmatprep.subr.bf16.mxu0 0
        %1870 = vmatpush2.bf16.xpose.msra.mxu0 0
        %1871 = vmatprep.subr.bf16.mxu0 0
        %1872 = vmatpush2.bf16.xpose.msra.mxu0 0
        %1873 = vmatprep.mubr.bf16.mxu0 0
        %1874 = vmatmul.mubr.bf16.gmra.mxu0 %v1794
        %v1875 = vpop.f32.mrf.mxu0
        %v1876 = vadd.f32 0.0, %v1875
        %v1877 = vpop.f32.mrf.mxu0
        %v1878 = vpop.f32.mrf.mxu0
        %v1879 = vadd.f32 0.0, %v1878
        %v1880 = vpop.f32.mrf.mxu0
        %1881 = vmatprep.mubr.bf16.mxu0 0
        %1882 = vmatmul.mubr.bf16.gmra.mxu0 %v1797
        %v1883 = vpop.f32.mrf.mxu0
        %v1884 = vadd.f32 0.0, %v1883
        %v1885 = vpop.f32.mrf.mxu0
        %v1886 = vpop.f32.mrf.mxu0
        %v1887 = vadd.f32 0.0, %v1886
        %v1888 = vpop.f32.mrf.mxu0
        %1889 = vmatprep.mubr.bf16.mxu0 0
        %1890 = vmatmul.mubr.bf16.gmra.mxu0 %v1800
        %v1891 = vpop.f32.mrf.mxu0
        %v1892 = vadd.f32 0.0, %v1891
        %v1893 = vpop.f32.mrf.mxu0
        %v1894 = vpop.f32.mrf.mxu0
        %v1895 = vadd.f32 0.0, %v1894
        %v1896 = vpop.f32.mrf.mxu0
        %1897 = vmatprep.mubr.bf16.mxu0 0
        %1898 = vmatmul.mubr.bf16.gmra.mxu0 %v1803
        %v1899 = vpop.f32.mrf.mxu0
        %v1900 = vadd.f32 0.0, %v1899
        %v1901 = vpop.f32.mrf.mxu0
        %v1902 = vpop.f32.mrf.mxu0
        %v1903 = vadd.f32 0.0, %v1902
        %v1904 = vpop.f32.mrf.mxu0
        %1905 = vmatprep.mubr.bf16.mxu0 0
        %1906 = vmatmul.mubr.bf16.gmra.mxu0 %v1806
        %v1907 = vpop.f32.mrf.mxu0
        %v1908 = vadd.f32 0.0, %v1907
        %v1909 = vpop.f32.mrf.mxu0
        %v1910 = vpop.f32.mrf.mxu0
        %v1911 = vadd.f32 0.0, %v1910
        %v1912 = vpop.f32.mrf.mxu0
        %1913 = vmatprep.mubr.bf16.mxu0 0
        %1914 = vmatmul.mubr.bf16.gmra.mxu0 %v1809
        %v1915 = vpop.f32.mrf.mxu0
        %v1916 = vadd.f32 0.0, %v1915
        %v1917 = vpop.f32.mrf.mxu0
        %v1918 = vpop.f32.mrf.mxu0
        %v1919 = vadd.f32 0.0, %v1918
        %v1920 = vpop.f32.mrf.mxu0
        %1921 = vmatprep.mubr.bf16.mxu0 0
        %1922 = vmatmul.mubr.bf16.gmra.mxu0 %v1812
        %v1923 = vpop.f32.mrf.mxu0
        %v1924 = vadd.f32 0.0, %v1923
        %v1925 = vpop.f32.mrf.mxu0
        %v1926 = vpop.f32.mrf.mxu0
        %v1927 = vadd.f32 0.0, %v1926
        %v1928 = vpop.f32.mrf.mxu0
        %1929 = vmatprep.mubr.bf16.mxu0 0
        %1930 = vmatmul.mubr.bf16.gmra.mxu0 %v1815
        %v1931 = vpop.f32.mrf.mxu0
        %v1932 = vadd.f32 0.0, %v1931
        %v1933 = vpop.f32.mrf.mxu0
        %v1934 = vpop.f32.mrf.mxu0
        %v1935 = vadd.f32 0.0, %v1934
        %v1936 = vpop.f32.mrf.mxu0
        %1937 = vdwg.mxu0
        %v1938 = vsel %vm666, %v1876, -1e+30
        %v1939 = vsel %vm666, %v1879, -1e+30
        %v1940 = vsel %vm666, %v1884, -1e+30
        %v1941 = vsel %vm666, %v1887, -1e+30
        %v1942 = vsel %vm666, %v1892, -1e+30
        %v1943 = vsel %vm666, %v1895, -1e+30
        %v1944 = vsel %vm666, %v1900, -1e+30
        %v1945 = vsel %vm666, %v1903, -1e+30
        %v1946 = vsel %vm666, %v1908, -1e+30
        %v1947 = vsel %vm666, %v1911, -1e+30
        %v1948 = vsel %vm666, %v1916, -1e+30
        %v1949 = vsel %vm666, %v1919, -1e+30
        %v1950 = vsel %vm666, %v1924, -1e+30
        %v1951 = vsel %vm666, %v1927, -1e+30
        %v1952 = vsel %vm666, %v1932, -1e+30
        %v1953 = vsel %vm666, %v1935, -1e+30
        %1954 = vmax.xlane.f32.xlu0 %v1938
        %v1955 = vpop.xlane.xlu0 %1954
        %1956 = vmax.xlane.f32.xlu0 %v1939
        %v1957 = vpop.xlane.xlu0 %1956
        %1958 = vmax.xlane.f32.xlu0 %v1940
        %v1959 = vpop.xlane.xlu0 %1958
        %1960 = vmax.xlane.f32.xlu0 %v1941
        %v1961 = vpop.xlane.xlu0 %1960
        %1962 = vmax.xlane.f32.xlu0 %v1942
        %v1963 = vpop.xlane.xlu0 %1962
        %1964 = vmax.xlane.f32.xlu0 %v1943
        %v1965 = vpop.xlane.xlu0 %1964
        %1966 = vmax.xlane.f32.xlu0 %v1944
        %v1967 = vpop.xlane.xlu0 %1966
        %1968 = vmax.xlane.f32.xlu0 %v1945
        %v1969 = vpop.xlane.xlu0 %1968
        %1970 = vmax.xlane.f32.xlu0 %v1946
        %v1971 = vpop.xlane.xlu0 %1970
        %1972 = vmax.xlane.f32.xlu0 %v1947
        %v1973 = vpop.xlane.xlu0 %1972
        %1974 = vmax.xlane.f32.xlu0 %v1948
        %v1975 = vpop.xlane.xlu0 %1974
        %1976 = vmax.xlane.f32.xlu0 %v1949
        %v1977 = vpop.xlane.xlu0 %1976
        %1978 = vmax.xlane.f32.xlu0 %v1950
        %v1979 = vpop.xlane.xlu0 %1978
        %1980 = vmax.xlane.f32.xlu0 %v1951
        %v1981 = vpop.xlane.xlu0 %1980
        %1982 = vmax.xlane.f32.xlu0 %v1952
        %v1983 = vpop.xlane.xlu0 %1982
        %1984 = vmax.xlane.f32.xlu0 %v1953
        %v1985 = vpop.xlane.xlu0 %1984
        %v1986 = vsub.f32 %v1938, %v1955
        %v1987 = vsub.f32 %v1939, %v1957
        %v1988 = vsub.f32 %v1940, %v1959
        %v1989 = vsub.f32 %v1941, %v1961
        %v1990 = vsub.f32 %v1942, %v1963
        %v1991 = vsub.f32 %v1943, %v1965
        %v1992 = vsub.f32 %v1944, %v1967
        %v1993 = vsub.f32 %v1945, %v1969
        %v1994 = vsub.f32 %v1946, %v1971
        %v1995 = vsub.f32 %v1947, %v1973
        %v1996 = vsub.f32 %v1948, %v1975
        %v1997 = vsub.f32 %v1949, %v1977
        %v1998 = vsub.f32 %v1950, %v1979
        %v1999 = vsub.f32 %v1951, %v1981
        %v2000 = vsub.f32 %v1952, %v1983
        %v2001 = vsub.f32 %v1953, %v1985
        %v2002 = vmul.f32 %v1986, 1.442695
        %v2003 = vpow.pop %v2002
        %v2004 = vmul.f32 %v1987, 1.442695
        %v2005 = vpow.pop %v2004
        %v2006 = vmul.f32 %v1988, 1.442695
        %v2007 = vpow.pop %v2006
        %v2008 = vmul.f32 %v1989, 1.442695
        %v2009 = vpow.pop %v2008
        %v2010 = vmul.f32 %v1990, 1.442695
        %v2011 = vpow.pop %v2010
        %v2012 = vmul.f32 %v1991, 1.442695
        %v2013 = vpow.pop %v2012
        %v2014 = vmul.f32 %v1992, 1.442695
        %v2015 = vpow.pop %v2014
        %v2016 = vmul.f32 %v1993, 1.442695
        %v2017 = vpow.pop %v2016
        %v2018 = vmul.f32 %v1994, 1.442695
        %v2019 = vpow.pop %v2018
        %v2020 = vmul.f32 %v1995, 1.442695
        %v2021 = vpow.pop %v2020
        %v2022 = vmul.f32 %v1996, 1.442695
        %v2023 = vpow.pop %v2022
        %v2024 = vmul.f32 %v1997, 1.442695
        %v2025 = vpow.pop %v2024
        %v2026 = vmul.f32 %v1998, 1.442695
        %v2027 = vpow.pop %v2026
        %v2028 = vmul.f32 %v1999, 1.442695
        %v2029 = vpow.pop %v2028
        %v2030 = vmul.f32 %v2000, 1.442695
        %v2031 = vpow.pop %v2030
        %v2032 = vmul.f32 %v2001, 1.442695
        %v2033 = vpow.pop %v2032
        %2034 = vadd.xlane.f32.xlu0 %v2003
        %v2035 = vpop.xlane.xlu0 %2034
        %2036 = vadd.xlane.f32.xlu0 %v2005
        %v2037 = vpop.xlane.xlu0 %2036
        %2038 = vadd.xlane.f32.xlu0 %v2007
        %v2039 = vpop.xlane.xlu0 %2038
        %2040 = vadd.xlane.f32.xlu0 %v2009
        %v2041 = vpop.xlane.xlu0 %2040
        %2042 = vadd.xlane.f32.xlu0 %v2011
        %v2043 = vpop.xlane.xlu0 %2042
        %2044 = vadd.xlane.f32.xlu0 %v2013
        %v2045 = vpop.xlane.xlu0 %2044
        %2046 = vadd.xlane.f32.xlu0 %v2015
        %v2047 = vpop.xlane.xlu0 %2046
        %2048 = vadd.xlane.f32.xlu0 %v2017
        %v2049 = vpop.xlane.xlu0 %2048
        %2050 = vadd.xlane.f32.xlu0 %v2019
        %v2051 = vpop.xlane.xlu0 %2050
        %2052 = vadd.xlane.f32.xlu0 %v2021
        %v2053 = vpop.xlane.xlu0 %2052
        %2054 = vadd.xlane.f32.xlu0 %v2023
        %v2055 = vpop.xlane.xlu0 %2054
        %2056 = vadd.xlane.f32.xlu0 %v2025
        %v2057 = vpop.xlane.xlu0 %2056
        %2058 = vadd.xlane.f32.xlu0 %v2027
        %v2059 = vpop.xlane.xlu0 %2058
        %2060 = vadd.xlane.f32.xlu0 %v2029
        %v2061 = vpop.xlane.xlu0 %2060
        %2062 = vadd.xlane.f32.xlu0 %v2031
        %v2063 = vpop.xlane.xlu0 %2062
        %2064 = vadd.xlane.f32.xlu0 %v2033
        %v2065 = vpop.xlane.xlu0 %2064
        %v2066 = vrcp.pop %v2035
        %v2067 = vrcp.pop %v2037
        %v2068 = vrcp.pop %v2039
        %v2069 = vrcp.pop %v2041
        %v2070 = vrcp.pop %v2043
        %v2071 = vrcp.pop %v2045
        %v2072 = vrcp.pop %v2047
        %v2073 = vrcp.pop %v2049
        %v2074 = vrcp.pop %v2051
        %v2075 = vrcp.pop %v2053
        %v2076 = vrcp.pop %v2055
        %v2077 = vrcp.pop %v2057
        %v2078 = vrcp.pop %v2059
        %v2079 = vrcp.pop %v2061
        %v2080 = vrcp.pop %v2063
        %v2081 = vrcp.pop %v2065
        %v2082 = vmul.f32 %v2003, %v2066
        %v2083 = vmul.f32 %v2005, %v2067
        %v2084 = vmul.f32 %v2007, %v2068
        %v2085 = vmul.f32 %v2009, %v2069
        %v2086 = vmul.f32 %v2011, %v2070
        %v2087 = vmul.f32 %v2013, %v2071
        %v2088 = vmul.f32 %v2015, %v2072
        %v2089 = vmul.f32 %v2017, %v2073
        %v2090 = vmul.f32 %v2019, %v2074
        %v2091 = vmul.f32 %v2021, %v2075
        %v2092 = vmul.f32 %v2023, %v2076
        %v2093 = vmul.f32 %v2025, %v2077
        %v2094 = vmul.f32 %v2027, %v2078
        %v2095 = vmul.f32 %v2029, %v2079
        %v2096 = vmul.f32 %v2031, %v2080
        %v2097 = vmul.f32 %v2033, %v2081
        %v2098 = vpack.c.bf16 %v2083, %v2082
        %v2099 = vpack.c.bf16 %v2085, %v2084
        %v2100 = vpack.c.bf16 %v2087, %v2086
        %v2101 = vpack.c.bf16 %v2089, %v2088
        %v2102 = vpack.c.bf16 %v2091, %v2090
        %v2103 = vpack.c.bf16 %v2093, %v2092
        %v2104 = vpack.c.bf16 %v2095, %v2094
        %v2105 = vpack.c.bf16 %v2097, %v2096
        %v2114 = vunpack.c.l.b16 %v2098
        %v2115 = vunpack.c.h.b16 %v2098
        %v2116 = vunpack.c.l.b16 %v2099
        %v2117 = vunpack.c.h.b16 %v2099
        %v2118 = vunpack.c.l.b16 %v2100
        %v2119 = vunpack.c.h.b16 %v2100
        %v2120 = vunpack.c.l.b16 %v2101
        %v2121 = vunpack.c.h.b16 %v2101
        %v2122 = vunpack.c.l.b16 %v2102
        %v2123 = vunpack.c.h.b16 %v2102
        %v2124 = vunpack.c.l.b16 %v2103
        %v2125 = vunpack.c.h.b16 %v2103
        %v2126 = vunpack.c.l.b16 %v2104
        %v2127 = vunpack.c.h.b16 %v2104
        %v2128 = vunpack.c.l.b16 %v2105
        %v2129 = vunpack.c.h.b16 %v2105
        %v2130 = vpack.c.b16 %v2114, %v2114
        %v2131 = vpack.c.b16 %v2115, %v2115
        %v2132 = vpack.c.b16 %v2116, %v2116
        %v2133 = vpack.c.b16 %v2117, %v2117
        %v2134 = vpack.c.b16 %v2118, %v2118
        %v2135 = vpack.c.b16 %v2119, %v2119
        %v2136 = vpack.c.b16 %v2120, %v2120
        %v2137 = vpack.c.b16 %v2121, %v2121
        %v2138 = vpack.c.b16 %v2122, %v2122
        %v2139 = vpack.c.b16 %v2123, %v2123
        %v2140 = vpack.c.b16 %v2124, %v2124
        %v2141 = vpack.c.b16 %v2125, %v2125
        %v2142 = vpack.c.b16 %v2126, %v2126
        %v2143 = vpack.c.b16 %v2127, %v2127
        %v2144 = vpack.c.b16 %v2128, %v2128
        %v2145 = vpack.c.b16 %v2129, %v2129
        %s2162 = scalar_lea.vmem %s266, 128 [#allocation3]
        %2163 = vst [vmem:[%s2162] sm:$0xf] %v2130
        %2164 = vst [vmem:[%s2162 + $0x4] sm:$0xf] %v2131
        %2165 = vst [vmem:[%s2162 + $0x8] sm:$0xf] %v2132
        %2166 = vst [vmem:[%s2162 + $0xc] sm:$0xf] %v2133
        %2167 = vst [vmem:[%s2162 + $0x10] sm:$0xf] %v2134
        %2168 = vst [vmem:[%s2162 + $0x14] sm:$0xf] %v2135
        %2169 = vst [vmem:[%s2162 + $0x18] sm:$0xf] %v2136
        %2170 = vst [vmem:[%s2162 + $0x1c] sm:$0xf] %v2137
        %2171 = vst [vmem:[%s2162 + $0x20] sm:$0xf] %v2138
        %2172 = vst [vmem:[%s2162 + $0x24] sm:$0xf] %v2139
        %2173 = vst [vmem:[%s2162 + $0x28] sm:$0xf] %v2140
        %2174 = vst [vmem:[%s2162 + $0x2c] sm:$0xf] %v2141
        %2175 = vst [vmem:[%s2162 + $0x30] sm:$0xf] %v2142
        %2176 = vst [vmem:[%s2162 + $0x34] sm:$0xf] %v2143
        %2177 = vst [vmem:[%s2162 + $0x38] sm:$0xf] %v2144
        %2178 = vst [vmem:[%s2162 + $0x3c] sm:$0xf] %v2145
        %2179 = vrot.lane.b32.xlu0 %v487, 48
        %v2180 = vpop.permute.xlu0 %2179
        %2181 = vrot.lane.b32.xlu0 %v488, 48
        %v2182 = vpop.permute.xlu0 %2181
        %2183 = vrot.lane.b32.xlu0 %v489, 48
        %v2184 = vpop.permute.xlu0 %2183
        %2185 = vrot.lane.b32.xlu0 %v490, 48
        %v2186 = vpop.permute.xlu0 %2185
        %2187 = vrot.lane.b32.xlu0 %v491, 48
        %v2188 = vpop.permute.xlu0 %2187
        %2189 = vrot.lane.b32.xlu0 %v492, 48
        %v2190 = vpop.permute.xlu0 %2189
        %2191 = vrot.lane.b32.xlu0 %v493, 48
        %v2192 = vpop.permute.xlu0 %2191
        %2193 = vrot.lane.b32.xlu0 %v494, 48
        %v2194 = vpop.permute.xlu0 %2193
        %2203 = vmatprep.subr.bf16.mxu0 0
        %2204 = vmatpush1.bf16.msra.mxu0 %v2194
        %2205 = vmatprep.subr.bf16.mxu0 0
        %2206 = vmatpush1.bf16.msra.mxu0 %v2192
        %2207 = vmatprep.subr.bf16.mxu0 0
        %2208 = vmatpush1.bf16.msra.mxu0 %v2190
        %2209 = vmatprep.subr.bf16.mxu0 0
        %2210 = vmatpush1.bf16.msra.mxu0 %v2188
        %2211 = vmatprep.subr.bf16.mxu0 0
        %2212 = vmatpush1.bf16.msra.mxu0 %v2186
        %2213 = vmatprep.subr.bf16.mxu0 0
        %2214 = vmatpush1.bf16.msra.mxu0 %v2184
        %2215 = vmatprep.subr.bf16.mxu0 0
        %2216 = vmatpush1.bf16.msra.mxu0 %v2182
        %2217 = vmatprep.subr.bf16.mxu0 0
        %2218 = vmatpush1.bf16.msra.mxu0 %v2180
        %2219 = vmatprep.subr.bf16.mxu0 0
        %2220 = vmatpush2.bf16.msra.mxu0 0
        %2221 = vmatprep.subr.bf16.mxu0 0
        %2222 = vmatpush2.bf16.msra.mxu0 0
        %2223 = vmatprep.subr.bf16.mxu0 0
        %2224 = vmatpush2.bf16.msra.mxu0 0
        %2225 = vmatprep.subr.bf16.mxu0 0
        %2226 = vmatpush2.bf16.msra.mxu0 0
        %2227 = vmatprep.subr.bf16.mxu0 0
        %2228 = vmatpush2.bf16.msra.mxu0 0
        %2229 = vmatprep.subr.bf16.mxu0 0
        %2230 = vmatpush2.bf16.msra.mxu0 0
        %2231 = vmatprep.subr.bf16.mxu0 0
        %2232 = vmatpush2.bf16.msra.mxu0 0
        %2233 = vmatprep.subr.bf16.mxu0 0
        %2234 = vmatpush2.bf16.msra.mxu0 0
        %2235 = vmatprep.mubr.bf16.mxu0 0
        %2236 = vmatmul.mubr.bf16.gmra.mxu0 %v2098
        %v2237 = vpop.f32.mrf.mxu0
        %v2238 = vadd.f32 0.0, %v2237
        %v2239 = vpop.f32.mrf.mxu0
        %v2240 = vpop.f32.mrf.mxu0
        %v2241 = vadd.f32 0.0, %v2240
        %v2242 = vpop.f32.mrf.mxu0
        %2243 = vmatprep.mubr.bf16.mxu0 0
        %2244 = vmatmul.mubr.bf16.gmra.mxu0 %v2099
        %v2245 = vpop.f32.mrf.mxu0
        %v2246 = vadd.f32 0.0, %v2245
        %v2247 = vpop.f32.mrf.mxu0
        %v2248 = vpop.f32.mrf.mxu0
        %v2249 = vadd.f32 0.0, %v2248
        %v2250 = vpop.f32.mrf.mxu0
        %2251 = vmatprep.mubr.bf16.mxu0 0
        %2252 = vmatmul.mubr.bf16.gmra.mxu0 %v2100
        %v2253 = vpop.f32.mrf.mxu0
        %v2254 = vadd.f32 0.0, %v2253
        %v2255 = vpop.f32.mrf.mxu0
        %v2256 = vpop.f32.mrf.mxu0
        %v2257 = vadd.f32 0.0, %v2256
        %v2258 = vpop.f32.mrf.mxu0
        %2259 = vmatprep.mubr.bf16.mxu0 0
        %2260 = vmatmul.mubr.bf16.gmra.mxu0 %v2101
        %v2261 = vpop.f32.mrf.mxu0
        %v2262 = vadd.f32 0.0, %v2261
        %v2263 = vpop.f32.mrf.mxu0
        %v2264 = vpop.f32.mrf.mxu0
        %v2265 = vadd.f32 0.0, %v2264
        %v2266 = vpop.f32.mrf.mxu0
        %2267 = vmatprep.mubr.bf16.mxu0 0
        %2268 = vmatmul.mubr.bf16.gmra.mxu0 %v2102
        %v2269 = vpop.f32.mrf.mxu0
        %v2270 = vadd.f32 0.0, %v2269
        %v2271 = vpop.f32.mrf.mxu0
        %v2272 = vpop.f32.mrf.mxu0
        %v2273 = vadd.f32 0.0, %v2272
        %v2274 = vpop.f32.mrf.mxu0
        %2275 = vmatprep.mubr.bf16.mxu0 0
        %2276 = vmatmul.mubr.bf16.gmra.mxu0 %v2103
        %v2277 = vpop.f32.mrf.mxu0
        %v2278 = vadd.f32 0.0, %v2277
        %v2279 = vpop.f32.mrf.mxu0
        %v2280 = vpop.f32.mrf.mxu0
        %v2281 = vadd.f32 0.0, %v2280
        %v2282 = vpop.f32.mrf.mxu0
        %2283 = vmatprep.mubr.bf16.mxu0 0
        %2284 = vmatmul.mubr.bf16.gmra.mxu0 %v2104
        %v2285 = vpop.f32.mrf.mxu0
        %v2286 = vadd.f32 0.0, %v2285
        %v2287 = vpop.f32.mrf.mxu0
        %v2288 = vpop.f32.mrf.mxu0
        %v2289 = vadd.f32 0.0, %v2288
        %v2290 = vpop.f32.mrf.mxu0
        %2291 = vmatprep.mubr.bf16.mxu0 0
        %2292 = vmatmul.mubr.bf16.gmra.mxu0 %v2105
        %v2293 = vpop.f32.mrf.mxu0
        %v2294 = vadd.f32 0.0, %v2293
        %v2295 = vpop.f32.mrf.mxu0
        %v2296 = vpop.f32.mrf.mxu0
        %v2297 = vadd.f32 0.0, %v2296
        %v2298 = vpop.f32.mrf.mxu0
        %2299 = vdwg.mxu0
        %v2300 = vpack.c.bf16 %v2241, %v2238
        %v2301 = vpack.c.bf16 %v2249, %v2246
        %v2302 = vpack.c.bf16 %v2257, %v2254
        %v2303 = vpack.c.bf16 %v2265, %v2262
        %v2304 = vpack.c.bf16 %v2273, %v2270
        %v2305 = vpack.c.bf16 %v2281, %v2278
        %v2306 = vpack.c.bf16 %v2289, %v2286
        %v2307 = vpack.c.bf16 %v2297, %v2294
        %v2316 = vunpack.c.l.b16 %v2300
        %v2317 = vunpack.c.h.b16 %v2300
        %v2318 = vunpack.c.l.b16 %v2301
        %v2319 = vunpack.c.h.b16 %v2301
        %v2320 = vunpack.c.l.b16 %v2302
        %v2321 = vunpack.c.h.b16 %v2302
        %v2322 = vunpack.c.l.b16 %v2303
        %v2323 = vunpack.c.h.b16 %v2303
        %v2324 = vunpack.c.l.b16 %v2304
        %v2325 = vunpack.c.h.b16 %v2304
        %v2326 = vunpack.c.l.b16 %v2305
        %v2327 = vunpack.c.h.b16 %v2305
        %v2328 = vunpack.c.l.b16 %v2306
        %v2329 = vunpack.c.h.b16 %v2306
        %v2330 = vunpack.c.l.b16 %v2307
        %v2331 = vunpack.c.h.b16 %v2307
        %v2332 = vpack.c.b16 %v2316, %v2316
        %v2333 = vpack.c.b16 %v2317, %v2317
        %v2334 = vpack.c.b16 %v2318, %v2318
        %v2335 = vpack.c.b16 %v2319, %v2319
        %v2336 = vpack.c.b16 %v2320, %v2320
        %v2337 = vpack.c.b16 %v2321, %v2321
        %v2338 = vpack.c.b16 %v2322, %v2322
        %v2339 = vpack.c.b16 %v2323, %v2323
        %v2340 = vpack.c.b16 %v2324, %v2324
        %v2341 = vpack.c.b16 %v2325, %v2325
        %v2342 = vpack.c.b16 %v2326, %v2326
        %v2343 = vpack.c.b16 %v2327, %v2327
        %v2344 = vpack.c.b16 %v2328, %v2328
        %v2345 = vpack.c.b16 %v2329, %v2329
        %v2346 = vpack.c.b16 %v2330, %v2330
        %v2347 = vpack.c.b16 %v2331, %v2331
        %2348 = vrot.lane.b32.xlu0 %v2332, 16
        %v2349 = vpop.permute.xlu0 %2348
        %2350 = vrot.lane.b32.xlu0 %v2333, 16
        %v2351 = vpop.permute.xlu0 %2350
        %2352 = vrot.lane.b32.xlu0 %v2334, 16
        %v2353 = vpop.permute.xlu0 %2352
        %2354 = vrot.lane.b32.xlu0 %v2335, 16
        %v2355 = vpop.permute.xlu0 %2354
        %2356 = vrot.lane.b32.xlu0 %v2336, 16
        %v2357 = vpop.permute.xlu0 %2356
        %2358 = vrot.lane.b32.xlu0 %v2337, 16
        %v2359 = vpop.permute.xlu0 %2358
        %2360 = vrot.lane.b32.xlu0 %v2338, 16
        %v2361 = vpop.permute.xlu0 %2360
        %2362 = vrot.lane.b32.xlu0 %v2339, 16
        %v2363 = vpop.permute.xlu0 %2362
        %2364 = vrot.lane.b32.xlu0 %v2340, 16
        %v2365 = vpop.permute.xlu0 %2364
        %2366 = vrot.lane.b32.xlu0 %v2341, 16
        %v2367 = vpop.permute.xlu0 %2366
        %2368 = vrot.lane.b32.xlu0 %v2342, 16
        %v2369 = vpop.permute.xlu0 %2368
        %2370 = vrot.lane.b32.xlu0 %v2343, 16
        %v2371 = vpop.permute.xlu0 %2370
        %2372 = vrot.lane.b32.xlu0 %v2344, 16
        %v2373 = vpop.permute.xlu0 %2372
        %2374 = vrot.lane.b32.xlu0 %v2345, 16
        %v2375 = vpop.permute.xlu0 %2374
        %2376 = vrot.lane.b32.xlu0 %v2346, 16
        %v2377 = vpop.permute.xlu0 %2376
        %2378 = vrot.lane.b32.xlu0 %v2347, 16
        %v2379 = vpop.permute.xlu0 %2378
        %vm2396 = vcmask 191616
        %2397 = vst.msk [vmem:[#allocation2] sm:$0xf] %vm2396, %v2349
        %2398 = vst.msk [vmem:[#allocation2 + $0x4] sm:$0xf] %vm2396, %v2351
        %2399 = vst.msk [vmem:[#allocation2 + $0x8] sm:$0xf] %vm2396, %v2353
        %2400 = vst.msk [vmem:[#allocation2 + $0xc] sm:$0xf] %vm2396, %v2355
        %2401 = vst.msk [vmem:[#allocation2 + $0x10] sm:$0xf] %vm2396, %v2357
        %2402 = vst.msk [vmem:[#allocation2 + $0x14] sm:$0xf] %vm2396, %v2359
        %2403 = vst.msk [vmem:[#allocation2 + $0x18] sm:$0xf] %vm2396, %v2361
        %2404 = vst.msk [vmem:[#allocation2 + $0x1c] sm:$0xf] %vm2396, %v2363
        %2405 = vst.msk [vmem:[#allocation2 + $0x20] sm:$0xf] %vm2396, %v2365
        %2406 = vst.msk [vmem:[#allocation2 + $0x24] sm:$0xf] %vm2396, %v2367
        %2407 = vst.msk [vmem:[#allocation2 + $0x28] sm:$0xf] %vm2396, %v2369
        %2408 = vst.msk [vmem:[#allocation2 + $0x2c] sm:$0xf] %vm2396, %v2371
        %2409 = vst.msk [vmem:[#allocation2 + $0x30] sm:$0xf] %vm2396, %v2373
        %2410 = vst.msk [vmem:[#allocation2 + $0x34] sm:$0xf] %vm2396, %v2375
        %2411 = vst.msk [vmem:[#allocation2 + $0x38] sm:$0xf] %vm2396, %v2377
        %2412 = vst.msk [vmem:[#allocation2 + $0x3c] sm:$0xf] %vm2396, %v2379
        %2413 = vrot.lane.b32.xlu0 %v487, 104
        %v2414 = vpop.permute.xlu0 %2413
        %2415 = vrot.lane.b32.xlu0 %v488, 104
        %v2416 = vpop.permute.xlu0 %2415
        %2417 = vrot.lane.b32.xlu0 %v489, 104
        %v2418 = vpop.permute.xlu0 %2417
        %2419 = vrot.lane.b32.xlu0 %v490, 104
        %v2420 = vpop.permute.xlu0 %2419
        %2421 = vrot.lane.b32.xlu0 %v491, 104
        %v2422 = vpop.permute.xlu0 %2421
        %2423 = vrot.lane.b32.xlu0 %v492, 104
        %v2424 = vpop.permute.xlu0 %2423
        %2425 = vrot.lane.b32.xlu0 %v493, 104
        %v2426 = vpop.permute.xlu0 %2425
        %2427 = vrot.lane.b32.xlu0 %v494, 104
        %v2428 = vpop.permute.xlu0 %2427
        %2429 = vrot.lane.b32.xlu0 %v487, 72
        %v2430 = vpop.permute.xlu0 %2429
        %2431 = vrot.lane.b32.xlu0 %v488, 72
        %v2432 = vpop.permute.xlu0 %2431
        %2433 = vrot.lane.b32.xlu0 %v489, 72
        %v2434 = vpop.permute.xlu0 %2433
        %2435 = vrot.lane.b32.xlu0 %v490, 72
        %v2436 = vpop.permute.xlu0 %2435
        %2437 = vrot.lane.b32.xlu0 %v491, 72
        %v2438 = vpop.permute.xlu0 %2437
        %2439 = vrot.lane.b32.xlu0 %v492, 72
        %v2440 = vpop.permute.xlu0 %2439
        %2441 = vrot.lane.b32.xlu0 %v493, 72
        %v2442 = vpop.permute.xlu0 %2441
        %2443 = vrot.lane.b32.xlu0 %v494, 72
        %v2444 = vpop.permute.xlu0 %2443
        %v2446 = vsel %vm519, %v2414, 0
        %v2449 = vsel %vm519, %v2416, 0
        %v2452 = vsel %vm519, %v2418, 0
        %v2455 = vsel %vm519, %v2420, 0
        %v2458 = vsel %vm519, %v2422, 0
        %v2461 = vsel %vm519, %v2424, 0
        %v2464 = vsel %vm519, %v2426, 0
        %v2467 = vsel %vm519, %v2428, 0
        %v2470 = vsel %vm519, %v2430, 0
        %v2473 = vsel %vm519, %v2432, 0
        %v2476 = vsel %vm519, %v2434, 0
        %v2479 = vsel %vm519, %v2436, 0
        %v2482 = vsel %vm519, %v2438, 0
        %v2485 = vsel %vm519, %v2440, 0
        %v2488 = vsel %vm519, %v2442, 0
        %v2491 = vsel %vm519, %v2444, 0
        %2493 = vmatprep.subr.bf16.mxu0 0
        %2494 = vmatpush1.bf16.xpose.msra.mxu0 %v2491
        %2495 = vmatprep.subr.bf16.mxu0 0
        %2496 = vmatpush1.bf16.xpose.msra.mxu0 %v2488
        %2497 = vmatprep.subr.bf16.mxu0 0
        %2498 = vmatpush1.bf16.xpose.msra.mxu0 %v2485
        %2499 = vmatprep.subr.bf16.mxu0 0
        %2500 = vmatpush1.bf16.xpose.msra.mxu0 %v2482
        %2501 = vmatprep.subr.bf16.mxu0 0
        %2502 = vmatpush1.bf16.xpose.msra.mxu0 %v2479
        %2503 = vmatprep.subr.bf16.mxu0 0
        %2504 = vmatpush1.bf16.xpose.msra.mxu0 %v2476
        %2505 = vmatprep.subr.bf16.mxu0 0
        %2506 = vmatpush1.bf16.xpose.msra.mxu0 %v2473
        %2507 = vmatprep.subr.bf16.mxu0 0
        %2508 = vmatpush1.bf16.xpose.msra.mxu0 %v2470
        %2509 = vmatprep.subr.bf16.mxu0 0
        %2510 = vmatpush2.bf16.xpose.msra.mxu0 0
        %2511 = vmatprep.subr.bf16.mxu0 0
        %2512 = vmatpush2.bf16.xpose.msra.mxu0 0
        %2513 = vmatprep.subr.bf16.mxu0 0
        %2514 = vmatpush2.bf16.xpose.msra.mxu0 0
        %2515 = vmatprep.subr.bf16.mxu0 0
        %2516 = vmatpush2.bf16.xpose.msra.mxu0 0
        %2517 = vmatprep.subr.bf16.mxu0 0
        %2518 = vmatpush2.bf16.xpose.msra.mxu0 0
        %2519 = vmatprep.subr.bf16.mxu0 0
        %2520 = vmatpush2.bf16.xpose.msra.mxu0 0
        %2521 = vmatprep.subr.bf16.mxu0 0
        %2522 = vmatpush2.bf16.xpose.msra.mxu0 0
        %2523 = vmatprep.subr.bf16.mxu0 0
        %2524 = vmatpush2.bf16.xpose.msra.mxu0 0
        %2525 = vmatprep.mubr.bf16.mxu0 0
        %2526 = vmatmul.mubr.bf16.gmra.mxu0 %v2446
        %v2527 = vpop.f32.mrf.mxu0
        %v2528 = vadd.f32 0.0, %v2527
        %v2529 = vpop.f32.mrf.mxu0
        %v2530 = vpop.f32.mrf.mxu0
        %v2531 = vadd.f32 0.0, %v2530
        %v2532 = vpop.f32.mrf.mxu0
        %2533 = vmatprep.mubr.bf16.mxu0 0
        %2534 = vmatmul.mubr.bf16.gmra.mxu0 %v2449
        %v2535 = vpop.f32.mrf.mxu0
        %v2536 = vadd.f32 0.0, %v2535
        %v2537 = vpop.f32.mrf.mxu0
        %v2538 = vpop.f32.mrf.mxu0
        %v2539 = vadd.f32 0.0, %v2538
        %v2540 = vpop.f32.mrf.mxu0
        %2541 = vmatprep.mubr.bf16.mxu0 0
        %2542 = vmatmul.mubr.bf16.gmra.mxu0 %v2452
        %v2543 = vpop.f32.mrf.mxu0
        %v2544 = vadd.f32 0.0, %v2543
        %v2545 = vpop.f32.mrf.mxu0
        %v2546 = vpop.f32.mrf.mxu0
        %v2547 = vadd.f32 0.0, %v2546
        %v2548 = vpop.f32.mrf.mxu0
        %2549 = vmatprep.mubr.bf16.mxu0 0
        %2550 = vmatmul.mubr.bf16.gmra.mxu0 %v2455
        %v2551 = vpop.f32.mrf.mxu0
        %v2552 = vadd.f32 0.0, %v2551
        %v2553 = vpop.f32.mrf.mxu0
        %v2554 = vpop.f32.mrf.mxu0
        %v2555 = vadd.f32 0.0, %v2554
        %v2556 = vpop.f32.mrf.mxu0
        %2557 = vmatprep.mubr.bf16.mxu0 0
        %2558 = vmatmul.mubr.bf16.gmra.mxu0 %v2458
        %v2559 = vpop.f32.mrf.mxu0
        %v2560 = vadd.f32 0.0, %v2559
        %v2561 = vpop.f32.mrf.mxu0
        %v2562 = vpop.f32.mrf.mxu0
        %v2563 = vadd.f32 0.0, %v2562
        %v2564 = vpop.f32.mrf.mxu0
        %2565 = vmatprep.mubr.bf16.mxu0 0
        %2566 = vmatmul.mubr.bf16.gmra.mxu0 %v2461
        %v2567 = vpop.f32.mrf.mxu0
        %v2568 = vadd.f32 0.0, %v2567
        %v2569 = vpop.f32.mrf.mxu0
        %v2570 = vpop.f32.mrf.mxu0
        %v2571 = vadd.f32 0.0, %v2570
        %v2572 = vpop.f32.mrf.mxu0
        %2573 = vmatprep.mubr.bf16.mxu0 0
        %2574 = vmatmul.mubr.bf16.gmra.mxu0 %v2464
        %v2575 = vpop.f32.mrf.mxu0
        %v2576 = vadd.f32 0.0, %v2575
        %v2577 = vpop.f32.mrf.mxu0
        %v2578 = vpop.f32.mrf.mxu0
        %v2579 = vadd.f32 0.0, %v2578
        %v2580 = vpop.f32.mrf.mxu0
        %2581 = vmatprep.mubr.bf16.mxu0 0
        %2582 = vmatmul.mubr.bf16.gmra.mxu0 %v2467
        %v2583 = vpop.f32.mrf.mxu0
        %v2584 = vadd.f32 0.0, %v2583
        %v2585 = vpop.f32.mrf.mxu0
        %v2586 = vpop.f32.mrf.mxu0
        %v2587 = vadd.f32 0.0, %v2586
        %v2588 = vpop.f32.mrf.mxu0
        %2589 = vdwg.mxu0
        %v2590 = vsel %vm666, %v2528, -1e+30
        %v2591 = vsel %vm666, %v2531, -1e+30
        %v2592 = vsel %vm666, %v2536, -1e+30
        %v2593 = vsel %vm666, %v2539, -1e+30
        %v2594 = vsel %vm666, %v2544, -1e+30
        %v2595 = vsel %vm666, %v2547, -1e+30
        %v2596 = vsel %vm666, %v2552, -1e+30
        %v2597 = vsel %vm666, %v2555, -1e+30
        %v2598 = vsel %vm666, %v2560, -1e+30
        %v2599 = vsel %vm666, %v2563, -1e+30
        %v2600 = vsel %vm666, %v2568, -1e+30
        %v2601 = vsel %vm666, %v2571, -1e+30
        %v2602 = vsel %vm666, %v2576, -1e+30
        %v2603 = vsel %vm666, %v2579, -1e+30
        %v2604 = vsel %vm666, %v2584, -1e+30
        %v2605 = vsel %vm666, %v2587, -1e+30
        %2606 = vmax.xlane.f32.xlu0 %v2590
        %v2607 = vpop.xlane.xlu0 %2606
        %2608 = vmax.xlane.f32.xlu0 %v2591
        %v2609 = vpop.xlane.xlu0 %2608
        %2610 = vmax.xlane.f32.xlu0 %v2592
        %v2611 = vpop.xlane.xlu0 %2610
        %2612 = vmax.xlane.f32.xlu0 %v2593
        %v2613 = vpop.xlane.xlu0 %2612
        %2614 = vmax.xlane.f32.xlu0 %v2594
        %v2615 = vpop.xlane.xlu0 %2614
        %2616 = vmax.xlane.f32.xlu0 %v2595
        %v2617 = vpop.xlane.xlu0 %2616
        %2618 = vmax.xlane.f32.xlu0 %v2596
        %v2619 = vpop.xlane.xlu0 %2618
        %2620 = vmax.xlane.f32.xlu0 %v2597
        %v2621 = vpop.xlane.xlu0 %2620
        %2622 = vmax.xlane.f32.xlu0 %v2598
        %v2623 = vpop.xlane.xlu0 %2622
        %2624 = vmax.xlane.f32.xlu0 %v2599
        %v2625 = vpop.xlane.xlu0 %2624
        %2626 = vmax.xlane.f32.xlu0 %v2600
        %v2627 = vpop.xlane.xlu0 %2626
        %2628 = vmax.xlane.f32.xlu0 %v2601
        %v2629 = vpop.xlane.xlu0 %2628
        %2630 = vmax.xlane.f32.xlu0 %v2602
        %v2631 = vpop.xlane.xlu0 %2630
        %2632 = vmax.xlane.f32.xlu0 %v2603
        %v2633 = vpop.xlane.xlu0 %2632
        %2634 = vmax.xlane.f32.xlu0 %v2604
        %v2635 = vpop.xlane.xlu0 %2634
        %2636 = vmax.xlane.f32.xlu0 %v2605
        %v2637 = vpop.xlane.xlu0 %2636
        %v2638 = vsub.f32 %v2590, %v2607
        %v2639 = vsub.f32 %v2591, %v2609
        %v2640 = vsub.f32 %v2592, %v2611
        %v2641 = vsub.f32 %v2593, %v2613
        %v2642 = vsub.f32 %v2594, %v2615
        %v2643 = vsub.f32 %v2595, %v2617
        %v2644 = vsub.f32 %v2596, %v2619
        %v2645 = vsub.f32 %v2597, %v2621
        %v2646 = vsub.f32 %v2598, %v2623
        %v2647 = vsub.f32 %v2599, %v2625
        %v2648 = vsub.f32 %v2600, %v2627
        %v2649 = vsub.f32 %v2601, %v2629
        %v2650 = vsub.f32 %v2602, %v2631
        %v2651 = vsub.f32 %v2603, %v2633
        %v2652 = vsub.f32 %v2604, %v2635
        %v2653 = vsub.f32 %v2605, %v2637
        %v2654 = vmul.f32 %v2638, 1.442695
        %v2655 = vpow.pop %v2654
        %v2656 = vmul.f32 %v2639, 1.442695
        %v2657 = vpow.pop %v2656
        %v2658 = vmul.f32 %v2640, 1.442695
        %v2659 = vpow.pop %v2658
        %v2660 = vmul.f32 %v2641, 1.442695
        %v2661 = vpow.pop %v2660
        %v2662 = vmul.f32 %v2642, 1.442695
        %v2663 = vpow.pop %v2662
        %v2664 = vmul.f32 %v2643, 1.442695
        %v2665 = vpow.pop %v2664
        %v2666 = vmul.f32 %v2644, 1.442695
        %v2667 = vpow.pop %v2666
        %v2668 = vmul.f32 %v2645, 1.442695
        %v2669 = vpow.pop %v2668
        %v2670 = vmul.f32 %v2646, 1.442695
        %v2671 = vpow.pop %v2670
        %v2672 = vmul.f32 %v2647, 1.442695
        %v2673 = vpow.pop %v2672
        %v2674 = vmul.f32 %v2648, 1.442695
        %v2675 = vpow.pop %v2674
        %v2676 = vmul.f32 %v2649, 1.442695
        %v2677 = vpow.pop %v2676
        %v2678 = vmul.f32 %v2650, 1.442695
        %v2679 = vpow.pop %v2678
        %v2680 = vmul.f32 %v2651, 1.442695
        %v2681 = vpow.pop %v2680
        %v2682 = vmul.f32 %v2652, 1.442695
        %v2683 = vpow.pop %v2682
        %v2684 = vmul.f32 %v2653, 1.442695
        %v2685 = vpow.pop %v2684
        %2686 = vadd.xlane.f32.xlu0 %v2655
        %v2687 = vpop.xlane.xlu0 %2686
        %2688 = vadd.xlane.f32.xlu0 %v2657
        %v2689 = vpop.xlane.xlu0 %2688
        %2690 = vadd.xlane.f32.xlu0 %v2659
        %v2691 = vpop.xlane.xlu0 %2690
        %2692 = vadd.xlane.f32.xlu0 %v2661
        %v2693 = vpop.xlane.xlu0 %2692
        %2694 = vadd.xlane.f32.xlu0 %v2663
        %v2695 = vpop.xlane.xlu0 %2694
        %2696 = vadd.xlane.f32.xlu0 %v2665
        %v2697 = vpop.xlane.xlu0 %2696
        %2698 = vadd.xlane.f32.xlu0 %v2667
        %v2699 = vpop.xlane.xlu0 %2698
        %2700 = vadd.xlane.f32.xlu0 %v2669
        %v2701 = vpop.xlane.xlu0 %2700
        %2702 = vadd.xlane.f32.xlu0 %v2671
        %v2703 = vpop.xlane.xlu0 %2702
        %2704 = vadd.xlane.f32.xlu0 %v2673
        %v2705 = vpop.xlane.xlu0 %2704
        %2706 = vadd.xlane.f32.xlu0 %v2675
        %v2707 = vpop.xlane.xlu0 %2706
        %2708 = vadd.xlane.f32.xlu0 %v2677
        %v2709 = vpop.xlane.xlu0 %2708
        %2710 = vadd.xlane.f32.xlu0 %v2679
        %v2711 = vpop.xlane.xlu0 %2710
        %2712 = vadd.xlane.f32.xlu0 %v2681
        %v2713 = vpop.xlane.xlu0 %2712
        %2714 = vadd.xlane.f32.xlu0 %v2683
        %v2715 = vpop.xlane.xlu0 %2714
        %2716 = vadd.xlane.f32.xlu0 %v2685
        %v2717 = vpop.xlane.xlu0 %2716
        %v2718 = vrcp.pop %v2687
        %v2719 = vrcp.pop %v2689
        %v2720 = vrcp.pop %v2691
        %v2721 = vrcp.pop %v2693
        %v2722 = vrcp.pop %v2695
        %v2723 = vrcp.pop %v2697
        %v2724 = vrcp.pop %v2699
        %v2725 = vrcp.pop %v2701
        %v2726 = vrcp.pop %v2703
        %v2727 = vrcp.pop %v2705
        %v2728 = vrcp.pop %v2707
        %v2729 = vrcp.pop %v2709
        %v2730 = vrcp.pop %v2711
        %v2731 = vrcp.pop %v2713
        %v2732 = vrcp.pop %v2715
        %v2733 = vrcp.pop %v2717
        %v2734 = vmul.f32 %v2655, %v2718
        %v2735 = vmul.f32 %v2657, %v2719
        %v2736 = vmul.f32 %v2659, %v2720
        %v2737 = vmul.f32 %v2661, %v2721
        %v2738 = vmul.f32 %v2663, %v2722
        %v2739 = vmul.f32 %v2665, %v2723
        %v2740 = vmul.f32 %v2667, %v2724
        %v2741 = vmul.f32 %v2669, %v2725
        %v2742 = vmul.f32 %v2671, %v2726
        %v2743 = vmul.f32 %v2673, %v2727
        %v2744 = vmul.f32 %v2675, %v2728
        %v2745 = vmul.f32 %v2677, %v2729
        %v2746 = vmul.f32 %v2679, %v2730
        %v2747 = vmul.f32 %v2681, %v2731
        %v2748 = vmul.f32 %v2683, %v2732
        %v2749 = vmul.f32 %v2685, %v2733
        %v2750 = vpack.c.bf16 %v2735, %v2734
        %v2751 = vpack.c.bf16 %v2737, %v2736
        %v2752 = vpack.c.bf16 %v2739, %v2738
        %v2753 = vpack.c.bf16 %v2741, %v2740
        %v2754 = vpack.c.bf16 %v2743, %v2742
        %v2755 = vpack.c.bf16 %v2745, %v2744
        %v2756 = vpack.c.bf16 %v2747, %v2746
        %v2757 = vpack.c.bf16 %v2749, %v2748
        %v2766 = vunpack.c.l.b16 %v2750
        %v2767 = vunpack.c.h.b16 %v2750
        %v2768 = vunpack.c.l.b16 %v2751
        %v2769 = vunpack.c.h.b16 %v2751
        %v2770 = vunpack.c.l.b16 %v2752
        %v2771 = vunpack.c.h.b16 %v2752
        %v2772 = vunpack.c.l.b16 %v2753
        %v2773 = vunpack.c.h.b16 %v2753
        %v2774 = vunpack.c.l.b16 %v2754
        %v2775 = vunpack.c.h.b16 %v2754
        %v2776 = vunpack.c.l.b16 %v2755
        %v2777 = vunpack.c.h.b16 %v2755
        %v2778 = vunpack.c.l.b16 %v2756
        %v2779 = vunpack.c.h.b16 %v2756
        %v2780 = vunpack.c.l.b16 %v2757
        %v2781 = vunpack.c.h.b16 %v2757
        %v2782 = vpack.c.b16 %v2766, %v2766
        %v2783 = vpack.c.b16 %v2767, %v2767
        %v2784 = vpack.c.b16 %v2768, %v2768
        %v2785 = vpack.c.b16 %v2769, %v2769
        %v2786 = vpack.c.b16 %v2770, %v2770
        %v2787 = vpack.c.b16 %v2771, %v2771
        %v2788 = vpack.c.b16 %v2772, %v2772
        %v2789 = vpack.c.b16 %v2773, %v2773
        %v2790 = vpack.c.b16 %v2774, %v2774
        %v2791 = vpack.c.b16 %v2775, %v2775
        %v2792 = vpack.c.b16 %v2776, %v2776
        %v2793 = vpack.c.b16 %v2777, %v2777
        %v2794 = vpack.c.b16 %v2778, %v2778
        %v2795 = vpack.c.b16 %v2779, %v2779
        %v2796 = vpack.c.b16 %v2780, %v2780
        %v2797 = vpack.c.b16 %v2781, %v2781
        %s2814 = scalar_lea.vmem %s266, 192 [#allocation3]
        %2815 = vst [vmem:[%s2814] sm:$0xf] %v2782
        %2816 = vst [vmem:[%s2814 + $0x4] sm:$0xf] %v2783
        %2817 = vst [vmem:[%s2814 + $0x8] sm:$0xf] %v2784
        %2818 = vst [vmem:[%s2814 + $0xc] sm:$0xf] %v2785
        %2819 = vst [vmem:[%s2814 + $0x10] sm:$0xf] %v2786
        %2820 = vst [vmem:[%s2814 + $0x14] sm:$0xf] %v2787
        %2821 = vst [vmem:[%s2814 + $0x18] sm:$0xf] %v2788
        %2822 = vst [vmem:[%s2814 + $0x1c] sm:$0xf] %v2789
        %2823 = vst [vmem:[%s2814 + $0x20] sm:$0xf] %v2790
        %2824 = vst [vmem:[%s2814 + $0x24] sm:$0xf] %v2791
        %2825 = vst [vmem:[%s2814 + $0x28] sm:$0xf] %v2792
        %2826 = vst [vmem:[%s2814 + $0x2c] sm:$0xf] %v2793
        %2827 = vst [vmem:[%s2814 + $0x30] sm:$0xf] %v2794
        %2828 = vst [vmem:[%s2814 + $0x34] sm:$0xf] %v2795
        %2829 = vst [vmem:[%s2814 + $0x38] sm:$0xf] %v2796
        %2830 = vst [vmem:[%s2814 + $0x3c] sm:$0xf] %v2797
        %2831 = vrot.lane.b32.xlu0 %v487, 40
        %v2832 = vpop.permute.xlu0 %2831
        %2833 = vrot.lane.b32.xlu0 %v488, 40
        %v2834 = vpop.permute.xlu0 %2833
        %2835 = vrot.lane.b32.xlu0 %v489, 40
        %v2836 = vpop.permute.xlu0 %2835
        %2837 = vrot.lane.b32.xlu0 %v490, 40
        %v2838 = vpop.permute.xlu0 %2837
        %2839 = vrot.lane.b32.xlu0 %v491, 40
        %v2840 = vpop.permute.xlu0 %2839
        %2841 = vrot.lane.b32.xlu0 %v492, 40
        %v2842 = vpop.permute.xlu0 %2841
        %2843 = vrot.lane.b32.xlu0 %v493, 40
        %v2844 = vpop.permute.xlu0 %2843
        %2845 = vrot.lane.b32.xlu0 %v494, 40
        %v2846 = vpop.permute.xlu0 %2845
        %2855 = vmatprep.subr.bf16.mxu0 0
        %2856 = vmatpush1.bf16.msra.mxu0 %v2846
        %2857 = vmatprep.subr.bf16.mxu0 0
        %2858 = vmatpush1.bf16.msra.mxu0 %v2844
        %2859 = vmatprep.subr.bf16.mxu0 0
        %2860 = vmatpush1.bf16.msra.mxu0 %v2842
        %2861 = vmatprep.subr.bf16.mxu0 0
        %2862 = vmatpush1.bf16.msra.mxu0 %v2840
        %2863 = vmatprep.subr.bf16.mxu0 0
        %2864 = vmatpush1.bf16.msra.mxu0 %v2838
        %2865 = vmatprep.subr.bf16.mxu0 0
        %2866 = vmatpush1.bf16.msra.mxu0 %v2836
        %2867 = vmatprep.subr.bf16.mxu0 0
        %2868 = vmatpush1.bf16.msra.mxu0 %v2834
        %2869 = vmatprep.subr.bf16.mxu0 0
        %2870 = vmatpush1.bf16.msra.mxu0 %v2832
        %2871 = vmatprep.subr.bf16.mxu0 0
        %2872 = vmatpush2.bf16.msra.mxu0 0
        %2873 = vmatprep.subr.bf16.mxu0 0
        %2874 = vmatpush2.bf16.msra.mxu0 0
        %2875 = vmatprep.subr.bf16.mxu0 0
        %2876 = vmatpush2.bf16.msra.mxu0 0
        %2877 = vmatprep.subr.bf16.mxu0 0
        %2878 = vmatpush2.bf16.msra.mxu0 0
        %2879 = vmatprep.subr.bf16.mxu0 0
        %2880 = vmatpush2.bf16.msra.mxu0 0
        %2881 = vmatprep.subr.bf16.mxu0 0
        %2882 = vmatpush2.bf16.msra.mxu0 0
        %2883 = vmatprep.subr.bf16.mxu0 0
        %2884 = vmatpush2.bf16.msra.mxu0 0
        %2885 = vmatprep.subr.bf16.mxu0 0
        %2886 = vmatpush2.bf16.msra.mxu0 0
        %2887 = vmatprep.mubr.bf16.mxu0 0
        %2888 = vmatmul.mubr.bf16.gmra.mxu0 %v2750
        %v2889 = vpop.f32.mrf.mxu0
        %v2890 = vadd.f32 0.0, %v2889
        %v2891 = vpop.f32.mrf.mxu0
        %v2892 = vpop.f32.mrf.mxu0
        %v2893 = vadd.f32 0.0, %v2892
        %v2894 = vpop.f32.mrf.mxu0
        %2895 = vmatprep.mubr.bf16.mxu0 0
        %2896 = vmatmul.mubr.bf16.gmra.mxu0 %v2751
        %v2897 = vpop.f32.mrf.mxu0
        %v2898 = vadd.f32 0.0, %v2897
        %v2899 = vpop.f32.mrf.mxu0
        %v2900 = vpop.f32.mrf.mxu0
        %v2901 = vadd.f32 0.0, %v2900
        %v2902 = vpop.f32.mrf.mxu0
        %2903 = vmatprep.mubr.bf16.mxu0 0
        %2904 = vmatmul.mubr.bf16.gmra.mxu0 %v2752
        %v2905 = vpop.f32.mrf.mxu0
        %v2906 = vadd.f32 0.0, %v2905
        %v2907 = vpop.f32.mrf.mxu0
        %v2908 = vpop.f32.mrf.mxu0
        %v2909 = vadd.f32 0.0, %v2908
        %v2910 = vpop.f32.mrf.mxu0
        %2911 = vmatprep.mubr.bf16.mxu0 0
        %2912 = vmatmul.mubr.bf16.gmra.mxu0 %v2753
        %v2913 = vpop.f32.mrf.mxu0
        %v2914 = vadd.f32 0.0, %v2913
        %v2915 = vpop.f32.mrf.mxu0
        %v2916 = vpop.f32.mrf.mxu0
        %v2917 = vadd.f32 0.0, %v2916
        %v2918 = vpop.f32.mrf.mxu0
        %2919 = vmatprep.mubr.bf16.mxu0 0
        %2920 = vmatmul.mubr.bf16.gmra.mxu0 %v2754
        %v2921 = vpop.f32.mrf.mxu0
        %v2922 = vadd.f32 0.0, %v2921
        %v2923 = vpop.f32.mrf.mxu0
        %v2924 = vpop.f32.mrf.mxu0
        %v2925 = vadd.f32 0.0, %v2924
        %v2926 = vpop.f32.mrf.mxu0
        %2927 = vmatprep.mubr.bf16.mxu0 0
        %2928 = vmatmul.mubr.bf16.gmra.mxu0 %v2755
        %v2929 = vpop.f32.mrf.mxu0
        %v2930 = vadd.f32 0.0, %v2929
        %v2931 = vpop.f32.mrf.mxu0
        %v2932 = vpop.f32.mrf.mxu0
        %v2933 = vadd.f32 0.0, %v2932
        %v2934 = vpop.f32.mrf.mxu0
        %2935 = vmatprep.mubr.bf16.mxu0 0
        %2936 = vmatmul.mubr.bf16.gmra.mxu0 %v2756
        %v2937 = vpop.f32.mrf.mxu0
        %v2938 = vadd.f32 0.0, %v2937
        %v2939 = vpop.f32.mrf.mxu0
        %v2940 = vpop.f32.mrf.mxu0
        %v2941 = vadd.f32 0.0, %v2940
        %v2942 = vpop.f32.mrf.mxu0
        %2943 = vmatprep.mubr.bf16.mxu0 0
        %2944 = vmatmul.mubr.bf16.gmra.mxu0 %v2757
        %v2945 = vpop.f32.mrf.mxu0
        %v2946 = vadd.f32 0.0, %v2945
        %v2947 = vpop.f32.mrf.mxu0
        %v2948 = vpop.f32.mrf.mxu0
        %v2949 = vadd.f32 0.0, %v2948
        %v2950 = vpop.f32.mrf.mxu0
        %2951 = vdwg.mxu0
        %v2952 = vpack.c.bf16 %v2893, %v2890
        %v2953 = vpack.c.bf16 %v2901, %v2898
        %v2954 = vpack.c.bf16 %v2909, %v2906
        %v2955 = vpack.c.bf16 %v2917, %v2914
        %v2956 = vpack.c.bf16 %v2925, %v2922
        %v2957 = vpack.c.bf16 %v2933, %v2930
        %v2958 = vpack.c.bf16 %v2941, %v2938
        %v2959 = vpack.c.bf16 %v2949, %v2946
        %v2968 = vunpack.c.l.b16 %v2952
        %v2969 = vunpack.c.h.b16 %v2952
        %v2970 = vunpack.c.l.b16 %v2953
        %v2971 = vunpack.c.h.b16 %v2953
        %v2972 = vunpack.c.l.b16 %v2954
        %v2973 = vunpack.c.h.b16 %v2954
        %v2974 = vunpack.c.l.b16 %v2955
        %v2975 = vunpack.c.h.b16 %v2955
        %v2976 = vunpack.c.l.b16 %v2956
        %v2977 = vunpack.c.h.b16 %v2956
        %v2978 = vunpack.c.l.b16 %v2957
        %v2979 = vunpack.c.h.b16 %v2957
        %v2980 = vunpack.c.l.b16 %v2958
        %v2981 = vunpack.c.h.b16 %v2958
        %v2982 = vunpack.c.l.b16 %v2959
        %v2983 = vunpack.c.h.b16 %v2959
        %v2984 = vpack.c.b16 %v2968, %v2968
        %v2985 = vpack.c.b16 %v2969, %v2969
        %v2986 = vpack.c.b16 %v2970, %v2970
        %v2987 = vpack.c.b16 %v2971, %v2971
        %v2988 = vpack.c.b16 %v2972, %v2972
        %v2989 = vpack.c.b16 %v2973, %v2973
        %v2990 = vpack.c.b16 %v2974, %v2974
        %v2991 = vpack.c.b16 %v2975, %v2975
        %v2992 = vpack.c.b16 %v2976, %v2976
        %v2993 = vpack.c.b16 %v2977, %v2977
        %v2994 = vpack.c.b16 %v2978, %v2978
        %v2995 = vpack.c.b16 %v2979, %v2979
        %v2996 = vpack.c.b16 %v2980, %v2980
        %v2997 = vpack.c.b16 %v2981, %v2981
        %v2998 = vpack.c.b16 %v2982, %v2982
        %v2999 = vpack.c.b16 %v2983, %v2983
        %3000 = vrot.lane.b32.xlu0 %v2984, 24
        %v3001 = vpop.permute.xlu0 %3000
        %3002 = vrot.lane.b32.xlu0 %v2985, 24
        %v3003 = vpop.permute.xlu0 %3002
        %3004 = vrot.lane.b32.xlu0 %v2986, 24
        %v3005 = vpop.permute.xlu0 %3004
        %3006 = vrot.lane.b32.xlu0 %v2987, 24
        %v3007 = vpop.permute.xlu0 %3006
        %3008 = vrot.lane.b32.xlu0 %v2988, 24
        %v3009 = vpop.permute.xlu0 %3008
        %3010 = vrot.lane.b32.xlu0 %v2989, 24
        %v3011 = vpop.permute.xlu0 %3010
        %3012 = vrot.lane.b32.xlu0 %v2990, 24
        %v3013 = vpop.permute.xlu0 %3012
        %3014 = vrot.lane.b32.xlu0 %v2991, 24
        %v3015 = vpop.permute.xlu0 %3014
        %3016 = vrot.lane.b32.xlu0 %v2992, 24
        %v3017 = vpop.permute.xlu0 %3016
        %3018 = vrot.lane.b32.xlu0 %v2993, 24
        %v3019 = vpop.permute.xlu0 %3018
        %3020 = vrot.lane.b32.xlu0 %v2994, 24
        %v3021 = vpop.permute.xlu0 %3020
        %3022 = vrot.lane.b32.xlu0 %v2995, 24
        %v3023 = vpop.permute.xlu0 %3022
        %3024 = vrot.lane.b32.xlu0 %v2996, 24
        %v3025 = vpop.permute.xlu0 %3024
        %3026 = vrot.lane.b32.xlu0 %v2997, 24
        %v3027 = vpop.permute.xlu0 %3026
        %3028 = vrot.lane.b32.xlu0 %v2998, 24
        %v3029 = vpop.permute.xlu0 %3028
        %3030 = vrot.lane.b32.xlu0 %v2999, 24
        %v3031 = vpop.permute.xlu0 %3030
        %vm3048 = vcmask 257216
        %3049 = vst.msk [vmem:[#allocation2] sm:$0xf] %vm3048, %v3001
        %3050 = vst.msk [vmem:[#allocation2 + $0x4] sm:$0xf] %vm3048, %v3003
        %3051 = vst.msk [vmem:[#allocation2 + $0x8] sm:$0xf] %vm3048, %v3005
        %3052 = vst.msk [vmem:[#allocation2 + $0xc] sm:$0xf] %vm3048, %v3007
        %3053 = vst.msk [vmem:[#allocation2 + $0x10] sm:$0xf] %vm3048, %v3009
        %3054 = vst.msk [vmem:[#allocation2 + $0x14] sm:$0xf] %vm3048, %v3011
        %3055 = vst.msk [vmem:[#allocation2 + $0x18] sm:$0xf] %vm3048, %v3013
        %3056 = vst.msk [vmem:[#allocation2 + $0x1c] sm:$0xf] %vm3048, %v3015
        %3057 = vst.msk [vmem:[#allocation2 + $0x20] sm:$0xf] %vm3048, %v3017
        %3058 = vst.msk [vmem:[#allocation2 + $0x24] sm:$0xf] %vm3048, %v3019
        %3059 = vst.msk [vmem:[#allocation2 + $0x28] sm:$0xf] %vm3048, %v3021
        %3060 = vst.msk [vmem:[#allocation2 + $0x2c] sm:$0xf] %vm3048, %v3023
        %3061 = vst.msk [vmem:[#allocation2 + $0x30] sm:$0xf] %vm3048, %v3025
        %3062 = vst.msk [vmem:[#allocation2 + $0x34] sm:$0xf] %vm3048, %v3027
        %3063 = vst.msk [vmem:[#allocation2 + $0x38] sm:$0xf] %vm3048, %v3029
        %3064 = vst.msk [vmem:[#allocation2 + $0x3c] sm:$0xf] %vm3048, %v3031
        %v3065 = vld [vmem:[#allocation2] sm:$0xf]
        %v3066 = vld [vmem:[#allocation2 + $0x4] sm:$0xf]
        %v3067 = vld [vmem:[#allocation2 + $0x8] sm:$0xf]
        %v3068 = vld [vmem:[#allocation2 + $0xc] sm:$0xf]
        %v3069 = vld [vmem:[#allocation2 + $0x10] sm:$0xf]
        %v3070 = vld [vmem:[#allocation2 + $0x14] sm:$0xf]
        %v3071 = vld [vmem:[#allocation2 + $0x18] sm:$0xf]
        %v3072 = vld [vmem:[#allocation2 + $0x1c] sm:$0xf]
        %v3073 = vld [vmem:[#allocation2 + $0x20] sm:$0xf]
        %v3074 = vld [vmem:[#allocation2 + $0x24] sm:$0xf]
        %v3075 = vld [vmem:[#allocation2 + $0x28] sm:$0xf]
        %v3076 = vld [vmem:[#allocation2 + $0x2c] sm:$0xf]
        %v3077 = vld [vmem:[#allocation2 + $0x30] sm:$0xf]
        %v3078 = vld [vmem:[#allocation2 + $0x34] sm:$0xf]
        %v3079 = vld [vmem:[#allocation2 + $0x38] sm:$0xf]
        %v3080 = vld [vmem:[#allocation2 + $0x3c] sm:$0xf]
        %s3081 = smul.addr %s295, 4
        %s3082 = scalar_lea.vmem %s3, %s3081
        %v3083 = vld [vmem:[%s3082] sm:$0xf]
        %v3084 = vld [vmem:[%s3082 + $0x4] sm:$0xf]
        %v3085 = vld [vmem:[%s3082 + $0x8] sm:$0xf]
        %v3086 = vld [vmem:[%s3082 + $0xc] sm:$0xf]
        %v3087 = vld [vmem:[%s4] sm:$0x1]
        %v3089 = vlaneseq
        %v3090 = vshrl.u32 %v3089, 7
        %v3091 = vsub.s32 0, %v3090
        %v3092 = vrot.slane %v3087, %v3091
        %v3110 = vunpack.c.l.b16 %v3065
        %v3111 = vunpack.c.l.b16 %v3066
        %v3112 = vunpack.c.l.b16 %v3067
        %v3113 = vunpack.c.l.b16 %v3068
        %v3114 = vunpack.c.l.b16 %v3069
        %v3115 = vunpack.c.l.b16 %v3070
        %v3116 = vunpack.c.l.b16 %v3071
        %v3117 = vunpack.c.l.b16 %v3072
        %v3118 = vunpack.c.l.b16 %v3073
        %v3119 = vunpack.c.l.b16 %v3074
        %v3120 = vunpack.c.l.b16 %v3075
        %v3121 = vunpack.c.l.b16 %v3076
        %v3122 = vunpack.c.l.b16 %v3077
        %v3123 = vunpack.c.l.b16 %v3078
        %v3124 = vunpack.c.l.b16 %v3079
        %v3125 = vunpack.c.l.b16 %v3080
        %v3126 = vpack.c.b16 %v3111, %v3110
        %v3127 = vpack.c.b16 %v3113, %v3112
        %v3128 = vpack.c.b16 %v3115, %v3114
        %v3129 = vpack.c.b16 %v3117, %v3116
        %v3130 = vpack.c.b16 %v3119, %v3118
        %v3131 = vpack.c.b16 %v3121, %v3120
        %v3132 = vpack.c.b16 %v3123, %v3122
        %v3133 = vpack.c.b16 %v3125, %v3124
        %v3138 = vunpack.c.l.b16 %v3083
        %v3139 = vunpack.c.l.b16 %v3084
        %v3140 = vunpack.c.l.b16 %v3085
        %v3141 = vunpack.c.l.b16 %v3086
        %v3142 = vpack.c.b16 %v3139, %v3138
        %v3143 = vpack.c.b16 %v3141, %v3140
        %v3147 = vsel %vm362, %v3126, 0
        %v3150 = vsel %vm362, %v3127, 0
        %v3153 = vsel %vm362, %v3128, 0
        %v3156 = vsel %vm362, %v3129, 0
        %v3159 = vsel %vm362, %v3130, 0
        %v3162 = vsel %vm362, %v3131, 0
        %v3165 = vsel %vm362, %v3132, 0
        %v3168 = vsel %vm362, %v3133, 0
        %3170 = vmatprep.subr.bf16.mxu0 0
        %3171 = vmatpush1.bf16.msra.mxu0 0
        %3172 = vmatprep.subr.bf16.mxu0 0
        %3173 = vmatpush1.bf16.msra.mxu0 0
        %3174 = vmatprep.subr.bf16.mxu0 0
        %3175 = vmatpush1.bf16.msra.mxu0 0
        %3176 = vmatprep.subr.bf16.mxu0 0
        %3177 = vmatpush1.bf16.msra.mxu0 0
        %3178 = vmatprep.subr.bf16.mxu0 0
        %3179 = vmatpush1.bf16.msra.mxu0 0
        %3180 = vmatprep.subr.bf16.mxu0 0
        %3181 = vmatpush1.bf16.msra.mxu0 0
        %3182 = vmatprep.subr.bf16.mxu0 0
        %3183 = vmatpush1.bf16.msra.mxu0 %v3143
        %3184 = vmatprep.subr.bf16.mxu0 0
        %3185 = vmatpush1.bf16.msra.mxu0 %v3142
        %3186 = vmatprep.subr.bf16.mxu0 0
        %3187 = vmatpush2.bf16.msra.mxu0 0
        %3188 = vmatprep.subr.bf16.mxu0 0
        %3189 = vmatpush2.bf16.msra.mxu0 0
        %3190 = vmatprep.subr.bf16.mxu0 0
        %3191 = vmatpush2.bf16.msra.mxu0 0
        %3192 = vmatprep.subr.bf16.mxu0 0
        %3193 = vmatpush2.bf16.msra.mxu0 0
        %3194 = vmatprep.subr.bf16.mxu0 0
        %3195 = vmatpush2.bf16.msra.mxu0 0
        %3196 = vmatprep.subr.bf16.mxu0 0
        %3197 = vmatpush2.bf16.msra.mxu0 0
        %3198 = vmatprep.subr.bf16.mxu0 0
        %3199 = vmatpush2.bf16.msra.mxu0 0
        %3200 = vmatprep.subr.bf16.mxu0 0
        %3201 = vmatpush2.bf16.msra.mxu0 0
        %3202 = vmatprep.mubr.bf16.mxu0 0
        %3203 = vmatmul.mubr.bf16.gmra.mxu0 %v3147
        %v3204 = vpop.f32.mrf.mxu0
        %v3205 = vadd.f32 %v3092, %v3204
        %v3206 = vpop.f32.mrf.mxu0
        %v3207 = vpop.f32.mrf.mxu0
        %v3208 = vadd.f32 %v3092, %v3207
        %v3209 = vpop.f32.mrf.mxu0
        %3210 = vmatprep.mubr.bf16.mxu0 0
        %3211 = vmatmul.mubr.bf16.gmra.mxu0 %v3150
        %v3212 = vpop.f32.mrf.mxu0
        %v3213 = vadd.f32 %v3092, %v3212
        %v3214 = vpop.f32.mrf.mxu0
        %v3215 = vpop.f32.mrf.mxu0
        %v3216 = vadd.f32 %v3092, %v3215
        %v3217 = vpop.f32.mrf.mxu0
        %3218 = vmatprep.mubr.bf16.mxu0 0
        %3219 = vmatmul.mubr.bf16.gmra.mxu0 %v3153
        %v3220 = vpop.f32.mrf.mxu0
        %v3221 = vadd.f32 %v3092, %v3220
        %v3222 = vpop.f32.mrf.mxu0
        %v3223 = vpop.f32.mrf.mxu0
        %v3224 = vadd.f32 %v3092, %v3223
        %v3225 = vpop.f32.mrf.mxu0
        %3226 = vmatprep.mubr.bf16.mxu0 0
        %3227 = vmatmul.mubr.bf16.gmra.mxu0 %v3156
        %v3228 = vpop.f32.mrf.mxu0
        %v3229 = vadd.f32 %v3092, %v3228
        %v3230 = vpop.f32.mrf.mxu0
        %v3231 = vpop.f32.mrf.mxu0
        %v3232 = vadd.f32 %v3092, %v3231
        %v3233 = vpop.f32.mrf.mxu0
        %3234 = vmatprep.mubr.bf16.mxu0 0
        %3235 = vmatmul.mubr.bf16.gmra.mxu0 %v3159
        %v3236 = vpop.f32.mrf.mxu0
        %v3237 = vadd.f32 %v3092, %v3236
        %v3238 = vpop.f32.mrf.mxu0
        %v3239 = vpop.f32.mrf.mxu0
        %v3240 = vadd.f32 %v3092, %v3239
        %v3241 = vpop.f32.mrf.mxu0
        %3242 = vmatprep.mubr.bf16.mxu0 0
        %3243 = vmatmul.mubr.bf16.gmra.mxu0 %v3162
        %v3244 = vpop.f32.mrf.mxu0
        %v3245 = vadd.f32 %v3092, %v3244
        %v3246 = vpop.f32.mrf.mxu0
        %v3247 = vpop.f32.mrf.mxu0
        %v3248 = vadd.f32 %v3092, %v3247
        %v3249 = vpop.f32.mrf.mxu0
        %3250 = vmatprep.mubr.bf16.mxu0 0
        %3251 = vmatmul.mubr.bf16.gmra.mxu0 %v3165
        %v3252 = vpop.f32.mrf.mxu0
        %v3253 = vadd.f32 %v3092, %v3252
        %v3254 = vpop.f32.mrf.mxu0
        %v3255 = vpop.f32.mrf.mxu0
        %v3256 = vadd.f32 %v3092, %v3255
        %v3257 = vpop.f32.mrf.mxu0
        %3258 = vmatprep.mubr.bf16.mxu0 0
        %3259 = vmatmul.mubr.bf16.gmra.mxu0 %v3168
        %v3260 = vpop.f32.mrf.mxu0
        %v3261 = vadd.f32 %v3092, %v3260
        %v3262 = vpop.f32.mrf.mxu0
        %v3263 = vpop.f32.mrf.mxu0
        %v3264 = vadd.f32 %v3092, %v3263
        %v3265 = vpop.f32.mrf.mxu0
        %3266 = vdwg.mxu0
        %3267 = vst.msk [vmem:[%s276] sm:$0xff] %vm362, %v3205
        %3268 = vst.msk [vmem:[%s276 + $0x8] sm:$0xff] %vm362, %v3208
        %3269 = vst.msk [vmem:[%s276 + $0x10] sm:$0xff] %vm362, %v3213
        %3270 = vst.msk [vmem:[%s276 + $0x18] sm:$0xff] %vm362, %v3216
        %3271 = vst.msk [vmem:[%s276 + $0x20] sm:$0xff] %vm362, %v3221
        %3272 = vst.msk [vmem:[%s276 + $0x28] sm:$0xff] %vm362, %v3224
        %3273 = vst.msk [vmem:[%s276 + $0x30] sm:$0xff] %vm362, %v3229
        %3274 = vst.msk [vmem:[%s276 + $0x38] sm:$0xff] %vm362, %v3232
        %3275 = vst.msk [vmem:[%s276 + $0x40] sm:$0xff] %vm362, %v3237
        %3276 = vst.msk [vmem:[%s276 + $0x48] sm:$0xff] %vm362, %v3240
        %3277 = vst.msk [vmem:[%s276 + $0x50] sm:$0xff] %vm362, %v3245
        %3278 = vst.msk [vmem:[%s276 + $0x58] sm:$0xff] %vm362, %v3248
        %3279 = vst.msk [vmem:[%s276 + $0x60] sm:$0xff] %vm362, %v3253
        %3280 = vst.msk [vmem:[%s276 + $0x68] sm:$0xff] %vm362, %v3256
        %3281 = vst.msk [vmem:[%s276 + $0x70] sm:$0xff] %vm362, %v3261
        %3282 = vst.msk [vmem:[%s276 + $0x78] sm:$0xff] %vm362, %v3264
        %p3283 = scmp.lt.s32.totalorder %s25, 1
        %s3284 = scalar_select %p3283, %s25, 1
        %s3285 = smul.addr %s3284, 16
        %s3286 = smul.addr %s3285, 8
        %s3287 = scalar_lea.vmem %s5, %s3286
        %s3288 = sand.u32 %s179, 1
        %s3289 = scalar_lea.sflag [#allocation4], %s3288
        %s3290 = sand.u32 %s179, 1
        %s3291 = smul.addr %s3290, 256
        %s3292 = scalar_lea.vmem [#allocation3], %s3291
        // Predicated region
        $region41: #{tpu_custom_call.1} parent=39 // pred_check
          %p3293 = pneg %p161
        $region42: #{tpu_custom_call.1} parent=39 // pred_check_branch
          %3295 = sbr.rel (%p3293) target = $region44
        $region43: #{tpu_custom_call.1} parent=39 // pred_region
          _
        $region44: #{tpu_custom_call.1} parent=39 // pred_fallthru
          _
        // Predicated region
        $region45: #{tpu_custom_call.1} parent=39 // pred_check
          %p3296 = pneg %p189
        $region46: #{tpu_custom_call.1} parent=39 // pred_check_branch
          %3298 = sbr.rel (%p3296) target = $region48
        $region47: #{tpu_custom_call.1} parent=39 // pred_region
          %s3299 = smul.u32 4, %s26
          %s3301 = ssub.s32 4096, 4096
          %3302 = vsyncadd %s3289, %s3301
          %s3303 = smul.addr %s3299, 16
          %s3304 = smul.addr %s25, 64
          %s3305 = sadd.s32 %s3303, %s3304
          %s3306 = smul.addr %s3305, 64
          %s3307 = scalar_lea.hbm %s6, %s3306
          %s3308 = sshll.u32 %s3292, 4
          %s3309 = int_to_ptr.vmem [resolvable:$true] %s3308
          %3314 = dma.vmem_to_hbm [thread:$0]  %s3309, 4096, %s3307, %s3289, 64, 64, 4
        $region48: #{tpu_custom_call.1} parent=39 // pred_fallthru
          _
      $region40: #{tpu_custom_call.1} parent=5 // pred_fallthru
        _
      %p3315 = scmp.le.s32.totalorder 2, %s16
      // Predicated region
      $region49: #{tpu_custom_call.1} parent=5 // pred_check
        %p3316 = pneg %p3315
      $region50: #{tpu_custom_call.1} parent=5 // pred_check_branch
        %3318 = sbr.rel (%p3316) target = $region52
      $region51: #{tpu_custom_call.1} parent=5 // pred_region
        %s3319 = ssub.s32 %s16, 2
        // Predicated region
        $region53: #{tpu_custom_call.1} parent=51 // pred_check
          %p3320 = pneg %p167
        $region54: #{tpu_custom_call.1} parent=51 // pred_check_branch
          %3322 = sbr.rel (%p3320) target = $region56
        $region55: #{tpu_custom_call.1} parent=51 // pred_region
          %p3323 = scmp.lt.s32.totalorder %s27, 1
          %s3324 = scalar_select %p3323, %s27, 1
          %s3325 = smul.addr %s3324, 16
          %s3326 = smul.addr %s3325, 8
          %s3327 = scalar_lea.vmem %s5, %s3326
        $region56: #{tpu_custom_call.1} parent=51 // pred_fallthru
          _
        // Predicated region
        $region57: #{tpu_custom_call.1} parent=51 // pred_check
          %p3328 = pneg %p195
        $region58: #{tpu_custom_call.1} parent=51 // pred_check_branch
          %3330 = sbr.rel (%p3328) target = $region60
        $region59: #{tpu_custom_call.1} parent=51 // pred_region
          %s3331 = sand.u32 %s180, 1
          %s3332 = scalar_lea.sflag [#allocation4], %s3331
          %s3333 = sand.u32 %s180, 1
          %s3334 = smul.addr %s3333, 256
          %s3335 = scalar_lea.vmem [#allocation3], %s3334
          %3336 = dma.done %s3332, 4096
        $region60: #{tpu_custom_call.1} parent=51 // pred_fallthru
          _
      $region52: #{tpu_custom_call.1} parent=5 // pred_fallthru
        _
    $region6: #{tpu_custom_call.1} parent=1 // loop_footer
      %s20 = sadd.s32 1, %s16
    $region7: #{tpu_custom_call.1} parent=1 // loop_footer_branch
      %15 = sbr.rel target = $region3
    $region8: #{tpu_custom_call.1} parent=1 // loop_exit
      _
    %3337 = vsyncpa [#allocation4], 1
    %s3338 = scalar_lea.sflag [#allocation4], 1
    %3339 = vsyncpa %s3338, 1

</llo_original>
